<compile_context>
chip_gen: v7x
topology: tpu7x:2x2x1
jax: 0.10.0
libtpu: 0.0.40
codegen_flags: <defaults>
</compile_context>

<pallas_src>
import jax
import jax.numpy as jnp
from jax.experimental import pallas as pl
from jax.experimental.pallas import tpu as pltpu


C_PAD = 8      # input channels zero-padded 3 -> 8
FEAT = 1024    # width of the last conv layer
HID = 512      # fc width


def _relu(x):
    return jnp.maximum(x, 0.0)


# ----------------------------------------------------------------------------
# Fused kernel: conv stack + max over points + fc + mu/logvar + reparameterize
# ----------------------------------------------------------------------------
def encoder_kernel(x_ref, w1, w2, w3, w4, w5, wf, wmv, bias, eps_ref,
                   z_ref, mu_ref, lv_ref, acc_ref):
    n = pl.program_id(1)
    n_last = pl.num_programs(1) - 1
    tile_b = acc_ref.shape[0]
    m_rows = x_ref.shape[1]          # tile_b * tile_n
    tile_n = m_rows // tile_b
    z_sz = mu_ref.shape[1]

    # ---- conv1 (3 real input channels) as VPU broadcast-FMAs, pure f32 ----
    x = x_ref[0]                                             # (m_rows, 8) f32
    w1f = w1[...]                                            # (8, 64) f32
    h = (x[:, 0:1] * w1f[0:1, :]
         + x[:, 1:2] * w1f[1:2, :]
         + x[:, 2:3] * w1f[2:3, :]
         + bias[:, 0:64])
    h = _relu(h)

    # ---- conv2..conv5 on the MXU: bf16 inputs, f32 accumulation ----
    h = _relu(jnp.dot(h.astype(jnp.bfloat16), w2[...],
                      preferred_element_type=jnp.float32) + bias[:, 128:256])
    h = _relu(jnp.dot(h.astype(jnp.bfloat16), w3[...],
                      preferred_element_type=jnp.float32) + bias[:, 256:512])
    h = _relu(jnp.dot(h.astype(jnp.bfloat16), w4[...],
                      preferred_element_type=jnp.float32) + bias[:, 512:1024])
    h = jnp.dot(h.astype(jnp.bfloat16), w5[...],
                preferred_element_type=jnp.float32) + bias[:, 1024:2048]

    # ---- per-row partial max: tile_n -> 8 sublanes (vreg-wise VPU max) ----
    parts = []
    for i in range(tile_b):
        hi = h[i * tile_n:(i + 1) * tile_n]                  # (tile_n, 1024)
        parts.append(jnp.max(hi.reshape(tile_n // 8, 8, FEAT), axis=0))

    @pl.when(n == 0)
    def _():
        for i in range(tile_b):
            acc_ref[i] = parts[i]

    @pl.when(n > 0)
    def _():
        for i in range(tile_b):
            acc_ref[i] = jnp.maximum(acc_ref[i], parts[i])

    # ---- batched heads, once per batch block at the last point tile ----
    @pl.when(n == n_last)
    def _():
        feat = jnp.max(acc_ref[...], axis=1)                 # (tile_b, 1024)
        g = _relu(jnp.dot(feat.astype(jnp.bfloat16), wf[...],
                          preferred_element_type=jnp.float32) + bias[:, 2048:2560])
        mv = jnp.dot(g.astype(jnp.bfloat16), wmv[...],
                     preferred_element_type=jnp.float32) + bias[:, 2560:2560 + 2 * z_sz]
        mu = mv[:, :z_sz]
        lv = mv[:, z_sz:]
        mu_ref[...] = mu
        lv_ref[...] = lv
        # z = eps * exp(0.5 * logvar) + mu
        z_ref[...] = eps_ref[...] * jnp.exp(0.5 * lv) + mu


def encoder_pallas(x_blk, w1, w2, w3, w4, w5, wf, wmv, bias, eps,
                   *, tile_b, tile_n):
    """x_blk: (B//tile_b, (Np//tile_n)*tile_b*tile_n, C_PAD) f32, regrouped so
    each grid step sees a contiguous (tile_b*tile_n, C_PAD) slab."""
    nb, rows, Cp = x_blk.shape
    m_rows = tile_b * tile_n
    nn = rows // m_rows
    B = nb * tile_b
    z_sz = wmv.shape[1] // 2

    const = lambda a: pl.BlockSpec(a.shape, lambda b, n: (0, 0))
    out_shapes = (jax.ShapeDtypeStruct((B, z_sz), jnp.float32),) * 3

    return pl.pallas_call(
        encoder_kernel,
        out_shape=out_shapes,
        grid_spec=pltpu.PrefetchScalarGridSpec(
            num_scalar_prefetch=0,
            grid=(nb, nn),
            in_specs=[
                pl.BlockSpec((1, m_rows, Cp), lambda b, n: (b, n, 0)),
                const(w1), const(w2), const(w3), const(w4), const(w5),
                const(wf), const(wmv), const(bias),
                pl.BlockSpec((tile_b, z_sz), lambda b, n: (b, 0)),
            ],
            out_specs=[pl.BlockSpec((tile_b, z_sz), lambda b, n: (b, 0))] * 3,
            scratch_shapes=[pltpu.VMEM((tile_b, 8, FEAT), jnp.float32)],
        ),
        compiler_params=pltpu.CompilerParams(
            dimension_semantics=("parallel", "arbitrary"),
            vmem_limit_bytes=48 * 1024 * 1024),
    )(x_blk, w1, w2, w3, w4, w5, wf, wmv, bias, eps)


# ----------------------------------------------------------------------------
# Parameter init (deterministic; PyTorch layer shapes stored as (in, out))
# ----------------------------------------------------------------------------
def init_params(key, z_size):
    def linear(k, fan_in, fan_out, w_dtype=jnp.bfloat16):
        kw, kb = jax.random.split(k)
        bound = 1.0 / float(fan_in) ** 0.5
        w = jax.random.uniform(kw, (fan_in, fan_out), jnp.float32, -bound, bound)
        b = jax.random.uniform(kb, (1, fan_out), jnp.float32, -bound, bound)
        return w.astype(w_dtype), b

    keys = jax.random.split(key, 8)
    # conv1 weight stays f32 (applied on the VPU); zero-pad 3 -> C_PAD rows.
    w1, b1 = linear(keys[0], 3, 64, jnp.float32)
    w1 = jnp.concatenate([w1, jnp.zeros((C_PAD - 3, 64), jnp.float32)], axis=0)
    conv = [(w1, b1),
            linear(keys[1], 64, 128),
            linear(keys[2], 128, 256),
            linear(keys[3], 256, 512),
            linear(keys[4], 512, FEAT)]
    fc = linear(keys[5], FEAT, HID)
    mu = linear(keys[6], HID, z_size)
    std = linear(keys[7], HID, z_size)
    return conv, fc, mu, std


def _pack_params(params):
    """Fuse mu/std weights and pack all biases into one lane-aligned array."""
    conv_p, fc_p, mu_p, std_p = params
    (w1, b1), (w2, b2), (w3, b3), (w4, b4), (w5, b5) = conv_p
    wf, bf = fc_p
    wm, bm = mu_p
    ws, bs = std_p
    z = wm.shape[1]
    wmv = jnp.concatenate([wm, ws], axis=1)                  # (HID, 2z) bf16
    bias = jnp.zeros((1, 2560 + 2 * z), jnp.float32)
    bias = bias.at[:, 0:64].set(b1)
    bias = bias.at[:, 128:256].set(b2)
    bias = bias.at[:, 256:512].set(b3)
    bias = bias.at[:, 512:1024].set(b4)
    bias = bias.at[:, 1024:2048].set(b5)
    bias = bias.at[:, 2048:2560].set(bf)
    bias = bias.at[:, 2560:2560 + z].set(bm)
    bias = bias.at[:, 2560 + z:2560 + 2 * z].set(bs)
    return w1, w2, w3, w4, w5, wf, wmv, bias


def _pick_tiles(B, Np):
    tile_n = next(t for t in (1024, 512, 256, 128, 64, 32, 16) if Np % t == 0)
    max_rows = 2048                      # bounds live f32 activations (~7 KB/row)
    cands = [t for t in range(1, min(B, 8) + 1)
             if B % t == 0 and t * tile_n <= max_rows]
    if B >= 4:                           # keep >=2 batch blocks for v7x megacore
        cands = [t for t in cands if B // t >= 2] or cands
    return max(cands), tile_n


# ----------------------------------------------------------------------------
# Encoder forward (takes NCL input like the PyTorch module)
# ----------------------------------------------------------------------------
def encoder_forward(x_ncl, params, eps):
    """x_ncl: (B, 3, N) f32.  eps: (B, z_size) f32.  Returns (z, mu, logvar)."""
    B, C, N = x_ncl.shape
    x_pts = jnp.transpose(x_ncl, (0, 2, 1))                   # (B, N, 3)
    x_pts = jnp.pad(x_pts, ((0, 0), (0, 0), (0, C_PAD - C)))  # (B, N, 8)

    # pad the point axis to a multiple of 16 by replicating the last point
    # (max-pooling over points is unchanged by duplicated points)
    Np = ((N + 15) // 16) * 16
    if Np != N:
        x_pts = jnp.pad(x_pts, ((0, 0), (0, Np - N), (0, 0)), mode="edge")

    tile_b, tile_n = _pick_tiles(B, Np)
    nb, nn = B // tile_b, Np // tile_n

    # regroup so each grid step sees a contiguous (tile_b*tile_n, C) slab:
    # (B, Np, C) -> (nb, nn, tile_b*tile_n, C) -> (nb, nn*tile_b*tile_n, C)
    x_blk = x_pts.reshape(nb, tile_b, nn, tile_n, C_PAD)
    x_blk = jnp.transpose(x_blk, (0, 2, 1, 3, 4))
    x_blk = x_blk.reshape(nb, nn * tile_b * tile_n, C_PAD)

    w1, w2, w3, w4, w5, wf, wmv, bias = _pack_params(params)
    return encoder_pallas(x_blk, w1, w2, w3, w4, w5, wf, wmv, bias, eps,
                          tile_b=tile_b, tile_n=tile_n)


# ----------------------------------------------------------------------------
# Pure-JAX reference (f32 math on the same weights) for a sanity check
# ----------------------------------------------------------------------------
def encoder_ref(x_ncl, params, eps):
    conv_p, fc_p, mu_p, std_p = params
    f32 = lambda t: t.astype(jnp.float32)
    B, C, N = x_ncl.shape
    x = jnp.transpose(x_ncl, (0, 2, 1))
    x = jnp.pad(x, ((0, 0), (0, 0), (0, C_PAD - C)))
    h = x
    for w, b in conv_p[:-1]:
        h = jnp.maximum(h @ f32(w) + f32(b), 0.0)
    w5, b5 = conv_p[-1]
    h = h @ f32(w5) + f32(b5)
    feat = h.max(axis=1)
    wf, bf = fc_p
    wm, bm = mu_p
    ws, bs = std_p
    g = jnp.maximum(feat @ f32(wf) + f32(bf), 0.0)
    mu = g @ f32(wm) + f32(bm)
    lv = g @ f32(ws) + f32(bs)
    z = eps * jnp.exp(0.5 * lv) + mu
    return z, mu, lv


if __name__ == "__main__":
    key = jax.random.PRNGKey(0)
    k_param, k_x, k_eps = jax.random.split(key, 3)

    B, N, Z = 2, 256, 128
    params = init_params(k_param, Z)
    x = jax.random.normal(k_x, (B, 3, N), jnp.float32)        # NCL input
    # TODO(synk): torch.randn_like noise inside reparameterize is generated
    # host-side here (deterministic eps) instead of via pltpu.prng in-kernel.
    eps = jax.random.normal(k_eps, (B, Z), jnp.float32)

    z, mu, logvar = jax.jit(encoder_forward)(x, params, eps)
    jax.block_until_ready((z, mu, logvar))

    assert z.shape == (B, Z) and mu.shape == (B, Z) and logvar.shape == (B, Z)
    assert bool(jnp.all(jnp.isfinite(z)) & jnp.all(jnp.isfinite(mu))
                & jnp.all(jnp.isfinite(logvar)))

    # loose sanity check vs pure-JAX reference (bf16 activation casts drift)
    z_r, mu_r, lv_r = encoder_ref(x, params, eps)
    for got, ref in ((z, z_r), (mu, mu_r), (logvar, lv_r)):
        tol = 1e-2 + 5e-2 * float(jnp.max(jnp.abs(ref)))
        assert float(jnp.max(jnp.abs(got - ref))) < tol

    print("KERNEL_OK")
</pallas_src>

<mosaic_0001>
module attributes {stable_mosaic.version = 11 : i64} {
  func.func @encoder_kernel(%arg0: i32, %arg1: i32, %arg2: memref<1x512x8xf32, #tpu.memory_space<vmem>>, %arg3: memref<8x64xf32, #tpu.memory_space<vmem>>, %arg4: memref<64x128xbf16, #tpu.memory_space<vmem>>, %arg5: memref<128x256xbf16, #tpu.memory_space<vmem>>, %arg6: memref<256x512xbf16, #tpu.memory_space<vmem>>, %arg7: memref<512x1024xbf16, #tpu.memory_space<vmem>>, %arg8: memref<1024x512xbf16, #tpu.memory_space<vmem>>, %arg9: memref<512x256xbf16, #tpu.memory_space<vmem>>, %arg10: memref<1x2816xf32, #tpu.memory_space<vmem>>, %arg11: memref<2x128xf32, #tpu.memory_space<vmem>>, %arg12: memref<2x128xf32, #tpu.memory_space<vmem>>, %arg13: memref<2x128xf32, #tpu.memory_space<vmem>>, %arg14: memref<2x128xf32, #tpu.memory_space<vmem>>, %arg15: memref<2x8x1024xf32, #tpu.memory_space<vmem>>) attributes {dimension_semantics = [#tpu.dimension_semantics<parallel>, #tpu.dimension_semantics<arbitrary>], iteration_bounds = array<i64: 1, 1>, scalar_prefetch = 0 : i64, scratch_operands = 1 : i64, tpu.core_type = #tpu.core_type<tc>, window_params = [{transform_indices = @transform_0, window_bounds = array<i64: 1, 512, 8>}, {pipeline_mode = #tpu.pipeline_mode<synchronous>, transform_indices = @transform_1, window_bounds = array<i64: 8, 64>}, {pipeline_mode = #tpu.pipeline_mode<synchronous>, transform_indices = @transform_2, window_bounds = array<i64: 64, 128>}, {pipeline_mode = #tpu.pipeline_mode<synchronous>, transform_indices = @transform_3, window_bounds = array<i64: 128, 256>}, {pipeline_mode = #tpu.pipeline_mode<synchronous>, transform_indices = @transform_4, window_bounds = array<i64: 256, 512>}, {pipeline_mode = #tpu.pipeline_mode<synchronous>, transform_indices = @transform_5, window_bounds = array<i64: 512, 1024>}, {pipeline_mode = #tpu.pipeline_mode<synchronous>, transform_indices = @transform_6, window_bounds = array<i64: 1024, 512>}, {pipeline_mode = #tpu.pipeline_mode<synchronous>, transform_indices = @transform_7, window_bounds = array<i64: 512, 256>}, {pipeline_mode = #tpu.pipeline_mode<synchronous>, transform_indices = @transform_8, window_bounds = array<i64: 1, 2816>}, {transform_indices = @transform_9, window_bounds = array<i64: 2, 128>}, {transform_indices = @transform_10, window_bounds = array<i64: 2, 128>}, {transform_indices = @transform_11, window_bounds = array<i64: 2, 128>}, {transform_indices = @transform_12, window_bounds = array<i64: 2, 128>}]} {
    %c0 = arith.constant 0 : index
    %c0_0 = arith.constant 0 : index
    %c0_1 = arith.constant 0 : index
    %0 = vector.load %arg2[%c0, %c0_0, %c0_1] : memref<1x512x8xf32, #tpu.memory_space<vmem>>, vector<1x512x8xf32>
    %1 = vector.shape_cast %0 : vector<1x512x8xf32> to vector<512x8xf32>
    %c0_2 = arith.constant 0 : index
    %c0_3 = arith.constant 0 : index
    %2 = vector.load %arg3[%c0_2, %c0_3] : memref<8x64xf32, #tpu.memory_space<vmem>>, vector<8x64xf32>
    %3 = vector.extract_strided_slice %1 {offsets = [0, 0], sizes = [512, 1], strides = [1, 1]} : vector<512x8xf32> to vector<512x1xf32>
    %4 = vector.extract_strided_slice %2 {offsets = [0, 0], sizes = [1, 64], strides = [1, 1]} : vector<8x64xf32> to vector<1x64xf32>
    %5 = vector.broadcast %3 : vector<512x1xf32> to vector<512x64xf32>
    %6 = vector.broadcast %4 : vector<1x64xf32> to vector<512x64xf32>
    %7 = arith.mulf %5, %6 : vector<512x64xf32>
    %8 = vector.extract_strided_slice %1 {offsets = [0, 1], sizes = [512, 1], strides = [1, 1]} : vector<512x8xf32> to vector<512x1xf32>
    %9 = vector.extract_strided_slice %2 {offsets = [1, 0], sizes = [1, 64], strides = [1, 1]} : vector<8x64xf32> to vector<1x64xf32>
    %10 = vector.broadcast %8 : vector<512x1xf32> to vector<512x64xf32>
    %11 = vector.broadcast %9 : vector<1x64xf32> to vector<512x64xf32>
    %12 = arith.mulf %10, %11 : vector<512x64xf32>
    %13 = arith.addf %7, %12 : vector<512x64xf32>
    %14 = vector.extract_strided_slice %1 {offsets = [0, 2], sizes = [512, 1], strides = [1, 1]} : vector<512x8xf32> to vector<512x1xf32>
    %15 = vector.extract_strided_slice %2 {offsets = [2, 0], sizes = [1, 64], strides = [1, 1]} : vector<8x64xf32> to vector<1x64xf32>
    %16 = vector.broadcast %14 : vector<512x1xf32> to vector<512x64xf32>
    %17 = vector.broadcast %15 : vector<1x64xf32> to vector<512x64xf32>
    %18 = arith.mulf %16, %17 : vector<512x64xf32>
    %19 = arith.addf %13, %18 : vector<512x64xf32>
    %c0_4 = arith.constant 0 : index
    %c0_5 = arith.constant 0 : index
    %20 = vector.load %arg10[%c0_4, %c0_5] : memref<1x2816xf32, #tpu.memory_space<vmem>>, vector<1x64xf32>
    %21 = vector.broadcast %20 : vector<1x64xf32> to vector<512x64xf32>
    %22 = arith.addf %19, %21 : vector<512x64xf32>
    %cst = arith.constant 0.000000e+00 : f32
    %23 = vector.broadcast %cst : f32 to vector<512x64xf32>
    %24 = arith.maximumf %22, %23 : vector<512x64xf32>
    %25 = arith.truncf %24 : vector<512x64xf32> to vector<512x64xbf16>
    %c0_6 = arith.constant 0 : index
    %c0_7 = arith.constant 0 : index
    %26 = vector.load %arg4[%c0_6, %c0_7] : memref<64x128xbf16, #tpu.memory_space<vmem>>, vector<64x128xbf16>
    %cst_8 = arith.constant dense<0.000000e+00> : vector<512x128xf32>
    %27 = tpu.matmul %25, %26, %cst_8 {dimension_numbers = #tpu.dot_dimension_numbers<[1], [0], [0], [1], [0, 0, 1, 1], [], []>} : vector<512x64xbf16>, vector<64x128xbf16>, vector<512x128xf32> -> vector<512x128xf32>
    %c0_9 = arith.constant 0 : index
    %c128 = arith.constant 128 : index
    %28 = vector.load %arg10[%c0_9, %c128] : memref<1x2816xf32, #tpu.memory_space<vmem>>, vector<1x128xf32>
    %29 = vector.broadcast %28 : vector<1x128xf32> to vector<512x128xf32>
    %30 = arith.addf %27, %29 : vector<512x128xf32>
    %cst_10 = arith.constant 0.000000e+00 : f32
    %31 = vector.broadcast %cst_10 : f32 to vector<512x128xf32>
    %32 = arith.maximumf %30, %31 : vector<512x128xf32>
    %33 = arith.truncf %32 : vector<512x128xf32> to vector<512x128xbf16>
    %c0_11 = arith.constant 0 : index
    %c0_12 = arith.constant 0 : index
    %34 = vector.load %arg5[%c0_11, %c0_12] : memref<128x256xbf16, #tpu.memory_space<vmem>>, vector<128x256xbf16>
    %cst_13 = arith.constant dense<0.000000e+00> : vector<512x256xf32>
    %35 = tpu.matmul %33, %34, %cst_13 {dimension_numbers = #tpu.dot_dimension_numbers<[1], [0], [0], [1], [0, 0, 1, 1], [], []>} : vector<512x128xbf16>, vector<128x256xbf16>, vector<512x256xf32> -> vector<512x256xf32>
    %c0_14 = arith.constant 0 : index
    %c256 = arith.constant 256 : index
    %36 = vector.load %arg10[%c0_14, %c256] : memref<1x2816xf32, #tpu.memory_space<vmem>>, vector<1x256xf32>
    %37 = vector.broadcast %36 : vector<1x256xf32> to vector<512x256xf32>
    %38 = arith.addf %35, %37 : vector<512x256xf32>
    %cst_15 = arith.constant 0.000000e+00 : f32
    %39 = vector.broadcast %cst_15 : f32 to vector<512x256xf32>
    %40 = arith.maximumf %38, %39 : vector<512x256xf32>
    %41 = arith.truncf %40 : vector<512x256xf32> to vector<512x256xbf16>
    %c0_16 = arith.constant 0 : index
    %c0_17 = arith.constant 0 : index
    %42 = vector.load %arg6[%c0_16, %c0_17] : memref<256x512xbf16, #tpu.memory_space<vmem>>, vector<256x512xbf16>
    %cst_18 = arith.constant dense<0.000000e+00> : vector<512x512xf32>
    %43 = tpu.matmul %41, %42, %cst_18 {dimension_numbers = #tpu.dot_dimension_numbers<[1], [0], [0], [1], [0, 0, 1, 1], [], []>} : vector<512x256xbf16>, vector<256x512xbf16>, vector<512x512xf32> -> vector<512x512xf32>
    %c0_19 = arith.constant 0 : index
    %c512 = arith.constant 512 : index
    %44 = vector.load %arg10[%c0_19, %c512] : memref<1x2816xf32, #tpu.memory_space<vmem>>, vector<1x512xf32>
    %45 = vector.broadcast %44 : vector<1x512xf32> to vector<512x512xf32>
    %46 = arith.addf %43, %45 : vector<512x512xf32>
    %cst_20 = arith.constant 0.000000e+00 : f32
    %47 = vector.broadcast %cst_20 : f32 to vector<512x512xf32>
    %48 = arith.maximumf %46, %47 : vector<512x512xf32>
    %49 = arith.truncf %48 : vector<512x512xf32> to vector<512x512xbf16>
    %c0_21 = arith.constant 0 : index
    %c0_22 = arith.constant 0 : index
    %50 = vector.load %arg7[%c0_21, %c0_22] : memref<512x1024xbf16, #tpu.memory_space<vmem>>, vector<512x1024xbf16>
    %cst_23 = arith.constant dense<0.000000e+00> : vector<512x1024xf32>
    %51 = tpu.matmul %49, %50, %cst_23 {dimension_numbers = #tpu.dot_dimension_numbers<[1], [0], [0], [1], [0, 0, 1, 1], [], []>} : vector<512x512xbf16>, vector<512x1024xbf16>, vector<512x1024xf32> -> vector<512x1024xf32>
    %c0_24 = arith.constant 0 : index
    %c1024 = arith.constant 1024 : index
    %52 = vector.load %arg10[%c0_24, %c1024] : memref<1x2816xf32, #tpu.memory_space<vmem>>, vector<1x1024xf32>
    %53 = vector.broadcast %52 : vector<1x1024xf32> to vector<512x1024xf32>
    %54 = arith.addf %51, %53 : vector<512x1024xf32>
    %55 = vector.extract_strided_slice %54 {offsets = [0, 0], sizes = [256, 1024], strides = [1, 1]} : vector<512x1024xf32> to vector<256x1024xf32>
    %56 = vector.shape_cast %55 : vector<256x1024xf32> to vector<32x8x1024xf32>
    %cst_25 = arith.constant dense<0xFF800000> : vector<8x1024xf32>
    %57 = vector.multi_reduction <maximumf>, %56, %cst_25 [0] : vector<32x8x1024xf32> to vector<8x1024xf32>
    %58 = vector.extract_strided_slice %54 {offsets = [256, 0], sizes = [256, 1024], strides = [1, 1]} : vector<512x1024xf32> to vector<256x1024xf32>
    %59 = vector.shape_cast %58 : vector<256x1024xf32> to vector<32x8x1024xf32>
    %cst_26 = arith.constant dense<0xFF800000> : vector<8x1024xf32>
    %60 = vector.multi_reduction <maximumf>, %59, %cst_26 [0] : vector<32x8x1024xf32> to vector<8x1024xf32>
    %c0_i32 = arith.constant 0 : i32
    %61 = arith.cmpi eq, %arg1, %c0_i32 : i32
    %62 = arith.extui %61 : i1 to i32
    %c0_i32_27 = arith.constant 0 : i32
    %63 = arith.cmpi ne, %62, %c0_i32_27 : i32
    scf.if %63 {
      %c0_32 = arith.constant 0 : index
      %c0_33 = arith.constant 0 : index
      %c0_34 = arith.constant 0 : index
      %70 = vector.load %arg15[%c0_32, %c0_33, %c0_34] : memref<2x8x1024xf32, #tpu.memory_space<vmem>>, vector<1x8x1024xf32>
      %71 = vector.shape_cast %70 : vector<1x8x1024xf32> to vector<8x1024xf32>
      %72 = vector.shape_cast %57 : vector<8x1024xf32> to vector<1x8x1024xf32>
      tpu.vector_store %arg15[%c0_32, %c0_33, %c0_34], %72 {strides = array<i32>} : memref<2x8x1024xf32, #tpu.memory_space<vmem>>, vector<1x8x1024xf32>,
      %c1 = arith.constant 1 : index
      %c0_35 = arith.constant 0 : index
      %c0_36 = arith.constant 0 : index
      %73 = vector.load %arg15[%c1, %c0_35, %c0_36] : memref<2x8x1024xf32, #tpu.memory_space<vmem>>, vector<1x8x1024xf32>
      %74 = vector.shape_cast %73 : vector<1x8x1024xf32> to vector<8x1024xf32>
      %75 = vector.shape_cast %60 : vector<8x1024xf32> to vector<1x8x1024xf32>
      tpu.vector_store %arg15[%c1, %c0_35, %c0_36], %75 {strides = array<i32>} : memref<2x8x1024xf32, #tpu.memory_space<vmem>>, vector<1x8x1024xf32>,
    } else {
    }
    %c0_i32_28 = arith.constant 0 : i32
    %64 = arith.cmpi sgt, %arg1, %c0_i32_28 : i32
    %65 = arith.extui %64 : i1 to i32
    %c0_i32_29 = arith.constant 0 : i32
    %66 = arith.cmpi ne, %65, %c0_i32_29 : i32
    scf.if %66 {
      %c0_32 = arith.constant 0 : index
      %c0_33 = arith.constant 0 : index
      %c0_34 = arith.constant 0 : index
      %70 = vector.load %arg15[%c0_32, %c0_33, %c0_34] : memref<2x8x1024xf32, #tpu.memory_space<vmem>>, vector<1x8x1024xf32>
      %71 = vector.shape_cast %70 : vector<1x8x1024xf32> to vector<8x1024xf32>
      %72 = arith.maximumf %71, %57 : vector<8x1024xf32>
      %c0_35 = arith.constant 0 : index
      %c0_36 = arith.constant 0 : index
      %c0_37 = arith.constant 0 : index
      %73 = vector.load %arg15[%c0_35, %c0_36, %c0_37] : memref<2x8x1024xf32, #tpu.memory_space<vmem>>, vector<1x8x1024xf32>
      %74 = vector.shape_cast %73 : vector<1x8x1024xf32> to vector<8x1024xf32>
      %75 = vector.shape_cast %72 : vector<8x1024xf32> to vector<1x8x1024xf32>
      tpu.vector_store %arg15[%c0_35, %c0_36, %c0_37], %75 {strides = array<i32>} : memref<2x8x1024xf32, #tpu.memory_space<vmem>>, vector<1x8x1024xf32>,
      %c1 = arith.constant 1 : index
      %c0_38 = arith.constant 0 : index
      %c0_39 = arith.constant 0 : index
      %76 = vector.load %arg15[%c1, %c0_38, %c0_39] : memref<2x8x1024xf32, #tpu.memory_space<vmem>>, vector<1x8x1024xf32>
      %77 = vector.shape_cast %76 : vector<1x8x1024xf32> to vector<8x1024xf32>
      %78 = arith.maximumf %77, %60 : vector<8x1024xf32>
      %c1_40 = arith.constant 1 : index
      %c0_41 = arith.constant 0 : index
      %c0_42 = arith.constant 0 : index
      %79 = vector.load %arg15[%c1_40, %c0_41, %c0_42] : memref<2x8x1024xf32, #tpu.memory_space<vmem>>, vector<1x8x1024xf32>
      %80 = vector.shape_cast %79 : vector<1x8x1024xf32> to vector<8x1024xf32>
      %81 = vector.shape_cast %78 : vector<8x1024xf32> to vector<1x8x1024xf32>
      tpu.vector_store %arg15[%c1_40, %c0_41, %c0_42], %81 {strides = array<i32>} : memref<2x8x1024xf32, #tpu.memory_space<vmem>>, vector<1x8x1024xf32>,
    } else {
    }
    %c0_i32_30 = arith.constant 0 : i32
    %67 = arith.cmpi eq, %arg1, %c0_i32_30 : i32
    %68 = arith.extui %67 : i1 to i32
    %c0_i32_31 = arith.constant 0 : i32
    %69 = arith.cmpi ne, %68, %c0_i32_31 : i32
    scf.if %69 {
      %c0_32 = arith.constant 0 : index
      %c0_33 = arith.constant 0 : index
      %c0_34 = arith.constant 0 : index
      %70 = vector.load %arg15[%c0_32, %c0_33, %c0_34] : memref<2x8x1024xf32, #tpu.memory_space<vmem>>, vector<2x8x1024xf32>
      %cst_35 = arith.constant dense<0xFF800000> : vector<2x1024xf32>
      %71 = vector.multi_reduction <maximumf>, %70, %cst_35 [1] : vector<2x8x1024xf32> to vector<2x1024xf32>
      %72 = arith.truncf %71 : vector<2x1024xf32> to vector<2x1024xbf16>
      %c0_36 = arith.constant 0 : index
      %c0_37 = arith.constant 0 : index
      %73 = vector.load %arg8[%c0_36, %c0_37] : memref<1024x512xbf16, #tpu.memory_space<vmem>>, vector<1024x512xbf16>
      %cst_38 = arith.constant dense<0.000000e+00> : vector<2x512xf32>
      %74 = tpu.matmul %72, %73, %cst_38 {dimension_numbers = #tpu.dot_dimension_numbers<[1], [0], [0], [1], [0, 0, 1, 1], [], []>} : vector<2x1024xbf16>, vector<1024x512xbf16>, vector<2x512xf32> -> vector<2x512xf32>
      %c0_39 = arith.constant 0 : index
      %c2048 = arith.constant 2048 : index
      %75 = vector.load %arg10[%c0_39, %c2048] : memref<1x2816xf32, #tpu.memory_space<vmem>>, vector<1x512xf32>
      %76 = vector.broadcast %75 : vector<1x512xf32> to vector<2x512xf32>
      %77 = arith.addf %74, %76 : vector<2x512xf32>
      %cst_40 = arith.constant 0.000000e+00 : f32
      %78 = vector.broadcast %cst_40 : f32 to vector<2x512xf32>
      %79 = arith.maximumf %77, %78 : vector<2x512xf32>
      %80 = arith.truncf %79 : vector<2x512xf32> to vector<2x512xbf16>
      %c0_41 = arith.constant 0 : index
      %c0_42 = arith.constant 0 : index
      %81 = vector.load %arg9[%c0_41, %c0_42] : memref<512x256xbf16, #tpu.memory_space<vmem>>, vector<512x256xbf16>
      %cst_43 = arith.constant dense<0.000000e+00> : vector<2x256xf32>
      %82 = tpu.matmul %80, %81, %cst_43 {dimension_numbers = #tpu.dot_dimension_numbers<[1], [0], [0], [1], [0, 0, 1, 1], [], []>} : vector<2x512xbf16>, vector<512x256xbf16>, vector<2x256xf32> -> vector<2x256xf32>
      %c0_44 = arith.constant 0 : index
      %c2560 = arith.constant 2560 : index
      %83 = vector.load %arg10[%c0_44, %c2560] : memref<1x2816xf32, #tpu.memory_space<vmem>>, vector<1x256xf32>
      %84 = vector.broadcast %83 : vector<1x256xf32> to vector<2x256xf32>
      %85 = arith.addf %82, %84 : vector<2x256xf32>
      %86 = vector.extract_strided_slice %85 {offsets = [0, 0], sizes = [2, 128], strides = [1, 1]} : vector<2x256xf32> to vector<2x128xf32>
      %87 = vector.extract_strided_slice %85 {offsets = [0, 128], sizes = [2, 128], strides = [1, 1]} : vector<2x256xf32> to vector<2x128xf32>
      %c0_45 = arith.constant 0 : index
      %c0_46 = arith.constant 0 : index
      %88 = vector.load %arg13[%c0_45, %c0_46] : memref<2x128xf32, #tpu.memory_space<vmem>>, vector<2x128xf32>
      tpu.vector_store %arg13[%c0_45, %c0_46], %86 {strides = array<i32>} : memref<2x128xf32, #tpu.memory_space<vmem>>, vector<2x128xf32>,
      %c0_47 = arith.constant 0 : index
      %c0_48 = arith.constant 0 : index
      %89 = vector.load %arg14[%c0_47, %c0_48] : memref<2x128xf32, #tpu.memory_space<vmem>>, vector<2x128xf32>
      tpu.vector_store %arg14[%c0_47, %c0_48], %87 {strides = array<i32>} : memref<2x128xf32, #tpu.memory_space<vmem>>, vector<2x128xf32>,
      %c0_49 = arith.constant 0 : index
      %c0_50 = arith.constant 0 : index
      %90 = vector.load %arg11[%c0_49, %c0_50] : memref<2x128xf32, #tpu.memory_space<vmem>>, vector<2x128xf32>
      %cst_51 = arith.constant 5.000000e-01 : f32
      %91 = vector.broadcast %cst_51 : f32 to vector<2x128xf32>
      %92 = arith.mulf %91, %87 : vector<2x128xf32>
      %93 = math.exp %92 : vector<2x128xf32>
      %94 = arith.mulf %90, %93 : vector<2x128xf32>
      %95 = arith.addf %94, %86 : vector<2x128xf32>
      %c0_52 = arith.constant 0 : index
      %c0_53 = arith.constant 0 : index
      %96 = vector.load %arg12[%c0_52, %c0_53] : memref<2x128xf32, #tpu.memory_space<vmem>>, vector<2x128xf32>
      tpu.vector_store %arg12[%c0_52, %c0_53], %95 {strides = array<i32>} : memref<2x128xf32, #tpu.memory_space<vmem>>, vector<2x128xf32>,
    } else {
    }
    return
  }
  func.func @transform_0(%arg0: i32, %arg1: i32) -> (i32, i32, i32) {
    %c0_i32 = arith.constant 0 : i32
    %c0_i32_0 = arith.constant 0 : i32
    return %arg0, %arg1, %c0_i32 : i32, i32, i32
  }
  func.func @transform_1(%arg0: i32, %arg1: i32) -> (i32, i32) {
    %c0_i32 = arith.constant 0 : i32
    %c0_i32_0 = arith.constant 0 : i32
    %c0_i32_1 = arith.constant 0 : i32
    return %c0_i32, %c0_i32_0 : i32, i32
  }
  func.func @transform_2(%arg0: i32, %arg1: i32) -> (i32, i32) {
    %c0_i32 = arith.constant 0 : i32
    %c0_i32_0 = arith.constant 0 : i32
    %c0_i32_1 = arith.constant 0 : i32
    return %c0_i32, %c0_i32_0 : i32, i32
  }
  func.func @transform_3(%arg0: i32, %arg1: i32) -> (i32, i32) {
    %c0_i32 = arith.constant 0 : i32
    %c0_i32_0 = arith.constant 0 : i32
    %c0_i32_1 = arith.constant 0 : i32
    return %c0_i32, %c0_i32_0 : i32, i32
  }
  func.func @transform_4(%arg0: i32, %arg1: i32) -> (i32, i32) {
    %c0_i32 = arith.constant 0 : i32
    %c0_i32_0 = arith.constant 0 : i32
    %c0_i32_1 = arith.constant 0 : i32
    return %c0_i32, %c0_i32_0 : i32, i32
  }
  func.func @transform_5(%arg0: i32, %arg1: i32) -> (i32, i32) {
    %c0_i32 = arith.constant 0 : i32
    %c0_i32_0 = arith.constant 0 : i32
    %c0_i32_1 = arith.constant 0 : i32
    return %c0_i32, %c0_i32_0 : i32, i32
  }
  func.func @transform_6(%arg0: i32, %arg1: i32) -> (i32, i32) {
    %c0_i32 = arith.constant 0 : i32
    %c0_i32_0 = arith.constant 0 : i32
    %c0_i32_1 = arith.constant 0 : i32
    return %c0_i32, %c0_i32_0 : i32, i32
  }
  func.func @transform_7(%arg0: i32, %arg1: i32) -> (i32, i32) {
    %c0_i32 = arith.constant 0 : i32
    %c0_i32_0 = arith.constant 0 : i32
    %c0_i32_1 = arith.constant 0 : i32
    return %c0_i32, %c0_i32_0 : i32, i32
  }
  func.func @transform_8(%arg0: i32, %arg1: i32) -> (i32, i32) {
    %c0_i32 = arith.constant 0 : i32
    %c0_i32_0 = arith.constant 0 : i32
    %c0_i32_1 = arith.constant 0 : i32
    return %c0_i32, %c0_i32_0 : i32, i32
  }
  func.func @transform_9(%arg0: i32, %arg1: i32) -> (i32, i32) {
    %c0_i32 = arith.constant 0 : i32
    %c0_i32_0 = arith.constant 0 : i32
    return %arg0, %c0_i32 : i32, i32
  }
  func.func @transform_10(%arg0: i32, %arg1: i32) -> (i32, i32) {
    %c0_i32 = arith.constant 0 : i32
    %c0_i32_0 = arith.constant 0 : i32
    return %arg0, %c0_i32 : i32, i32
  }
  func.func @transform_11(%arg0: i32, %arg1: i32) -> (i32, i32) {
    %c0_i32 = arith.constant 0 : i32
    %c0_i32_0 = arith.constant 0 : i32
    return %arg0, %c0_i32 : i32, i32
  }
  func.func @transform_12(%arg0: i32, %arg1: i32) -> (i32, i32) {
    %c0_i32 = arith.constant 0 : i32
    %c0_i32_0 = arith.constant 0 : i32
    return %arg0, %c0_i32 : i32, i32
  }
}

</mosaic_0001>

<llo_original>
// kernel: encoder_forward.1
$region0: #{encoder_forward.1}
  #allocation0 [shape = 'u32[]', space=smem, size = 0x4, offset = 0x4, fixed_abs, tag = 'smem constant byte address 0x4 - core index']
  #allocation1 [shape = 'u32[144,128]{1,0:T(1,128)}', space=vmem, size = 0x12000, scoped, tag = 'internal scratch']
  #allocation2 [shape = 'f32[2,8,1024]{2,1,0:T(8,128)}', space=vmem, size = 0x10000, scoped, tag = 'scratch operand']
  %s0 = inlined_call_operand.vmem [shape: f32[1,512,8], index: 0, kind: input, shape index: {}]
  %s1 = inlined_call_operand.vmem [shape: f32[8,64], index: 1, kind: input, shape index: {}]
  %s2 = inlined_call_operand.vmem [shape: bf16[64,128], index: 2, kind: input, shape index: {}]
  %s3 = inlined_call_operand.vmem [shape: bf16[128,256], index: 3, kind: input, shape index: {}]
  %s4 = inlined_call_operand.vmem [shape: bf16[256,512], index: 4, kind: input, shape index: {}]
  %s5 = inlined_call_operand.vmem [shape: bf16[512,1024], index: 5, kind: input, shape index: {}]
  %s6 = inlined_call_operand.hbm [shape: bf16[1024,512], index: 6, kind: input, shape index: {}]
  %s7 = inlined_call_operand.vmem [shape: bf16[512,256], index: 7, kind: input, shape index: {}]
  %s8 = inlined_call_operand.vmem [shape: f32[1,2816], index: 8, kind: input, shape index: {}]
  %s9 = inlined_call_operand.vmem [shape: f32[2,128], index: 9, kind: input, shape index: {}]
  %s10 = inlined_call_operand.hbm [shape: f32[2,128], index: 10, kind: output, shape index: {0}]
  %s11 = inlined_call_operand.hbm [shape: f32[2,128], index: 11, kind: output, shape index: {1}]
  %s12 = inlined_call_operand.hbm [shape: f32[2,128], index: 12, kind: output, shape index: {2}]
  %13 = xla_tuple %s10, %s11, %s12
  %s14 = sld [smem:[#allocation0]]
  $region82: #{encoder_forward.1} parent=0
    _
  %s16 = ssub.s32 1, %s14
  %s17 = scalar_select 0, %s16, %s14
  $region1: #{encoder_forward.1} parent=0
    #allocation3 [shape = 'u8[1048576]{0}', space=vmem, size = 0x100000, scoped, tag = 'input window, operand 6, single buffered']
    #allocation4 [shape = 's32[1]{0}', space=sflag, size = 0x4, scoped, tag = 'scoped memory for encoder_forward.1']
    #allocation5 [shape = 's32[1]{0}', space=sflag, size = 0x4, scoped, tag = 'scoped memory for encoder_forward.1']
    #allocation6 [shape = 'u8[1024]{0}', space=vmem, size = 0x400, scoped, tag = 'output window, operand 0, single buffered']
    #allocation7 [shape = 'u8[1024]{0}', space=vmem, size = 0x400, scoped, tag = 'output window, operand 1, single buffered']
    #allocation8 [shape = 's32[1]{0}', space=sflag, size = 0x4, scoped, tag = 'scoped memory for encoder_forward.1']
    #allocation9 [shape = 'u8[1024]{0}', space=vmem, size = 0x400, scoped, tag = 'output window, operand 2, single buffered']
    %18 = vsyncpa [#allocation4], 0
    %19 = vsyncpa [#allocation5], 0
    %20 = vsyncpa [#allocation8], 0
    // Predicated region
    $region2: #{encoder_forward.1} parent=1 // pred_check
      _
    $region3: #{encoder_forward.1} parent=1 // pred_check_branch
      %22 = sbr.rel (0) target = $region5
    $region4: #{encoder_forward.1} parent=1 // pred_region
      _
    $region5: #{encoder_forward.1} parent=1 // pred_fallthru
      _
    // Predicated region
    $region6: #{encoder_forward.1} parent=1 // pred_check
      _
    $region7: #{encoder_forward.1} parent=1 // pred_check_branch
      %24 = sbr.rel (0) target = $region9
    $region8: #{encoder_forward.1} parent=1 // pred_region
      _
    $region9: #{encoder_forward.1} parent=1 // pred_fallthru
      _
    // Predicated region
    $region10: #{encoder_forward.1} parent=1 // pred_check
      _
    $region11: #{encoder_forward.1} parent=1 // pred_check_branch
      %26 = sbr.rel (0) target = $region13
    $region12: #{encoder_forward.1} parent=1 // pred_region
      _
    $region13: #{encoder_forward.1} parent=1 // pred_fallthru
      _
    // Predicated region
    $region14: #{encoder_forward.1} parent=1 // pred_check
      _
    $region15: #{encoder_forward.1} parent=1 // pred_check_branch
      %28 = sbr.rel (0) target = $region17
    $region16: #{encoder_forward.1} parent=1 // pred_region
      _
    $region17: #{encoder_forward.1} parent=1 // pred_fallthru
      _
    // Predicated region
    $region18: #{encoder_forward.1} parent=1 // pred_check
      _
    $region19: #{encoder_forward.1} parent=1 // pred_check_branch
      %30 = sbr.rel (0) target = $region21
    $region20: #{encoder_forward.1} parent=1 // pred_region
      _
    $region21: #{encoder_forward.1} parent=1 // pred_fallthru
      _
    // Predicated region
    $region22: #{encoder_forward.1} parent=1 // pred_check
      _
    $region23: #{encoder_forward.1} parent=1 // pred_check_branch
      %32 = sbr.rel (0) target = $region25
    $region24: #{encoder_forward.1} parent=1 // pred_region
      _
    $region25: #{encoder_forward.1} parent=1 // pred_fallthru
      _
    // Predicated region
    $region26: #{encoder_forward.1} parent=1 // pred_check
      _
    $region27: #{encoder_forward.1} parent=1 // pred_check_branch
      %34 = sbr.rel (0) target = $region29
    $region28: #{encoder_forward.1} parent=1 // pred_region
      %s36 = ssub.s32 32768, 32768
      %37 = vsyncadd [#allocation4], %s36
      %s38 = sshll.u32 [#allocation3], 4
      %s39 = int_to_ptr.vmem [resolvable:$true] %s38
      %44 = dma.hbm_to_vmem [thread:$0]  %s6, 32768, %s39, [#allocation4], 256, 256, 16
    $region29: #{encoder_forward.1} parent=1 // pred_fallthru
      _
    // Predicated region
    $region30: #{encoder_forward.1} parent=1 // pred_check
      _
    $region31: #{encoder_forward.1} parent=1 // pred_check_branch
      %46 = sbr.rel (0) target = $region33
    $region32: #{encoder_forward.1} parent=1 // pred_region
      _
    $region33: #{encoder_forward.1} parent=1 // pred_fallthru
      _
    // Predicated region
    $region34: #{encoder_forward.1} parent=1 // pred_check
      _
    $region35: #{encoder_forward.1} parent=1 // pred_check_branch
      %48 = sbr.rel (0) target = $region37
    $region36: #{encoder_forward.1} parent=1 // pred_region
      _
    $region37: #{encoder_forward.1} parent=1 // pred_fallthru
      _
    // Predicated region
    $region38: #{encoder_forward.1} parent=1 // pred_check
      _
    $region39: #{encoder_forward.1} parent=1 // pred_check_branch
      %50 = sbr.rel (0) target = $region41
    $region40: #{encoder_forward.1} parent=1 // pred_region
      _
    $region41: #{encoder_forward.1} parent=1 // pred_fallthru
      _
    // Predicated region
    $region42: #{encoder_forward.1} parent=1 // pred_check
      _
    $region43: #{encoder_forward.1} parent=1 // pred_check_branch
      %52 = sbr.rel (0) target = $region45
    $region44: #{encoder_forward.1} parent=1 // pred_region
      %53 = dma.done [#allocation4], 32768
    $region45: #{encoder_forward.1} parent=1 // pred_fallthru
      _
    %v55 = vld [vmem:[%s0] sm:$0xff]
    %v56 = vld [vmem:[%s0 + $0x8] sm:$0xff]
    %v57 = vld [vmem:[%s0 + $0x10] sm:$0xff]
    %v58 = vld [vmem:[%s0 + $0x18] sm:$0xff]
    %v59 = vld [vmem:[%s0 + $0x20] sm:$0xff]
    %v60 = vld [vmem:[%s0 + $0x28] sm:$0xff]
    %v61 = vld [vmem:[%s0 + $0x30] sm:$0xff]
    %v62 = vld [vmem:[%s0 + $0x38] sm:$0xff]
    %v63 = vld [vmem:[%s0 + $0x40] sm:$0xff]
    %v64 = vld [vmem:[%s0 + $0x48] sm:$0xff]
    %v65 = vld [vmem:[%s0 + $0x50] sm:$0xff]
    %v66 = vld [vmem:[%s0 + $0x58] sm:$0xff]
    %v67 = vld [vmem:[%s0 + $0x60] sm:$0xff]
    %v68 = vld [vmem:[%s0 + $0x68] sm:$0xff]
    %v69 = vld [vmem:[%s0 + $0x70] sm:$0xff]
    %v70 = vld [vmem:[%s0 + $0x78] sm:$0xff]
    %v71 = vld [vmem:[%s0 + $0x80] sm:$0xff]
    %v72 = vld [vmem:[%s0 + $0x88] sm:$0xff]
    %v73 = vld [vmem:[%s0 + $0x90] sm:$0xff]
    %v74 = vld [vmem:[%s0 + $0x98] sm:$0xff]
    %v75 = vld [vmem:[%s0 + $0xa0] sm:$0xff]
    %v76 = vld [vmem:[%s0 + $0xa8] sm:$0xff]
    %v77 = vld [vmem:[%s0 + $0xb0] sm:$0xff]
    %v78 = vld [vmem:[%s0 + $0xb8] sm:$0xff]
    %v79 = vld [vmem:[%s0 + $0xc0] sm:$0xff]
    %v80 = vld [vmem:[%s0 + $0xc8] sm:$0xff]
    %v81 = vld [vmem:[%s0 + $0xd0] sm:$0xff]
    %v82 = vld [vmem:[%s0 + $0xd8] sm:$0xff]
    %v83 = vld [vmem:[%s0 + $0xe0] sm:$0xff]
    %v84 = vld [vmem:[%s0 + $0xe8] sm:$0xff]
    %v85 = vld [vmem:[%s0 + $0xf0] sm:$0xff]
    %v86 = vld [vmem:[%s0 + $0xf8] sm:$0xff]
    %v87 = vld [vmem:[%s0 + $0x100] sm:$0xff]
    %v88 = vld [vmem:[%s0 + $0x108] sm:$0xff]
    %v89 = vld [vmem:[%s0 + $0x110] sm:$0xff]
    %v90 = vld [vmem:[%s0 + $0x118] sm:$0xff]
    %v91 = vld [vmem:[%s0 + $0x120] sm:$0xff]
    %v92 = vld [vmem:[%s0 + $0x128] sm:$0xff]
    %v93 = vld [vmem:[%s0 + $0x130] sm:$0xff]
    %v94 = vld [vmem:[%s0 + $0x138] sm:$0xff]
    %v95 = vld [vmem:[%s0 + $0x140] sm:$0xff]
    %v96 = vld [vmem:[%s0 + $0x148] sm:$0xff]
    %v97 = vld [vmem:[%s0 + $0x150] sm:$0xff]
    %v98 = vld [vmem:[%s0 + $0x158] sm:$0xff]
    %v99 = vld [vmem:[%s0 + $0x160] sm:$0xff]
    %v100 = vld [vmem:[%s0 + $0x168] sm:$0xff]
    %v101 = vld [vmem:[%s0 + $0x170] sm:$0xff]
    %v102 = vld [vmem:[%s0 + $0x178] sm:$0xff]
    %v103 = vld [vmem:[%s0 + $0x180] sm:$0xff]
    %v104 = vld [vmem:[%s0 + $0x188] sm:$0xff]
    %v105 = vld [vmem:[%s0 + $0x190] sm:$0xff]
    %v106 = vld [vmem:[%s0 + $0x198] sm:$0xff]
    %v107 = vld [vmem:[%s0 + $0x1a0] sm:$0xff]
    %v108 = vld [vmem:[%s0 + $0x1a8] sm:$0xff]
    %v109 = vld [vmem:[%s0 + $0x1b0] sm:$0xff]
    %v110 = vld [vmem:[%s0 + $0x1b8] sm:$0xff]
    %v111 = vld [vmem:[%s0 + $0x1c0] sm:$0xff]
    %v112 = vld [vmem:[%s0 + $0x1c8] sm:$0xff]
    %v113 = vld [vmem:[%s0 + $0x1d0] sm:$0xff]
    %v114 = vld [vmem:[%s0 + $0x1d8] sm:$0xff]
    %v115 = vld [vmem:[%s0 + $0x1e0] sm:$0xff]
    %v116 = vld [vmem:[%s0 + $0x1e8] sm:$0xff]
    %v117 = vld [vmem:[%s0 + $0x1f0] sm:$0xff]
    %v118 = vld [vmem:[%s0 + $0x1f8] sm:$0xff]
    %v119 = vld [vmem:[%s1] sm:$0xff]
    %121 = vset.pattern.permute.xlu0 0
    %122 = vperm.xlu0 %121, %v55
    %v123 = vpop.permute.xlu0 %122
    %126 = vset.pattern.permute.xlu0 0
    %127 = vperm.xlu0 %126, %v56
    %v128 = vpop.permute.xlu0 %127
    %131 = vset.pattern.permute.xlu0 0
    %132 = vperm.xlu0 %131, %v57
    %v133 = vpop.permute.xlu0 %132
    %136 = vset.pattern.permute.xlu0 0
    %137 = vperm.xlu0 %136, %v58
    %v138 = vpop.permute.xlu0 %137
    %141 = vset.pattern.permute.xlu0 0
    %142 = vperm.xlu0 %141, %v59
    %v143 = vpop.permute.xlu0 %142
    %146 = vset.pattern.permute.xlu0 0
    %147 = vperm.xlu0 %146, %v60
    %v148 = vpop.permute.xlu0 %147
    %151 = vset.pattern.permute.xlu0 0
    %152 = vperm.xlu0 %151, %v61
    %v153 = vpop.permute.xlu0 %152
    %156 = vset.pattern.permute.xlu0 0
    %157 = vperm.xlu0 %156, %v62
    %v158 = vpop.permute.xlu0 %157
    %161 = vset.pattern.permute.xlu0 0
    %162 = vperm.xlu0 %161, %v63
    %v163 = vpop.permute.xlu0 %162
    %166 = vset.pattern.permute.xlu0 0
    %167 = vperm.xlu0 %166, %v64
    %v168 = vpop.permute.xlu0 %167
    %171 = vset.pattern.permute.xlu0 0
    %172 = vperm.xlu0 %171, %v65
    %v173 = vpop.permute.xlu0 %172
    %176 = vset.pattern.permute.xlu0 0
    %177 = vperm.xlu0 %176, %v66
    %v178 = vpop.permute.xlu0 %177
    %181 = vset.pattern.permute.xlu0 0
    %182 = vperm.xlu0 %181, %v67
    %v183 = vpop.permute.xlu0 %182
    %186 = vset.pattern.permute.xlu0 0
    %187 = vperm.xlu0 %186, %v68
    %v188 = vpop.permute.xlu0 %187
    %191 = vset.pattern.permute.xlu0 0
    %192 = vperm.xlu0 %191, %v69
    %v193 = vpop.permute.xlu0 %192
    %196 = vset.pattern.permute.xlu0 0
    %197 = vperm.xlu0 %196, %v70
    %v198 = vpop.permute.xlu0 %197
    %201 = vset.pattern.permute.xlu0 0
    %202 = vperm.xlu0 %201, %v71
    %v203 = vpop.permute.xlu0 %202
    %206 = vset.pattern.permute.xlu0 0
    %207 = vperm.xlu0 %206, %v72
    %v208 = vpop.permute.xlu0 %207
    %211 = vset.pattern.permute.xlu0 0
    %212 = vperm.xlu0 %211, %v73
    %v213 = vpop.permute.xlu0 %212
    %216 = vset.pattern.permute.xlu0 0
    %217 = vperm.xlu0 %216, %v74
    %v218 = vpop.permute.xlu0 %217
    %221 = vset.pattern.permute.xlu0 0
    %222 = vperm.xlu0 %221, %v75
    %v223 = vpop.permute.xlu0 %222
    %226 = vset.pattern.permute.xlu0 0
    %227 = vperm.xlu0 %226, %v76
    %v228 = vpop.permute.xlu0 %227
    %231 = vset.pattern.permute.xlu0 0
    %232 = vperm.xlu0 %231, %v77
    %v233 = vpop.permute.xlu0 %232
    %236 = vset.pattern.permute.xlu0 0
    %237 = vperm.xlu0 %236, %v78
    %v238 = vpop.permute.xlu0 %237
    %241 = vset.pattern.permute.xlu0 0
    %242 = vperm.xlu0 %241, %v79
    %v243 = vpop.permute.xlu0 %242
    %246 = vset.pattern.permute.xlu0 0
    %247 = vperm.xlu0 %246, %v80
    %v248 = vpop.permute.xlu0 %247
    %251 = vset.pattern.permute.xlu0 0
    %252 = vperm.xlu0 %251, %v81
    %v253 = vpop.permute.xlu0 %252
    %256 = vset.pattern.permute.xlu0 0
    %257 = vperm.xlu0 %256, %v82
    %v258 = vpop.permute.xlu0 %257
    %261 = vset.pattern.permute.xlu0 0
    %262 = vperm.xlu0 %261, %v83
    %v263 = vpop.permute.xlu0 %262
    %266 = vset.pattern.permute.xlu0 0
    %267 = vperm.xlu0 %266, %v84
    %v268 = vpop.permute.xlu0 %267
    %271 = vset.pattern.permute.xlu0 0
    %272 = vperm.xlu0 %271, %v85
    %v273 = vpop.permute.xlu0 %272
    %276 = vset.pattern.permute.xlu0 0
    %277 = vperm.xlu0 %276, %v86
    %v278 = vpop.permute.xlu0 %277
    %281 = vset.pattern.permute.xlu0 0
    %282 = vperm.xlu0 %281, %v87
    %v283 = vpop.permute.xlu0 %282
    %286 = vset.pattern.permute.xlu0 0
    %287 = vperm.xlu0 %286, %v88
    %v288 = vpop.permute.xlu0 %287
    %291 = vset.pattern.permute.xlu0 0
    %292 = vperm.xlu0 %291, %v89
    %v293 = vpop.permute.xlu0 %292
    %296 = vset.pattern.permute.xlu0 0
    %297 = vperm.xlu0 %296, %v90
    %v298 = vpop.permute.xlu0 %297
    %301 = vset.pattern.permute.xlu0 0
    %302 = vperm.xlu0 %301, %v91
    %v303 = vpop.permute.xlu0 %302
    %306 = vset.pattern.permute.xlu0 0
    %307 = vperm.xlu0 %306, %v92
    %v308 = vpop.permute.xlu0 %307
    %311 = vset.pattern.permute.xlu0 0
    %312 = vperm.xlu0 %311, %v93
    %v313 = vpop.permute.xlu0 %312
    %316 = vset.pattern.permute.xlu0 0
    %317 = vperm.xlu0 %316, %v94
    %v318 = vpop.permute.xlu0 %317
    %321 = vset.pattern.permute.xlu0 0
    %322 = vperm.xlu0 %321, %v95
    %v323 = vpop.permute.xlu0 %322
    %326 = vset.pattern.permute.xlu0 0
    %327 = vperm.xlu0 %326, %v96
    %v328 = vpop.permute.xlu0 %327
    %331 = vset.pattern.permute.xlu0 0
    %332 = vperm.xlu0 %331, %v97
    %v333 = vpop.permute.xlu0 %332
    %336 = vset.pattern.permute.xlu0 0
    %337 = vperm.xlu0 %336, %v98
    %v338 = vpop.permute.xlu0 %337
    %341 = vset.pattern.permute.xlu0 0
    %342 = vperm.xlu0 %341, %v99
    %v343 = vpop.permute.xlu0 %342
    %346 = vset.pattern.permute.xlu0 0
    %347 = vperm.xlu0 %346, %v100
    %v348 = vpop.permute.xlu0 %347
    %351 = vset.pattern.permute.xlu0 0
    %352 = vperm.xlu0 %351, %v101
    %v353 = vpop.permute.xlu0 %352
    %356 = vset.pattern.permute.xlu0 0
    %357 = vperm.xlu0 %356, %v102
    %v358 = vpop.permute.xlu0 %357
    %361 = vset.pattern.permute.xlu0 0
    %362 = vperm.xlu0 %361, %v103
    %v363 = vpop.permute.xlu0 %362
    %366 = vset.pattern.permute.xlu0 0
    %367 = vperm.xlu0 %366, %v104
    %v368 = vpop.permute.xlu0 %367
    %371 = vset.pattern.permute.xlu0 0
    %372 = vperm.xlu0 %371, %v105
    %v373 = vpop.permute.xlu0 %372
    %376 = vset.pattern.permute.xlu0 0
    %377 = vperm.xlu0 %376, %v106
    %v378 = vpop.permute.xlu0 %377
    %381 = vset.pattern.permute.xlu0 0
    %382 = vperm.xlu0 %381, %v107
    %v383 = vpop.permute.xlu0 %382
    %386 = vset.pattern.permute.xlu0 0
    %387 = vperm.xlu0 %386, %v108
    %v388 = vpop.permute.xlu0 %387
    %391 = vset.pattern.permute.xlu0 0
    %392 = vperm.xlu0 %391, %v109
    %v393 = vpop.permute.xlu0 %392
    %396 = vset.pattern.permute.xlu0 0
    %397 = vperm.xlu0 %396, %v110
    %v398 = vpop.permute.xlu0 %397
    %401 = vset.pattern.permute.xlu0 0
    %402 = vperm.xlu0 %401, %v111
    %v403 = vpop.permute.xlu0 %402
    %406 = vset.pattern.permute.xlu0 0
    %407 = vperm.xlu0 %406, %v112
    %v408 = vpop.permute.xlu0 %407
    %411 = vset.pattern.permute.xlu0 0
    %412 = vperm.xlu0 %411, %v113
    %v413 = vpop.permute.xlu0 %412
    %416 = vset.pattern.permute.xlu0 0
    %417 = vperm.xlu0 %416, %v114
    %v418 = vpop.permute.xlu0 %417
    %421 = vset.pattern.permute.xlu0 0
    %422 = vperm.xlu0 %421, %v115
    %v423 = vpop.permute.xlu0 %422
    %426 = vset.pattern.permute.xlu0 0
    %427 = vperm.xlu0 %426, %v116
    %v428 = vpop.permute.xlu0 %427
    %431 = vset.pattern.permute.xlu0 0
    %432 = vperm.xlu0 %431, %v117
    %v433 = vpop.permute.xlu0 %432
    %436 = vset.pattern.permute.xlu0 0
    %437 = vperm.xlu0 %436, %v118
    %v438 = vpop.permute.xlu0 %437
    %v440 = vlaneseq
    %v441 = vshrl.u32 %v440, 7
    %v442 = vsub.s32 0, %v441
    %v443 = vrot.slane %v119, %v442
    %v444 = vmul.f32 %v123, %v443
    %v445 = vmul.f32 %v128, %v443
    %v446 = vmul.f32 %v133, %v443
    %v447 = vmul.f32 %v138, %v443
    %v448 = vmul.f32 %v143, %v443
    %v449 = vmul.f32 %v148, %v443
    %v450 = vmul.f32 %v153, %v443
    %v451 = vmul.f32 %v158, %v443
    %v452 = vmul.f32 %v163, %v443
    %v453 = vmul.f32 %v168, %v443
    %v454 = vmul.f32 %v173, %v443
    %v455 = vmul.f32 %v178, %v443
    %v456 = vmul.f32 %v183, %v443
    %v457 = vmul.f32 %v188, %v443
    %v458 = vmul.f32 %v193, %v443
    %v459 = vmul.f32 %v198, %v443
    %v460 = vmul.f32 %v203, %v443
    %v461 = vmul.f32 %v208, %v443
    %v462 = vmul.f32 %v213, %v443
    %v463 = vmul.f32 %v218, %v443
    %v464 = vmul.f32 %v223, %v443
    %v465 = vmul.f32 %v228, %v443
    %v466 = vmul.f32 %v233, %v443
    %v467 = vmul.f32 %v238, %v443
    %v468 = vmul.f32 %v243, %v443
    %v469 = vmul.f32 %v248, %v443
    %v470 = vmul.f32 %v253, %v443
    %v471 = vmul.f32 %v258, %v443
    %v472 = vmul.f32 %v263, %v443
    %v473 = vmul.f32 %v268, %v443
    %v474 = vmul.f32 %v273, %v443
    %v475 = vmul.f32 %v278, %v443
    %v476 = vmul.f32 %v283, %v443
    %v477 = vmul.f32 %v288, %v443
    %v478 = vmul.f32 %v293, %v443
    %v479 = vmul.f32 %v298, %v443
    %v480 = vmul.f32 %v303, %v443
    %v481 = vmul.f32 %v308, %v443
    %v482 = vmul.f32 %v313, %v443
    %v483 = vmul.f32 %v318, %v443
    %v484 = vmul.f32 %v323, %v443
    %v485 = vmul.f32 %v328, %v443
    %v486 = vmul.f32 %v333, %v443
    %v487 = vmul.f32 %v338, %v443
    %v488 = vmul.f32 %v343, %v443
    %v489 = vmul.f32 %v348, %v443
    %v490 = vmul.f32 %v353, %v443
    %v491 = vmul.f32 %v358, %v443
    %v492 = vmul.f32 %v363, %v443
    %v493 = vmul.f32 %v368, %v443
    %v494 = vmul.f32 %v373, %v443
    %v495 = vmul.f32 %v378, %v443
    %v496 = vmul.f32 %v383, %v443
    %v497 = vmul.f32 %v388, %v443
    %v498 = vmul.f32 %v393, %v443
    %v499 = vmul.f32 %v398, %v443
    %v500 = vmul.f32 %v403, %v443
    %v501 = vmul.f32 %v408, %v443
    %v502 = vmul.f32 %v413, %v443
    %v503 = vmul.f32 %v418, %v443
    %v504 = vmul.f32 %v423, %v443
    %v505 = vmul.f32 %v428, %v443
    %v506 = vmul.f32 %v433, %v443
    %v507 = vmul.f32 %v438, %v443
    %508 = vset.pattern.permute.xlu0 1
    %509 = vperm.xlu0 %508, %v55
    %v510 = vpop.permute.xlu0 %509
    %512 = vset.pattern.permute.xlu0 1
    %513 = vperm.xlu0 %512, %v56
    %v514 = vpop.permute.xlu0 %513
    %516 = vset.pattern.permute.xlu0 1
    %517 = vperm.xlu0 %516, %v57
    %v518 = vpop.permute.xlu0 %517
    %520 = vset.pattern.permute.xlu0 1
    %521 = vperm.xlu0 %520, %v58
    %v522 = vpop.permute.xlu0 %521
    %524 = vset.pattern.permute.xlu0 1
    %525 = vperm.xlu0 %524, %v59
    %v526 = vpop.permute.xlu0 %525
    %528 = vset.pattern.permute.xlu0 1
    %529 = vperm.xlu0 %528, %v60
    %v530 = vpop.permute.xlu0 %529
    %532 = vset.pattern.permute.xlu0 1
    %533 = vperm.xlu0 %532, %v61
    %v534 = vpop.permute.xlu0 %533
    %536 = vset.pattern.permute.xlu0 1
    %537 = vperm.xlu0 %536, %v62
    %v538 = vpop.permute.xlu0 %537
    %540 = vset.pattern.permute.xlu0 1
    %541 = vperm.xlu0 %540, %v63
    %v542 = vpop.permute.xlu0 %541
    %544 = vset.pattern.permute.xlu0 1
    %545 = vperm.xlu0 %544, %v64
    %v546 = vpop.permute.xlu0 %545
    %548 = vset.pattern.permute.xlu0 1
    %549 = vperm.xlu0 %548, %v65
    %v550 = vpop.permute.xlu0 %549
    %552 = vset.pattern.permute.xlu0 1
    %553 = vperm.xlu0 %552, %v66
    %v554 = vpop.permute.xlu0 %553
    %556 = vset.pattern.permute.xlu0 1
    %557 = vperm.xlu0 %556, %v67
    %v558 = vpop.permute.xlu0 %557
    %560 = vset.pattern.permute.xlu0 1
    %561 = vperm.xlu0 %560, %v68
    %v562 = vpop.permute.xlu0 %561
    %564 = vset.pattern.permute.xlu0 1
    %565 = vperm.xlu0 %564, %v69
    %v566 = vpop.permute.xlu0 %565
    %568 = vset.pattern.permute.xlu0 1
    %569 = vperm.xlu0 %568, %v70
    %v570 = vpop.permute.xlu0 %569
    %572 = vset.pattern.permute.xlu0 1
    %573 = vperm.xlu0 %572, %v71
    %v574 = vpop.permute.xlu0 %573
    %576 = vset.pattern.permute.xlu0 1
    %577 = vperm.xlu0 %576, %v72
    %v578 = vpop.permute.xlu0 %577
    %580 = vset.pattern.permute.xlu0 1
    %581 = vperm.xlu0 %580, %v73
    %v582 = vpop.permute.xlu0 %581
    %584 = vset.pattern.permute.xlu0 1
    %585 = vperm.xlu0 %584, %v74
    %v586 = vpop.permute.xlu0 %585
    %588 = vset.pattern.permute.xlu0 1
    %589 = vperm.xlu0 %588, %v75
    %v590 = vpop.permute.xlu0 %589
    %592 = vset.pattern.permute.xlu0 1
    %593 = vperm.xlu0 %592, %v76
    %v594 = vpop.permute.xlu0 %593
    %596 = vset.pattern.permute.xlu0 1
    %597 = vperm.xlu0 %596, %v77
    %v598 = vpop.permute.xlu0 %597
    %600 = vset.pattern.permute.xlu0 1
    %601 = vperm.xlu0 %600, %v78
    %v602 = vpop.permute.xlu0 %601
    %604 = vset.pattern.permute.xlu0 1
    %605 = vperm.xlu0 %604, %v79
    %v606 = vpop.permute.xlu0 %605
    %608 = vset.pattern.permute.xlu0 1
    %609 = vperm.xlu0 %608, %v80
    %v610 = vpop.permute.xlu0 %609
    %612 = vset.pattern.permute.xlu0 1
    %613 = vperm.xlu0 %612, %v81
    %v614 = vpop.permute.xlu0 %613
    %616 = vset.pattern.permute.xlu0 1
    %617 = vperm.xlu0 %616, %v82
    %v618 = vpop.permute.xlu0 %617
    %620 = vset.pattern.permute.xlu0 1
    %621 = vperm.xlu0 %620, %v83
    %v622 = vpop.permute.xlu0 %621
    %624 = vset.pattern.permute.xlu0 1
    %625 = vperm.xlu0 %624, %v84
    %v626 = vpop.permute.xlu0 %625
    %628 = vset.pattern.permute.xlu0 1
    %629 = vperm.xlu0 %628, %v85
    %v630 = vpop.permute.xlu0 %629
    %632 = vset.pattern.permute.xlu0 1
    %633 = vperm.xlu0 %632, %v86
    %v634 = vpop.permute.xlu0 %633
    %636 = vset.pattern.permute.xlu0 1
    %637 = vperm.xlu0 %636, %v87
    %v638 = vpop.permute.xlu0 %637
    %640 = vset.pattern.permute.xlu0 1
    %641 = vperm.xlu0 %640, %v88
    %v642 = vpop.permute.xlu0 %641
    %644 = vset.pattern.permute.xlu0 1
    %645 = vperm.xlu0 %644, %v89
    %v646 = vpop.permute.xlu0 %645
    %648 = vset.pattern.permute.xlu0 1
    %649 = vperm.xlu0 %648, %v90
    %v650 = vpop.permute.xlu0 %649
    %652 = vset.pattern.permute.xlu0 1
    %653 = vperm.xlu0 %652, %v91
    %v654 = vpop.permute.xlu0 %653
    %656 = vset.pattern.permute.xlu0 1
    %657 = vperm.xlu0 %656, %v92
    %v658 = vpop.permute.xlu0 %657
    %660 = vset.pattern.permute.xlu0 1
    %661 = vperm.xlu0 %660, %v93
    %v662 = vpop.permute.xlu0 %661
    %664 = vset.pattern.permute.xlu0 1
    %665 = vperm.xlu0 %664, %v94
    %v666 = vpop.permute.xlu0 %665
    %668 = vset.pattern.permute.xlu0 1
    %669 = vperm.xlu0 %668, %v95
    %v670 = vpop.permute.xlu0 %669
    %672 = vset.pattern.permute.xlu0 1
    %673 = vperm.xlu0 %672, %v96
    %v674 = vpop.permute.xlu0 %673
    %676 = vset.pattern.permute.xlu0 1
    %677 = vperm.xlu0 %676, %v97
    %v678 = vpop.permute.xlu0 %677
    %680 = vset.pattern.permute.xlu0 1
    %681 = vperm.xlu0 %680, %v98
    %v682 = vpop.permute.xlu0 %681
    %684 = vset.pattern.permute.xlu0 1
    %685 = vperm.xlu0 %684, %v99
    %v686 = vpop.permute.xlu0 %685
    %688 = vset.pattern.permute.xlu0 1
    %689 = vperm.xlu0 %688, %v100
    %v690 = vpop.permute.xlu0 %689
    %692 = vset.pattern.permute.xlu0 1
    %693 = vperm.xlu0 %692, %v101
    %v694 = vpop.permute.xlu0 %693
    %696 = vset.pattern.permute.xlu0 1
    %697 = vperm.xlu0 %696, %v102
    %v698 = vpop.permute.xlu0 %697
    %700 = vset.pattern.permute.xlu0 1
    %701 = vperm.xlu0 %700, %v103
    %v702 = vpop.permute.xlu0 %701
    %704 = vset.pattern.permute.xlu0 1
    %705 = vperm.xlu0 %704, %v104
    %v706 = vpop.permute.xlu0 %705
    %708 = vset.pattern.permute.xlu0 1
    %709 = vperm.xlu0 %708, %v105
    %v710 = vpop.permute.xlu0 %709
    %712 = vset.pattern.permute.xlu0 1
    %713 = vperm.xlu0 %712, %v106
    %v714 = vpop.permute.xlu0 %713
    %716 = vset.pattern.permute.xlu0 1
    %717 = vperm.xlu0 %716, %v107
    %v718 = vpop.permute.xlu0 %717
    %720 = vset.pattern.permute.xlu0 1
    %721 = vperm.xlu0 %720, %v108
    %v722 = vpop.permute.xlu0 %721
    %724 = vset.pattern.permute.xlu0 1
    %725 = vperm.xlu0 %724, %v109
    %v726 = vpop.permute.xlu0 %725
    %728 = vset.pattern.permute.xlu0 1
    %729 = vperm.xlu0 %728, %v110
    %v730 = vpop.permute.xlu0 %729
    %732 = vset.pattern.permute.xlu0 1
    %733 = vperm.xlu0 %732, %v111
    %v734 = vpop.permute.xlu0 %733
    %736 = vset.pattern.permute.xlu0 1
    %737 = vperm.xlu0 %736, %v112
    %v738 = vpop.permute.xlu0 %737
    %740 = vset.pattern.permute.xlu0 1
    %741 = vperm.xlu0 %740, %v113
    %v742 = vpop.permute.xlu0 %741
    %744 = vset.pattern.permute.xlu0 1
    %745 = vperm.xlu0 %744, %v114
    %v746 = vpop.permute.xlu0 %745
    %748 = vset.pattern.permute.xlu0 1
    %749 = vperm.xlu0 %748, %v115
    %v750 = vpop.permute.xlu0 %749
    %752 = vset.pattern.permute.xlu0 1
    %753 = vperm.xlu0 %752, %v116
    %v754 = vpop.permute.xlu0 %753
    %756 = vset.pattern.permute.xlu0 1
    %757 = vperm.xlu0 %756, %v117
    %v758 = vpop.permute.xlu0 %757
    %760 = vset.pattern.permute.xlu0 1
    %761 = vperm.xlu0 %760, %v118
    %v762 = vpop.permute.xlu0 %761
    %v764 = vlaneseq
    %v765 = vshrl.u32 %v764, 7
    %v766 = vsub.s32 1, %v765
    %v767 = vrot.slane %v119, %v766
    %v768 = vmul.f32 %v510, %v767
    %v769 = vmul.f32 %v514, %v767
    %v770 = vmul.f32 %v518, %v767
    %v771 = vmul.f32 %v522, %v767
    %v772 = vmul.f32 %v526, %v767
    %v773 = vmul.f32 %v530, %v767
    %v774 = vmul.f32 %v534, %v767
    %v775 = vmul.f32 %v538, %v767
    %v776 = vmul.f32 %v542, %v767
    %v777 = vmul.f32 %v546, %v767
    %v778 = vmul.f32 %v550, %v767
    %v779 = vmul.f32 %v554, %v767
    %v780 = vmul.f32 %v558, %v767
    %v781 = vmul.f32 %v562, %v767
    %v782 = vmul.f32 %v566, %v767
    %v783 = vmul.f32 %v570, %v767
    %v784 = vmul.f32 %v574, %v767
    %v785 = vmul.f32 %v578, %v767
    %v786 = vmul.f32 %v582, %v767
    %v787 = vmul.f32 %v586, %v767
    %v788 = vmul.f32 %v590, %v767
    %v789 = vmul.f32 %v594, %v767
    %v790 = vmul.f32 %v598, %v767
    %v791 = vmul.f32 %v602, %v767
    %v792 = vmul.f32 %v606, %v767
    %v793 = vmul.f32 %v610, %v767
    %v794 = vmul.f32 %v614, %v767
    %v795 = vmul.f32 %v618, %v767
    %v796 = vmul.f32 %v622, %v767
    %v797 = vmul.f32 %v626, %v767
    %v798 = vmul.f32 %v630, %v767
    %v799 = vmul.f32 %v634, %v767
    %v800 = vmul.f32 %v638, %v767
    %v801 = vmul.f32 %v642, %v767
    %v802 = vmul.f32 %v646, %v767
    %v803 = vmul.f32 %v650, %v767
    %v804 = vmul.f32 %v654, %v767
    %v805 = vmul.f32 %v658, %v767
    %v806 = vmul.f32 %v662, %v767
    %v807 = vmul.f32 %v666, %v767
    %v808 = vmul.f32 %v670, %v767
    %v809 = vmul.f32 %v674, %v767
    %v810 = vmul.f32 %v678, %v767
    %v811 = vmul.f32 %v682, %v767
    %v812 = vmul.f32 %v686, %v767
    %v813 = vmul.f32 %v690, %v767
    %v814 = vmul.f32 %v694, %v767
    %v815 = vmul.f32 %v698, %v767
    %v816 = vmul.f32 %v702, %v767
    %v817 = vmul.f32 %v706, %v767
    %v818 = vmul.f32 %v710, %v767
    %v819 = vmul.f32 %v714, %v767
    %v820 = vmul.f32 %v718, %v767
    %v821 = vmul.f32 %v722, %v767
    %v822 = vmul.f32 %v726, %v767
    %v823 = vmul.f32 %v730, %v767
    %v824 = vmul.f32 %v734, %v767
    %v825 = vmul.f32 %v738, %v767
    %v826 = vmul.f32 %v742, %v767
    %v827 = vmul.f32 %v746, %v767
    %v828 = vmul.f32 %v750, %v767
    %v829 = vmul.f32 %v754, %v767
    %v830 = vmul.f32 %v758, %v767
    %v831 = vmul.f32 %v762, %v767
    %v832 = vadd.f32 %v444, %v768
    %v833 = vadd.f32 %v445, %v769
    %v834 = vadd.f32 %v446, %v770
    %v835 = vadd.f32 %v447, %v771
    %v836 = vadd.f32 %v448, %v772
    %v837 = vadd.f32 %v449, %v773
    %v838 = vadd.f32 %v450, %v774
    %v839 = vadd.f32 %v451, %v775
    %v840 = vadd.f32 %v452, %v776
    %v841 = vadd.f32 %v453, %v777
    %v842 = vadd.f32 %v454, %v778
    %v843 = vadd.f32 %v455, %v779
    %v844 = vadd.f32 %v456, %v780
    %v845 = vadd.f32 %v457, %v781
    %v846 = vadd.f32 %v458, %v782
    %v847 = vadd.f32 %v459, %v783
    %v848 = vadd.f32 %v460, %v784
    %v849 = vadd.f32 %v461, %v785
    %v850 = vadd.f32 %v462, %v786
    %v851 = vadd.f32 %v463, %v787
    %v852 = vadd.f32 %v464, %v788
    %v853 = vadd.f32 %v465, %v789
    %v854 = vadd.f32 %v466, %v790
    %v855 = vadd.f32 %v467, %v791
    %v856 = vadd.f32 %v468, %v792
    %v857 = vadd.f32 %v469, %v793
    %v858 = vadd.f32 %v470, %v794
    %v859 = vadd.f32 %v471, %v795
    %v860 = vadd.f32 %v472, %v796
    %v861 = vadd.f32 %v473, %v797
    %v862 = vadd.f32 %v474, %v798
    %v863 = vadd.f32 %v475, %v799
    %v864 = vadd.f32 %v476, %v800
    %v865 = vadd.f32 %v477, %v801
    %v866 = vadd.f32 %v478, %v802
    %v867 = vadd.f32 %v479, %v803
    %v868 = vadd.f32 %v480, %v804
    %v869 = vadd.f32 %v481, %v805
    %v870 = vadd.f32 %v482, %v806
    %v871 = vadd.f32 %v483, %v807
    %v872 = vadd.f32 %v484, %v808
    %v873 = vadd.f32 %v485, %v809
    %v874 = vadd.f32 %v486, %v810
    %v875 = vadd.f32 %v487, %v811
    %v876 = vadd.f32 %v488, %v812
    %v877 = vadd.f32 %v489, %v813
    %v878 = vadd.f32 %v490, %v814
    %v879 = vadd.f32 %v491, %v815
    %v880 = vadd.f32 %v492, %v816
    %v881 = vadd.f32 %v493, %v817
    %v882 = vadd.f32 %v494, %v818
    %v883 = vadd.f32 %v495, %v819
    %v884 = vadd.f32 %v496, %v820
    %v885 = vadd.f32 %v497, %v821
    %v886 = vadd.f32 %v498, %v822
    %v887 = vadd.f32 %v499, %v823
    %v888 = vadd.f32 %v500, %v824
    %v889 = vadd.f32 %v501, %v825
    %v890 = vadd.f32 %v502, %v826
    %v891 = vadd.f32 %v503, %v827
    %v892 = vadd.f32 %v504, %v828
    %v893 = vadd.f32 %v505, %v829
    %v894 = vadd.f32 %v506, %v830
    %v895 = vadd.f32 %v507, %v831
    %896 = vset.pattern.permute.xlu0 2
    %897 = vperm.xlu0 %896, %v55
    %v898 = vpop.permute.xlu0 %897
    %900 = vset.pattern.permute.xlu0 2
    %901 = vperm.xlu0 %900, %v56
    %v902 = vpop.permute.xlu0 %901
    %904 = vset.pattern.permute.xlu0 2
    %905 = vperm.xlu0 %904, %v57
    %v906 = vpop.permute.xlu0 %905
    %908 = vset.pattern.permute.xlu0 2
    %909 = vperm.xlu0 %908, %v58
    %v910 = vpop.permute.xlu0 %909
    %912 = vset.pattern.permute.xlu0 2
    %913 = vperm.xlu0 %912, %v59
    %v914 = vpop.permute.xlu0 %913
    %916 = vset.pattern.permute.xlu0 2
    %917 = vperm.xlu0 %916, %v60
    %v918 = vpop.permute.xlu0 %917
    %920 = vset.pattern.permute.xlu0 2
    %921 = vperm.xlu0 %920, %v61
    %v922 = vpop.permute.xlu0 %921
    %924 = vset.pattern.permute.xlu0 2
    %925 = vperm.xlu0 %924, %v62
    %v926 = vpop.permute.xlu0 %925
    %928 = vset.pattern.permute.xlu0 2
    %929 = vperm.xlu0 %928, %v63
    %v930 = vpop.permute.xlu0 %929
    %932 = vset.pattern.permute.xlu0 2
    %933 = vperm.xlu0 %932, %v64
    %v934 = vpop.permute.xlu0 %933
    %936 = vset.pattern.permute.xlu0 2
    %937 = vperm.xlu0 %936, %v65
    %v938 = vpop.permute.xlu0 %937
    %940 = vset.pattern.permute.xlu0 2
    %941 = vperm.xlu0 %940, %v66
    %v942 = vpop.permute.xlu0 %941
    %944 = vset.pattern.permute.xlu0 2
    %945 = vperm.xlu0 %944, %v67
    %v946 = vpop.permute.xlu0 %945
    %948 = vset.pattern.permute.xlu0 2
    %949 = vperm.xlu0 %948, %v68
    %v950 = vpop.permute.xlu0 %949
    %952 = vset.pattern.permute.xlu0 2
    %953 = vperm.xlu0 %952, %v69
    %v954 = vpop.permute.xlu0 %953
    %956 = vset.pattern.permute.xlu0 2
    %957 = vperm.xlu0 %956, %v70
    %v958 = vpop.permute.xlu0 %957
    %960 = vset.pattern.permute.xlu0 2
    %961 = vperm.xlu0 %960, %v71
    %v962 = vpop.permute.xlu0 %961
    %964 = vset.pattern.permute.xlu0 2
    %965 = vperm.xlu0 %964, %v72
    %v966 = vpop.permute.xlu0 %965
    %968 = vset.pattern.permute.xlu0 2
    %969 = vperm.xlu0 %968, %v73
    %v970 = vpop.permute.xlu0 %969
    %972 = vset.pattern.permute.xlu0 2
    %973 = vperm.xlu0 %972, %v74
    %v974 = vpop.permute.xlu0 %973
    %976 = vset.pattern.permute.xlu0 2
    %977 = vperm.xlu0 %976, %v75
    %v978 = vpop.permute.xlu0 %977
    %980 = vset.pattern.permute.xlu0 2
    %981 = vperm.xlu0 %980, %v76
    %v982 = vpop.permute.xlu0 %981
    %984 = vset.pattern.permute.xlu0 2
    %985 = vperm.xlu0 %984, %v77
    %v986 = vpop.permute.xlu0 %985
    %988 = vset.pattern.permute.xlu0 2
    %989 = vperm.xlu0 %988, %v78
    %v990 = vpop.permute.xlu0 %989
    %992 = vset.pattern.permute.xlu0 2
    %993 = vperm.xlu0 %992, %v79
    %v994 = vpop.permute.xlu0 %993
    %996 = vset.pattern.permute.xlu0 2
    %997 = vperm.xlu0 %996, %v80
    %v998 = vpop.permute.xlu0 %997
    %1000 = vset.pattern.permute.xlu0 2
    %1001 = vperm.xlu0 %1000, %v81
    %v1002 = vpop.permute.xlu0 %1001
    %1004 = vset.pattern.permute.xlu0 2
    %1005 = vperm.xlu0 %1004, %v82
    %v1006 = vpop.permute.xlu0 %1005
    %1008 = vset.pattern.permute.xlu0 2
    %1009 = vperm.xlu0 %1008, %v83
    %v1010 = vpop.permute.xlu0 %1009
    %1012 = vset.pattern.permute.xlu0 2
    %1013 = vperm.xlu0 %1012, %v84
    %v1014 = vpop.permute.xlu0 %1013
    %1016 = vset.pattern.permute.xlu0 2
    %1017 = vperm.xlu0 %1016, %v85
    %v1018 = vpop.permute.xlu0 %1017
    %1020 = vset.pattern.permute.xlu0 2
    %1021 = vperm.xlu0 %1020, %v86
    %v1022 = vpop.permute.xlu0 %1021
    %1024 = vset.pattern.permute.xlu0 2
    %1025 = vperm.xlu0 %1024, %v87
    %v1026 = vpop.permute.xlu0 %1025
    %1028 = vset.pattern.permute.xlu0 2
    %1029 = vperm.xlu0 %1028, %v88
    %v1030 = vpop.permute.xlu0 %1029
    %1032 = vset.pattern.permute.xlu0 2
    %1033 = vperm.xlu0 %1032, %v89
    %v1034 = vpop.permute.xlu0 %1033
    %1036 = vset.pattern.permute.xlu0 2
    %1037 = vperm.xlu0 %1036, %v90
    %v1038 = vpop.permute.xlu0 %1037
    %1040 = vset.pattern.permute.xlu0 2
    %1041 = vperm.xlu0 %1040, %v91
    %v1042 = vpop.permute.xlu0 %1041
    %1044 = vset.pattern.permute.xlu0 2
    %1045 = vperm.xlu0 %1044, %v92
    %v1046 = vpop.permute.xlu0 %1045
    %1048 = vset.pattern.permute.xlu0 2
    %1049 = vperm.xlu0 %1048, %v93
    %v1050 = vpop.permute.xlu0 %1049
    %1052 = vset.pattern.permute.xlu0 2
    %1053 = vperm.xlu0 %1052, %v94
    %v1054 = vpop.permute.xlu0 %1053
    %1056 = vset.pattern.permute.xlu0 2
    %1057 = vperm.xlu0 %1056, %v95
    %v1058 = vpop.permute.xlu0 %1057
    %1060 = vset.pattern.permute.xlu0 2
    %1061 = vperm.xlu0 %1060, %v96
    %v1062 = vpop.permute.xlu0 %1061
    %1064 = vset.pattern.permute.xlu0 2
    %1065 = vperm.xlu0 %1064, %v97
    %v1066 = vpop.permute.xlu0 %1065
    %1068 = vset.pattern.permute.xlu0 2
    %1069 = vperm.xlu0 %1068, %v98
    %v1070 = vpop.permute.xlu0 %1069
    %1072 = vset.pattern.permute.xlu0 2
    %1073 = vperm.xlu0 %1072, %v99
    %v1074 = vpop.permute.xlu0 %1073
    %1076 = vset.pattern.permute.xlu0 2
    %1077 = vperm.xlu0 %1076, %v100
    %v1078 = vpop.permute.xlu0 %1077
    %1080 = vset.pattern.permute.xlu0 2
    %1081 = vperm.xlu0 %1080, %v101
    %v1082 = vpop.permute.xlu0 %1081
    %1084 = vset.pattern.permute.xlu0 2
    %1085 = vperm.xlu0 %1084, %v102
    %v1086 = vpop.permute.xlu0 %1085
    %1088 = vset.pattern.permute.xlu0 2
    %1089 = vperm.xlu0 %1088, %v103
    %v1090 = vpop.permute.xlu0 %1089
    %1092 = vset.pattern.permute.xlu0 2
    %1093 = vperm.xlu0 %1092, %v104
    %v1094 = vpop.permute.xlu0 %1093
    %1096 = vset.pattern.permute.xlu0 2
    %1097 = vperm.xlu0 %1096, %v105
    %v1098 = vpop.permute.xlu0 %1097
    %1100 = vset.pattern.permute.xlu0 2
    %1101 = vperm.xlu0 %1100, %v106
    %v1102 = vpop.permute.xlu0 %1101
    %1104 = vset.pattern.permute.xlu0 2
    %1105 = vperm.xlu0 %1104, %v107
    %v1106 = vpop.permute.xlu0 %1105
    %1108 = vset.pattern.permute.xlu0 2
    %1109 = vperm.xlu0 %1108, %v108
    %v1110 = vpop.permute.xlu0 %1109
    %1112 = vset.pattern.permute.xlu0 2
    %1113 = vperm.xlu0 %1112, %v109
    %v1114 = vpop.permute.xlu0 %1113
    %1116 = vset.pattern.permute.xlu0 2
    %1117 = vperm.xlu0 %1116, %v110
    %v1118 = vpop.permute.xlu0 %1117
    %1120 = vset.pattern.permute.xlu0 2
    %1121 = vperm.xlu0 %1120, %v111
    %v1122 = vpop.permute.xlu0 %1121
    %1124 = vset.pattern.permute.xlu0 2
    %1125 = vperm.xlu0 %1124, %v112
    %v1126 = vpop.permute.xlu0 %1125
    %1128 = vset.pattern.permute.xlu0 2
    %1129 = vperm.xlu0 %1128, %v113
    %v1130 = vpop.permute.xlu0 %1129
    %1132 = vset.pattern.permute.xlu0 2
    %1133 = vperm.xlu0 %1132, %v114
    %v1134 = vpop.permute.xlu0 %1133
    %1136 = vset.pattern.permute.xlu0 2
    %1137 = vperm.xlu0 %1136, %v115
    %v1138 = vpop.permute.xlu0 %1137
    %1140 = vset.pattern.permute.xlu0 2
    %1141 = vperm.xlu0 %1140, %v116
    %v1142 = vpop.permute.xlu0 %1141
    %1144 = vset.pattern.permute.xlu0 2
    %1145 = vperm.xlu0 %1144, %v117
    %v1146 = vpop.permute.xlu0 %1145
    %1148 = vset.pattern.permute.xlu0 2
    %1149 = vperm.xlu0 %1148, %v118
    %v1150 = vpop.permute.xlu0 %1149
    %v1152 = vlaneseq
    %v1153 = vshrl.u32 %v1152, 7
    %v1154 = vsub.s32 2, %v1153
    %v1155 = vrot.slane %v119, %v1154
    %v1156 = vmul.f32 %v898, %v1155
    %v1157 = vmul.f32 %v902, %v1155
    %v1158 = vmul.f32 %v906, %v1155
    %v1159 = vmul.f32 %v910, %v1155
    %v1160 = vmul.f32 %v914, %v1155
    %v1161 = vmul.f32 %v918, %v1155
    %v1162 = vmul.f32 %v922, %v1155
    %v1163 = vmul.f32 %v926, %v1155
    %v1164 = vmul.f32 %v930, %v1155
    %v1165 = vmul.f32 %v934, %v1155
    %v1166 = vmul.f32 %v938, %v1155
    %v1167 = vmul.f32 %v942, %v1155
    %v1168 = vmul.f32 %v946, %v1155
    %v1169 = vmul.f32 %v950, %v1155
    %v1170 = vmul.f32 %v954, %v1155
    %v1171 = vmul.f32 %v958, %v1155
    %v1172 = vmul.f32 %v962, %v1155
    %v1173 = vmul.f32 %v966, %v1155
    %v1174 = vmul.f32 %v970, %v1155
    %v1175 = vmul.f32 %v974, %v1155
    %v1176 = vmul.f32 %v978, %v1155
    %v1177 = vmul.f32 %v982, %v1155
    %v1178 = vmul.f32 %v986, %v1155
    %v1179 = vmul.f32 %v990, %v1155
    %v1180 = vmul.f32 %v994, %v1155
    %v1181 = vmul.f32 %v998, %v1155
    %v1182 = vmul.f32 %v1002, %v1155
    %v1183 = vmul.f32 %v1006, %v1155
    %v1184 = vmul.f32 %v1010, %v1155
    %v1185 = vmul.f32 %v1014, %v1155
    %v1186 = vmul.f32 %v1018, %v1155
    %v1187 = vmul.f32 %v1022, %v1155
    %v1188 = vmul.f32 %v1026, %v1155
    %v1189 = vmul.f32 %v1030, %v1155
    %v1190 = vmul.f32 %v1034, %v1155
    %v1191 = vmul.f32 %v1038, %v1155
    %v1192 = vmul.f32 %v1042, %v1155
    %v1193 = vmul.f32 %v1046, %v1155
    %v1194 = vmul.f32 %v1050, %v1155
    %v1195 = vmul.f32 %v1054, %v1155
    %v1196 = vmul.f32 %v1058, %v1155
    %v1197 = vmul.f32 %v1062, %v1155
    %v1198 = vmul.f32 %v1066, %v1155
    %v1199 = vmul.f32 %v1070, %v1155
    %v1200 = vmul.f32 %v1074, %v1155
    %v1201 = vmul.f32 %v1078, %v1155
    %v1202 = vmul.f32 %v1082, %v1155
    %v1203 = vmul.f32 %v1086, %v1155
    %v1204 = vmul.f32 %v1090, %v1155
    %v1205 = vmul.f32 %v1094, %v1155
    %v1206 = vmul.f32 %v1098, %v1155
    %v1207 = vmul.f32 %v1102, %v1155
    %v1208 = vmul.f32 %v1106, %v1155
    %v1209 = vmul.f32 %v1110, %v1155
    %v1210 = vmul.f32 %v1114, %v1155
    %v1211 = vmul.f32 %v1118, %v1155
    %v1212 = vmul.f32 %v1122, %v1155
    %v1213 = vmul.f32 %v1126, %v1155
    %v1214 = vmul.f32 %v1130, %v1155
    %v1215 = vmul.f32 %v1134, %v1155
    %v1216 = vmul.f32 %v1138, %v1155
    %v1217 = vmul.f32 %v1142, %v1155
    %v1218 = vmul.f32 %v1146, %v1155
    %v1219 = vmul.f32 %v1150, %v1155
    %v1220 = vadd.f32 %v832, %v1156
    %v1221 = vadd.f32 %v833, %v1157
    %v1222 = vadd.f32 %v834, %v1158
    %v1223 = vadd.f32 %v835, %v1159
    %v1224 = vadd.f32 %v836, %v1160
    %v1225 = vadd.f32 %v837, %v1161
    %v1226 = vadd.f32 %v838, %v1162
    %v1227 = vadd.f32 %v839, %v1163
    %v1228 = vadd.f32 %v840, %v1164
    %v1229 = vadd.f32 %v841, %v1165
    %v1230 = vadd.f32 %v842, %v1166
    %v1231 = vadd.f32 %v843, %v1167
    %v1232 = vadd.f32 %v844, %v1168
    %v1233 = vadd.f32 %v845, %v1169
    %v1234 = vadd.f32 %v846, %v1170
    %v1235 = vadd.f32 %v847, %v1171
    %v1236 = vadd.f32 %v848, %v1172
    %v1237 = vadd.f32 %v849, %v1173
    %v1238 = vadd.f32 %v850, %v1174
    %v1239 = vadd.f32 %v851, %v1175
    %v1240 = vadd.f32 %v852, %v1176
    %v1241 = vadd.f32 %v853, %v1177
    %v1242 = vadd.f32 %v854, %v1178
    %v1243 = vadd.f32 %v855, %v1179
    %v1244 = vadd.f32 %v856, %v1180
    %v1245 = vadd.f32 %v857, %v1181
    %v1246 = vadd.f32 %v858, %v1182
    %v1247 = vadd.f32 %v859, %v1183
    %v1248 = vadd.f32 %v860, %v1184
    %v1249 = vadd.f32 %v861, %v1185
    %v1250 = vadd.f32 %v862, %v1186
    %v1251 = vadd.f32 %v863, %v1187
    %v1252 = vadd.f32 %v864, %v1188
    %v1253 = vadd.f32 %v865, %v1189
    %v1254 = vadd.f32 %v866, %v1190
    %v1255 = vadd.f32 %v867, %v1191
    %v1256 = vadd.f32 %v868, %v1192
    %v1257 = vadd.f32 %v869, %v1193
    %v1258 = vadd.f32 %v870, %v1194
    %v1259 = vadd.f32 %v871, %v1195
    %v1260 = vadd.f32 %v872, %v1196
    %v1261 = vadd.f32 %v873, %v1197
    %v1262 = vadd.f32 %v874, %v1198
    %v1263 = vadd.f32 %v875, %v1199
    %v1264 = vadd.f32 %v876, %v1200
    %v1265 = vadd.f32 %v877, %v1201
    %v1266 = vadd.f32 %v878, %v1202
    %v1267 = vadd.f32 %v879, %v1203
    %v1268 = vadd.f32 %v880, %v1204
    %v1269 = vadd.f32 %v881, %v1205
    %v1270 = vadd.f32 %v882, %v1206
    %v1271 = vadd.f32 %v883, %v1207
    %v1272 = vadd.f32 %v884, %v1208
    %v1273 = vadd.f32 %v885, %v1209
    %v1274 = vadd.f32 %v886, %v1210
    %v1275 = vadd.f32 %v887, %v1211
    %v1276 = vadd.f32 %v888, %v1212
    %v1277 = vadd.f32 %v889, %v1213
    %v1278 = vadd.f32 %v890, %v1214
    %v1279 = vadd.f32 %v891, %v1215
    %v1280 = vadd.f32 %v892, %v1216
    %v1281 = vadd.f32 %v893, %v1217
    %v1282 = vadd.f32 %v894, %v1218
    %v1283 = vadd.f32 %v895, %v1219
    %v1284 = vld [vmem:[%s8] sm:$0x1]
    %v1286 = vlaneseq
    %v1287 = vshrl.u32 %v1286, 7
    %v1288 = vsub.s32 0, %v1287
    %v1289 = vrot.slane %v1284, %v1288
    %v1291 = vadd.f32 %v1220, %v1289
    %v1292 = vadd.f32 %v1221, %v1289
    %v1293 = vadd.f32 %v1222, %v1289
    %v1294 = vadd.f32 %v1223, %v1289
    %v1295 = vadd.f32 %v1224, %v1289
    %v1296 = vadd.f32 %v1225, %v1289
    %v1297 = vadd.f32 %v1226, %v1289
    %v1298 = vadd.f32 %v1227, %v1289
    %v1299 = vadd.f32 %v1228, %v1289
    %v1300 = vadd.f32 %v1229, %v1289
    %v1301 = vadd.f32 %v1230, %v1289
    %v1302 = vadd.f32 %v1231, %v1289
    %v1303 = vadd.f32 %v1232, %v1289
    %v1304 = vadd.f32 %v1233, %v1289
    %v1305 = vadd.f32 %v1234, %v1289
    %v1306 = vadd.f32 %v1235, %v1289
    %v1307 = vadd.f32 %v1236, %v1289
    %v1308 = vadd.f32 %v1237, %v1289
    %v1309 = vadd.f32 %v1238, %v1289
    %v1310 = vadd.f32 %v1239, %v1289
    %v1311 = vadd.f32 %v1240, %v1289
    %v1312 = vadd.f32 %v1241, %v1289
    %v1313 = vadd.f32 %v1242, %v1289
    %v1314 = vadd.f32 %v1243, %v1289
    %v1315 = vadd.f32 %v1244, %v1289
    %v1316 = vadd.f32 %v1245, %v1289
    %v1317 = vadd.f32 %v1246, %v1289
    %v1318 = vadd.f32 %v1247, %v1289
    %v1319 = vadd.f32 %v1248, %v1289
    %v1320 = vadd.f32 %v1249, %v1289
    %v1321 = vadd.f32 %v1250, %v1289
    %v1322 = vadd.f32 %v1251, %v1289
    %v1323 = vadd.f32 %v1252, %v1289
    %v1324 = vadd.f32 %v1253, %v1289
    %v1325 = vadd.f32 %v1254, %v1289
    %v1326 = vadd.f32 %v1255, %v1289
    %v1327 = vadd.f32 %v1256, %v1289
    %v1328 = vadd.f32 %v1257, %v1289
    %v1329 = vadd.f32 %v1258, %v1289
    %v1330 = vadd.f32 %v1259, %v1289
    %v1331 = vadd.f32 %v1260, %v1289
    %v1332 = vadd.f32 %v1261, %v1289
    %v1333 = vadd.f32 %v1262, %v1289
    %v1334 = vadd.f32 %v1263, %v1289
    %v1335 = vadd.f32 %v1264, %v1289
    %v1336 = vadd.f32 %v1265, %v1289
    %v1337 = vadd.f32 %v1266, %v1289
    %v1338 = vadd.f32 %v1267, %v1289
    %v1339 = vadd.f32 %v1268, %v1289
    %v1340 = vadd.f32 %v1269, %v1289
    %v1341 = vadd.f32 %v1270, %v1289
    %v1342 = vadd.f32 %v1271, %v1289
    %v1343 = vadd.f32 %v1272, %v1289
    %v1344 = vadd.f32 %v1273, %v1289
    %v1345 = vadd.f32 %v1274, %v1289
    %v1346 = vadd.f32 %v1275, %v1289
    %v1347 = vadd.f32 %v1276, %v1289
    %v1348 = vadd.f32 %v1277, %v1289
    %v1349 = vadd.f32 %v1278, %v1289
    %v1350 = vadd.f32 %v1279, %v1289
    %v1351 = vadd.f32 %v1280, %v1289
    %v1352 = vadd.f32 %v1281, %v1289
    %v1353 = vadd.f32 %v1282, %v1289
    %v1354 = vadd.f32 %v1283, %v1289
    %v1355 = vmax.f32 %v1291, 0.0
    %v1356 = vmax.f32 %v1292, 0.0
    %v1357 = vmax.f32 %v1293, 0.0
    %v1358 = vmax.f32 %v1294, 0.0
    %v1359 = vmax.f32 %v1295, 0.0
    %v1360 = vmax.f32 %v1296, 0.0
    %v1361 = vmax.f32 %v1297, 0.0
    %v1362 = vmax.f32 %v1298, 0.0
    %v1363 = vmax.f32 %v1299, 0.0
    %v1364 = vmax.f32 %v1300, 0.0
    %v1365 = vmax.f32 %v1301, 0.0
    %v1366 = vmax.f32 %v1302, 0.0
    %v1367 = vmax.f32 %v1303, 0.0
    %v1368 = vmax.f32 %v1304, 0.0
    %v1369 = vmax.f32 %v1305, 0.0
    %v1370 = vmax.f32 %v1306, 0.0
    %v1371 = vmax.f32 %v1307, 0.0
    %v1372 = vmax.f32 %v1308, 0.0
    %v1373 = vmax.f32 %v1309, 0.0
    %v1374 = vmax.f32 %v1310, 0.0
    %v1375 = vmax.f32 %v1311, 0.0
    %v1376 = vmax.f32 %v1312, 0.0
    %v1377 = vmax.f32 %v1313, 0.0
    %v1378 = vmax.f32 %v1314, 0.0
    %v1379 = vmax.f32 %v1315, 0.0
    %v1380 = vmax.f32 %v1316, 0.0
    %v1381 = vmax.f32 %v1317, 0.0
    %v1382 = vmax.f32 %v1318, 0.0
    %v1383 = vmax.f32 %v1319, 0.0
    %v1384 = vmax.f32 %v1320, 0.0
    %v1385 = vmax.f32 %v1321, 0.0
    %v1386 = vmax.f32 %v1322, 0.0
    %v1387 = vmax.f32 %v1323, 0.0
    %v1388 = vmax.f32 %v1324, 0.0
    %v1389 = vmax.f32 %v1325, 0.0
    %v1390 = vmax.f32 %v1326, 0.0
    %v1391 = vmax.f32 %v1327, 0.0
    %v1392 = vmax.f32 %v1328, 0.0
    %v1393 = vmax.f32 %v1329, 0.0
    %v1394 = vmax.f32 %v1330, 0.0
    %v1395 = vmax.f32 %v1331, 0.0
    %v1396 = vmax.f32 %v1332, 0.0
    %v1397 = vmax.f32 %v1333, 0.0
    %v1398 = vmax.f32 %v1334, 0.0
    %v1399 = vmax.f32 %v1335, 0.0
    %v1400 = vmax.f32 %v1336, 0.0
    %v1401 = vmax.f32 %v1337, 0.0
    %v1402 = vmax.f32 %v1338, 0.0
    %v1403 = vmax.f32 %v1339, 0.0
    %v1404 = vmax.f32 %v1340, 0.0
    %v1405 = vmax.f32 %v1341, 0.0
    %v1406 = vmax.f32 %v1342, 0.0
    %v1407 = vmax.f32 %v1343, 0.0
    %v1408 = vmax.f32 %v1344, 0.0
    %v1409 = vmax.f32 %v1345, 0.0
    %v1410 = vmax.f32 %v1346, 0.0
    %v1411 = vmax.f32 %v1347, 0.0
    %v1412 = vmax.f32 %v1348, 0.0
    %v1413 = vmax.f32 %v1349, 0.0
    %v1414 = vmax.f32 %v1350, 0.0
    %v1415 = vmax.f32 %v1351, 0.0
    %v1416 = vmax.f32 %v1352, 0.0
    %v1417 = vmax.f32 %v1353, 0.0
    %v1418 = vmax.f32 %v1354, 0.0
    %v1419 = vpack.c.bf16 %v1356, %v1355
    %v1420 = vpack.c.bf16 %v1358, %v1357
    %v1421 = vpack.c.bf16 %v1360, %v1359
    %v1422 = vpack.c.bf16 %v1362, %v1361
    %v1423 = vpack.c.bf16 %v1364, %v1363
    %v1424 = vpack.c.bf16 %v1366, %v1365
    %v1425 = vpack.c.bf16 %v1368, %v1367
    %v1426 = vpack.c.bf16 %v1370, %v1369
    %v1427 = vpack.c.bf16 %v1372, %v1371
    %v1428 = vpack.c.bf16 %v1374, %v1373
    %v1429 = vpack.c.bf16 %v1376, %v1375
    %v1430 = vpack.c.bf16 %v1378, %v1377
    %v1431 = vpack.c.bf16 %v1380, %v1379
    %v1432 = vpack.c.bf16 %v1382, %v1381
    %v1433 = vpack.c.bf16 %v1384, %v1383
    %v1434 = vpack.c.bf16 %v1386, %v1385
    %v1435 = vpack.c.bf16 %v1388, %v1387
    %v1436 = vpack.c.bf16 %v1390, %v1389
    %v1437 = vpack.c.bf16 %v1392, %v1391
    %v1438 = vpack.c.bf16 %v1394, %v1393
    %v1439 = vpack.c.bf16 %v1396, %v1395
    %v1440 = vpack.c.bf16 %v1398, %v1397
    %v1441 = vpack.c.bf16 %v1400, %v1399
    %v1442 = vpack.c.bf16 %v1402, %v1401
    %v1443 = vpack.c.bf16 %v1404, %v1403
    %v1444 = vpack.c.bf16 %v1406, %v1405
    %v1445 = vpack.c.bf16 %v1408, %v1407
    %v1446 = vpack.c.bf16 %v1410, %v1409
    %v1447 = vpack.c.bf16 %v1412, %v1411
    %v1448 = vpack.c.bf16 %v1414, %v1413
    %v1449 = vpack.c.bf16 %v1416, %v1415
    %v1450 = vpack.c.bf16 %v1418, %v1417
    %v1451 = vld [vmem:[%s2] sm:$0xf]
    %v1452 = vld [vmem:[%s2 + $0x4] sm:$0xf]
    %v1453 = vld [vmem:[%s2 + $0x8] sm:$0xf]
    %v1454 = vld [vmem:[%s2 + $0xc] sm:$0xf]
    %v1455 = vld [vmem:[%s2 + $0x10] sm:$0xf]
    %v1456 = vld [vmem:[%s2 + $0x14] sm:$0xf]
    %v1457 = vld [vmem:[%s2 + $0x18] sm:$0xf]
    %v1458 = vld [vmem:[%s2 + $0x1c] sm:$0xf]
    %v1459 = vld [vmem:[%s8 + $0x1] sm:$0x1]
    %v1461 = vlaneseq
    %v1462 = vshrl.u32 %v1461, 7
    %v1463 = vsub.s32 0, %v1462
    %v1464 = vrot.slane %v1459, %v1463
    %v1474 = vunpack.c.l.b16 %v1451
    %v1475 = vunpack.c.l.b16 %v1452
    %v1476 = vunpack.c.l.b16 %v1453
    %v1477 = vunpack.c.l.b16 %v1454
    %v1478 = vunpack.c.l.b16 %v1455
    %v1479 = vunpack.c.l.b16 %v1456
    %v1480 = vunpack.c.l.b16 %v1457
    %v1481 = vunpack.c.l.b16 %v1458
    %v1482 = vpack.c.b16 %v1475, %v1474
    %v1483 = vpack.c.b16 %v1477, %v1476
    %v1484 = vpack.c.b16 %v1479, %v1478
    %v1485 = vpack.c.b16 %v1481, %v1480
    %vm1490 = vcmask 523264
    %v1492 = vsel %vm1490, %v1419, 0
    %v1495 = vsel %vm1490, %v1420, 0
    %v1498 = vsel %vm1490, %v1421, 0
    %v1501 = vsel %vm1490, %v1422, 0
    %v1504 = vsel %vm1490, %v1423, 0
    %v1507 = vsel %vm1490, %v1424, 0
    %v1510 = vsel %vm1490, %v1425, 0
    %v1513 = vsel %vm1490, %v1426, 0
    %v1516 = vsel %vm1490, %v1427, 0
    %v1519 = vsel %vm1490, %v1428, 0
    %v1522 = vsel %vm1490, %v1429, 0
    %v1525 = vsel %vm1490, %v1430, 0
    %v1528 = vsel %vm1490, %v1431, 0
    %v1531 = vsel %vm1490, %v1432, 0
    %v1534 = vsel %vm1490, %v1433, 0
    %v1537 = vsel %vm1490, %v1434, 0
    %v1540 = vsel %vm1490, %v1435, 0
    %v1543 = vsel %vm1490, %v1436, 0
    %v1546 = vsel %vm1490, %v1437, 0
    %v1549 = vsel %vm1490, %v1438, 0
    %v1552 = vsel %vm1490, %v1439, 0
    %v1555 = vsel %vm1490, %v1440, 0
    %v1558 = vsel %vm1490, %v1441, 0
    %v1561 = vsel %vm1490, %v1442, 0
    %v1564 = vsel %vm1490, %v1443, 0
    %v1567 = vsel %vm1490, %v1444, 0
    %v1570 = vsel %vm1490, %v1445, 0
    %v1573 = vsel %vm1490, %v1446, 0
    %v1576 = vsel %vm1490, %v1447, 0
    %v1579 = vsel %vm1490, %v1448, 0
    %v1582 = vsel %vm1490, %v1449, 0
    %v1585 = vsel %vm1490, %v1450, 0
    %1587 = vmatprep.subr.bf16.mxu0 0
    %1588 = vmatpush1.bf16.msra.mxu0 %v1482
    %1589 = vmatprep.subr.bf16.mxu0 0
    %1590 = vmatpush1.bf16.msra.mxu0 %v1483
    %1591 = vmatprep.subr.bf16.mxu0 0
    %1592 = vmatpush1.bf16.msra.mxu0 %v1484
    %1593 = vmatprep.subr.bf16.mxu0 0
    %1594 = vmatpush1.bf16.msra.mxu0 %v1485
    %1595 = vmatprep.subr.bf16.mxu0 0
    %1596 = vmatpush1.bf16.msra.mxu0 0
    %1597 = vmatprep.subr.bf16.mxu0 0
    %1598 = vmatpush1.bf16.msra.mxu0 0
    %1599 = vmatprep.subr.bf16.mxu0 0
    %1600 = vmatpush1.bf16.msra.mxu0 0
    %1601 = vmatprep.subr.bf16.mxu0 0
    %1602 = vmatpush1.bf16.msra.mxu0 0
    %1603 = vmatprep.subr.bf16.mxu0 0
    %1604 = vmatpush1.bf16.msra.mxu0 0
    %1605 = vmatprep.subr.bf16.mxu0 0
    %1606 = vmatpush1.bf16.msra.mxu0 0
    %1607 = vmatprep.subr.bf16.mxu0 0
    %1608 = vmatpush1.bf16.msra.mxu0 0
    %1609 = vmatprep.subr.bf16.mxu0 0
    %1610 = vmatpush1.bf16.msra.mxu0 0
    %1611 = vmatprep.subr.bf16.mxu0 0
    %1612 = vmatpush1.bf16.msra.mxu0 0
    %1613 = vmatprep.subr.bf16.mxu0 0
    %1614 = vmatpush1.bf16.msra.mxu0 0
    %1615 = vmatprep.subr.bf16.mxu0 0
    %1616 = vmatpush1.bf16.msra.mxu0 0
    %1617 = vmatprep.subr.bf16.mxu0 0
    %1618 = vmatpush1.bf16.msra.mxu0 0
    %1619 = vmatprep.mubr.bf16.mxu0 0
    %1620 = vmatmul.mubr.bf16.gmra.mrb[0].mxu0 %v1492
    %v1621 = vpop.f32.mrb[0].mxu0
    %v1622 = vadd.f32 %v1464, %v1621
    %v1623 = vpop.f32.mrb[0].mxu0
    %v1624 = vpop.f32.mrb[0].mxu0
    %v1625 = vadd.f32 %v1464, %v1624
    %v1626 = vpop.f32.mrb[0].mxu0
    %1627 = vmatprep.mubr.bf16.mxu0 0
    %1628 = vmatmul.mubr.bf16.gmra.mrb[0].mxu0 %v1495
    %v1629 = vpop.f32.mrb[0].mxu0
    %v1630 = vadd.f32 %v1464, %v1629
    %v1631 = vpop.f32.mrb[0].mxu0
    %v1632 = vpop.f32.mrb[0].mxu0
    %v1633 = vadd.f32 %v1464, %v1632
    %v1634 = vpop.f32.mrb[0].mxu0
    %1635 = vmatprep.mubr.bf16.mxu0 0
    %1636 = vmatmul.mubr.bf16.gmra.mrb[0].mxu0 %v1498
    %v1637 = vpop.f32.mrb[0].mxu0
    %v1638 = vadd.f32 %v1464, %v1637
    %v1639 = vpop.f32.mrb[0].mxu0
    %v1640 = vpop.f32.mrb[0].mxu0
    %v1641 = vadd.f32 %v1464, %v1640
    %v1642 = vpop.f32.mrb[0].mxu0
    %1643 = vmatprep.mubr.bf16.mxu0 0
    %1644 = vmatmul.mubr.bf16.gmra.mrb[0].mxu0 %v1501
    %v1645 = vpop.f32.mrb[0].mxu0
    %v1646 = vadd.f32 %v1464, %v1645
    %v1647 = vpop.f32.mrb[0].mxu0
    %v1648 = vpop.f32.mrb[0].mxu0
    %v1649 = vadd.f32 %v1464, %v1648
    %v1650 = vpop.f32.mrb[0].mxu0
    %1651 = vmatprep.mubr.bf16.mxu0 0
    %1652 = vmatmul.mubr.bf16.gmra.mrb[0].mxu0 %v1504
    %v1653 = vpop.f32.mrb[0].mxu0
    %v1654 = vadd.f32 %v1464, %v1653
    %v1655 = vpop.f32.mrb[0].mxu0
    %v1656 = vpop.f32.mrb[0].mxu0
    %v1657 = vadd.f32 %v1464, %v1656
    %v1658 = vpop.f32.mrb[0].mxu0
    %1659 = vmatprep.mubr.bf16.mxu0 0
    %1660 = vmatmul.mubr.bf16.gmra.mrb[0].mxu0 %v1507
    %v1661 = vpop.f32.mrb[0].mxu0
    %v1662 = vadd.f32 %v1464, %v1661
    %v1663 = vpop.f32.mrb[0].mxu0
    %v1664 = vpop.f32.mrb[0].mxu0
    %v1665 = vadd.f32 %v1464, %v1664
    %v1666 = vpop.f32.mrb[0].mxu0
    %1667 = vmatprep.mubr.bf16.mxu0 0
    %1668 = vmatmul.mubr.bf16.gmra.mrb[0].mxu0 %v1510
    %v1669 = vpop.f32.mrb[0].mxu0
    %v1670 = vadd.f32 %v1464, %v1669
    %v1671 = vpop.f32.mrb[0].mxu0
    %v1672 = vpop.f32.mrb[0].mxu0
    %v1673 = vadd.f32 %v1464, %v1672
    %v1674 = vpop.f32.mrb[0].mxu0
    %1675 = vmatprep.mubr.bf16.mxu0 0
    %1676 = vmatmul.mubr.bf16.gmra.mrb[0].mxu0 %v1513
    %v1677 = vpop.f32.mrb[0].mxu0
    %v1678 = vadd.f32 %v1464, %v1677
    %v1679 = vpop.f32.mrb[0].mxu0
    %v1680 = vpop.f32.mrb[0].mxu0
    %v1681 = vadd.f32 %v1464, %v1680
    %v1682 = vpop.f32.mrb[0].mxu0
    %1683 = vmatprep.mubr.bf16.mxu0 0
    %1684 = vmatmul.mubr.bf16.gmra.mrb[0].mxu0 %v1516
    %v1685 = vpop.f32.mrb[0].mxu0
    %v1686 = vadd.f32 %v1464, %v1685
    %v1687 = vpop.f32.mrb[0].mxu0
    %v1688 = vpop.f32.mrb[0].mxu0
    %v1689 = vadd.f32 %v1464, %v1688
    %v1690 = vpop.f32.mrb[0].mxu0
    %1691 = vmatprep.mubr.bf16.mxu0 0
    %1692 = vmatmul.mubr.bf16.gmra.mrb[0].mxu0 %v1519
    %v1693 = vpop.f32.mrb[0].mxu0
    %v1694 = vadd.f32 %v1464, %v1693
    %v1695 = vpop.f32.mrb[0].mxu0
    %v1696 = vpop.f32.mrb[0].mxu0
    %v1697 = vadd.f32 %v1464, %v1696
    %v1698 = vpop.f32.mrb[0].mxu0
    %1699 = vmatprep.mubr.bf16.mxu0 0
    %1700 = vmatmul.mubr.bf16.gmra.mrb[0].mxu0 %v1522
    %v1701 = vpop.f32.mrb[0].mxu0
    %v1702 = vadd.f32 %v1464, %v1701
    %v1703 = vpop.f32.mrb[0].mxu0
    %v1704 = vpop.f32.mrb[0].mxu0
    %v1705 = vadd.f32 %v1464, %v1704
    %v1706 = vpop.f32.mrb[0].mxu0
    %1707 = vmatprep.mubr.bf16.mxu0 0
    %1708 = vmatmul.mubr.bf16.gmra.mrb[0].mxu0 %v1525
    %v1709 = vpop.f32.mrb[0].mxu0
    %v1710 = vadd.f32 %v1464, %v1709
    %v1711 = vpop.f32.mrb[0].mxu0
    %v1712 = vpop.f32.mrb[0].mxu0
    %v1713 = vadd.f32 %v1464, %v1712
    %v1714 = vpop.f32.mrb[0].mxu0
    %1715 = vmatprep.mubr.bf16.mxu0 0
    %1716 = vmatmul.mubr.bf16.gmra.mrb[0].mxu0 %v1528
    %v1717 = vpop.f32.mrb[0].mxu0
    %v1718 = vadd.f32 %v1464, %v1717
    %v1719 = vpop.f32.mrb[0].mxu0
    %v1720 = vpop.f32.mrb[0].mxu0
    %v1721 = vadd.f32 %v1464, %v1720
    %v1722 = vpop.f32.mrb[0].mxu0
    %1723 = vmatprep.mubr.bf16.mxu0 0
    %1724 = vmatmul.mubr.bf16.gmra.mrb[0].mxu0 %v1531
    %v1725 = vpop.f32.mrb[0].mxu0
    %v1726 = vadd.f32 %v1464, %v1725
    %v1727 = vpop.f32.mrb[0].mxu0
    %v1728 = vpop.f32.mrb[0].mxu0
    %v1729 = vadd.f32 %v1464, %v1728
    %v1730 = vpop.f32.mrb[0].mxu0
    %1731 = vmatprep.mubr.bf16.mxu0 0
    %1732 = vmatmul.mubr.bf16.gmra.mrb[0].mxu0 %v1534
    %v1733 = vpop.f32.mrb[0].mxu0
    %v1734 = vadd.f32 %v1464, %v1733
    %v1735 = vpop.f32.mrb[0].mxu0
    %v1736 = vpop.f32.mrb[0].mxu0
    %v1737 = vadd.f32 %v1464, %v1736
    %v1738 = vpop.f32.mrb[0].mxu0
    %1739 = vmatprep.mubr.bf16.mxu0 0
    %1740 = vmatmul.mubr.bf16.gmra.mrb[0].mxu0 %v1537
    %v1741 = vpop.f32.mrb[0].mxu0
    %v1742 = vadd.f32 %v1464, %v1741
    %v1743 = vpop.f32.mrb[0].mxu0
    %v1744 = vpop.f32.mrb[0].mxu0
    %v1745 = vadd.f32 %v1464, %v1744
    %v1746 = vpop.f32.mrb[0].mxu0
    %1747 = vmatprep.mubr.bf16.mxu0 0
    %1748 = vmatmul.mubr.bf16.gmra.mrb[0].mxu0 %v1540
    %v1749 = vpop.f32.mrb[0].mxu0
    %v1750 = vadd.f32 %v1464, %v1749
    %v1751 = vpop.f32.mrb[0].mxu0
    %v1752 = vpop.f32.mrb[0].mxu0
    %v1753 = vadd.f32 %v1464, %v1752
    %v1754 = vpop.f32.mrb[0].mxu0
    %1755 = vmatprep.mubr.bf16.mxu0 0
    %1756 = vmatmul.mubr.bf16.gmra.mrb[0].mxu0 %v1543
    %v1757 = vpop.f32.mrb[0].mxu0
    %v1758 = vadd.f32 %v1464, %v1757
    %v1759 = vpop.f32.mrb[0].mxu0
    %v1760 = vpop.f32.mrb[0].mxu0
    %v1761 = vadd.f32 %v1464, %v1760
    %v1762 = vpop.f32.mrb[0].mxu0
    %1763 = vmatprep.mubr.bf16.mxu0 0
    %1764 = vmatmul.mubr.bf16.gmra.mrb[0].mxu0 %v1546
    %v1765 = vpop.f32.mrb[0].mxu0
    %v1766 = vadd.f32 %v1464, %v1765
    %v1767 = vpop.f32.mrb[0].mxu0
    %v1768 = vpop.f32.mrb[0].mxu0
    %v1769 = vadd.f32 %v1464, %v1768
    %v1770 = vpop.f32.mrb[0].mxu0
    %1771 = vmatprep.mubr.bf16.mxu0 0
    %1772 = vmatmul.mubr.bf16.gmra.mrb[0].mxu0 %v1549
    %v1773 = vpop.f32.mrb[0].mxu0
    %v1774 = vadd.f32 %v1464, %v1773
    %v1775 = vpop.f32.mrb[0].mxu0
    %v1776 = vpop.f32.mrb[0].mxu0
    %v1777 = vadd.f32 %v1464, %v1776
    %v1778 = vpop.f32.mrb[0].mxu0
    %1779 = vmatprep.mubr.bf16.mxu0 0
    %1780 = vmatmul.mubr.bf16.gmra.mrb[0].mxu0 %v1552
    %v1781 = vpop.f32.mrb[0].mxu0
    %v1782 = vadd.f32 %v1464, %v1781
    %v1783 = vpop.f32.mrb[0].mxu0
    %v1784 = vpop.f32.mrb[0].mxu0
    %v1785 = vadd.f32 %v1464, %v1784
    %v1786 = vpop.f32.mrb[0].mxu0
    %1787 = vmatprep.mubr.bf16.mxu0 0
    %1788 = vmatmul.mubr.bf16.gmra.mrb[0].mxu0 %v1555
    %v1789 = vpop.f32.mrb[0].mxu0
    %v1790 = vadd.f32 %v1464, %v1789
    %v1791 = vpop.f32.mrb[0].mxu0
    %v1792 = vpop.f32.mrb[0].mxu0
    %v1793 = vadd.f32 %v1464, %v1792
    %v1794 = vpop.f32.mrb[0].mxu0
    %1795 = vmatprep.mubr.bf16.mxu0 0
    %1796 = vmatmul.mubr.bf16.gmra.mrb[0].mxu0 %v1558
    %v1797 = vpop.f32.mrb[0].mxu0
    %v1798 = vadd.f32 %v1464, %v1797
    %v1799 = vpop.f32.mrb[0].mxu0
    %v1800 = vpop.f32.mrb[0].mxu0
    %v1801 = vadd.f32 %v1464, %v1800
    %v1802 = vpop.f32.mrb[0].mxu0
    %1803 = vmatprep.mubr.bf16.mxu0 0
    %1804 = vmatmul.mubr.bf16.gmra.mrb[0].mxu0 %v1561
    %v1805 = vpop.f32.mrb[0].mxu0
    %v1806 = vadd.f32 %v1464, %v1805
    %v1807 = vpop.f32.mrb[0].mxu0
    %v1808 = vpop.f32.mrb[0].mxu0
    %v1809 = vadd.f32 %v1464, %v1808
    %v1810 = vpop.f32.mrb[0].mxu0
    %1811 = vmatprep.mubr.bf16.mxu0 0
    %1812 = vmatmul.mubr.bf16.gmra.mrb[0].mxu0 %v1564
    %v1813 = vpop.f32.mrb[0].mxu0
    %v1814 = vadd.f32 %v1464, %v1813
    %v1815 = vpop.f32.mrb[0].mxu0
    %v1816 = vpop.f32.mrb[0].mxu0
    %v1817 = vadd.f32 %v1464, %v1816
    %v1818 = vpop.f32.mrb[0].mxu0
    %1819 = vmatprep.mubr.bf16.mxu0 0
    %1820 = vmatmul.mubr.bf16.gmra.mrb[0].mxu0 %v1567
    %v1821 = vpop.f32.mrb[0].mxu0
    %v1822 = vadd.f32 %v1464, %v1821
    %v1823 = vpop.f32.mrb[0].mxu0
    %v1824 = vpop.f32.mrb[0].mxu0
    %v1825 = vadd.f32 %v1464, %v1824
    %v1826 = vpop.f32.mrb[0].mxu0
    %1827 = vmatprep.mubr.bf16.mxu0 0
    %1828 = vmatmul.mubr.bf16.gmra.mrb[0].mxu0 %v1570
    %v1829 = vpop.f32.mrb[0].mxu0
    %v1830 = vadd.f32 %v1464, %v1829
    %v1831 = vpop.f32.mrb[0].mxu0
    %v1832 = vpop.f32.mrb[0].mxu0
    %v1833 = vadd.f32 %v1464, %v1832
    %v1834 = vpop.f32.mrb[0].mxu0
    %1835 = vmatprep.mubr.bf16.mxu0 0
    %1836 = vmatmul.mubr.bf16.gmra.mrb[0].mxu0 %v1573
    %v1837 = vpop.f32.mrb[0].mxu0
    %v1838 = vadd.f32 %v1464, %v1837
    %v1839 = vpop.f32.mrb[0].mxu0
    %v1840 = vpop.f32.mrb[0].mxu0
    %v1841 = vadd.f32 %v1464, %v1840
    %v1842 = vpop.f32.mrb[0].mxu0
    %1843 = vmatprep.mubr.bf16.mxu0 0
    %1844 = vmatmul.mubr.bf16.gmra.mrb[0].mxu0 %v1576
    %v1845 = vpop.f32.mrb[0].mxu0
    %v1846 = vadd.f32 %v1464, %v1845
    %v1847 = vpop.f32.mrb[0].mxu0
    %v1848 = vpop.f32.mrb[0].mxu0
    %v1849 = vadd.f32 %v1464, %v1848
    %v1850 = vpop.f32.mrb[0].mxu0
    %1851 = vmatprep.mubr.bf16.mxu0 0
    %1852 = vmatmul.mubr.bf16.gmra.mrb[0].mxu0 %v1579
    %v1853 = vpop.f32.mrb[0].mxu0
    %v1854 = vadd.f32 %v1464, %v1853
    %v1855 = vpop.f32.mrb[0].mxu0
    %v1856 = vpop.f32.mrb[0].mxu0
    %v1857 = vadd.f32 %v1464, %v1856
    %v1858 = vpop.f32.mrb[0].mxu0
    %1859 = vmatprep.mubr.bf16.mxu0 0
    %1860 = vmatmul.mubr.bf16.gmra.mrb[0].mxu0 %v1582
    %v1861 = vpop.f32.mrb[0].mxu0
    %v1862 = vadd.f32 %v1464, %v1861
    %v1863 = vpop.f32.mrb[0].mxu0
    %v1864 = vpop.f32.mrb[0].mxu0
    %v1865 = vadd.f32 %v1464, %v1864
    %v1866 = vpop.f32.mrb[0].mxu0
    %1867 = vmatprep.mubr.bf16.mxu0 0
    %1868 = vmatmul.mubr.bf16.gmra.mrb[0].mxu0 %v1585
    %v1869 = vpop.f32.mrb[0].mxu0
    %v1870 = vadd.f32 %v1464, %v1869
    %v1871 = vpop.f32.mrb[0].mxu0
    %v1872 = vpop.f32.mrb[0].mxu0
    %v1873 = vadd.f32 %v1464, %v1872
    %v1874 = vpop.f32.mrb[0].mxu0
    %1875 = vdwg.mxu0
    %v1876 = vmax.f32 %v1622, 0.0
    %v1877 = vmax.f32 %v1625, 0.0
    %v1878 = vmax.f32 %v1630, 0.0
    %v1879 = vmax.f32 %v1633, 0.0
    %v1880 = vmax.f32 %v1638, 0.0
    %v1881 = vmax.f32 %v1641, 0.0
    %v1882 = vmax.f32 %v1646, 0.0
    %v1883 = vmax.f32 %v1649, 0.0
    %v1884 = vmax.f32 %v1654, 0.0
    %v1885 = vmax.f32 %v1657, 0.0
    %v1886 = vmax.f32 %v1662, 0.0
    %v1887 = vmax.f32 %v1665, 0.0
    %v1888 = vmax.f32 %v1670, 0.0
    %v1889 = vmax.f32 %v1673, 0.0
    %v1890 = vmax.f32 %v1678, 0.0
    %v1891 = vmax.f32 %v1681, 0.0
    %v1892 = vmax.f32 %v1686, 0.0
    %v1893 = vmax.f32 %v1689, 0.0
    %v1894 = vmax.f32 %v1694, 0.0
    %v1895 = vmax.f32 %v1697, 0.0
    %v1896 = vmax.f32 %v1702, 0.0
    %v1897 = vmax.f32 %v1705, 0.0
    %v1898 = vmax.f32 %v1710, 0.0
    %v1899 = vmax.f32 %v1713, 0.0
    %v1900 = vmax.f32 %v1718, 0.0
    %v1901 = vmax.f32 %v1721, 0.0
    %v1902 = vmax.f32 %v1726, 0.0
    %v1903 = vmax.f32 %v1729, 0.0
    %v1904 = vmax.f32 %v1734, 0.0
    %v1905 = vmax.f32 %v1737, 0.0
    %v1906 = vmax.f32 %v1742, 0.0
    %v1907 = vmax.f32 %v1745, 0.0
    %v1908 = vmax.f32 %v1750, 0.0
    %v1909 = vmax.f32 %v1753, 0.0
    %v1910 = vmax.f32 %v1758, 0.0
    %v1911 = vmax.f32 %v1761, 0.0
    %v1912 = vmax.f32 %v1766, 0.0
    %v1913 = vmax.f32 %v1769, 0.0
    %v1914 = vmax.f32 %v1774, 0.0
    %v1915 = vmax.f32 %v1777, 0.0
    %v1916 = vmax.f32 %v1782, 0.0
    %v1917 = vmax.f32 %v1785, 0.0
    %v1918 = vmax.f32 %v1790, 0.0
    %v1919 = vmax.f32 %v1793, 0.0
    %v1920 = vmax.f32 %v1798, 0.0
    %v1921 = vmax.f32 %v1801, 0.0
    %v1922 = vmax.f32 %v1806, 0.0
    %v1923 = vmax.f32 %v1809, 0.0
    %v1924 = vmax.f32 %v1814, 0.0
    %v1925 = vmax.f32 %v1817, 0.0
    %v1926 = vmax.f32 %v1822, 0.0
    %v1927 = vmax.f32 %v1825, 0.0
    %v1928 = vmax.f32 %v1830, 0.0
    %v1929 = vmax.f32 %v1833, 0.0
    %v1930 = vmax.f32 %v1838, 0.0
    %v1931 = vmax.f32 %v1841, 0.0
    %v1932 = vmax.f32 %v1846, 0.0
    %v1933 = vmax.f32 %v1849, 0.0
    %v1934 = vmax.f32 %v1854, 0.0
    %v1935 = vmax.f32 %v1857, 0.0
    %v1936 = vmax.f32 %v1862, 0.0
    %v1937 = vmax.f32 %v1865, 0.0
    %v1938 = vmax.f32 %v1870, 0.0
    %v1939 = vmax.f32 %v1873, 0.0
    %v1940 = vpack.c.bf16 %v1877, %v1876
    %v1941 = vpack.c.bf16 %v1879, %v1878
    %v1942 = vpack.c.bf16 %v1881, %v1880
    %v1943 = vpack.c.bf16 %v1883, %v1882
    %v1944 = vpack.c.bf16 %v1885, %v1884
    %v1945 = vpack.c.bf16 %v1887, %v1886
    %v1946 = vpack.c.bf16 %v1889, %v1888
    %v1947 = vpack.c.bf16 %v1891, %v1890
    %v1948 = vpack.c.bf16 %v1893, %v1892
    %v1949 = vpack.c.bf16 %v1895, %v1894
    %v1950 = vpack.c.bf16 %v1897, %v1896
    %v1951 = vpack.c.bf16 %v1899, %v1898
    %v1952 = vpack.c.bf16 %v1901, %v1900
    %v1953 = vpack.c.bf16 %v1903, %v1902
    %v1954 = vpack.c.bf16 %v1905, %v1904
    %v1955 = vpack.c.bf16 %v1907, %v1906
    %v1956 = vpack.c.bf16 %v1909, %v1908
    %v1957 = vpack.c.bf16 %v1911, %v1910
    %v1958 = vpack.c.bf16 %v1913, %v1912
    %v1959 = vpack.c.bf16 %v1915, %v1914
    %v1960 = vpack.c.bf16 %v1917, %v1916
    %v1961 = vpack.c.bf16 %v1919, %v1918
    %v1962 = vpack.c.bf16 %v1921, %v1920
    %v1963 = vpack.c.bf16 %v1923, %v1922
    %v1964 = vpack.c.bf16 %v1925, %v1924
    %v1965 = vpack.c.bf16 %v1927, %v1926
    %v1966 = vpack.c.bf16 %v1929, %v1928
    %v1967 = vpack.c.bf16 %v1931, %v1930
    %v1968 = vpack.c.bf16 %v1933, %v1932
    %v1969 = vpack.c.bf16 %v1935, %v1934
    %v1970 = vpack.c.bf16 %v1937, %v1936
    %v1971 = vpack.c.bf16 %v1939, %v1938
    %v1972 = vld [vmem:[%s3] sm:$0xff]
    %v1973 = vld [vmem:[%s3 + $0x8] sm:$0xff]
    %v1974 = vld [vmem:[%s3 + $0x10] sm:$0xff]
    %v1975 = vld [vmem:[%s3 + $0x18] sm:$0xff]
    %v1976 = vld [vmem:[%s3 + $0x20] sm:$0xff]
    %v1977 = vld [vmem:[%s3 + $0x28] sm:$0xff]
    %v1978 = vld [vmem:[%s3 + $0x30] sm:$0xff]
    %v1979 = vld [vmem:[%s3 + $0x38] sm:$0xff]
    %v1980 = vld [vmem:[%s3 + $0x40] sm:$0xff]
    %v1981 = vld [vmem:[%s3 + $0x48] sm:$0xff]
    %v1982 = vld [vmem:[%s3 + $0x50] sm:$0xff]
    %v1983 = vld [vmem:[%s3 + $0x58] sm:$0xff]
    %v1984 = vld [vmem:[%s3 + $0x60] sm:$0xff]
    %v1985 = vld [vmem:[%s3 + $0x68] sm:$0xff]
    %v1986 = vld [vmem:[%s3 + $0x70] sm:$0xff]
    %v1987 = vld [vmem:[%s3 + $0x78] sm:$0xff]
    %v1988 = vld [vmem:[%s8 + $0x2] sm:$0x3]
    %v1990 = vlaneseq
    %v1991 = vshrl.u32 %v1990, 7
    %v1992 = vsub.s32 0, %v1991
    %v1993 = vrot.slane %v1988, %v1992
    %v1994 = vlaneseq
    %v1995 = vshrl.u32 %v1994, 7
    %v1996 = vsub.s32 1, %v1995
    %v1997 = vrot.slane %v1988, %v1996
    %v2016 = vunpack.c.l.b16 %v1972
    %v2017 = vunpack.c.h.b16 %v1972
    %v2018 = vunpack.c.l.b16 %v1973
    %v2019 = vunpack.c.h.b16 %v1973
    %v2020 = vunpack.c.l.b16 %v1974
    %v2021 = vunpack.c.h.b16 %v1974
    %v2022 = vunpack.c.l.b16 %v1975
    %v2023 = vunpack.c.h.b16 %v1975
    %v2024 = vunpack.c.l.b16 %v1976
    %v2025 = vunpack.c.h.b16 %v1976
    %v2026 = vunpack.c.l.b16 %v1977
    %v2027 = vunpack.c.h.b16 %v1977
    %v2028 = vunpack.c.l.b16 %v1978
    %v2029 = vunpack.c.h.b16 %v1978
    %v2030 = vunpack.c.l.b16 %v1979
    %v2031 = vunpack.c.h.b16 %v1979
    %v2032 = vunpack.c.l.b16 %v1980
    %v2033 = vunpack.c.h.b16 %v1980
    %v2034 = vunpack.c.l.b16 %v1981
    %v2035 = vunpack.c.h.b16 %v1981
    %v2036 = vunpack.c.l.b16 %v1982
    %v2037 = vunpack.c.h.b16 %v1982
    %v2038 = vunpack.c.l.b16 %v1983
    %v2039 = vunpack.c.h.b16 %v1983
    %v2040 = vunpack.c.l.b16 %v1984
    %v2041 = vunpack.c.h.b16 %v1984
    %v2042 = vunpack.c.l.b16 %v1985
    %v2043 = vunpack.c.h.b16 %v1985
    %v2044 = vunpack.c.l.b16 %v1986
    %v2045 = vunpack.c.h.b16 %v1986
    %v2046 = vunpack.c.l.b16 %v1987
    %v2047 = vunpack.c.h.b16 %v1987
    %v2048 = vpack.c.b16 %v2018, %v2016
    %v2049 = vpack.c.b16 %v2019, %v2017
    %v2050 = vpack.c.b16 %v2022, %v2020
    %v2051 = vpack.c.b16 %v2023, %v2021
    %v2052 = vpack.c.b16 %v2026, %v2024
    %v2053 = vpack.c.b16 %v2027, %v2025
    %v2054 = vpack.c.b16 %v2030, %v2028
    %v2055 = vpack.c.b16 %v2031, %v2029
    %v2056 = vpack.c.b16 %v2034, %v2032
    %v2057 = vpack.c.b16 %v2035, %v2033
    %v2058 = vpack.c.b16 %v2038, %v2036
    %v2059 = vpack.c.b16 %v2039, %v2037
    %v2060 = vpack.c.b16 %v2042, %v2040
    %v2061 = vpack.c.b16 %v2043, %v2041
    %v2062 = vpack.c.b16 %v2046, %v2044
    %v2063 = vpack.c.b16 %v2047, %v2045
    %2080 = vmatprep.subr.bf16.mxu0 %v2049
    %2081 = vmatpush1.bf16.msra.mxu0 %v2048
    %2082 = vmatprep.subr.bf16.mxu0 %v2051
    %2083 = vmatpush1.bf16.msra.mxu0 %v2050
    %2084 = vmatprep.subr.bf16.mxu0 %v2053
    %2085 = vmatpush1.bf16.msra.mxu0 %v2052
    %2086 = vmatprep.subr.bf16.mxu0 %v2055
    %2087 = vmatpush1.bf16.msra.mxu0 %v2054
    %2088 = vmatprep.subr.bf16.mxu0 %v2057
    %2089 = vmatpush1.bf16.msra.mxu0 %v2056
    %2090 = vmatprep.subr.bf16.mxu0 %v2059
    %2091 = vmatpush1.bf16.msra.mxu0 %v2058
    %2092 = vmatprep.subr.bf16.mxu0 %v2061
    %2093 = vmatpush1.bf16.msra.mxu0 %v2060
    %2094 = vmatprep.subr.bf16.mxu0 %v2063
    %2095 = vmatpush1.bf16.msra.mxu0 %v2062
    %2096 = vmatprep.subr.bf16.mxu0 0
    %2097 = vmatpush1.bf16.msra.mxu0 0
    %2098 = vmatprep.subr.bf16.mxu0 0
    %2099 = vmatpush1.bf16.msra.mxu0 0
    %2100 = vmatprep.subr.bf16.mxu0 0
    %2101 = vmatpush1.bf16.msra.mxu0 0
    %2102 = vmatprep.subr.bf16.mxu0 0
    %2103 = vmatpush1.bf16.msra.mxu0 0
    %2104 = vmatprep.subr.bf16.mxu0 0
    %2105 = vmatpush1.bf16.msra.mxu0 0
    %2106 = vmatprep.subr.bf16.mxu0 0
    %2107 = vmatpush1.bf16.msra.mxu0 0
    %2108 = vmatprep.subr.bf16.mxu0 0
    %2109 = vmatpush1.bf16.msra.mxu0 0
    %2110 = vmatprep.subr.bf16.mxu0 0
    %2111 = vmatpush1.bf16.msra.mxu0 0
    %2112 = vmatprep.mubr.bf16.mxu0 0
    %2113 = vmatmul.mubr.bf16.gmra.mrb[0].mxu0 %v1940
    %v2114 = vpop.f32.mrb[0].mxu0
    %v2115 = vadd.f32 %v1993, %v2114
    %v2116 = vpop.f32.mrb[0].mxu0
    %v2117 = vadd.f32 %v1997, %v2116
    %v2118 = vpop.f32.mrb[0].mxu0
    %v2119 = vadd.f32 %v1993, %v2118
    %v2120 = vpop.f32.mrb[0].mxu0
    %v2121 = vadd.f32 %v1997, %v2120
    %2122 = vmatprep.mubr.bf16.mxu0 0
    %2123 = vmatmul.mubr.bf16.gmra.mrb[0].mxu0 %v1941
    %v2124 = vpop.f32.mrb[0].mxu0
    %v2125 = vadd.f32 %v1993, %v2124
    %v2126 = vpop.f32.mrb[0].mxu0
    %v2127 = vadd.f32 %v1997, %v2126
    %v2128 = vpop.f32.mrb[0].mxu0
    %v2129 = vadd.f32 %v1993, %v2128
    %v2130 = vpop.f32.mrb[0].mxu0
    %v2131 = vadd.f32 %v1997, %v2130
    %2132 = vmatprep.mubr.bf16.mxu0 0
    %2133 = vmatmul.mubr.bf16.gmra.mrb[0].mxu0 %v1942
    %v2134 = vpop.f32.mrb[0].mxu0
    %v2135 = vadd.f32 %v1993, %v2134
    %v2136 = vpop.f32.mrb[0].mxu0
    %v2137 = vadd.f32 %v1997, %v2136
    %v2138 = vpop.f32.mrb[0].mxu0
    %v2139 = vadd.f32 %v1993, %v2138
    %v2140 = vpop.f32.mrb[0].mxu0
    %v2141 = vadd.f32 %v1997, %v2140
    %2142 = vmatprep.mubr.bf16.mxu0 0
    %2143 = vmatmul.mubr.bf16.gmra.mrb[0].mxu0 %v1943
    %v2144 = vpop.f32.mrb[0].mxu0
    %v2145 = vadd.f32 %v1993, %v2144
    %v2146 = vpop.f32.mrb[0].mxu0
    %v2147 = vadd.f32 %v1997, %v2146
    %v2148 = vpop.f32.mrb[0].mxu0
    %v2149 = vadd.f32 %v1993, %v2148
    %v2150 = vpop.f32.mrb[0].mxu0
    %v2151 = vadd.f32 %v1997, %v2150
    %2152 = vmatprep.mubr.bf16.mxu0 0
    %2153 = vmatmul.mubr.bf16.gmra.mrb[0].mxu0 %v1944
    %v2154 = vpop.f32.mrb[0].mxu0
    %v2155 = vadd.f32 %v1993, %v2154
    %v2156 = vpop.f32.mrb[0].mxu0
    %v2157 = vadd.f32 %v1997, %v2156
    %v2158 = vpop.f32.mrb[0].mxu0
    %v2159 = vadd.f32 %v1993, %v2158
    %v2160 = vpop.f32.mrb[0].mxu0
    %v2161 = vadd.f32 %v1997, %v2160
    %2162 = vmatprep.mubr.bf16.mxu0 0
    %2163 = vmatmul.mubr.bf16.gmra.mrb[0].mxu0 %v1945
    %v2164 = vpop.f32.mrb[0].mxu0
    %v2165 = vadd.f32 %v1993, %v2164
    %v2166 = vpop.f32.mrb[0].mxu0
    %v2167 = vadd.f32 %v1997, %v2166
    %v2168 = vpop.f32.mrb[0].mxu0
    %v2169 = vadd.f32 %v1993, %v2168
    %v2170 = vpop.f32.mrb[0].mxu0
    %v2171 = vadd.f32 %v1997, %v2170
    %2172 = vmatprep.mubr.bf16.mxu0 0
    %2173 = vmatmul.mubr.bf16.gmra.mrb[0].mxu0 %v1946
    %v2174 = vpop.f32.mrb[0].mxu0
    %v2175 = vadd.f32 %v1993, %v2174
    %v2176 = vpop.f32.mrb[0].mxu0
    %v2177 = vadd.f32 %v1997, %v2176
    %v2178 = vpop.f32.mrb[0].mxu0
    %v2179 = vadd.f32 %v1993, %v2178
    %v2180 = vpop.f32.mrb[0].mxu0
    %v2181 = vadd.f32 %v1997, %v2180
    %2182 = vmatprep.mubr.bf16.mxu0 0
    %2183 = vmatmul.mubr.bf16.gmra.mrb[0].mxu0 %v1947
    %v2184 = vpop.f32.mrb[0].mxu0
    %v2185 = vadd.f32 %v1993, %v2184
    %v2186 = vpop.f32.mrb[0].mxu0
    %v2187 = vadd.f32 %v1997, %v2186
    %v2188 = vpop.f32.mrb[0].mxu0
    %v2189 = vadd.f32 %v1993, %v2188
    %v2190 = vpop.f32.mrb[0].mxu0
    %v2191 = vadd.f32 %v1997, %v2190
    %2192 = vmatprep.mubr.bf16.mxu0 0
    %2193 = vmatmul.mubr.bf16.gmra.mrb[0].mxu0 %v1948
    %v2194 = vpop.f32.mrb[0].mxu0
    %v2195 = vadd.f32 %v1993, %v2194
    %v2196 = vpop.f32.mrb[0].mxu0
    %v2197 = vadd.f32 %v1997, %v2196
    %v2198 = vpop.f32.mrb[0].mxu0
    %v2199 = vadd.f32 %v1993, %v2198
    %v2200 = vpop.f32.mrb[0].mxu0
    %v2201 = vadd.f32 %v1997, %v2200
    %2202 = vmatprep.mubr.bf16.mxu0 0
    %2203 = vmatmul.mubr.bf16.gmra.mrb[0].mxu0 %v1949
    %v2204 = vpop.f32.mrb[0].mxu0
    %v2205 = vadd.f32 %v1993, %v2204
    %v2206 = vpop.f32.mrb[0].mxu0
    %v2207 = vadd.f32 %v1997, %v2206
    %v2208 = vpop.f32.mrb[0].mxu0
    %v2209 = vadd.f32 %v1993, %v2208
    %v2210 = vpop.f32.mrb[0].mxu0
    %v2211 = vadd.f32 %v1997, %v2210
    %2212 = vmatprep.mubr.bf16.mxu0 0
    %2213 = vmatmul.mubr.bf16.gmra.mrb[0].mxu0 %v1950
    %v2214 = vpop.f32.mrb[0].mxu0
    %v2215 = vadd.f32 %v1993, %v2214
    %v2216 = vpop.f32.mrb[0].mxu0
    %v2217 = vadd.f32 %v1997, %v2216
    %v2218 = vpop.f32.mrb[0].mxu0
    %v2219 = vadd.f32 %v1993, %v2218
    %v2220 = vpop.f32.mrb[0].mxu0
    %v2221 = vadd.f32 %v1997, %v2220
    %2222 = vmatprep.mubr.bf16.mxu0 0
    %2223 = vmatmul.mubr.bf16.gmra.mrb[0].mxu0 %v1951
    %v2224 = vpop.f32.mrb[0].mxu0
    %v2225 = vadd.f32 %v1993, %v2224
    %v2226 = vpop.f32.mrb[0].mxu0
    %v2227 = vadd.f32 %v1997, %v2226
    %v2228 = vpop.f32.mrb[0].mxu0
    %v2229 = vadd.f32 %v1993, %v2228
    %v2230 = vpop.f32.mrb[0].mxu0
    %v2231 = vadd.f32 %v1997, %v2230
    %2232 = vmatprep.mubr.bf16.mxu0 0
    %2233 = vmatmul.mubr.bf16.gmra.mrb[0].mxu0 %v1952
    %v2234 = vpop.f32.mrb[0].mxu0
    %v2235 = vadd.f32 %v1993, %v2234
    %v2236 = vpop.f32.mrb[0].mxu0
    %v2237 = vadd.f32 %v1997, %v2236
    %v2238 = vpop.f32.mrb[0].mxu0
    %v2239 = vadd.f32 %v1993, %v2238
    %v2240 = vpop.f32.mrb[0].mxu0
    %v2241 = vadd.f32 %v1997, %v2240
    %2242 = vmatprep.mubr.bf16.mxu0 0
    %2243 = vmatmul.mubr.bf16.gmra.mrb[0].mxu0 %v1953
    %v2244 = vpop.f32.mrb[0].mxu0
    %v2245 = vadd.f32 %v1993, %v2244
    %v2246 = vpop.f32.mrb[0].mxu0
    %v2247 = vadd.f32 %v1997, %v2246
    %v2248 = vpop.f32.mrb[0].mxu0
    %v2249 = vadd.f32 %v1993, %v2248
    %v2250 = vpop.f32.mrb[0].mxu0
    %v2251 = vadd.f32 %v1997, %v2250
    %2252 = vmatprep.mubr.bf16.mxu0 0
    %2253 = vmatmul.mubr.bf16.gmra.mrb[0].mxu0 %v1954
    %v2254 = vpop.f32.mrb[0].mxu0
    %v2255 = vadd.f32 %v1993, %v2254
    %v2256 = vpop.f32.mrb[0].mxu0
    %v2257 = vadd.f32 %v1997, %v2256
    %v2258 = vpop.f32.mrb[0].mxu0
    %v2259 = vadd.f32 %v1993, %v2258
    %v2260 = vpop.f32.mrb[0].mxu0
    %v2261 = vadd.f32 %v1997, %v2260
    %2262 = vmatprep.mubr.bf16.mxu0 0
    %2263 = vmatmul.mubr.bf16.gmra.mrb[0].mxu0 %v1955
    %v2264 = vpop.f32.mrb[0].mxu0
    %v2265 = vadd.f32 %v1993, %v2264
    %v2266 = vpop.f32.mrb[0].mxu0
    %v2267 = vadd.f32 %v1997, %v2266
    %v2268 = vpop.f32.mrb[0].mxu0
    %v2269 = vadd.f32 %v1993, %v2268
    %v2270 = vpop.f32.mrb[0].mxu0
    %v2271 = vadd.f32 %v1997, %v2270
    %2272 = vmatprep.mubr.bf16.mxu0 0
    %2273 = vmatmul.mubr.bf16.gmra.mrb[0].mxu0 %v1956
    %v2274 = vpop.f32.mrb[0].mxu0
    %v2275 = vadd.f32 %v1993, %v2274
    %v2276 = vpop.f32.mrb[0].mxu0
    %v2277 = vadd.f32 %v1997, %v2276
    %v2278 = vpop.f32.mrb[0].mxu0
    %v2279 = vadd.f32 %v1993, %v2278
    %v2280 = vpop.f32.mrb[0].mxu0
    %v2281 = vadd.f32 %v1997, %v2280
    %2282 = vmatprep.mubr.bf16.mxu0 0
    %2283 = vmatmul.mubr.bf16.gmra.mrb[0].mxu0 %v1957
    %v2284 = vpop.f32.mrb[0].mxu0
    %v2285 = vadd.f32 %v1993, %v2284
    %v2286 = vpop.f32.mrb[0].mxu0
    %v2287 = vadd.f32 %v1997, %v2286
    %v2288 = vpop.f32.mrb[0].mxu0
    %v2289 = vadd.f32 %v1993, %v2288
    %v2290 = vpop.f32.mrb[0].mxu0
    %v2291 = vadd.f32 %v1997, %v2290
    %2292 = vmatprep.mubr.bf16.mxu0 0
    %2293 = vmatmul.mubr.bf16.gmra.mrb[0].mxu0 %v1958
    %v2294 = vpop.f32.mrb[0].mxu0
    %v2295 = vadd.f32 %v1993, %v2294
    %v2296 = vpop.f32.mrb[0].mxu0
    %v2297 = vadd.f32 %v1997, %v2296
    %v2298 = vpop.f32.mrb[0].mxu0
    %v2299 = vadd.f32 %v1993, %v2298
    %v2300 = vpop.f32.mrb[0].mxu0
    %v2301 = vadd.f32 %v1997, %v2300
    %2302 = vmatprep.mubr.bf16.mxu0 0
    %2303 = vmatmul.mubr.bf16.gmra.mrb[0].mxu0 %v1959
    %v2304 = vpop.f32.mrb[0].mxu0
    %v2305 = vadd.f32 %v1993, %v2304
    %v2306 = vpop.f32.mrb[0].mxu0
    %v2307 = vadd.f32 %v1997, %v2306
    %v2308 = vpop.f32.mrb[0].mxu0
    %v2309 = vadd.f32 %v1993, %v2308
    %v2310 = vpop.f32.mrb[0].mxu0
    %v2311 = vadd.f32 %v1997, %v2310
    %2312 = vmatprep.mubr.bf16.mxu0 0
    %2313 = vmatmul.mubr.bf16.gmra.mrb[0].mxu0 %v1960
    %v2314 = vpop.f32.mrb[0].mxu0
    %v2315 = vadd.f32 %v1993, %v2314
    %v2316 = vpop.f32.mrb[0].mxu0
    %v2317 = vadd.f32 %v1997, %v2316
    %v2318 = vpop.f32.mrb[0].mxu0
    %v2319 = vadd.f32 %v1993, %v2318
    %v2320 = vpop.f32.mrb[0].mxu0
    %v2321 = vadd.f32 %v1997, %v2320
    %2322 = vmatprep.mubr.bf16.mxu0 0
    %2323 = vmatmul.mubr.bf16.gmra.mrb[0].mxu0 %v1961
    %v2324 = vpop.f32.mrb[0].mxu0
    %v2325 = vadd.f32 %v1993, %v2324
    %v2326 = vpop.f32.mrb[0].mxu0
    %v2327 = vadd.f32 %v1997, %v2326
    %v2328 = vpop.f32.mrb[0].mxu0
    %v2329 = vadd.f32 %v1993, %v2328
    %v2330 = vpop.f32.mrb[0].mxu0
    %v2331 = vadd.f32 %v1997, %v2330
    %2332 = vmatprep.mubr.bf16.mxu0 0
    %2333 = vmatmul.mubr.bf16.gmra.mrb[0].mxu0 %v1962
    %v2334 = vpop.f32.mrb[0].mxu0
    %v2335 = vadd.f32 %v1993, %v2334
    %v2336 = vpop.f32.mrb[0].mxu0
    %v2337 = vadd.f32 %v1997, %v2336
    %v2338 = vpop.f32.mrb[0].mxu0
    %v2339 = vadd.f32 %v1993, %v2338
    %v2340 = vpop.f32.mrb[0].mxu0
    %v2341 = vadd.f32 %v1997, %v2340
    %2342 = vmatprep.mubr.bf16.mxu0 0
    %2343 = vmatmul.mubr.bf16.gmra.mrb[0].mxu0 %v1963
    %v2344 = vpop.f32.mrb[0].mxu0
    %v2345 = vadd.f32 %v1993, %v2344
    %v2346 = vpop.f32.mrb[0].mxu0
    %v2347 = vadd.f32 %v1997, %v2346
    %v2348 = vpop.f32.mrb[0].mxu0
    %v2349 = vadd.f32 %v1993, %v2348
    %v2350 = vpop.f32.mrb[0].mxu0
    %v2351 = vadd.f32 %v1997, %v2350
    %2352 = vmatprep.mubr.bf16.mxu0 0
    %2353 = vmatmul.mubr.bf16.gmra.mrb[0].mxu0 %v1964
    %v2354 = vpop.f32.mrb[0].mxu0
    %v2355 = vadd.f32 %v1993, %v2354
    %v2356 = vpop.f32.mrb[0].mxu0
    %v2357 = vadd.f32 %v1997, %v2356
    %v2358 = vpop.f32.mrb[0].mxu0
    %v2359 = vadd.f32 %v1993, %v2358
    %v2360 = vpop.f32.mrb[0].mxu0
    %v2361 = vadd.f32 %v1997, %v2360
    %2362 = vmatprep.mubr.bf16.mxu0 0
    %2363 = vmatmul.mubr.bf16.gmra.mrb[0].mxu0 %v1965
    %v2364 = vpop.f32.mrb[0].mxu0
    %v2365 = vadd.f32 %v1993, %v2364
    %v2366 = vpop.f32.mrb[0].mxu0
    %v2367 = vadd.f32 %v1997, %v2366
    %v2368 = vpop.f32.mrb[0].mxu0
    %v2369 = vadd.f32 %v1993, %v2368
    %v2370 = vpop.f32.mrb[0].mxu0
    %v2371 = vadd.f32 %v1997, %v2370
    %2372 = vmatprep.mubr.bf16.mxu0 0
    %2373 = vmatmul.mubr.bf16.gmra.mrb[0].mxu0 %v1966
    %v2374 = vpop.f32.mrb[0].mxu0
    %v2375 = vadd.f32 %v1993, %v2374
    %v2376 = vpop.f32.mrb[0].mxu0
    %v2377 = vadd.f32 %v1997, %v2376
    %v2378 = vpop.f32.mrb[0].mxu0
    %v2379 = vadd.f32 %v1993, %v2378
    %v2380 = vpop.f32.mrb[0].mxu0
    %v2381 = vadd.f32 %v1997, %v2380
    %2382 = vmatprep.mubr.bf16.mxu0 0
    %2383 = vmatmul.mubr.bf16.gmra.mrb[0].mxu0 %v1967
    %v2384 = vpop.f32.mrb[0].mxu0
    %v2385 = vadd.f32 %v1993, %v2384
    %v2386 = vpop.f32.mrb[0].mxu0
    %v2387 = vadd.f32 %v1997, %v2386
    %v2388 = vpop.f32.mrb[0].mxu0
    %v2389 = vadd.f32 %v1993, %v2388
    %v2390 = vpop.f32.mrb[0].mxu0
    %v2391 = vadd.f32 %v1997, %v2390
    %2392 = vmatprep.mubr.bf16.mxu0 0
    %2393 = vmatmul.mubr.bf16.gmra.mrb[0].mxu0 %v1968
    %v2394 = vpop.f32.mrb[0].mxu0
    %v2395 = vadd.f32 %v1993, %v2394
    %v2396 = vpop.f32.mrb[0].mxu0
    %v2397 = vadd.f32 %v1997, %v2396
    %v2398 = vpop.f32.mrb[0].mxu0
    %v2399 = vadd.f32 %v1993, %v2398
    %v2400 = vpop.f32.mrb[0].mxu0
    %v2401 = vadd.f32 %v1997, %v2400
    %2402 = vmatprep.mubr.bf16.mxu0 0
    %2403 = vmatmul.mubr.bf16.gmra.mrb[0].mxu0 %v1969
    %v2404 = vpop.f32.mrb[0].mxu0
    %v2405 = vadd.f32 %v1993, %v2404
    %v2406 = vpop.f32.mrb[0].mxu0
    %v2407 = vadd.f32 %v1997, %v2406
    %v2408 = vpop.f32.mrb[0].mxu0
    %v2409 = vadd.f32 %v1993, %v2408
    %v2410 = vpop.f32.mrb[0].mxu0
    %v2411 = vadd.f32 %v1997, %v2410
    %2412 = vmatprep.mubr.bf16.mxu0 0
    %2413 = vmatmul.mubr.bf16.gmra.mrb[0].mxu0 %v1970
    %v2414 = vpop.f32.mrb[0].mxu0
    %v2415 = vadd.f32 %v1993, %v2414
    %v2416 = vpop.f32.mrb[0].mxu0
    %v2417 = vadd.f32 %v1997, %v2416
    %v2418 = vpop.f32.mrb[0].mxu0
    %v2419 = vadd.f32 %v1993, %v2418
    %v2420 = vpop.f32.mrb[0].mxu0
    %v2421 = vadd.f32 %v1997, %v2420
    %2422 = vmatprep.mubr.bf16.mxu0 0
    %2423 = vmatmul.mubr.bf16.gmra.mrb[0].mxu0 %v1971
    %v2424 = vpop.f32.mrb[0].mxu0
    %v2425 = vadd.f32 %v1993, %v2424
    %v2426 = vpop.f32.mrb[0].mxu0
    %v2427 = vadd.f32 %v1997, %v2426
    %v2428 = vpop.f32.mrb[0].mxu0
    %v2429 = vadd.f32 %v1993, %v2428
    %v2430 = vpop.f32.mrb[0].mxu0
    %v2431 = vadd.f32 %v1997, %v2430
    %2432 = vdwg.mxu0
    %v2433 = vmax.f32 %v2115, 0.0
    %v2434 = vmax.f32 %v2117, 0.0
    %v2435 = vmax.f32 %v2119, 0.0
    %v2436 = vmax.f32 %v2121, 0.0
    %v2437 = vmax.f32 %v2125, 0.0
    %v2438 = vmax.f32 %v2127, 0.0
    %v2439 = vmax.f32 %v2129, 0.0
    %v2440 = vmax.f32 %v2131, 0.0
    %v2441 = vmax.f32 %v2135, 0.0
    %v2442 = vmax.f32 %v2137, 0.0
    %v2443 = vmax.f32 %v2139, 0.0
    %v2444 = vmax.f32 %v2141, 0.0
    %v2445 = vmax.f32 %v2145, 0.0
    %v2446 = vmax.f32 %v2147, 0.0
    %v2447 = vmax.f32 %v2149, 0.0
    %v2448 = vmax.f32 %v2151, 0.0
    %v2449 = vmax.f32 %v2155, 0.0
    %v2450 = vmax.f32 %v2157, 0.0
    %v2451 = vmax.f32 %v2159, 0.0
    %v2452 = vmax.f32 %v2161, 0.0
    %v2453 = vmax.f32 %v2165, 0.0
    %v2454 = vmax.f32 %v2167, 0.0
    %v2455 = vmax.f32 %v2169, 0.0
    %v2456 = vmax.f32 %v2171, 0.0
    %v2457 = vmax.f32 %v2175, 0.0
    %v2458 = vmax.f32 %v2177, 0.0
    %v2459 = vmax.f32 %v2179, 0.0
    %v2460 = vmax.f32 %v2181, 0.0
    %v2461 = vmax.f32 %v2185, 0.0
    %v2462 = vmax.f32 %v2187, 0.0
    %v2463 = vmax.f32 %v2189, 0.0
    %v2464 = vmax.f32 %v2191, 0.0
    %v2465 = vmax.f32 %v2195, 0.0
    %v2466 = vmax.f32 %v2197, 0.0
    %v2467 = vmax.f32 %v2199, 0.0
    %v2468 = vmax.f32 %v2201, 0.0
    %v2469 = vmax.f32 %v2205, 0.0
    %v2470 = vmax.f32 %v2207, 0.0
    %v2471 = vmax.f32 %v2209, 0.0
    %v2472 = vmax.f32 %v2211, 0.0
    %v2473 = vmax.f32 %v2215, 0.0
    %v2474 = vmax.f32 %v2217, 0.0
    %v2475 = vmax.f32 %v2219, 0.0
    %v2476 = vmax.f32 %v2221, 0.0
    %v2477 = vmax.f32 %v2225, 0.0
    %v2478 = vmax.f32 %v2227, 0.0
    %v2479 = vmax.f32 %v2229, 0.0
    %v2480 = vmax.f32 %v2231, 0.0
    %v2481 = vmax.f32 %v2235, 0.0
    %v2482 = vmax.f32 %v2237, 0.0
    %v2483 = vmax.f32 %v2239, 0.0
    %v2484 = vmax.f32 %v2241, 0.0
    %v2485 = vmax.f32 %v2245, 0.0
    %v2486 = vmax.f32 %v2247, 0.0
    %v2487 = vmax.f32 %v2249, 0.0
    %v2488 = vmax.f32 %v2251, 0.0
    %v2489 = vmax.f32 %v2255, 0.0
    %v2490 = vmax.f32 %v2257, 0.0
    %v2491 = vmax.f32 %v2259, 0.0
    %v2492 = vmax.f32 %v2261, 0.0
    %v2493 = vmax.f32 %v2265, 0.0
    %v2494 = vmax.f32 %v2267, 0.0
    %v2495 = vmax.f32 %v2269, 0.0
    %v2496 = vmax.f32 %v2271, 0.0
    %v2497 = vmax.f32 %v2275, 0.0
    %v2498 = vmax.f32 %v2277, 0.0
    %v2499 = vmax.f32 %v2279, 0.0
    %v2500 = vmax.f32 %v2281, 0.0
    %v2501 = vmax.f32 %v2285, 0.0
    %v2502 = vmax.f32 %v2287, 0.0
    %v2503 = vmax.f32 %v2289, 0.0
    %v2504 = vmax.f32 %v2291, 0.0
    %v2505 = vmax.f32 %v2295, 0.0
    %v2506 = vmax.f32 %v2297, 0.0
    %v2507 = vmax.f32 %v2299, 0.0
    %v2508 = vmax.f32 %v2301, 0.0
    %v2509 = vmax.f32 %v2305, 0.0
    %v2510 = vmax.f32 %v2307, 0.0
    %v2511 = vmax.f32 %v2309, 0.0
    %v2512 = vmax.f32 %v2311, 0.0
    %v2513 = vmax.f32 %v2315, 0.0
    %v2514 = vmax.f32 %v2317, 0.0
    %v2515 = vmax.f32 %v2319, 0.0
    %v2516 = vmax.f32 %v2321, 0.0
    %v2517 = vmax.f32 %v2325, 0.0
    %v2518 = vmax.f32 %v2327, 0.0
    %v2519 = vmax.f32 %v2329, 0.0
    %v2520 = vmax.f32 %v2331, 0.0
    %v2521 = vmax.f32 %v2335, 0.0
    %v2522 = vmax.f32 %v2337, 0.0
    %v2523 = vmax.f32 %v2339, 0.0
    %v2524 = vmax.f32 %v2341, 0.0
    %v2525 = vmax.f32 %v2345, 0.0
    %v2526 = vmax.f32 %v2347, 0.0
    %v2527 = vmax.f32 %v2349, 0.0
    %v2528 = vmax.f32 %v2351, 0.0
    %v2529 = vmax.f32 %v2355, 0.0
    %v2530 = vmax.f32 %v2357, 0.0
    %v2531 = vmax.f32 %v2359, 0.0
    %v2532 = vmax.f32 %v2361, 0.0
    %v2533 = vmax.f32 %v2365, 0.0
    %v2534 = vmax.f32 %v2367, 0.0
    %v2535 = vmax.f32 %v2369, 0.0
    %v2536 = vmax.f32 %v2371, 0.0
    %v2537 = vmax.f32 %v2375, 0.0
    %v2538 = vmax.f32 %v2377, 0.0
    %v2539 = vmax.f32 %v2379, 0.0
    %v2540 = vmax.f32 %v2381, 0.0
    %v2541 = vmax.f32 %v2385, 0.0
    %v2542 = vmax.f32 %v2387, 0.0
    %v2543 = vmax.f32 %v2389, 0.0
    %v2544 = vmax.f32 %v2391, 0.0
    %v2545 = vmax.f32 %v2395, 0.0
    %v2546 = vmax.f32 %v2397, 0.0
    %v2547 = vmax.f32 %v2399, 0.0
    %v2548 = vmax.f32 %v2401, 0.0
    %v2549 = vmax.f32 %v2405, 0.0
    %v2550 = vmax.f32 %v2407, 0.0
    %v2551 = vmax.f32 %v2409, 0.0
    %v2552 = vmax.f32 %v2411, 0.0
    %v2553 = vmax.f32 %v2415, 0.0
    %v2554 = vmax.f32 %v2417, 0.0
    %v2555 = vmax.f32 %v2419, 0.0
    %v2556 = vmax.f32 %v2421, 0.0
    %v2557 = vmax.f32 %v2425, 0.0
    %v2558 = vmax.f32 %v2427, 0.0
    %v2559 = vmax.f32 %v2429, 0.0
    %v2560 = vmax.f32 %v2431, 0.0
    %v2561 = vpack.c.bf16 %v2435, %v2433
    %v2562 = vpack.c.bf16 %v2436, %v2434
    %v2563 = vpack.c.bf16 %v2439, %v2437
    %v2564 = vpack.c.bf16 %v2440, %v2438
    %v2565 = vpack.c.bf16 %v2443, %v2441
    %v2566 = vpack.c.bf16 %v2444, %v2442
    %v2567 = vpack.c.bf16 %v2447, %v2445
    %v2568 = vpack.c.bf16 %v2448, %v2446
    %v2569 = vpack.c.bf16 %v2451, %v2449
    %v2570 = vpack.c.bf16 %v2452, %v2450
    %v2571 = vpack.c.bf16 %v2455, %v2453
    %v2572 = vpack.c.bf16 %v2456, %v2454
    %v2573 = vpack.c.bf16 %v2459, %v2457
    %v2574 = vpack.c.bf16 %v2460, %v2458
    %v2575 = vpack.c.bf16 %v2463, %v2461
    %v2576 = vpack.c.bf16 %v2464, %v2462
    %v2577 = vpack.c.bf16 %v2467, %v2465
    %v2578 = vpack.c.bf16 %v2468, %v2466
    %v2579 = vpack.c.bf16 %v2471, %v2469
    %v2580 = vpack.c.bf16 %v2472, %v2470
    %v2581 = vpack.c.bf16 %v2475, %v2473
    %v2582 = vpack.c.bf16 %v2476, %v2474
    %v2583 = vpack.c.bf16 %v2479, %v2477
    %v2584 = vpack.c.bf16 %v2480, %v2478
    %v2585 = vpack.c.bf16 %v2483, %v2481
    %v2586 = vpack.c.bf16 %v2484, %v2482
    %v2587 = vpack.c.bf16 %v2487, %v2485
    %v2588 = vpack.c.bf16 %v2488, %v2486
    %v2589 = vpack.c.bf16 %v2491, %v2489
    %v2590 = vpack.c.bf16 %v2492, %v2490
    %v2591 = vpack.c.bf16 %v2495, %v2493
    %v2592 = vpack.c.bf16 %v2496, %v2494
    %v2593 = vpack.c.bf16 %v2499, %v2497
    %v2594 = vpack.c.bf16 %v2500, %v2498
    %v2595 = vpack.c.bf16 %v2503, %v2501
    %v2596 = vpack.c.bf16 %v2504, %v2502
    %v2597 = vpack.c.bf16 %v2507, %v2505
    %v2598 = vpack.c.bf16 %v2508, %v2506
    %v2599 = vpack.c.bf16 %v2511, %v2509
    %v2600 = vpack.c.bf16 %v2512, %v2510
    %v2601 = vpack.c.bf16 %v2515, %v2513
    %v2602 = vpack.c.bf16 %v2516, %v2514
    %v2603 = vpack.c.bf16 %v2519, %v2517
    %v2604 = vpack.c.bf16 %v2520, %v2518
    %v2605 = vpack.c.bf16 %v2523, %v2521
    %v2606 = vpack.c.bf16 %v2524, %v2522
    %v2607 = vpack.c.bf16 %v2527, %v2525
    %v2608 = vpack.c.bf16 %v2528, %v2526
    %v2609 = vpack.c.bf16 %v2531, %v2529
    %v2610 = vpack.c.bf16 %v2532, %v2530
    %v2611 = vpack.c.bf16 %v2535, %v2533
    %v2612 = vpack.c.bf16 %v2536, %v2534
    %v2613 = vpack.c.bf16 %v2539, %v2537
    %v2614 = vpack.c.bf16 %v2540, %v2538
    %v2615 = vpack.c.bf16 %v2543, %v2541
    %v2616 = vpack.c.bf16 %v2544, %v2542
    %v2617 = vpack.c.bf16 %v2547, %v2545
    %v2618 = vpack.c.bf16 %v2548, %v2546
    %v2619 = vpack.c.bf16 %v2551, %v2549
    %v2620 = vpack.c.bf16 %v2552, %v2550
    %v2621 = vpack.c.bf16 %v2555, %v2553
    %v2622 = vpack.c.bf16 %v2556, %v2554
    %v2623 = vpack.c.bf16 %v2559, %v2557
    %v2624 = vpack.c.bf16 %v2560, %v2558
    %v2625 = vld [vmem:[%s4] sm:$0xff]
    %v2626 = vld [vmem:[%s4 + $0x8] sm:$0xff]
    %v2627 = vld [vmem:[%s4 + $0x10] sm:$0xff]
    %v2628 = vld [vmem:[%s4 + $0x18] sm:$0xff]
    %v2629 = vld [vmem:[%s4 + $0x20] sm:$0xff]
    %v2630 = vld [vmem:[%s4 + $0x28] sm:$0xff]
    %v2631 = vld [vmem:[%s4 + $0x30] sm:$0xff]
    %v2632 = vld [vmem:[%s4 + $0x38] sm:$0xff]
    %v2633 = vld [vmem:[%s4 + $0x40] sm:$0xff]
    %v2634 = vld [vmem:[%s4 + $0x48] sm:$0xff]
    %v2635 = vld [vmem:[%s4 + $0x50] sm:$0xff]
    %v2636 = vld [vmem:[%s4 + $0x58] sm:$0xff]
    %v2637 = vld [vmem:[%s4 + $0x60] sm:$0xff]
    %v2638 = vld [vmem:[%s4 + $0x68] sm:$0xff]
    %v2639 = vld [vmem:[%s4 + $0x70] sm:$0xff]
    %v2640 = vld [vmem:[%s4 + $0x78] sm:$0xff]
    %v2641 = vld [vmem:[%s4 + $0x80] sm:$0xff]
    %v2642 = vld [vmem:[%s4 + $0x88] sm:$0xff]
    %v2643 = vld [vmem:[%s4 + $0x90] sm:$0xff]
    %v2644 = vld [vmem:[%s4 + $0x98] sm:$0xff]
    %v2645 = vld [vmem:[%s4 + $0xa0] sm:$0xff]
    %v2646 = vld [vmem:[%s4 + $0xa8] sm:$0xff]
    %v2647 = vld [vmem:[%s4 + $0xb0] sm:$0xff]
    %v2648 = vld [vmem:[%s4 + $0xb8] sm:$0xff]
    %v2649 = vld [vmem:[%s4 + $0xc0] sm:$0xff]
    %v2650 = vld [vmem:[%s4 + $0xc8] sm:$0xff]
    %v2651 = vld [vmem:[%s4 + $0xd0] sm:$0xff]
    %v2652 = vld [vmem:[%s4 + $0xd8] sm:$0xff]
    %v2653 = vld [vmem:[%s4 + $0xe0] sm:$0xff]
    %v2654 = vld [vmem:[%s4 + $0xe8] sm:$0xff]
    %v2655 = vld [vmem:[%s4 + $0xf0] sm:$0xff]
    %v2656 = vld [vmem:[%s4 + $0xf8] sm:$0xff]
    %v2657 = vld [vmem:[%s4 + $0x100] sm:$0xff]
    %v2658 = vld [vmem:[%s4 + $0x108] sm:$0xff]
    %v2659 = vld [vmem:[%s4 + $0x110] sm:$0xff]
    %v2660 = vld [vmem:[%s4 + $0x118] sm:$0xff]
    %v2661 = vld [vmem:[%s4 + $0x120] sm:$0xff]
    %v2662 = vld [vmem:[%s4 + $0x128] sm:$0xff]
    %v2663 = vld [vmem:[%s4 + $0x130] sm:$0xff]
    %v2664 = vld [vmem:[%s4 + $0x138] sm:$0xff]
    %v2665 = vld [vmem:[%s4 + $0x140] sm:$0xff]
    %v2666 = vld [vmem:[%s4 + $0x148] sm:$0xff]
    %v2667 = vld [vmem:[%s4 + $0x150] sm:$0xff]
    %v2668 = vld [vmem:[%s4 + $0x158] sm:$0xff]
    %v2669 = vld [vmem:[%s4 + $0x160] sm:$0xff]
    %v2670 = vld [vmem:[%s4 + $0x168] sm:$0xff]
    %v2671 = vld [vmem:[%s4 + $0x170] sm:$0xff]
    %v2672 = vld [vmem:[%s4 + $0x178] sm:$0xff]
    %v2673 = vld [vmem:[%s4 + $0x180] sm:$0xff]
    %v2674 = vld [vmem:[%s4 + $0x188] sm:$0xff]
    %v2675 = vld [vmem:[%s4 + $0x190] sm:$0xff]
    %v2676 = vld [vmem:[%s4 + $0x198] sm:$0xff]
    %v2677 = vld [vmem:[%s4 + $0x1a0] sm:$0xff]
    %v2678 = vld [vmem:[%s4 + $0x1a8] sm:$0xff]
    %v2679 = vld [vmem:[%s4 + $0x1b0] sm:$0xff]
    %v2680 = vld [vmem:[%s4 + $0x1b8] sm:$0xff]
    %v2681 = vld [vmem:[%s4 + $0x1c0] sm:$0xff]
    %v2682 = vld [vmem:[%s4 + $0x1c8] sm:$0xff]
    %v2683 = vld [vmem:[%s4 + $0x1d0] sm:$0xff]
    %v2684 = vld [vmem:[%s4 + $0x1d8] sm:$0xff]
    %v2685 = vld [vmem:[%s4 + $0x1e0] sm:$0xff]
    %v2686 = vld [vmem:[%s4 + $0x1e8] sm:$0xff]
    %v2687 = vld [vmem:[%s4 + $0x1f0] sm:$0xff]
    %v2688 = vld [vmem:[%s4 + $0x1f8] sm:$0xff]
    %v2689 = vld [vmem:[%s8 + $0x4] sm:$0xf]
    %v2691 = vlaneseq
    %v2692 = vshrl.u32 %v2691, 7
    %v2693 = vsub.s32 0, %v2692
    %v2694 = vrot.slane %v2689, %v2693
    %v2695 = vlaneseq
    %v2696 = vshrl.u32 %v2695, 7
    %v2697 = vsub.s32 1, %v2696
    %v2698 = vrot.slane %v2689, %v2697
    %v2699 = vlaneseq
    %v2700 = vshrl.u32 %v2699, 7
    %v2701 = vsub.s32 2, %v2700
    %v2702 = vrot.slane %v2689, %v2701
    %v2703 = vlaneseq
    %v2704 = vshrl.u32 %v2703, 7
    %v2705 = vsub.s32 3, %v2704
    %v2706 = vrot.slane %v2689, %v2705
    %v2775 = vunpack.c.l.b16 %v2625
    %v2776 = vunpack.c.h.b16 %v2625
    %v2777 = vunpack.c.l.b16 %v2626
    %v2778 = vunpack.c.h.b16 %v2626
    %v2779 = vunpack.c.l.b16 %v2627
    %v2780 = vunpack.c.h.b16 %v2627
    %v2781 = vunpack.c.l.b16 %v2628
    %v2782 = vunpack.c.h.b16 %v2628
    %v2783 = vunpack.c.l.b16 %v2629
    %v2784 = vunpack.c.h.b16 %v2629
    %v2785 = vunpack.c.l.b16 %v2630
    %v2786 = vunpack.c.h.b16 %v2630
    %v2787 = vunpack.c.l.b16 %v2631
    %v2788 = vunpack.c.h.b16 %v2631
    %v2789 = vunpack.c.l.b16 %v2632
    %v2790 = vunpack.c.h.b16 %v2632
    %v2791 = vunpack.c.l.b16 %v2633
    %v2792 = vunpack.c.h.b16 %v2633
    %v2793 = vunpack.c.l.b16 %v2634
    %v2794 = vunpack.c.h.b16 %v2634
    %v2795 = vunpack.c.l.b16 %v2635
    %v2796 = vunpack.c.h.b16 %v2635
    %v2797 = vunpack.c.l.b16 %v2636
    %v2798 = vunpack.c.h.b16 %v2636
    %v2799 = vunpack.c.l.b16 %v2637
    %v2800 = vunpack.c.h.b16 %v2637
    %v2801 = vunpack.c.l.b16 %v2638
    %v2802 = vunpack.c.h.b16 %v2638
    %v2803 = vunpack.c.l.b16 %v2639
    %v2804 = vunpack.c.h.b16 %v2639
    %v2805 = vunpack.c.l.b16 %v2640
    %v2806 = vunpack.c.h.b16 %v2640
    %v2807 = vunpack.c.l.b16 %v2641
    %v2808 = vunpack.c.h.b16 %v2641
    %v2809 = vunpack.c.l.b16 %v2642
    %v2810 = vunpack.c.h.b16 %v2642
    %v2811 = vunpack.c.l.b16 %v2643
    %v2812 = vunpack.c.h.b16 %v2643
    %v2813 = vunpack.c.l.b16 %v2644
    %v2814 = vunpack.c.h.b16 %v2644
    %v2815 = vunpack.c.l.b16 %v2645
    %v2816 = vunpack.c.h.b16 %v2645
    %v2817 = vunpack.c.l.b16 %v2646
    %v2818 = vunpack.c.h.b16 %v2646
    %v2819 = vunpack.c.l.b16 %v2647
    %v2820 = vunpack.c.h.b16 %v2647
    %v2821 = vunpack.c.l.b16 %v2648
    %v2822 = vunpack.c.h.b16 %v2648
    %v2823 = vunpack.c.l.b16 %v2649
    %v2824 = vunpack.c.h.b16 %v2649
    %v2825 = vunpack.c.l.b16 %v2650
    %v2826 = vunpack.c.h.b16 %v2650
    %v2827 = vunpack.c.l.b16 %v2651
    %v2828 = vunpack.c.h.b16 %v2651
    %v2829 = vunpack.c.l.b16 %v2652
    %v2830 = vunpack.c.h.b16 %v2652
    %v2831 = vunpack.c.l.b16 %v2653
    %v2832 = vunpack.c.h.b16 %v2653
    %v2833 = vunpack.c.l.b16 %v2654
    %v2834 = vunpack.c.h.b16 %v2654
    %v2835 = vunpack.c.l.b16 %v2655
    %v2836 = vunpack.c.h.b16 %v2655
    %v2837 = vunpack.c.l.b16 %v2656
    %v2838 = vunpack.c.h.b16 %v2656
    %v2839 = vunpack.c.l.b16 %v2657
    %v2840 = vunpack.c.h.b16 %v2657
    %v2841 = vunpack.c.l.b16 %v2658
    %v2842 = vunpack.c.h.b16 %v2658
    %v2843 = vunpack.c.l.b16 %v2659
    %v2844 = vunpack.c.h.b16 %v2659
    %v2845 = vunpack.c.l.b16 %v2660
    %v2846 = vunpack.c.h.b16 %v2660
    %v2847 = vunpack.c.l.b16 %v2661
    %v2848 = vunpack.c.h.b16 %v2661
    %v2849 = vunpack.c.l.b16 %v2662
    %v2850 = vunpack.c.h.b16 %v2662
    %v2851 = vunpack.c.l.b16 %v2663
    %v2852 = vunpack.c.h.b16 %v2663
    %v2853 = vunpack.c.l.b16 %v2664
    %v2854 = vunpack.c.h.b16 %v2664
    %v2855 = vunpack.c.l.b16 %v2665
    %v2856 = vunpack.c.h.b16 %v2665
    %v2857 = vunpack.c.l.b16 %v2666
    %v2858 = vunpack.c.h.b16 %v2666
    %v2859 = vunpack.c.l.b16 %v2667
    %v2860 = vunpack.c.h.b16 %v2667
    %v2861 = vunpack.c.l.b16 %v2668
    %v2862 = vunpack.c.h.b16 %v2668
    %v2863 = vunpack.c.l.b16 %v2669
    %v2864 = vunpack.c.h.b16 %v2669
    %v2865 = vunpack.c.l.b16 %v2670
    %v2866 = vunpack.c.h.b16 %v2670
    %v2867 = vunpack.c.l.b16 %v2671
    %v2868 = vunpack.c.h.b16 %v2671
    %v2869 = vunpack.c.l.b16 %v2672
    %v2870 = vunpack.c.h.b16 %v2672
    %v2871 = vunpack.c.l.b16 %v2673
    %v2872 = vunpack.c.h.b16 %v2673
    %v2873 = vunpack.c.l.b16 %v2674
    %v2874 = vunpack.c.h.b16 %v2674
    %v2875 = vunpack.c.l.b16 %v2675
    %v2876 = vunpack.c.h.b16 %v2675
    %v2877 = vunpack.c.l.b16 %v2676
    %v2878 = vunpack.c.h.b16 %v2676
    %v2879 = vunpack.c.l.b16 %v2677
    %v2880 = vunpack.c.h.b16 %v2677
    %v2881 = vunpack.c.l.b16 %v2678
    %v2882 = vunpack.c.h.b16 %v2678
    %v2883 = vunpack.c.l.b16 %v2679
    %v2884 = vunpack.c.h.b16 %v2679
    %v2885 = vunpack.c.l.b16 %v2680
    %v2886 = vunpack.c.h.b16 %v2680
    %v2887 = vunpack.c.l.b16 %v2681
    %v2888 = vunpack.c.h.b16 %v2681
    %v2889 = vunpack.c.l.b16 %v2682
    %v2890 = vunpack.c.h.b16 %v2682
    %v2891 = vunpack.c.l.b16 %v2683
    %v2892 = vunpack.c.h.b16 %v2683
    %v2893 = vunpack.c.l.b16 %v2684
    %v2894 = vunpack.c.h.b16 %v2684
    %v2895 = vunpack.c.l.b16 %v2685
    %v2896 = vunpack.c.h.b16 %v2685
    %v2897 = vunpack.c.l.b16 %v2686
    %v2898 = vunpack.c.h.b16 %v2686
    %v2899 = vunpack.c.l.b16 %v2687
    %v2900 = vunpack.c.h.b16 %v2687
    %v2901 = vunpack.c.l.b16 %v2688
    %v2902 = vunpack.c.h.b16 %v2688
    %v2903 = vpack.c.b16 %v2779, %v2775
    %v2904 = vpack.c.b16 %v2780, %v2776
    %v2905 = vpack.c.b16 %v2781, %v2777
    %v2906 = vpack.c.b16 %v2782, %v2778
    %v2907 = vpack.c.b16 %v2787, %v2783
    %v2908 = vpack.c.b16 %v2788, %v2784
    %v2909 = vpack.c.b16 %v2789, %v2785
    %v2910 = vpack.c.b16 %v2790, %v2786
    %v2911 = vpack.c.b16 %v2795, %v2791
    %v2912 = vpack.c.b16 %v2796, %v2792
    %v2913 = vpack.c.b16 %v2797, %v2793
    %v2914 = vpack.c.b16 %v2798, %v2794
    %v2915 = vpack.c.b16 %v2803, %v2799
    %v2916 = vpack.c.b16 %v2804, %v2800
    %v2917 = vpack.c.b16 %v2805, %v2801
    %v2918 = vpack.c.b16 %v2806, %v2802
    %v2919 = vpack.c.b16 %v2811, %v2807
    %v2920 = vpack.c.b16 %v2812, %v2808
    %v2921 = vpack.c.b16 %v2813, %v2809
    %v2922 = vpack.c.b16 %v2814, %v2810
    %v2923 = vpack.c.b16 %v2819, %v2815
    %v2924 = vpack.c.b16 %v2820, %v2816
    %v2925 = vpack.c.b16 %v2821, %v2817
    %v2926 = vpack.c.b16 %v2822, %v2818
    %v2927 = vpack.c.b16 %v2827, %v2823
    %v2928 = vpack.c.b16 %v2828, %v2824
    %v2929 = vpack.c.b16 %v2829, %v2825
    %v2930 = vpack.c.b16 %v2830, %v2826
    %v2931 = vpack.c.b16 %v2835, %v2831
    %v2932 = vpack.c.b16 %v2836, %v2832
    %v2933 = vpack.c.b16 %v2837, %v2833
    %v2934 = vpack.c.b16 %v2838, %v2834
    %v2935 = vpack.c.b16 %v2843, %v2839
    %v2936 = vpack.c.b16 %v2844, %v2840
    %v2937 = vpack.c.b16 %v2845, %v2841
    %v2938 = vpack.c.b16 %v2846, %v2842
    %v2939 = vpack.c.b16 %v2851, %v2847
    %v2940 = vpack.c.b16 %v2852, %v2848
    %v2941 = vpack.c.b16 %v2853, %v2849
    %v2942 = vpack.c.b16 %v2854, %v2850
    %v2943 = vpack.c.b16 %v2859, %v2855
    %v2944 = vpack.c.b16 %v2860, %v2856
    %v2945 = vpack.c.b16 %v2861, %v2857
    %v2946 = vpack.c.b16 %v2862, %v2858
    %v2947 = vpack.c.b16 %v2867, %v2863
    %v2948 = vpack.c.b16 %v2868, %v2864
    %v2949 = vpack.c.b16 %v2869, %v2865
    %v2950 = vpack.c.b16 %v2870, %v2866
    %v2951 = vpack.c.b16 %v2875, %v2871
    %v2952 = vpack.c.b16 %v2876, %v2872
    %v2953 = vpack.c.b16 %v2877, %v2873
    %v2954 = vpack.c.b16 %v2878, %v2874
    %v2955 = vpack.c.b16 %v2883, %v2879
    %v2956 = vpack.c.b16 %v2884, %v2880
    %v2957 = vpack.c.b16 %v2885, %v2881
    %v2958 = vpack.c.b16 %v2886, %v2882
    %v2959 = vpack.c.b16 %v2891, %v2887
    %v2960 = vpack.c.b16 %v2892, %v2888
    %v2961 = vpack.c.b16 %v2893, %v2889
    %v2962 = vpack.c.b16 %v2894, %v2890
    %v2963 = vpack.c.b16 %v2899, %v2895
    %v2964 = vpack.c.b16 %v2900, %v2896
    %v2965 = vpack.c.b16 %v2901, %v2897
    %v2966 = vpack.c.b16 %v2902, %v2898
    %3031 = vmatprep.subr.bf16.mxu0 %v2904
    %3032 = vmatpush1.bf16.msra.mxu0 %v2903
    %3033 = vmatprep.subr.bf16.mxu0 %v2908
    %3034 = vmatpush1.bf16.msra.mxu0 %v2907
    %3035 = vmatprep.subr.bf16.mxu0 %v2912
    %3036 = vmatpush1.bf16.msra.mxu0 %v2911
    %3037 = vmatprep.subr.bf16.mxu0 %v2916
    %3038 = vmatpush1.bf16.msra.mxu0 %v2915
    %3039 = vmatprep.subr.bf16.mxu0 %v2920
    %3040 = vmatpush1.bf16.msra.mxu0 %v2919
    %3041 = vmatprep.subr.bf16.mxu0 %v2924
    %3042 = vmatpush1.bf16.msra.mxu0 %v2923
    %3043 = vmatprep.subr.bf16.mxu0 %v2928
    %3044 = vmatpush1.bf16.msra.mxu0 %v2927
    %3045 = vmatprep.subr.bf16.mxu0 %v2932
    %3046 = vmatpush1.bf16.msra.mxu0 %v2931
    %3047 = vmatprep.subr.bf16.mxu0 %v2936
    %3048 = vmatpush1.bf16.msra.mxu0 %v2935
    %3049 = vmatprep.subr.bf16.mxu0 %v2940
    %3050 = vmatpush1.bf16.msra.mxu0 %v2939
    %3051 = vmatprep.subr.bf16.mxu0 %v2944
    %3052 = vmatpush1.bf16.msra.mxu0 %v2943
    %3053 = vmatprep.subr.bf16.mxu0 %v2948
    %3054 = vmatpush1.bf16.msra.mxu0 %v2947
    %3055 = vmatprep.subr.bf16.mxu0 %v2952
    %3056 = vmatpush1.bf16.msra.mxu0 %v2951
    %3057 = vmatprep.subr.bf16.mxu0 %v2956
    %3058 = vmatpush1.bf16.msra.mxu0 %v2955
    %3059 = vmatprep.subr.bf16.mxu0 %v2960
    %3060 = vmatpush1.bf16.msra.mxu0 %v2959
    %3061 = vmatprep.subr.bf16.mxu0 %v2964
    %3062 = vmatpush1.bf16.msra.mxu0 %v2963
    %3063 = vmatprep.mubr.bf16.mxu0 %v2562
    %3064 = vmatmul.mubr.bf16.gmra.mrb[0].mxu0 %v2561
    %v3065 = vpop.f32.mrb[0].mxu0
    %v3066 = vadd.f32 %v2694, %v3065
    %v3067 = vpop.f32.mrb[0].mxu0
    %v3068 = vadd.f32 %v2698, %v3067
    %v3069 = vpop.f32.mrb[0].mxu0
    %v3070 = vadd.f32 %v2694, %v3069
    %v3071 = vpop.f32.mrb[0].mxu0
    %v3072 = vadd.f32 %v2698, %v3071
    %3073 = vmatprep.mubr.bf16.mxu0 %v2564
    %3074 = vmatmul.mubr.bf16.gmra.mrb[0].mxu0 %v2563
    %v3075 = vpop.f32.mrb[0].mxu0
    %v3076 = vadd.f32 %v2694, %v3075
    %v3077 = vpop.f32.mrb[0].mxu0
    %v3078 = vadd.f32 %v2698, %v3077
    %v3079 = vpop.f32.mrb[0].mxu0
    %v3080 = vadd.f32 %v2694, %v3079
    %v3081 = vpop.f32.mrb[0].mxu0
    %v3082 = vadd.f32 %v2698, %v3081
    %3083 = vmatprep.mubr.bf16.mxu0 %v2566
    %3084 = vmatmul.mubr.bf16.gmra.mrb[0].mxu0 %v2565
    %v3085 = vpop.f32.mrb[0].mxu0
    %v3086 = vadd.f32 %v2694, %v3085
    %v3087 = vpop.f32.mrb[0].mxu0
    %v3088 = vadd.f32 %v2698, %v3087
    %v3089 = vpop.f32.mrb[0].mxu0
    %v3090 = vadd.f32 %v2694, %v3089
    %v3091 = vpop.f32.mrb[0].mxu0
    %v3092 = vadd.f32 %v2698, %v3091
    %3093 = vmatprep.mubr.bf16.mxu0 %v2568
    %3094 = vmatmul.mubr.bf16.gmra.mrb[0].mxu0 %v2567
    %v3095 = vpop.f32.mrb[0].mxu0
    %v3096 = vadd.f32 %v2694, %v3095
    %v3097 = vpop.f32.mrb[0].mxu0
    %v3098 = vadd.f32 %v2698, %v3097
    %v3099 = vpop.f32.mrb[0].mxu0
    %v3100 = vadd.f32 %v2694, %v3099
    %v3101 = vpop.f32.mrb[0].mxu0
    %v3102 = vadd.f32 %v2698, %v3101
    %3103 = vmatprep.mubr.bf16.mxu0 %v2570
    %3104 = vmatmul.mubr.bf16.gmra.mrb[0].mxu0 %v2569
    %v3105 = vpop.f32.mrb[0].mxu0
    %v3106 = vadd.f32 %v2694, %v3105
    %v3107 = vpop.f32.mrb[0].mxu0
    %v3108 = vadd.f32 %v2698, %v3107
    %v3109 = vpop.f32.mrb[0].mxu0
    %v3110 = vadd.f32 %v2694, %v3109
    %v3111 = vpop.f32.mrb[0].mxu0
    %v3112 = vadd.f32 %v2698, %v3111
    %3113 = vmatprep.mubr.bf16.mxu0 %v2572
    %3114 = vmatmul.mubr.bf16.gmra.mrb[0].mxu0 %v2571
    %v3115 = vpop.f32.mrb[0].mxu0
    %v3116 = vadd.f32 %v2694, %v3115
    %v3117 = vpop.f32.mrb[0].mxu0
    %v3118 = vadd.f32 %v2698, %v3117
    %v3119 = vpop.f32.mrb[0].mxu0
    %v3120 = vadd.f32 %v2694, %v3119
    %v3121 = vpop.f32.mrb[0].mxu0
    %v3122 = vadd.f32 %v2698, %v3121
    %3123 = vmatprep.mubr.bf16.mxu0 %v2574
    %3124 = vmatmul.mubr.bf16.gmra.mrb[0].mxu0 %v2573
    %v3125 = vpop.f32.mrb[0].mxu0
    %v3126 = vadd.f32 %v2694, %v3125
    %v3127 = vpop.f32.mrb[0].mxu0
    %v3128 = vadd.f32 %v2698, %v3127
    %v3129 = vpop.f32.mrb[0].mxu0
    %v3130 = vadd.f32 %v2694, %v3129
    %v3131 = vpop.f32.mrb[0].mxu0
    %v3132 = vadd.f32 %v2698, %v3131
    %3133 = vmatprep.mubr.bf16.mxu0 %v2576
    %3134 = vmatmul.mubr.bf16.gmra.mrb[0].mxu0 %v2575
    %v3135 = vpop.f32.mrb[0].mxu0
    %v3136 = vadd.f32 %v2694, %v3135
    %v3137 = vpop.f32.mrb[0].mxu0
    %v3138 = vadd.f32 %v2698, %v3137
    %v3139 = vpop.f32.mrb[0].mxu0
    %v3140 = vadd.f32 %v2694, %v3139
    %v3141 = vpop.f32.mrb[0].mxu0
    %v3142 = vadd.f32 %v2698, %v3141
    %3143 = vmatprep.mubr.bf16.mxu0 %v2578
    %3144 = vmatmul.mubr.bf16.gmra.mrb[0].mxu0 %v2577
    %v3145 = vpop.f32.mrb[0].mxu0
    %v3146 = vadd.f32 %v2694, %v3145
    %v3147 = vpop.f32.mrb[0].mxu0
    %v3148 = vadd.f32 %v2698, %v3147
    %v3149 = vpop.f32.mrb[0].mxu0
    %v3150 = vadd.f32 %v2694, %v3149
    %v3151 = vpop.f32.mrb[0].mxu0
    %v3152 = vadd.f32 %v2698, %v3151
    %3153 = vmatprep.mubr.bf16.mxu0 %v2580
    %3154 = vmatmul.mubr.bf16.gmra.mrb[0].mxu0 %v2579
    %v3155 = vpop.f32.mrb[0].mxu0
    %v3156 = vadd.f32 %v2694, %v3155
    %v3157 = vpop.f32.mrb[0].mxu0
    %v3158 = vadd.f32 %v2698, %v3157
    %v3159 = vpop.f32.mrb[0].mxu0
    %v3160 = vadd.f32 %v2694, %v3159
    %v3161 = vpop.f32.mrb[0].mxu0
    %v3162 = vadd.f32 %v2698, %v3161
    %3163 = vmatprep.mubr.bf16.mxu0 %v2582
    %3164 = vmatmul.mubr.bf16.gmra.mrb[0].mxu0 %v2581
    %v3165 = vpop.f32.mrb[0].mxu0
    %v3166 = vadd.f32 %v2694, %v3165
    %v3167 = vpop.f32.mrb[0].mxu0
    %v3168 = vadd.f32 %v2698, %v3167
    %v3169 = vpop.f32.mrb[0].mxu0
    %v3170 = vadd.f32 %v2694, %v3169
    %v3171 = vpop.f32.mrb[0].mxu0
    %v3172 = vadd.f32 %v2698, %v3171
    %3173 = vmatprep.mubr.bf16.mxu0 %v2584
    %3174 = vmatmul.mubr.bf16.gmra.mrb[0].mxu0 %v2583
    %v3175 = vpop.f32.mrb[0].mxu0
    %v3176 = vadd.f32 %v2694, %v3175
    %v3177 = vpop.f32.mrb[0].mxu0
    %v3178 = vadd.f32 %v2698, %v3177
    %v3179 = vpop.f32.mrb[0].mxu0
    %v3180 = vadd.f32 %v2694, %v3179
    %v3181 = vpop.f32.mrb[0].mxu0
    %v3182 = vadd.f32 %v2698, %v3181
    %3183 = vmatprep.mubr.bf16.mxu0 %v2586
    %3184 = vmatmul.mubr.bf16.gmra.mrb[0].mxu0 %v2585
    %v3185 = vpop.f32.mrb[0].mxu0
    %v3186 = vadd.f32 %v2694, %v3185
    %v3187 = vpop.f32.mrb[0].mxu0
    %v3188 = vadd.f32 %v2698, %v3187
    %v3189 = vpop.f32.mrb[0].mxu0
    %v3190 = vadd.f32 %v2694, %v3189
    %v3191 = vpop.f32.mrb[0].mxu0
    %v3192 = vadd.f32 %v2698, %v3191
    %3193 = vmatprep.mubr.bf16.mxu0 %v2588
    %3194 = vmatmul.mubr.bf16.gmra.mrb[0].mxu0 %v2587
    %v3195 = vpop.f32.mrb[0].mxu0
    %v3196 = vadd.f32 %v2694, %v3195
    %v3197 = vpop.f32.mrb[0].mxu0
    %v3198 = vadd.f32 %v2698, %v3197
    %v3199 = vpop.f32.mrb[0].mxu0
    %v3200 = vadd.f32 %v2694, %v3199
    %v3201 = vpop.f32.mrb[0].mxu0
    %v3202 = vadd.f32 %v2698, %v3201
    %3203 = vmatprep.mubr.bf16.mxu0 %v2590
    %3204 = vmatmul.mubr.bf16.gmra.mrb[0].mxu0 %v2589
    %v3205 = vpop.f32.mrb[0].mxu0
    %v3206 = vadd.f32 %v2694, %v3205
    %v3207 = vpop.f32.mrb[0].mxu0
    %v3208 = vadd.f32 %v2698, %v3207
    %v3209 = vpop.f32.mrb[0].mxu0
    %v3210 = vadd.f32 %v2694, %v3209
    %v3211 = vpop.f32.mrb[0].mxu0
    %v3212 = vadd.f32 %v2698, %v3211
    %3213 = vmatprep.mubr.bf16.mxu0 %v2592
    %3214 = vmatmul.mubr.bf16.gmra.mrb[0].mxu0 %v2591
    %v3215 = vpop.f32.mrb[0].mxu0
    %v3216 = vadd.f32 %v2694, %v3215
    %v3217 = vpop.f32.mrb[0].mxu0
    %v3218 = vadd.f32 %v2698, %v3217
    %v3219 = vpop.f32.mrb[0].mxu0
    %v3220 = vadd.f32 %v2694, %v3219
    %v3221 = vpop.f32.mrb[0].mxu0
    %v3222 = vadd.f32 %v2698, %v3221
    %3223 = vmatprep.mubr.bf16.mxu0 %v2594
    %3224 = vmatmul.mubr.bf16.gmra.mrb[0].mxu0 %v2593
    %v3225 = vpop.f32.mrb[0].mxu0
    %v3226 = vadd.f32 %v2694, %v3225
    %v3227 = vpop.f32.mrb[0].mxu0
    %v3228 = vadd.f32 %v2698, %v3227
    %v3229 = vpop.f32.mrb[0].mxu0
    %v3230 = vadd.f32 %v2694, %v3229
    %v3231 = vpop.f32.mrb[0].mxu0
    %v3232 = vadd.f32 %v2698, %v3231
    %3233 = vmatprep.mubr.bf16.mxu0 %v2596
    %3234 = vmatmul.mubr.bf16.gmra.mrb[0].mxu0 %v2595
    %v3235 = vpop.f32.mrb[0].mxu0
    %v3236 = vadd.f32 %v2694, %v3235
    %v3237 = vpop.f32.mrb[0].mxu0
    %v3238 = vadd.f32 %v2698, %v3237
    %v3239 = vpop.f32.mrb[0].mxu0
    %v3240 = vadd.f32 %v2694, %v3239
    %v3241 = vpop.f32.mrb[0].mxu0
    %v3242 = vadd.f32 %v2698, %v3241
    %3243 = vmatprep.mubr.bf16.mxu0 %v2598
    %3244 = vmatmul.mubr.bf16.gmra.mrb[0].mxu0 %v2597
    %v3245 = vpop.f32.mrb[0].mxu0
    %v3246 = vadd.f32 %v2694, %v3245
    %v3247 = vpop.f32.mrb[0].mxu0
    %v3248 = vadd.f32 %v2698, %v3247
    %v3249 = vpop.f32.mrb[0].mxu0
    %v3250 = vadd.f32 %v2694, %v3249
    %v3251 = vpop.f32.mrb[0].mxu0
    %v3252 = vadd.f32 %v2698, %v3251
    %3253 = vmatprep.mubr.bf16.mxu0 %v2600
    %3254 = vmatmul.mubr.bf16.gmra.mrb[0].mxu0 %v2599
    %v3255 = vpop.f32.mrb[0].mxu0
    %v3256 = vadd.f32 %v2694, %v3255
    %v3257 = vpop.f32.mrb[0].mxu0
    %v3258 = vadd.f32 %v2698, %v3257
    %v3259 = vpop.f32.mrb[0].mxu0
    %v3260 = vadd.f32 %v2694, %v3259
    %v3261 = vpop.f32.mrb[0].mxu0
    %v3262 = vadd.f32 %v2698, %v3261
    %3263 = vmatprep.mubr.bf16.mxu0 %v2602
    %3264 = vmatmul.mubr.bf16.gmra.mrb[0].mxu0 %v2601
    %v3265 = vpop.f32.mrb[0].mxu0
    %v3266 = vadd.f32 %v2694, %v3265
    %v3267 = vpop.f32.mrb[0].mxu0
    %v3268 = vadd.f32 %v2698, %v3267
    %v3269 = vpop.f32.mrb[0].mxu0
    %v3270 = vadd.f32 %v2694, %v3269
    %v3271 = vpop.f32.mrb[0].mxu0
    %v3272 = vadd.f32 %v2698, %v3271
    %3273 = vmatprep.mubr.bf16.mxu0 %v2604
    %3274 = vmatmul.mubr.bf16.gmra.mrb[0].mxu0 %v2603
    %v3275 = vpop.f32.mrb[0].mxu0
    %v3276 = vadd.f32 %v2694, %v3275
    %v3277 = vpop.f32.mrb[0].mxu0
    %v3278 = vadd.f32 %v2698, %v3277
    %v3279 = vpop.f32.mrb[0].mxu0
    %v3280 = vadd.f32 %v2694, %v3279
    %v3281 = vpop.f32.mrb[0].mxu0
    %v3282 = vadd.f32 %v2698, %v3281
    %3283 = vmatprep.mubr.bf16.mxu0 %v2606
    %3284 = vmatmul.mubr.bf16.gmra.mrb[0].mxu0 %v2605
    %v3285 = vpop.f32.mrb[0].mxu0
    %v3286 = vadd.f32 %v2694, %v3285
    %v3287 = vpop.f32.mrb[0].mxu0
    %v3288 = vadd.f32 %v2698, %v3287
    %v3289 = vpop.f32.mrb[0].mxu0
    %v3290 = vadd.f32 %v2694, %v3289
    %v3291 = vpop.f32.mrb[0].mxu0
    %v3292 = vadd.f32 %v2698, %v3291
    %3293 = vmatprep.mubr.bf16.mxu0 %v2608
    %3294 = vmatmul.mubr.bf16.gmra.mrb[0].mxu0 %v2607
    %v3295 = vpop.f32.mrb[0].mxu0
    %v3296 = vadd.f32 %v2694, %v3295
    %v3297 = vpop.f32.mrb[0].mxu0
    %v3298 = vadd.f32 %v2698, %v3297
    %v3299 = vpop.f32.mrb[0].mxu0
    %v3300 = vadd.f32 %v2694, %v3299
    %v3301 = vpop.f32.mrb[0].mxu0
    %v3302 = vadd.f32 %v2698, %v3301
    %3303 = vmatprep.mubr.bf16.mxu0 %v2610
    %3304 = vmatmul.mubr.bf16.gmra.mrb[0].mxu0 %v2609
    %v3305 = vpop.f32.mrb[0].mxu0
    %v3306 = vadd.f32 %v2694, %v3305
    %v3307 = vpop.f32.mrb[0].mxu0
    %v3308 = vadd.f32 %v2698, %v3307
    %v3309 = vpop.f32.mrb[0].mxu0
    %v3310 = vadd.f32 %v2694, %v3309
    %v3311 = vpop.f32.mrb[0].mxu0
    %v3312 = vadd.f32 %v2698, %v3311
    %3313 = vmatprep.mubr.bf16.mxu0 %v2612
    %3314 = vmatmul.mubr.bf16.gmra.mrb[0].mxu0 %v2611
    %v3315 = vpop.f32.mrb[0].mxu0
    %v3316 = vadd.f32 %v2694, %v3315
    %v3317 = vpop.f32.mrb[0].mxu0
    %v3318 = vadd.f32 %v2698, %v3317
    %v3319 = vpop.f32.mrb[0].mxu0
    %v3320 = vadd.f32 %v2694, %v3319
    %v3321 = vpop.f32.mrb[0].mxu0
    %v3322 = vadd.f32 %v2698, %v3321
    %3323 = vmatprep.mubr.bf16.mxu0 %v2614
    %3324 = vmatmul.mubr.bf16.gmra.mrb[0].mxu0 %v2613
    %v3325 = vpop.f32.mrb[0].mxu0
    %v3326 = vadd.f32 %v2694, %v3325
    %v3327 = vpop.f32.mrb[0].mxu0
    %v3328 = vadd.f32 %v2698, %v3327
    %v3329 = vpop.f32.mrb[0].mxu0
    %v3330 = vadd.f32 %v2694, %v3329
    %v3331 = vpop.f32.mrb[0].mxu0
    %v3332 = vadd.f32 %v2698, %v3331
    %3333 = vmatprep.mubr.bf16.mxu0 %v2616
    %3334 = vmatmul.mubr.bf16.gmra.mrb[0].mxu0 %v2615
    %v3335 = vpop.f32.mrb[0].mxu0
    %v3336 = vadd.f32 %v2694, %v3335
    %v3337 = vpop.f32.mrb[0].mxu0
    %v3338 = vadd.f32 %v2698, %v3337
    %v3339 = vpop.f32.mrb[0].mxu0
    %v3340 = vadd.f32 %v2694, %v3339
    %v3341 = vpop.f32.mrb[0].mxu0
    %v3342 = vadd.f32 %v2698, %v3341
    %3343 = vmatprep.mubr.bf16.mxu0 %v2618
    %3344 = vmatmul.mubr.bf16.gmra.mrb[0].mxu0 %v2617
    %v3345 = vpop.f32.mrb[0].mxu0
    %v3346 = vadd.f32 %v2694, %v3345
    %v3347 = vpop.f32.mrb[0].mxu0
    %v3348 = vadd.f32 %v2698, %v3347
    %v3349 = vpop.f32.mrb[0].mxu0
    %v3350 = vadd.f32 %v2694, %v3349
    %v3351 = vpop.f32.mrb[0].mxu0
    %v3352 = vadd.f32 %v2698, %v3351
    %3353 = vmatprep.mubr.bf16.mxu0 %v2620
    %3354 = vmatmul.mubr.bf16.gmra.mrb[0].mxu0 %v2619
    %v3355 = vpop.f32.mrb[0].mxu0
    %v3356 = vadd.f32 %v2694, %v3355
    %v3357 = vpop.f32.mrb[0].mxu0
    %v3358 = vadd.f32 %v2698, %v3357
    %v3359 = vpop.f32.mrb[0].mxu0
    %v3360 = vadd.f32 %v2694, %v3359
    %v3361 = vpop.f32.mrb[0].mxu0
    %v3362 = vadd.f32 %v2698, %v3361
    %3363 = vmatprep.mubr.bf16.mxu0 %v2622
    %3364 = vmatmul.mubr.bf16.gmra.mrb[0].mxu0 %v2621
    %v3365 = vpop.f32.mrb[0].mxu0
    %v3366 = vadd.f32 %v2694, %v3365
    %v3367 = vpop.f32.mrb[0].mxu0
    %v3368 = vadd.f32 %v2698, %v3367
    %v3369 = vpop.f32.mrb[0].mxu0
    %v3370 = vadd.f32 %v2694, %v3369
    %v3371 = vpop.f32.mrb[0].mxu0
    %v3372 = vadd.f32 %v2698, %v3371
    %3373 = vmatprep.mubr.bf16.mxu0 %v2624
    %3374 = vmatmul.mubr.bf16.gmra.mrb[0].mxu0 %v2623
    %v3375 = vpop.f32.mrb[0].mxu0
    %v3376 = vadd.f32 %v2694, %v3375
    %v3377 = vpop.f32.mrb[0].mxu0
    %v3378 = vadd.f32 %v2698, %v3377
    %v3379 = vpop.f32.mrb[0].mxu0
    %v3380 = vadd.f32 %v2694, %v3379
    %v3381 = vpop.f32.mrb[0].mxu0
    %v3382 = vadd.f32 %v2698, %v3381
    %3383 = vdwg.mxu0
    %3384 = vmatprep.subr.bf16.mxu0 %v2906
    %3385 = vmatpush1.bf16.msra.mxu0 %v2905
    %3386 = vmatprep.subr.bf16.mxu0 %v2910
    %3387 = vmatpush1.bf16.msra.mxu0 %v2909
    %3388 = vmatprep.subr.bf16.mxu0 %v2914
    %3389 = vmatpush1.bf16.msra.mxu0 %v2913
    %3390 = vmatprep.subr.bf16.mxu0 %v2918
    %3391 = vmatpush1.bf16.msra.mxu0 %v2917
    %3392 = vmatprep.subr.bf16.mxu0 %v2922
    %3393 = vmatpush1.bf16.msra.mxu0 %v2921
    %3394 = vmatprep.subr.bf16.mxu0 %v2926
    %3395 = vmatpush1.bf16.msra.mxu0 %v2925
    %3396 = vmatprep.subr.bf16.mxu0 %v2930
    %3397 = vmatpush1.bf16.msra.mxu0 %v2929
    %3398 = vmatprep.subr.bf16.mxu0 %v2934
    %3399 = vmatpush1.bf16.msra.mxu0 %v2933
    %3400 = vmatprep.subr.bf16.mxu0 %v2938
    %3401 = vmatpush1.bf16.msra.mxu0 %v2937
    %3402 = vmatprep.subr.bf16.mxu0 %v2942
    %3403 = vmatpush1.bf16.msra.mxu0 %v2941
    %3404 = vmatprep.subr.bf16.mxu0 %v2946
    %3405 = vmatpush1.bf16.msra.mxu0 %v2945
    %3406 = vmatprep.subr.bf16.mxu0 %v2950
    %3407 = vmatpush1.bf16.msra.mxu0 %v2949
    %3408 = vmatprep.subr.bf16.mxu0 %v2954
    %3409 = vmatpush1.bf16.msra.mxu0 %v2953
    %3410 = vmatprep.subr.bf16.mxu0 %v2958
    %3411 = vmatpush1.bf16.msra.mxu0 %v2957
    %3412 = vmatprep.subr.bf16.mxu0 %v2962
    %3413 = vmatpush1.bf16.msra.mxu0 %v2961
    %3414 = vmatprep.subr.bf16.mxu0 %v2966
    %3415 = vmatpush1.bf16.msra.mxu0 %v2965
    %3416 = vmatprep.mubr.bf16.mxu0 %v2562
    %3417 = vmatmul.mubr.bf16.gmra.mrb[0].mxu0 %v2561
    %v3418 = vpop.f32.mrb[0].mxu0
    %v3419 = vadd.f32 %v2702, %v3418
    %v3420 = vpop.f32.mrb[0].mxu0
    %v3421 = vadd.f32 %v2706, %v3420
    %v3422 = vpop.f32.mrb[0].mxu0
    %v3423 = vadd.f32 %v2702, %v3422
    %v3424 = vpop.f32.mrb[0].mxu0
    %v3425 = vadd.f32 %v2706, %v3424
    %3426 = vmatprep.mubr.bf16.mxu0 %v2564
    %3427 = vmatmul.mubr.bf16.gmra.mrb[0].mxu0 %v2563
    %v3428 = vpop.f32.mrb[0].mxu0
    %v3429 = vadd.f32 %v2702, %v3428
    %v3430 = vpop.f32.mrb[0].mxu0
    %v3431 = vadd.f32 %v2706, %v3430
    %v3432 = vpop.f32.mrb[0].mxu0
    %v3433 = vadd.f32 %v2702, %v3432
    %v3434 = vpop.f32.mrb[0].mxu0
    %v3435 = vadd.f32 %v2706, %v3434
    %3436 = vmatprep.mubr.bf16.mxu0 %v2566
    %3437 = vmatmul.mubr.bf16.gmra.mrb[0].mxu0 %v2565
    %v3438 = vpop.f32.mrb[0].mxu0
    %v3439 = vadd.f32 %v2702, %v3438
    %v3440 = vpop.f32.mrb[0].mxu0
    %v3441 = vadd.f32 %v2706, %v3440
    %v3442 = vpop.f32.mrb[0].mxu0
    %v3443 = vadd.f32 %v2702, %v3442
    %v3444 = vpop.f32.mrb[0].mxu0
    %v3445 = vadd.f32 %v2706, %v3444
    %3446 = vmatprep.mubr.bf16.mxu0 %v2568
    %3447 = vmatmul.mubr.bf16.gmra.mrb[0].mxu0 %v2567
    %v3448 = vpop.f32.mrb[0].mxu0
    %v3449 = vadd.f32 %v2702, %v3448
    %v3450 = vpop.f32.mrb[0].mxu0
    %v3451 = vadd.f32 %v2706, %v3450
    %v3452 = vpop.f32.mrb[0].mxu0
    %v3453 = vadd.f32 %v2702, %v3452
    %v3454 = vpop.f32.mrb[0].mxu0
    %v3455 = vadd.f32 %v2706, %v3454
    %3456 = vmatprep.mubr.bf16.mxu0 %v2570
    %3457 = vmatmul.mubr.bf16.gmra.mrb[0].mxu0 %v2569
    %v3458 = vpop.f32.mrb[0].mxu0
    %v3459 = vadd.f32 %v2702, %v3458
    %v3460 = vpop.f32.mrb[0].mxu0
    %v3461 = vadd.f32 %v2706, %v3460
    %v3462 = vpop.f32.mrb[0].mxu0
    %v3463 = vadd.f32 %v2702, %v3462
    %v3464 = vpop.f32.mrb[0].mxu0
    %v3465 = vadd.f32 %v2706, %v3464
    %3466 = vmatprep.mubr.bf16.mxu0 %v2572
    %3467 = vmatmul.mubr.bf16.gmra.mrb[0].mxu0 %v2571
    %v3468 = vpop.f32.mrb[0].mxu0
    %v3469 = vadd.f32 %v2702, %v3468
    %v3470 = vpop.f32.mrb[0].mxu0
    %v3471 = vadd.f32 %v2706, %v3470
    %v3472 = vpop.f32.mrb[0].mxu0
    %v3473 = vadd.f32 %v2702, %v3472
    %v3474 = vpop.f32.mrb[0].mxu0
    %v3475 = vadd.f32 %v2706, %v3474
    %3476 = vmatprep.mubr.bf16.mxu0 %v2574
    %3477 = vmatmul.mubr.bf16.gmra.mrb[0].mxu0 %v2573
    %v3478 = vpop.f32.mrb[0].mxu0
    %v3479 = vadd.f32 %v2702, %v3478
    %v3480 = vpop.f32.mrb[0].mxu0
    %v3481 = vadd.f32 %v2706, %v3480
    %v3482 = vpop.f32.mrb[0].mxu0
    %v3483 = vadd.f32 %v2702, %v3482
    %v3484 = vpop.f32.mrb[0].mxu0
    %v3485 = vadd.f32 %v2706, %v3484
    %3486 = vmatprep.mubr.bf16.mxu0 %v2576
    %3487 = vmatmul.mubr.bf16.gmra.mrb[0].mxu0 %v2575
    %v3488 = vpop.f32.mrb[0].mxu0
    %v3489 = vadd.f32 %v2702, %v3488
    %v3490 = vpop.f32.mrb[0].mxu0
    %v3491 = vadd.f32 %v2706, %v3490
    %v3492 = vpop.f32.mrb[0].mxu0
    %v3493 = vadd.f32 %v2702, %v3492
    %v3494 = vpop.f32.mrb[0].mxu0
    %v3495 = vadd.f32 %v2706, %v3494
    %3496 = vmatprep.mubr.bf16.mxu0 %v2578
    %3497 = vmatmul.mubr.bf16.gmra.mrb[0].mxu0 %v2577
    %v3498 = vpop.f32.mrb[0].mxu0
    %v3499 = vadd.f32 %v2702, %v3498
    %v3500 = vpop.f32.mrb[0].mxu0
    %v3501 = vadd.f32 %v2706, %v3500
    %v3502 = vpop.f32.mrb[0].mxu0
    %v3503 = vadd.f32 %v2702, %v3502
    %v3504 = vpop.f32.mrb[0].mxu0
    %v3505 = vadd.f32 %v2706, %v3504
    %3506 = vmatprep.mubr.bf16.mxu0 %v2580
    %3507 = vmatmul.mubr.bf16.gmra.mrb[0].mxu0 %v2579
    %v3508 = vpop.f32.mrb[0].mxu0
    %v3509 = vadd.f32 %v2702, %v3508
    %v3510 = vpop.f32.mrb[0].mxu0
    %v3511 = vadd.f32 %v2706, %v3510
    %v3512 = vpop.f32.mrb[0].mxu0
    %v3513 = vadd.f32 %v2702, %v3512
    %v3514 = vpop.f32.mrb[0].mxu0
    %v3515 = vadd.f32 %v2706, %v3514
    %3516 = vmatprep.mubr.bf16.mxu0 %v2582
    %3517 = vmatmul.mubr.bf16.gmra.mrb[0].mxu0 %v2581
    %v3518 = vpop.f32.mrb[0].mxu0
    %v3519 = vadd.f32 %v2702, %v3518
    %v3520 = vpop.f32.mrb[0].mxu0
    %v3521 = vadd.f32 %v2706, %v3520
    %v3522 = vpop.f32.mrb[0].mxu0
    %v3523 = vadd.f32 %v2702, %v3522
    %v3524 = vpop.f32.mrb[0].mxu0
    %v3525 = vadd.f32 %v2706, %v3524
    %3526 = vmatprep.mubr.bf16.mxu0 %v2584
    %3527 = vmatmul.mubr.bf16.gmra.mrb[0].mxu0 %v2583
    %v3528 = vpop.f32.mrb[0].mxu0
    %v3529 = vadd.f32 %v2702, %v3528
    %v3530 = vpop.f32.mrb[0].mxu0
    %v3531 = vadd.f32 %v2706, %v3530
    %v3532 = vpop.f32.mrb[0].mxu0
    %v3533 = vadd.f32 %v2702, %v3532
    %v3534 = vpop.f32.mrb[0].mxu0
    %v3535 = vadd.f32 %v2706, %v3534
    %3536 = vmatprep.mubr.bf16.mxu0 %v2586
    %3537 = vmatmul.mubr.bf16.gmra.mrb[0].mxu0 %v2585
    %v3538 = vpop.f32.mrb[0].mxu0
    %v3539 = vadd.f32 %v2702, %v3538
    %v3540 = vpop.f32.mrb[0].mxu0
    %v3541 = vadd.f32 %v2706, %v3540
    %v3542 = vpop.f32.mrb[0].mxu0
    %v3543 = vadd.f32 %v2702, %v3542
    %v3544 = vpop.f32.mrb[0].mxu0
    %v3545 = vadd.f32 %v2706, %v3544
    %3546 = vmatprep.mubr.bf16.mxu0 %v2588
    %3547 = vmatmul.mubr.bf16.gmra.mrb[0].mxu0 %v2587
    %v3548 = vpop.f32.mrb[0].mxu0
    %v3549 = vadd.f32 %v2702, %v3548
    %v3550 = vpop.f32.mrb[0].mxu0
    %v3551 = vadd.f32 %v2706, %v3550
    %v3552 = vpop.f32.mrb[0].mxu0
    %v3553 = vadd.f32 %v2702, %v3552
    %v3554 = vpop.f32.mrb[0].mxu0
    %v3555 = vadd.f32 %v2706, %v3554
    %3556 = vmatprep.mubr.bf16.mxu0 %v2590
    %3557 = vmatmul.mubr.bf16.gmra.mrb[0].mxu0 %v2589
    %v3558 = vpop.f32.mrb[0].mxu0
    %v3559 = vadd.f32 %v2702, %v3558
    %v3560 = vpop.f32.mrb[0].mxu0
    %v3561 = vadd.f32 %v2706, %v3560
    %v3562 = vpop.f32.mrb[0].mxu0
    %v3563 = vadd.f32 %v2702, %v3562
    %v3564 = vpop.f32.mrb[0].mxu0
    %v3565 = vadd.f32 %v2706, %v3564
    %3566 = vmatprep.mubr.bf16.mxu0 %v2592
    %3567 = vmatmul.mubr.bf16.gmra.mrb[0].mxu0 %v2591
    %v3568 = vpop.f32.mrb[0].mxu0
    %v3569 = vadd.f32 %v2702, %v3568
    %v3570 = vpop.f32.mrb[0].mxu0
    %v3571 = vadd.f32 %v2706, %v3570
    %v3572 = vpop.f32.mrb[0].mxu0
    %v3573 = vadd.f32 %v2702, %v3572
    %v3574 = vpop.f32.mrb[0].mxu0
    %v3575 = vadd.f32 %v2706, %v3574
    %3576 = vmatprep.mubr.bf16.mxu0 %v2594
    %3577 = vmatmul.mubr.bf16.gmra.mrb[0].mxu0 %v2593
    %v3578 = vpop.f32.mrb[0].mxu0
    %v3579 = vadd.f32 %v2702, %v3578
    %v3580 = vpop.f32.mrb[0].mxu0
    %v3581 = vadd.f32 %v2706, %v3580
    %v3582 = vpop.f32.mrb[0].mxu0
    %v3583 = vadd.f32 %v2702, %v3582
    %v3584 = vpop.f32.mrb[0].mxu0
    %v3585 = vadd.f32 %v2706, %v3584
    %3586 = vmatprep.mubr.bf16.mxu0 %v2596
    %3587 = vmatmul.mubr.bf16.gmra.mrb[0].mxu0 %v2595
    %v3588 = vpop.f32.mrb[0].mxu0
    %v3589 = vadd.f32 %v2702, %v3588
    %v3590 = vpop.f32.mrb[0].mxu0
    %v3591 = vadd.f32 %v2706, %v3590
    %v3592 = vpop.f32.mrb[0].mxu0
    %v3593 = vadd.f32 %v2702, %v3592
    %v3594 = vpop.f32.mrb[0].mxu0
    %v3595 = vadd.f32 %v2706, %v3594
    %3596 = vmatprep.mubr.bf16.mxu0 %v2598
    %3597 = vmatmul.mubr.bf16.gmra.mrb[0].mxu0 %v2597
    %v3598 = vpop.f32.mrb[0].mxu0
    %v3599 = vadd.f32 %v2702, %v3598
    %v3600 = vpop.f32.mrb[0].mxu0
    %v3601 = vadd.f32 %v2706, %v3600
    %v3602 = vpop.f32.mrb[0].mxu0
    %v3603 = vadd.f32 %v2702, %v3602
    %v3604 = vpop.f32.mrb[0].mxu0
    %v3605 = vadd.f32 %v2706, %v3604
    %3606 = vmatprep.mubr.bf16.mxu0 %v2600
    %3607 = vmatmul.mubr.bf16.gmra.mrb[0].mxu0 %v2599
    %v3608 = vpop.f32.mrb[0].mxu0
    %v3609 = vadd.f32 %v2702, %v3608
    %v3610 = vpop.f32.mrb[0].mxu0
    %v3611 = vadd.f32 %v2706, %v3610
    %v3612 = vpop.f32.mrb[0].mxu0
    %v3613 = vadd.f32 %v2702, %v3612
    %v3614 = vpop.f32.mrb[0].mxu0
    %v3615 = vadd.f32 %v2706, %v3614
    %3616 = vmatprep.mubr.bf16.mxu0 %v2602
    %3617 = vmatmul.mubr.bf16.gmra.mrb[0].mxu0 %v2601
    %v3618 = vpop.f32.mrb[0].mxu0
    %v3619 = vadd.f32 %v2702, %v3618
    %v3620 = vpop.f32.mrb[0].mxu0
    %v3621 = vadd.f32 %v2706, %v3620
    %v3622 = vpop.f32.mrb[0].mxu0
    %v3623 = vadd.f32 %v2702, %v3622
    %v3624 = vpop.f32.mrb[0].mxu0
    %v3625 = vadd.f32 %v2706, %v3624
    %3626 = vmatprep.mubr.bf16.mxu0 %v2604
    %3627 = vmatmul.mubr.bf16.gmra.mrb[0].mxu0 %v2603
    %v3628 = vpop.f32.mrb[0].mxu0
    %v3629 = vadd.f32 %v2702, %v3628
    %v3630 = vpop.f32.mrb[0].mxu0
    %v3631 = vadd.f32 %v2706, %v3630
    %v3632 = vpop.f32.mrb[0].mxu0
    %v3633 = vadd.f32 %v2702, %v3632
    %v3634 = vpop.f32.mrb[0].mxu0
    %v3635 = vadd.f32 %v2706, %v3634
    %3636 = vmatprep.mubr.bf16.mxu0 %v2606
    %3637 = vmatmul.mubr.bf16.gmra.mrb[0].mxu0 %v2605
    %v3638 = vpop.f32.mrb[0].mxu0
    %v3639 = vadd.f32 %v2702, %v3638
    %v3640 = vpop.f32.mrb[0].mxu0
    %v3641 = vadd.f32 %v2706, %v3640
    %v3642 = vpop.f32.mrb[0].mxu0
    %v3643 = vadd.f32 %v2702, %v3642
    %v3644 = vpop.f32.mrb[0].mxu0
    %v3645 = vadd.f32 %v2706, %v3644
    %3646 = vmatprep.mubr.bf16.mxu0 %v2608
    %3647 = vmatmul.mubr.bf16.gmra.mrb[0].mxu0 %v2607
    %v3648 = vpop.f32.mrb[0].mxu0
    %v3649 = vadd.f32 %v2702, %v3648
    %v3650 = vpop.f32.mrb[0].mxu0
    %v3651 = vadd.f32 %v2706, %v3650
    %v3652 = vpop.f32.mrb[0].mxu0
    %v3653 = vadd.f32 %v2702, %v3652
    %v3654 = vpop.f32.mrb[0].mxu0
    %v3655 = vadd.f32 %v2706, %v3654
    %3656 = vmatprep.mubr.bf16.mxu0 %v2610
    %3657 = vmatmul.mubr.bf16.gmra.mrb[0].mxu0 %v2609
    %v3658 = vpop.f32.mrb[0].mxu0
    %v3659 = vadd.f32 %v2702, %v3658
    %v3660 = vpop.f32.mrb[0].mxu0
    %v3661 = vadd.f32 %v2706, %v3660
    %v3662 = vpop.f32.mrb[0].mxu0
    %v3663 = vadd.f32 %v2702, %v3662
    %v3664 = vpop.f32.mrb[0].mxu0
    %v3665 = vadd.f32 %v2706, %v3664
    %3666 = vmatprep.mubr.bf16.mxu0 %v2612
    %3667 = vmatmul.mubr.bf16.gmra.mrb[0].mxu0 %v2611
    %v3668 = vpop.f32.mrb[0].mxu0
    %v3669 = vadd.f32 %v2702, %v3668
    %v3670 = vpop.f32.mrb[0].mxu0
    %v3671 = vadd.f32 %v2706, %v3670
    %v3672 = vpop.f32.mrb[0].mxu0
    %v3673 = vadd.f32 %v2702, %v3672
    %v3674 = vpop.f32.mrb[0].mxu0
    %v3675 = vadd.f32 %v2706, %v3674
    %3676 = vmatprep.mubr.bf16.mxu0 %v2614
    %3677 = vmatmul.mubr.bf16.gmra.mrb[0].mxu0 %v2613
    %v3678 = vpop.f32.mrb[0].mxu0
    %v3679 = vadd.f32 %v2702, %v3678
    %v3680 = vpop.f32.mrb[0].mxu0
    %v3681 = vadd.f32 %v2706, %v3680
    %v3682 = vpop.f32.mrb[0].mxu0
    %v3683 = vadd.f32 %v2702, %v3682
    %v3684 = vpop.f32.mrb[0].mxu0
    %v3685 = vadd.f32 %v2706, %v3684
    %3686 = vmatprep.mubr.bf16.mxu0 %v2616
    %3687 = vmatmul.mubr.bf16.gmra.mrb[0].mxu0 %v2615
    %v3688 = vpop.f32.mrb[0].mxu0
    %v3689 = vadd.f32 %v2702, %v3688
    %v3690 = vpop.f32.mrb[0].mxu0
    %v3691 = vadd.f32 %v2706, %v3690
    %v3692 = vpop.f32.mrb[0].mxu0
    %v3693 = vadd.f32 %v2702, %v3692
    %v3694 = vpop.f32.mrb[0].mxu0
    %v3695 = vadd.f32 %v2706, %v3694
    %3696 = vmatprep.mubr.bf16.mxu0 %v2618
    %3697 = vmatmul.mubr.bf16.gmra.mrb[0].mxu0 %v2617
    %v3698 = vpop.f32.mrb[0].mxu0
    %v3699 = vadd.f32 %v2702, %v3698
    %v3700 = vpop.f32.mrb[0].mxu0
    %v3701 = vadd.f32 %v2706, %v3700
    %v3702 = vpop.f32.mrb[0].mxu0
    %v3703 = vadd.f32 %v2702, %v3702
    %v3704 = vpop.f32.mrb[0].mxu0
    %v3705 = vadd.f32 %v2706, %v3704
    %3706 = vmatprep.mubr.bf16.mxu0 %v2620
    %3707 = vmatmul.mubr.bf16.gmra.mrb[0].mxu0 %v2619
    %v3708 = vpop.f32.mrb[0].mxu0
    %v3709 = vadd.f32 %v2702, %v3708
    %v3710 = vpop.f32.mrb[0].mxu0
    %v3711 = vadd.f32 %v2706, %v3710
    %v3712 = vpop.f32.mrb[0].mxu0
    %v3713 = vadd.f32 %v2702, %v3712
    %v3714 = vpop.f32.mrb[0].mxu0
    %v3715 = vadd.f32 %v2706, %v3714
    %3716 = vmatprep.mubr.bf16.mxu0 %v2622
    %3717 = vmatmul.mubr.bf16.gmra.mrb[0].mxu0 %v2621
    %v3718 = vpop.f32.mrb[0].mxu0
    %v3719 = vadd.f32 %v2702, %v3718
    %v3720 = vpop.f32.mrb[0].mxu0
    %v3721 = vadd.f32 %v2706, %v3720
    %v3722 = vpop.f32.mrb[0].mxu0
    %v3723 = vadd.f32 %v2702, %v3722
    %v3724 = vpop.f32.mrb[0].mxu0
    %v3725 = vadd.f32 %v2706, %v3724
    %3726 = vmatprep.mubr.bf16.mxu0 %v2624
    %3727 = vmatmul.mubr.bf16.gmra.mrb[0].mxu0 %v2623
    %v3728 = vpop.f32.mrb[0].mxu0
    %v3729 = vadd.f32 %v2702, %v3728
    %v3730 = vpop.f32.mrb[0].mxu0
    %v3731 = vadd.f32 %v2706, %v3730
    %v3732 = vpop.f32.mrb[0].mxu0
    %v3733 = vadd.f32 %v2702, %v3732
    %v3734 = vpop.f32.mrb[0].mxu0
    %v3735 = vadd.f32 %v2706, %v3734
    %3736 = vdwg.mxu0
    %v3737 = vmax.f32 %v3066, 0.0
    %v3738 = vmax.f32 %v3068, 0.0
    %v3739 = vmax.f32 %v3419, 0.0
    %v3740 = vmax.f32 %v3421, 0.0
    %v3741 = vmax.f32 %v3070, 0.0
    %v3742 = vmax.f32 %v3072, 0.0
    %v3743 = vmax.f32 %v3423, 0.0
    %v3744 = vmax.f32 %v3425, 0.0
    %v3745 = vmax.f32 %v3076, 0.0
    %v3746 = vmax.f32 %v3078, 0.0
    %v3747 = vmax.f32 %v3429, 0.0
    %v3748 = vmax.f32 %v3431, 0.0
    %v3749 = vmax.f32 %v3080, 0.0
    %v3750 = vmax.f32 %v3082, 0.0
    %v3751 = vmax.f32 %v3433, 0.0
    %v3752 = vmax.f32 %v3435, 0.0
    %v3753 = vmax.f32 %v3086, 0.0
    %v3754 = vmax.f32 %v3088, 0.0
    %v3755 = vmax.f32 %v3439, 0.0
    %v3756 = vmax.f32 %v3441, 0.0
    %v3757 = vmax.f32 %v3090, 0.0
    %v3758 = vmax.f32 %v3092, 0.0
    %v3759 = vmax.f32 %v3443, 0.0
    %v3760 = vmax.f32 %v3445, 0.0
    %v3761 = vmax.f32 %v3096, 0.0
    %v3762 = vmax.f32 %v3098, 0.0
    %v3763 = vmax.f32 %v3449, 0.0
    %v3764 = vmax.f32 %v3451, 0.0
    %v3765 = vmax.f32 %v3100, 0.0
    %v3766 = vmax.f32 %v3102, 0.0
    %v3767 = vmax.f32 %v3453, 0.0
    %v3768 = vmax.f32 %v3455, 0.0
    %v3769 = vmax.f32 %v3106, 0.0
    %v3770 = vmax.f32 %v3108, 0.0
    %v3771 = vmax.f32 %v3459, 0.0
    %v3772 = vmax.f32 %v3461, 0.0
    %v3773 = vmax.f32 %v3110, 0.0
    %v3774 = vmax.f32 %v3112, 0.0
    %v3775 = vmax.f32 %v3463, 0.0
    %v3776 = vmax.f32 %v3465, 0.0
    %v3777 = vmax.f32 %v3116, 0.0
    %v3778 = vmax.f32 %v3118, 0.0
    %v3779 = vmax.f32 %v3469, 0.0
    %v3780 = vmax.f32 %v3471, 0.0
    %v3781 = vmax.f32 %v3120, 0.0
    %v3782 = vmax.f32 %v3122, 0.0
    %v3783 = vmax.f32 %v3473, 0.0
    %v3784 = vmax.f32 %v3475, 0.0
    %v3785 = vmax.f32 %v3126, 0.0
    %v3786 = vmax.f32 %v3128, 0.0
    %v3787 = vmax.f32 %v3479, 0.0
    %v3788 = vmax.f32 %v3481, 0.0
    %v3789 = vmax.f32 %v3130, 0.0
    %v3790 = vmax.f32 %v3132, 0.0
    %v3791 = vmax.f32 %v3483, 0.0
    %v3792 = vmax.f32 %v3485, 0.0
    %v3793 = vmax.f32 %v3136, 0.0
    %v3794 = vmax.f32 %v3138, 0.0
    %v3795 = vmax.f32 %v3489, 0.0
    %v3796 = vmax.f32 %v3491, 0.0
    %v3797 = vmax.f32 %v3140, 0.0
    %v3798 = vmax.f32 %v3142, 0.0
    %v3799 = vmax.f32 %v3493, 0.0
    %v3800 = vmax.f32 %v3495, 0.0
    %v3801 = vmax.f32 %v3146, 0.0
    %v3802 = vmax.f32 %v3148, 0.0
    %v3803 = vmax.f32 %v3499, 0.0
    %v3804 = vmax.f32 %v3501, 0.0
    %v3805 = vmax.f32 %v3150, 0.0
    %v3806 = vmax.f32 %v3152, 0.0
    %v3807 = vmax.f32 %v3503, 0.0
    %v3808 = vmax.f32 %v3505, 0.0
    %v3809 = vmax.f32 %v3156, 0.0
    %v3810 = vmax.f32 %v3158, 0.0
    %v3811 = vmax.f32 %v3509, 0.0
    %v3812 = vmax.f32 %v3511, 0.0
    %v3813 = vmax.f32 %v3160, 0.0
    %v3814 = vmax.f32 %v3162, 0.0
    %v3815 = vmax.f32 %v3513, 0.0
    %v3816 = vmax.f32 %v3515, 0.0
    %v3817 = vmax.f32 %v3166, 0.0
    %v3818 = vmax.f32 %v3168, 0.0
    %v3819 = vmax.f32 %v3519, 0.0
    %v3820 = vmax.f32 %v3521, 0.0
    %v3821 = vmax.f32 %v3170, 0.0
    %v3822 = vmax.f32 %v3172, 0.0
    %v3823 = vmax.f32 %v3523, 0.0
    %v3824 = vmax.f32 %v3525, 0.0
    %v3825 = vmax.f32 %v3176, 0.0
    %v3826 = vmax.f32 %v3178, 0.0
    %v3827 = vmax.f32 %v3529, 0.0
    %v3828 = vmax.f32 %v3531, 0.0
    %v3829 = vmax.f32 %v3180, 0.0
    %v3830 = vmax.f32 %v3182, 0.0
    %v3831 = vmax.f32 %v3533, 0.0
    %v3832 = vmax.f32 %v3535, 0.0
    %v3833 = vmax.f32 %v3186, 0.0
    %v3834 = vmax.f32 %v3188, 0.0
    %v3835 = vmax.f32 %v3539, 0.0
    %v3836 = vmax.f32 %v3541, 0.0
    %v3837 = vmax.f32 %v3190, 0.0
    %v3838 = vmax.f32 %v3192, 0.0
    %v3839 = vmax.f32 %v3543, 0.0
    %v3840 = vmax.f32 %v3545, 0.0
    %v3841 = vmax.f32 %v3196, 0.0
    %v3842 = vmax.f32 %v3198, 0.0
    %v3843 = vmax.f32 %v3549, 0.0
    %v3844 = vmax.f32 %v3551, 0.0
    %v3845 = vmax.f32 %v3200, 0.0
    %v3846 = vmax.f32 %v3202, 0.0
    %v3847 = vmax.f32 %v3553, 0.0
    %v3848 = vmax.f32 %v3555, 0.0
    %v3849 = vmax.f32 %v3206, 0.0
    %v3850 = vmax.f32 %v3208, 0.0
    %v3851 = vmax.f32 %v3559, 0.0
    %v3852 = vmax.f32 %v3561, 0.0
    %v3853 = vmax.f32 %v3210, 0.0
    %v3854 = vmax.f32 %v3212, 0.0
    %v3855 = vmax.f32 %v3563, 0.0
    %v3856 = vmax.f32 %v3565, 0.0
    %v3857 = vmax.f32 %v3216, 0.0
    %v3858 = vmax.f32 %v3218, 0.0
    %v3859 = vmax.f32 %v3569, 0.0
    %v3860 = vmax.f32 %v3571, 0.0
    %v3861 = vmax.f32 %v3220, 0.0
    %v3862 = vmax.f32 %v3222, 0.0
    %v3863 = vmax.f32 %v3573, 0.0
    %v3864 = vmax.f32 %v3575, 0.0
    %v3865 = vmax.f32 %v3226, 0.0
    %v3866 = vmax.f32 %v3228, 0.0
    %v3867 = vmax.f32 %v3579, 0.0
    %v3868 = vmax.f32 %v3581, 0.0
    %v3869 = vmax.f32 %v3230, 0.0
    %v3870 = vmax.f32 %v3232, 0.0
    %v3871 = vmax.f32 %v3583, 0.0
    %v3872 = vmax.f32 %v3585, 0.0
    %v3873 = vmax.f32 %v3236, 0.0
    %v3874 = vmax.f32 %v3238, 0.0
    %v3875 = vmax.f32 %v3589, 0.0
    %v3876 = vmax.f32 %v3591, 0.0
    %v3877 = vmax.f32 %v3240, 0.0
    %v3878 = vmax.f32 %v3242, 0.0
    %v3879 = vmax.f32 %v3593, 0.0
    %v3880 = vmax.f32 %v3595, 0.0
    %v3881 = vmax.f32 %v3246, 0.0
    %v3882 = vmax.f32 %v3248, 0.0
    %v3883 = vmax.f32 %v3599, 0.0
    %v3884 = vmax.f32 %v3601, 0.0
    %v3885 = vmax.f32 %v3250, 0.0
    %v3886 = vmax.f32 %v3252, 0.0
    %v3887 = vmax.f32 %v3603, 0.0
    %v3888 = vmax.f32 %v3605, 0.0
    %v3889 = vmax.f32 %v3256, 0.0
    %v3890 = vmax.f32 %v3258, 0.0
    %v3891 = vmax.f32 %v3609, 0.0
    %v3892 = vmax.f32 %v3611, 0.0
    %v3893 = vmax.f32 %v3260, 0.0
    %v3894 = vmax.f32 %v3262, 0.0
    %v3895 = vmax.f32 %v3613, 0.0
    %v3896 = vmax.f32 %v3615, 0.0
    %v3897 = vmax.f32 %v3266, 0.0
    %v3898 = vmax.f32 %v3268, 0.0
    %v3899 = vmax.f32 %v3619, 0.0
    %v3900 = vmax.f32 %v3621, 0.0
    %v3901 = vmax.f32 %v3270, 0.0
    %v3902 = vmax.f32 %v3272, 0.0
    %v3903 = vmax.f32 %v3623, 0.0
    %v3904 = vmax.f32 %v3625, 0.0
    %v3905 = vmax.f32 %v3276, 0.0
    %v3906 = vmax.f32 %v3278, 0.0
    %v3907 = vmax.f32 %v3629, 0.0
    %v3908 = vmax.f32 %v3631, 0.0
    %v3909 = vmax.f32 %v3280, 0.0
    %v3910 = vmax.f32 %v3282, 0.0
    %v3911 = vmax.f32 %v3633, 0.0
    %v3912 = vmax.f32 %v3635, 0.0
    %v3913 = vmax.f32 %v3286, 0.0
    %v3914 = vmax.f32 %v3288, 0.0
    %v3915 = vmax.f32 %v3639, 0.0
    %v3916 = vmax.f32 %v3641, 0.0
    %v3917 = vmax.f32 %v3290, 0.0
    %v3918 = vmax.f32 %v3292, 0.0
    %v3919 = vmax.f32 %v3643, 0.0
    %v3920 = vmax.f32 %v3645, 0.0
    %v3921 = vmax.f32 %v3296, 0.0
    %v3922 = vmax.f32 %v3298, 0.0
    %v3923 = vmax.f32 %v3649, 0.0
    %v3924 = vmax.f32 %v3651, 0.0
    %v3925 = vmax.f32 %v3300, 0.0
    %v3926 = vmax.f32 %v3302, 0.0
    %v3927 = vmax.f32 %v3653, 0.0
    %v3928 = vmax.f32 %v3655, 0.0
    %v3929 = vmax.f32 %v3306, 0.0
    %v3930 = vmax.f32 %v3308, 0.0
    %v3931 = vmax.f32 %v3659, 0.0
    %v3932 = vmax.f32 %v3661, 0.0
    %v3933 = vmax.f32 %v3310, 0.0
    %v3934 = vmax.f32 %v3312, 0.0
    %v3935 = vmax.f32 %v3663, 0.0
    %v3936 = vmax.f32 %v3665, 0.0
    %v3937 = vmax.f32 %v3316, 0.0
    %v3938 = vmax.f32 %v3318, 0.0
    %v3939 = vmax.f32 %v3669, 0.0
    %v3940 = vmax.f32 %v3671, 0.0
    %v3941 = vmax.f32 %v3320, 0.0
    %v3942 = vmax.f32 %v3322, 0.0
    %v3943 = vmax.f32 %v3673, 0.0
    %v3944 = vmax.f32 %v3675, 0.0
    %v3945 = vmax.f32 %v3326, 0.0
    %v3946 = vmax.f32 %v3328, 0.0
    %v3947 = vmax.f32 %v3679, 0.0
    %v3948 = vmax.f32 %v3681, 0.0
    %v3949 = vmax.f32 %v3330, 0.0
    %v3950 = vmax.f32 %v3332, 0.0
    %v3951 = vmax.f32 %v3683, 0.0
    %v3952 = vmax.f32 %v3685, 0.0
    %v3953 = vmax.f32 %v3336, 0.0
    %v3954 = vmax.f32 %v3338, 0.0
    %v3955 = vmax.f32 %v3689, 0.0
    %v3956 = vmax.f32 %v3691, 0.0
    %v3957 = vmax.f32 %v3340, 0.0
    %v3958 = vmax.f32 %v3342, 0.0
    %v3959 = vmax.f32 %v3693, 0.0
    %v3960 = vmax.f32 %v3695, 0.0
    %v3961 = vmax.f32 %v3346, 0.0
    %v3962 = vmax.f32 %v3348, 0.0
    %v3963 = vmax.f32 %v3699, 0.0
    %v3964 = vmax.f32 %v3701, 0.0
    %v3965 = vmax.f32 %v3350, 0.0
    %v3966 = vmax.f32 %v3352, 0.0
    %v3967 = vmax.f32 %v3703, 0.0
    %v3968 = vmax.f32 %v3705, 0.0
    %v3969 = vmax.f32 %v3356, 0.0
    %v3970 = vmax.f32 %v3358, 0.0
    %v3971 = vmax.f32 %v3709, 0.0
    %v3972 = vmax.f32 %v3711, 0.0
    %v3973 = vmax.f32 %v3360, 0.0
    %v3974 = vmax.f32 %v3362, 0.0
    %v3975 = vmax.f32 %v3713, 0.0
    %v3976 = vmax.f32 %v3715, 0.0
    %v3977 = vmax.f32 %v3366, 0.0
    %v3978 = vmax.f32 %v3368, 0.0
    %v3979 = vmax.f32 %v3719, 0.0
    %v3980 = vmax.f32 %v3721, 0.0
    %v3981 = vmax.f32 %v3370, 0.0
    %v3982 = vmax.f32 %v3372, 0.0
    %v3983 = vmax.f32 %v3723, 0.0
    %v3984 = vmax.f32 %v3725, 0.0
    %v3985 = vmax.f32 %v3376, 0.0
    %v3986 = vmax.f32 %v3378, 0.0
    %v3987 = vmax.f32 %v3729, 0.0
    %v3988 = vmax.f32 %v3731, 0.0
    %v3989 = vmax.f32 %v3380, 0.0
    %v3990 = vmax.f32 %v3382, 0.0
    %v3991 = vmax.f32 %v3733, 0.0
    %v3992 = vmax.f32 %v3735, 0.0
    %v3993 = vpack.c.bf16 %v3741, %v3737
    %v3994 = vpack.c.bf16 %v3742, %v3738
    %v3995 = vpack.c.bf16 %v3743, %v3739
    %v3996 = vpack.c.bf16 %v3744, %v3740
    %v3997 = vpack.c.bf16 %v3749, %v3745
    %v3998 = vpack.c.bf16 %v3750, %v3746
    %v3999 = vpack.c.bf16 %v3751, %v3747
    %v4000 = vpack.c.bf16 %v3752, %v3748
    %v4001 = vpack.c.bf16 %v3757, %v3753
    %v4002 = vpack.c.bf16 %v3758, %v3754
    %v4003 = vpack.c.bf16 %v3759, %v3755
    %v4004 = vpack.c.bf16 %v3760, %v3756
    %v4005 = vpack.c.bf16 %v3765, %v3761
    %v4006 = vpack.c.bf16 %v3766, %v3762
    %v4007 = vpack.c.bf16 %v3767, %v3763
    %v4008 = vpack.c.bf16 %v3768, %v3764
    %v4009 = vpack.c.bf16 %v3773, %v3769
    %v4010 = vpack.c.bf16 %v3774, %v3770
    %v4011 = vpack.c.bf16 %v3775, %v3771
    %v4012 = vpack.c.bf16 %v3776, %v3772
    %v4013 = vpack.c.bf16 %v3781, %v3777
    %v4014 = vpack.c.bf16 %v3782, %v3778
    %v4015 = vpack.c.bf16 %v3783, %v3779
    %v4016 = vpack.c.bf16 %v3784, %v3780
    %v4017 = vpack.c.bf16 %v3789, %v3785
    %v4018 = vpack.c.bf16 %v3790, %v3786
    %v4019 = vpack.c.bf16 %v3791, %v3787
    %v4020 = vpack.c.bf16 %v3792, %v3788
    %v4021 = vpack.c.bf16 %v3797, %v3793
    %v4022 = vpack.c.bf16 %v3798, %v3794
    %v4023 = vpack.c.bf16 %v3799, %v3795
    %v4024 = vpack.c.bf16 %v3800, %v3796
    %v4025 = vpack.c.bf16 %v3805, %v3801
    %v4026 = vpack.c.bf16 %v3806, %v3802
    %v4027 = vpack.c.bf16 %v3807, %v3803
    %v4028 = vpack.c.bf16 %v3808, %v3804
    %v4029 = vpack.c.bf16 %v3813, %v3809
    %v4030 = vpack.c.bf16 %v3814, %v3810
    %v4031 = vpack.c.bf16 %v3815, %v3811
    %v4032 = vpack.c.bf16 %v3816, %v3812
    %v4033 = vpack.c.bf16 %v3821, %v3817
    %v4034 = vpack.c.bf16 %v3822, %v3818
    %v4035 = vpack.c.bf16 %v3823, %v3819
    %v4036 = vpack.c.bf16 %v3824, %v3820
    %v4037 = vpack.c.bf16 %v3829, %v3825
    %v4038 = vpack.c.bf16 %v3830, %v3826
    %v4039 = vpack.c.bf16 %v3831, %v3827
    %v4040 = vpack.c.bf16 %v3832, %v3828
    %v4041 = vpack.c.bf16 %v3837, %v3833
    %v4042 = vpack.c.bf16 %v3838, %v3834
    %v4043 = vpack.c.bf16 %v3839, %v3835
    %v4044 = vpack.c.bf16 %v3840, %v3836
    %v4045 = vpack.c.bf16 %v3845, %v3841
    %v4046 = vpack.c.bf16 %v3846, %v3842
    %v4047 = vpack.c.bf16 %v3847, %v3843
    %v4048 = vpack.c.bf16 %v3848, %v3844
    %v4049 = vpack.c.bf16 %v3853, %v3849
    %v4050 = vpack.c.bf16 %v3854, %v3850
    %v4051 = vpack.c.bf16 %v3855, %v3851
    %v4052 = vpack.c.bf16 %v3856, %v3852
    %v4053 = vpack.c.bf16 %v3861, %v3857
    %v4054 = vpack.c.bf16 %v3862, %v3858
    %v4055 = vpack.c.bf16 %v3863, %v3859
    %v4056 = vpack.c.bf16 %v3864, %v3860
    %v4057 = vpack.c.bf16 %v3869, %v3865
    %v4058 = vpack.c.bf16 %v3870, %v3866
    %v4059 = vpack.c.bf16 %v3871, %v3867
    %v4060 = vpack.c.bf16 %v3872, %v3868
    %v4061 = vpack.c.bf16 %v3877, %v3873
    %v4062 = vpack.c.bf16 %v3878, %v3874
    %v4063 = vpack.c.bf16 %v3879, %v3875
    %v4064 = vpack.c.bf16 %v3880, %v3876
    %v4065 = vpack.c.bf16 %v3885, %v3881
    %v4066 = vpack.c.bf16 %v3886, %v3882
    %v4067 = vpack.c.bf16 %v3887, %v3883
    %v4068 = vpack.c.bf16 %v3888, %v3884
    %v4069 = vpack.c.bf16 %v3893, %v3889
    %v4070 = vpack.c.bf16 %v3894, %v3890
    %v4071 = vpack.c.bf16 %v3895, %v3891
    %v4072 = vpack.c.bf16 %v3896, %v3892
    %v4073 = vpack.c.bf16 %v3901, %v3897
    %v4074 = vpack.c.bf16 %v3902, %v3898
    %v4075 = vpack.c.bf16 %v3903, %v3899
    %v4076 = vpack.c.bf16 %v3904, %v3900
    %v4077 = vpack.c.bf16 %v3909, %v3905
    %v4078 = vpack.c.bf16 %v3910, %v3906
    %v4079 = vpack.c.bf16 %v3911, %v3907
    %v4080 = vpack.c.bf16 %v3912, %v3908
    %v4081 = vpack.c.bf16 %v3917, %v3913
    %v4082 = vpack.c.bf16 %v3918, %v3914
    %v4083 = vpack.c.bf16 %v3919, %v3915
    %v4084 = vpack.c.bf16 %v3920, %v3916
    %v4085 = vpack.c.bf16 %v3925, %v3921
    %v4086 = vpack.c.bf16 %v3926, %v3922
    %v4087 = vpack.c.bf16 %v3927, %v3923
    %v4088 = vpack.c.bf16 %v3928, %v3924
    %v4089 = vpack.c.bf16 %v3933, %v3929
    %v4090 = vpack.c.bf16 %v3934, %v3930
    %v4091 = vpack.c.bf16 %v3935, %v3931
    %v4092 = vpack.c.bf16 %v3936, %v3932
    %v4093 = vpack.c.bf16 %v3941, %v3937
    %v4094 = vpack.c.bf16 %v3942, %v3938
    %v4095 = vpack.c.bf16 %v3943, %v3939
    %v4096 = vpack.c.bf16 %v3944, %v3940
    %v4097 = vpack.c.bf16 %v3949, %v3945
    %v4098 = vpack.c.bf16 %v3950, %v3946
    %v4099 = vpack.c.bf16 %v3951, %v3947
    %v4100 = vpack.c.bf16 %v3952, %v3948
    %v4101 = vpack.c.bf16 %v3957, %v3953
    %v4102 = vpack.c.bf16 %v3958, %v3954
    %v4103 = vpack.c.bf16 %v3959, %v3955
    %v4104 = vpack.c.bf16 %v3960, %v3956
    %v4105 = vpack.c.bf16 %v3965, %v3961
    %v4106 = vpack.c.bf16 %v3966, %v3962
    %v4107 = vpack.c.bf16 %v3967, %v3963
    %v4108 = vpack.c.bf16 %v3968, %v3964
    %v4109 = vpack.c.bf16 %v3973, %v3969
    %v4110 = vpack.c.bf16 %v3974, %v3970
    %v4111 = vpack.c.bf16 %v3975, %v3971
    %v4112 = vpack.c.bf16 %v3976, %v3972
    %v4113 = vpack.c.bf16 %v3981, %v3977
    %v4114 = vpack.c.bf16 %v3982, %v3978
    %v4115 = vpack.c.bf16 %v3983, %v3979
    %v4116 = vpack.c.bf16 %v3984, %v3980
    %v4117 = vpack.c.bf16 %v3989, %v3985
    %v4118 = vpack.c.bf16 %v3990, %v3986
    %v4119 = vpack.c.bf16 %v3991, %v3987
    %v4120 = vpack.c.bf16 %v3992, %v3988
    %v4121 = vld [vmem:[%s5] sm:$0xff]
    %v4122 = vld [vmem:[%s5 + $0x8] sm:$0xff]
    %v4123 = vld [vmem:[%s5 + $0x10] sm:$0xff]
    %v4124 = vld [vmem:[%s5 + $0x18] sm:$0xff]
    %v4125 = vld [vmem:[%s5 + $0x20] sm:$0xff]
    %v4126 = vld [vmem:[%s5 + $0x28] sm:$0xff]
    %v4127 = vld [vmem:[%s5 + $0x30] sm:$0xff]
    %v4128 = vld [vmem:[%s5 + $0x38] sm:$0xff]
    %v4129 = vld [vmem:[%s5 + $0x40] sm:$0xff]
    %v4130 = vld [vmem:[%s5 + $0x48] sm:$0xff]
    %v4131 = vld [vmem:[%s5 + $0x50] sm:$0xff]
    %v4132 = vld [vmem:[%s5 + $0x58] sm:$0xff]
    %v4133 = vld [vmem:[%s5 + $0x60] sm:$0xff]
    %v4134 = vld [vmem:[%s5 + $0x68] sm:$0xff]
    %v4135 = vld [vmem:[%s5 + $0x70] sm:$0xff]
    %v4136 = vld [vmem:[%s5 + $0x78] sm:$0xff]
    %v4137 = vld [vmem:[%s5 + $0x80] sm:$0xff]
    %v4138 = vld [vmem:[%s5 + $0x88] sm:$0xff]
    %v4139 = vld [vmem:[%s5 + $0x90] sm:$0xff]
    %v4140 = vld [vmem:[%s5 + $0x98] sm:$0xff]
    %v4141 = vld [vmem:[%s5 + $0xa0] sm:$0xff]
    %v4142 = vld [vmem:[%s5 + $0xa8] sm:$0xff]
    %v4143 = vld [vmem:[%s5 + $0xb0] sm:$0xff]
    %v4144 = vld [vmem:[%s5 + $0xb8] sm:$0xff]
    %v4145 = vld [vmem:[%s5 + $0xc0] sm:$0xff]
    %v4146 = vld [vmem:[%s5 + $0xc8] sm:$0xff]
    %v4147 = vld [vmem:[%s5 + $0xd0] sm:$0xff]
    %v4148 = vld [vmem:[%s5 + $0xd8] sm:$0xff]
    %v4149 = vld [vmem:[%s5 + $0xe0] sm:$0xff]
    %v4150 = vld [vmem:[%s5 + $0xe8] sm:$0xff]
    %v4151 = vld [vmem:[%s5 + $0xf0] sm:$0xff]
    %v4152 = vld [vmem:[%s5 + $0xf8] sm:$0xff]
    %v4153 = vld [vmem:[%s5 + $0x100] sm:$0xff]
    %v4154 = vld [vmem:[%s5 + $0x108] sm:$0xff]
    %v4155 = vld [vmem:[%s5 + $0x110] sm:$0xff]
    %v4156 = vld [vmem:[%s5 + $0x118] sm:$0xff]
    %v4157 = vld [vmem:[%s5 + $0x120] sm:$0xff]
    %v4158 = vld [vmem:[%s5 + $0x128] sm:$0xff]
    %v4159 = vld [vmem:[%s5 + $0x130] sm:$0xff]
    %v4160 = vld [vmem:[%s5 + $0x138] sm:$0xff]
    %v4161 = vld [vmem:[%s5 + $0x140] sm:$0xff]
    %v4162 = vld [vmem:[%s5 + $0x148] sm:$0xff]
    %v4163 = vld [vmem:[%s5 + $0x150] sm:$0xff]
    %v4164 = vld [vmem:[%s5 + $0x158] sm:$0xff]
    %v4165 = vld [vmem:[%s5 + $0x160] sm:$0xff]
    %v4166 = vld [vmem:[%s5 + $0x168] sm:$0xff]
    %v4167 = vld [vmem:[%s5 + $0x170] sm:$0xff]
    %v4168 = vld [vmem:[%s5 + $0x178] sm:$0xff]
    %v4169 = vld [vmem:[%s5 + $0x180] sm:$0xff]
    %v4170 = vld [vmem:[%s5 + $0x188] sm:$0xff]
    %v4171 = vld [vmem:[%s5 + $0x190] sm:$0xff]
    %v4172 = vld [vmem:[%s5 + $0x198] sm:$0xff]
    %v4173 = vld [vmem:[%s5 + $0x1a0] sm:$0xff]
    %v4174 = vld [vmem:[%s5 + $0x1a8] sm:$0xff]
    %v4175 = vld [vmem:[%s5 + $0x1b0] sm:$0xff]
    %v4176 = vld [vmem:[%s5 + $0x1b8] sm:$0xff]
    %v4177 = vld [vmem:[%s5 + $0x1c0] sm:$0xff]
    %v4178 = vld [vmem:[%s5 + $0x1c8] sm:$0xff]
    %v4179 = vld [vmem:[%s5 + $0x1d0] sm:$0xff]
    %v4180 = vld [vmem:[%s5 + $0x1d8] sm:$0xff]
    %v4181 = vld [vmem:[%s5 + $0x1e0] sm:$0xff]
    %v4182 = vld [vmem:[%s5 + $0x1e8] sm:$0xff]
    %v4183 = vld [vmem:[%s5 + $0x1f0] sm:$0xff]
    %v4184 = vld [vmem:[%s5 + $0x1f8] sm:$0xff]
    %v4185 = vld [vmem:[%s5 + $0x200] sm:$0xff]
    %v4186 = vld [vmem:[%s5 + $0x208] sm:$0xff]
    %v4187 = vld [vmem:[%s5 + $0x210] sm:$0xff]
    %v4188 = vld [vmem:[%s5 + $0x218] sm:$0xff]
    %v4189 = vld [vmem:[%s5 + $0x220] sm:$0xff]
    %v4190 = vld [vmem:[%s5 + $0x228] sm:$0xff]
    %v4191 = vld [vmem:[%s5 + $0x230] sm:$0xff]
    %v4192 = vld [vmem:[%s5 + $0x238] sm:$0xff]
    %v4193 = vld [vmem:[%s5 + $0x240] sm:$0xff]
    %v4194 = vld [vmem:[%s5 + $0x248] sm:$0xff]
    %v4195 = vld [vmem:[%s5 + $0x250] sm:$0xff]
    %v4196 = vld [vmem:[%s5 + $0x258] sm:$0xff]
    %v4197 = vld [vmem:[%s5 + $0x260] sm:$0xff]
    %v4198 = vld [vmem:[%s5 + $0x268] sm:$0xff]
    %v4199 = vld [vmem:[%s5 + $0x270] sm:$0xff]
    %v4200 = vld [vmem:[%s5 + $0x278] sm:$0xff]
    %v4201 = vld [vmem:[%s5 + $0x280] sm:$0xff]
    %v4202 = vld [vmem:[%s5 + $0x288] sm:$0xff]
    %v4203 = vld [vmem:[%s5 + $0x290] sm:$0xff]
    %v4204 = vld [vmem:[%s5 + $0x298] sm:$0xff]
    %v4205 = vld [vmem:[%s5 + $0x2a0] sm:$0xff]
    %v4206 = vld [vmem:[%s5 + $0x2a8] sm:$0xff]
    %v4207 = vld [vmem:[%s5 + $0x2b0] sm:$0xff]
    %v4208 = vld [vmem:[%s5 + $0x2b8] sm:$0xff]
    %v4209 = vld [vmem:[%s5 + $0x2c0] sm:$0xff]
    %v4210 = vld [vmem:[%s5 + $0x2c8] sm:$0xff]
    %v4211 = vld [vmem:[%s5 + $0x2d0] sm:$0xff]
    %v4212 = vld [vmem:[%s5 + $0x2d8] sm:$0xff]
    %v4213 = vld [vmem:[%s5 + $0x2e0] sm:$0xff]
    %v4214 = vld [vmem:[%s5 + $0x2e8] sm:$0xff]
    %v4215 = vld [vmem:[%s5 + $0x2f0] sm:$0xff]
    %v4216 = vld [vmem:[%s5 + $0x2f8] sm:$0xff]
    %v4217 = vld [vmem:[%s5 + $0x300] sm:$0xff]
    %v4218 = vld [vmem:[%s5 + $0x308] sm:$0xff]
    %v4219 = vld [vmem:[%s5 + $0x310] sm:$0xff]
    %v4220 = vld [vmem:[%s5 + $0x318] sm:$0xff]
    %v4221 = vld [vmem:[%s5 + $0x320] sm:$0xff]
    %v4222 = vld [vmem:[%s5 + $0x328] sm:$0xff]
    %v4223 = vld [vmem:[%s5 + $0x330] sm:$0xff]
    %v4224 = vld [vmem:[%s5 + $0x338] sm:$0xff]
    %v4225 = vld [vmem:[%s5 + $0x340] sm:$0xff]
    %v4226 = vld [vmem:[%s5 + $0x348] sm:$0xff]
    %v4227 = vld [vmem:[%s5 + $0x350] sm:$0xff]
    %v4228 = vld [vmem:[%s5 + $0x358] sm:$0xff]
    %v4229 = vld [vmem:[%s5 + $0x360] sm:$0xff]
    %v4230 = vld [vmem:[%s5 + $0x368] sm:$0xff]
    %v4231 = vld [vmem:[%s5 + $0x370] sm:$0xff]
    %v4232 = vld [vmem:[%s5 + $0x378] sm:$0xff]
    %v4233 = vld [vmem:[%s5 + $0x380] sm:$0xff]
    %v4234 = vld [vmem:[%s5 + $0x388] sm:$0xff]
    %v4235 = vld [vmem:[%s5 + $0x390] sm:$0xff]
    %v4236 = vld [vmem:[%s5 + $0x398] sm:$0xff]
    %v4237 = vld [vmem:[%s5 + $0x3a0] sm:$0xff]
    %v4238 = vld [vmem:[%s5 + $0x3a8] sm:$0xff]
    %v4239 = vld [vmem:[%s5 + $0x3b0] sm:$0xff]
    %v4240 = vld [vmem:[%s5 + $0x3b8] sm:$0xff]
    %v4241 = vld [vmem:[%s5 + $0x3c0] sm:$0xff]
    %v4242 = vld [vmem:[%s5 + $0x3c8] sm:$0xff]
    %v4243 = vld [vmem:[%s5 + $0x3d0] sm:$0xff]
    %v4244 = vld [vmem:[%s5 + $0x3d8] sm:$0xff]
    %v4245 = vld [vmem:[%s5 + $0x3e0] sm:$0xff]
    %v4246 = vld [vmem:[%s5 + $0x3e8] sm:$0xff]
    %v4247 = vld [vmem:[%s5 + $0x3f0] sm:$0xff]
    %v4248 = vld [vmem:[%s5 + $0x3f8] sm:$0xff]
    %v4249 = vld [vmem:[%s5 + $0x400] sm:$0xff]
    %v4250 = vld [vmem:[%s5 + $0x408] sm:$0xff]
    %v4251 = vld [vmem:[%s5 + $0x410] sm:$0xff]
    %v4252 = vld [vmem:[%s5 + $0x418] sm:$0xff]
    %v4253 = vld [vmem:[%s5 + $0x420] sm:$0xff]
    %v4254 = vld [vmem:[%s5 + $0x428] sm:$0xff]
    %v4255 = vld [vmem:[%s5 + $0x430] sm:$0xff]
    %v4256 = vld [vmem:[%s5 + $0x438] sm:$0xff]
    %v4257 = vld [vmem:[%s5 + $0x440] sm:$0xff]
    %v4258 = vld [vmem:[%s5 + $0x448] sm:$0xff]
    %v4259 = vld [vmem:[%s5 + $0x450] sm:$0xff]
    %v4260 = vld [vmem:[%s5 + $0x458] sm:$0xff]
    %v4261 = vld [vmem:[%s5 + $0x460] sm:$0xff]
    %v4262 = vld [vmem:[%s5 + $0x468] sm:$0xff]
    %v4263 = vld [vmem:[%s5 + $0x470] sm:$0xff]
    %v4264 = vld [vmem:[%s5 + $0x478] sm:$0xff]
    %v4265 = vld [vmem:[%s5 + $0x480] sm:$0xff]
    %v4266 = vld [vmem:[%s5 + $0x488] sm:$0xff]
    %v4267 = vld [vmem:[%s5 + $0x490] sm:$0xff]
    %v4268 = vld [vmem:[%s5 + $0x498] sm:$0xff]
    %v4269 = vld [vmem:[%s5 + $0x4a0] sm:$0xff]
    %v4270 = vld [vmem:[%s5 + $0x4a8] sm:$0xff]
    %v4271 = vld [vmem:[%s5 + $0x4b0] sm:$0xff]
    %v4272 = vld [vmem:[%s5 + $0x4b8] sm:$0xff]
    %v4273 = vld [vmem:[%s5 + $0x4c0] sm:$0xff]
    %v4274 = vld [vmem:[%s5 + $0x4c8] sm:$0xff]
    %v4275 = vld [vmem:[%s5 + $0x4d0] sm:$0xff]
    %v4276 = vld [vmem:[%s5 + $0x4d8] sm:$0xff]
    %v4277 = vld [vmem:[%s5 + $0x4e0] sm:$0xff]
    %v4278 = vld [vmem:[%s5 + $0x4e8] sm:$0xff]
    %v4279 = vld [vmem:[%s5 + $0x4f0] sm:$0xff]
    %v4280 = vld [vmem:[%s5 + $0x4f8] sm:$0xff]
    %v4281 = vld [vmem:[%s5 + $0x500] sm:$0xff]
    %v4282 = vld [vmem:[%s5 + $0x508] sm:$0xff]
    %v4283 = vld [vmem:[%s5 + $0x510] sm:$0xff]
    %v4284 = vld [vmem:[%s5 + $0x518] sm:$0xff]
    %v4285 = vld [vmem:[%s5 + $0x520] sm:$0xff]
    %v4286 = vld [vmem:[%s5 + $0x528] sm:$0xff]
    %v4287 = vld [vmem:[%s5 + $0x530] sm:$0xff]
    %v4288 = vld [vmem:[%s5 + $0x538] sm:$0xff]
    %v4289 = vld [vmem:[%s5 + $0x540] sm:$0xff]
    %v4290 = vld [vmem:[%s5 + $0x548] sm:$0xff]
    %v4291 = vld [vmem:[%s5 + $0x550] sm:$0xff]
    %v4292 = vld [vmem:[%s5 + $0x558] sm:$0xff]
    %v4293 = vld [vmem:[%s5 + $0x560] sm:$0xff]
    %v4294 = vld [vmem:[%s5 + $0x568] sm:$0xff]
    %v4295 = vld [vmem:[%s5 + $0x570] sm:$0xff]
    %v4296 = vld [vmem:[%s5 + $0x578] sm:$0xff]
    %v4297 = vld [vmem:[%s5 + $0x580] sm:$0xff]
    %v4298 = vld [vmem:[%s5 + $0x588] sm:$0xff]
    %v4299 = vld [vmem:[%s5 + $0x590] sm:$0xff]
    %v4300 = vld [vmem:[%s5 + $0x598] sm:$0xff]
    %v4301 = vld [vmem:[%s5 + $0x5a0] sm:$0xff]
    %v4302 = vld [vmem:[%s5 + $0x5a8] sm:$0xff]
    %v4303 = vld [vmem:[%s5 + $0x5b0] sm:$0xff]
    %v4304 = vld [vmem:[%s5 + $0x5b8] sm:$0xff]
    %v4305 = vld [vmem:[%s5 + $0x5c0] sm:$0xff]
    %v4306 = vld [vmem:[%s5 + $0x5c8] sm:$0xff]
    %v4307 = vld [vmem:[%s5 + $0x5d0] sm:$0xff]
    %v4308 = vld [vmem:[%s5 + $0x5d8] sm:$0xff]
    %v4309 = vld [vmem:[%s5 + $0x5e0] sm:$0xff]
    %v4310 = vld [vmem:[%s5 + $0x5e8] sm:$0xff]
    %v4311 = vld [vmem:[%s5 + $0x5f0] sm:$0xff]
    %v4312 = vld [vmem:[%s5 + $0x5f8] sm:$0xff]
    %v4313 = vld [vmem:[%s5 + $0x600] sm:$0xff]
    %v4314 = vld [vmem:[%s5 + $0x608] sm:$0xff]
    %v4315 = vld [vmem:[%s5 + $0x610] sm:$0xff]
    %v4316 = vld [vmem:[%s5 + $0x618] sm:$0xff]
    %v4317 = vld [vmem:[%s5 + $0x620] sm:$0xff]
    %v4318 = vld [vmem:[%s5 + $0x628] sm:$0xff]
    %v4319 = vld [vmem:[%s5 + $0x630] sm:$0xff]
    %v4320 = vld [vmem:[%s5 + $0x638] sm:$0xff]
    %v4321 = vld [vmem:[%s5 + $0x640] sm:$0xff]
    %v4322 = vld [vmem:[%s5 + $0x648] sm:$0xff]
    %v4323 = vld [vmem:[%s5 + $0x650] sm:$0xff]
    %v4324 = vld [vmem:[%s5 + $0x658] sm:$0xff]
    %v4325 = vld [vmem:[%s5 + $0x660] sm:$0xff]
    %v4326 = vld [vmem:[%s5 + $0x668] sm:$0xff]
    %v4327 = vld [vmem:[%s5 + $0x670] sm:$0xff]
    %v4328 = vld [vmem:[%s5 + $0x678] sm:$0xff]
    %v4329 = vld [vmem:[%s5 + $0x680] sm:$0xff]
    %v4330 = vld [vmem:[%s5 + $0x688] sm:$0xff]
    %v4331 = vld [vmem:[%s5 + $0x690] sm:$0xff]
    %v4332 = vld [vmem:[%s5 + $0x698] sm:$0xff]
    %v4333 = vld [vmem:[%s5 + $0x6a0] sm:$0xff]
    %v4334 = vld [vmem:[%s5 + $0x6a8] sm:$0xff]
    %v4335 = vld [vmem:[%s5 + $0x6b0] sm:$0xff]
    %v4336 = vld [vmem:[%s5 + $0x6b8] sm:$0xff]
    %v4337 = vld [vmem:[%s5 + $0x6c0] sm:$0xff]
    %v4338 = vld [vmem:[%s5 + $0x6c8] sm:$0xff]
    %v4339 = vld [vmem:[%s5 + $0x6d0] sm:$0xff]
    %v4340 = vld [vmem:[%s5 + $0x6d8] sm:$0xff]
    %v4341 = vld [vmem:[%s5 + $0x6e0] sm:$0xff]
    %v4342 = vld [vmem:[%s5 + $0x6e8] sm:$0xff]
    %v4343 = vld [vmem:[%s5 + $0x6f0] sm:$0xff]
    %v4344 = vld [vmem:[%s5 + $0x6f8] sm:$0xff]
    %v4345 = vld [vmem:[%s5 + $0x700] sm:$0xff]
    %v4346 = vld [vmem:[%s5 + $0x708] sm:$0xff]
    %v4347 = vld [vmem:[%s5 + $0x710] sm:$0xff]
    %v4348 = vld [vmem:[%s5 + $0x718] sm:$0xff]
    %v4349 = vld [vmem:[%s5 + $0x720] sm:$0xff]
    %v4350 = vld [vmem:[%s5 + $0x728] sm:$0xff]
    %v4351 = vld [vmem:[%s5 + $0x730] sm:$0xff]
    %v4352 = vld [vmem:[%s5 + $0x738] sm:$0xff]
    %v4353 = vld [vmem:[%s5 + $0x740] sm:$0xff]
    %v4354 = vld [vmem:[%s5 + $0x748] sm:$0xff]
    %v4355 = vld [vmem:[%s5 + $0x750] sm:$0xff]
    %v4356 = vld [vmem:[%s5 + $0x758] sm:$0xff]
    %v4357 = vld [vmem:[%s5 + $0x760] sm:$0xff]
    %v4358 = vld [vmem:[%s5 + $0x768] sm:$0xff]
    %v4359 = vld [vmem:[%s5 + $0x770] sm:$0xff]
    %v4360 = vld [vmem:[%s5 + $0x778] sm:$0xff]
    %v4361 = vld [vmem:[%s5 + $0x780] sm:$0xff]
    %v4362 = vld [vmem:[%s5 + $0x788] sm:$0xff]
    %v4363 = vld [vmem:[%s5 + $0x790] sm:$0xff]
    %v4364 = vld [vmem:[%s5 + $0x798] sm:$0xff]
    %v4365 = vld [vmem:[%s5 + $0x7a0] sm:$0xff]
    %v4366 = vld [vmem:[%s5 + $0x7a8] sm:$0xff]
    %v4367 = vld [vmem:[%s5 + $0x7b0] sm:$0xff]
    %v4368 = vld [vmem:[%s5 + $0x7b8] sm:$0xff]
    %v4369 = vld [vmem:[%s5 + $0x7c0] sm:$0xff]
    %v4370 = vld [vmem:[%s5 + $0x7c8] sm:$0xff]
    %v4371 = vld [vmem:[%s5 + $0x7d0] sm:$0xff]
    %v4372 = vld [vmem:[%s5 + $0x7d8] sm:$0xff]
    %v4373 = vld [vmem:[%s5 + $0x7e0] sm:$0xff]
    %v4374 = vld [vmem:[%s5 + $0x7e8] sm:$0xff]
    %v4375 = vld [vmem:[%s5 + $0x7f0] sm:$0xff]
    %v4376 = vld [vmem:[%s5 + $0x7f8] sm:$0xff]
    %v4377 = vld [vmem:[%s8 + $0x8] sm:$0xff]
    %v4379 = vlaneseq
    %v4380 = vshrl.u32 %v4379, 7
    %v4381 = vsub.s32 0, %v4380
    %v4382 = vrot.slane %v4377, %v4381
    %v4383 = vlaneseq
    %v4384 = vshrl.u32 %v4383, 7
    %v4385 = vsub.s32 1, %v4384
    %v4386 = vrot.slane %v4377, %v4385
    %v4387 = vlaneseq
    %v4388 = vshrl.u32 %v4387, 7
    %v4389 = vsub.s32 2, %v4388
    %v4390 = vrot.slane %v4377, %v4389
    %v4391 = vlaneseq
    %v4392 = vshrl.u32 %v4391, 7
    %v4393 = vsub.s32 3, %v4392
    %v4394 = vrot.slane %v4377, %v4393
    %v4395 = vlaneseq
    %v4396 = vshrl.u32 %v4395, 7
    %v4397 = vsub.s32 4, %v4396
    %v4398 = vrot.slane %v4377, %v4397
    %v4399 = vlaneseq
    %v4400 = vshrl.u32 %v4399, 7
    %v4401 = vsub.s32 5, %v4400
    %v4402 = vrot.slane %v4377, %v4401
    %v4403 = vlaneseq
    %v4404 = vshrl.u32 %v4403, 7
    %v4405 = vsub.s32 6, %v4404
    %v4406 = vrot.slane %v4377, %v4405
    %v4407 = vlaneseq
    %v4408 = vshrl.u32 %v4407, 7
    %v4409 = vsub.s32 7, %v4408
    %v4410 = vrot.slane %v4377, %v4409
    %v4675 = vunpack.c.l.b16 %v4121
    %v4676 = vunpack.c.h.b16 %v4121
    %v4677 = vunpack.c.l.b16 %v4122
    %v4678 = vunpack.c.h.b16 %v4122
    %v4679 = vunpack.c.l.b16 %v4123
    %v4680 = vunpack.c.h.b16 %v4123
    %v4681 = vunpack.c.l.b16 %v4124
    %v4682 = vunpack.c.h.b16 %v4124
    %v4683 = vunpack.c.l.b16 %v4125
    %v4684 = vunpack.c.h.b16 %v4125
    %v4685 = vunpack.c.l.b16 %v4126
    %v4686 = vunpack.c.h.b16 %v4126
    %v4687 = vunpack.c.l.b16 %v4127
    %v4688 = vunpack.c.h.b16 %v4127
    %v4689 = vunpack.c.l.b16 %v4128
    %v4690 = vunpack.c.h.b16 %v4128
    %v4691 = vunpack.c.l.b16 %v4129
    %v4692 = vunpack.c.h.b16 %v4129
    %v4693 = vunpack.c.l.b16 %v4130
    %v4694 = vunpack.c.h.b16 %v4130
    %v4695 = vunpack.c.l.b16 %v4131
    %v4696 = vunpack.c.h.b16 %v4131
    %v4697 = vunpack.c.l.b16 %v4132
    %v4698 = vunpack.c.h.b16 %v4132
    %v4699 = vunpack.c.l.b16 %v4133
    %v4700 = vunpack.c.h.b16 %v4133
    %v4701 = vunpack.c.l.b16 %v4134
    %v4702 = vunpack.c.h.b16 %v4134
    %v4703 = vunpack.c.l.b16 %v4135
    %v4704 = vunpack.c.h.b16 %v4135
    %v4705 = vunpack.c.l.b16 %v4136
    %v4706 = vunpack.c.h.b16 %v4136
    %v4707 = vunpack.c.l.b16 %v4137
    %v4708 = vunpack.c.h.b16 %v4137
    %v4709 = vunpack.c.l.b16 %v4138
    %v4710 = vunpack.c.h.b16 %v4138
    %v4711 = vunpack.c.l.b16 %v4139
    %v4712 = vunpack.c.h.b16 %v4139
    %v4713 = vunpack.c.l.b16 %v4140
    %v4714 = vunpack.c.h.b16 %v4140
    %v4715 = vunpack.c.l.b16 %v4141
    %v4716 = vunpack.c.h.b16 %v4141
    %v4717 = vunpack.c.l.b16 %v4142
    %v4718 = vunpack.c.h.b16 %v4142
    %v4719 = vunpack.c.l.b16 %v4143
    %v4720 = vunpack.c.h.b16 %v4143
    %v4721 = vunpack.c.l.b16 %v4144
    %v4722 = vunpack.c.h.b16 %v4144
    %v4723 = vunpack.c.l.b16 %v4145
    %v4724 = vunpack.c.h.b16 %v4145
    %v4725 = vunpack.c.l.b16 %v4146
    %v4726 = vunpack.c.h.b16 %v4146
    %v4727 = vunpack.c.l.b16 %v4147
    %v4728 = vunpack.c.h.b16 %v4147
    %v4729 = vunpack.c.l.b16 %v4148
    %v4730 = vunpack.c.h.b16 %v4148
    %v4731 = vunpack.c.l.b16 %v4149
    %v4732 = vunpack.c.h.b16 %v4149
    %v4733 = vunpack.c.l.b16 %v4150
    %v4734 = vunpack.c.h.b16 %v4150
    %v4735 = vunpack.c.l.b16 %v4151
    %v4736 = vunpack.c.h.b16 %v4151
    %v4737 = vunpack.c.l.b16 %v4152
    %v4738 = vunpack.c.h.b16 %v4152
    %v4739 = vunpack.c.l.b16 %v4153
    %v4740 = vunpack.c.h.b16 %v4153
    %v4741 = vunpack.c.l.b16 %v4154
    %v4742 = vunpack.c.h.b16 %v4154
    %v4743 = vunpack.c.l.b16 %v4155
    %v4744 = vunpack.c.h.b16 %v4155
    %v4745 = vunpack.c.l.b16 %v4156
    %v4746 = vunpack.c.h.b16 %v4156
    %v4747 = vunpack.c.l.b16 %v4157
    %v4748 = vunpack.c.h.b16 %v4157
    %v4749 = vunpack.c.l.b16 %v4158
    %v4750 = vunpack.c.h.b16 %v4158
    %v4751 = vunpack.c.l.b16 %v4159
    %v4752 = vunpack.c.h.b16 %v4159
    %v4753 = vunpack.c.l.b16 %v4160
    %v4754 = vunpack.c.h.b16 %v4160
    %v4755 = vunpack.c.l.b16 %v4161
    %v4756 = vunpack.c.h.b16 %v4161
    %v4757 = vunpack.c.l.b16 %v4162
    %v4758 = vunpack.c.h.b16 %v4162
    %v4759 = vunpack.c.l.b16 %v4163
    %v4760 = vunpack.c.h.b16 %v4163
    %v4761 = vunpack.c.l.b16 %v4164
    %v4762 = vunpack.c.h.b16 %v4164
    %v4763 = vunpack.c.l.b16 %v4165
    %v4764 = vunpack.c.h.b16 %v4165
    %v4765 = vunpack.c.l.b16 %v4166
    %v4766 = vunpack.c.h.b16 %v4166
    %v4767 = vunpack.c.l.b16 %v4167
    %v4768 = vunpack.c.h.b16 %v4167
    %v4769 = vunpack.c.l.b16 %v4168
    %v4770 = vunpack.c.h.b16 %v4168
    %v4771 = vunpack.c.l.b16 %v4169
    %v4772 = vunpack.c.h.b16 %v4169
    %v4773 = vunpack.c.l.b16 %v4170
    %v4774 = vunpack.c.h.b16 %v4170
    %v4775 = vunpack.c.l.b16 %v4171
    %v4776 = vunpack.c.h.b16 %v4171
    %v4777 = vunpack.c.l.b16 %v4172
    %v4778 = vunpack.c.h.b16 %v4172
    %v4779 = vunpack.c.l.b16 %v4173
    %v4780 = vunpack.c.h.b16 %v4173
    %v4781 = vunpack.c.l.b16 %v4174
    %v4782 = vunpack.c.h.b16 %v4174
    %v4783 = vunpack.c.l.b16 %v4175
    %v4784 = vunpack.c.h.b16 %v4175
    %v4785 = vunpack.c.l.b16 %v4176
    %v4786 = vunpack.c.h.b16 %v4176
    %v4787 = vunpack.c.l.b16 %v4177
    %v4788 = vunpack.c.h.b16 %v4177
    %v4789 = vunpack.c.l.b16 %v4178
    %v4790 = vunpack.c.h.b16 %v4178
    %v4791 = vunpack.c.l.b16 %v4179
    %v4792 = vunpack.c.h.b16 %v4179
    %v4793 = vunpack.c.l.b16 %v4180
    %v4794 = vunpack.c.h.b16 %v4180
    %v4795 = vunpack.c.l.b16 %v4181
    %v4796 = vunpack.c.h.b16 %v4181
    %v4797 = vunpack.c.l.b16 %v4182
    %v4798 = vunpack.c.h.b16 %v4182
    %v4799 = vunpack.c.l.b16 %v4183
    %v4800 = vunpack.c.h.b16 %v4183
    %v4801 = vunpack.c.l.b16 %v4184
    %v4802 = vunpack.c.h.b16 %v4184
    %v4803 = vunpack.c.l.b16 %v4185
    %v4804 = vunpack.c.h.b16 %v4185
    %v4805 = vunpack.c.l.b16 %v4186
    %v4806 = vunpack.c.h.b16 %v4186
    %v4807 = vunpack.c.l.b16 %v4187
    %v4808 = vunpack.c.h.b16 %v4187
    %v4809 = vunpack.c.l.b16 %v4188
    %v4810 = vunpack.c.h.b16 %v4188
    %v4811 = vunpack.c.l.b16 %v4189
    %v4812 = vunpack.c.h.b16 %v4189
    %v4813 = vunpack.c.l.b16 %v4190
    %v4814 = vunpack.c.h.b16 %v4190
    %v4815 = vunpack.c.l.b16 %v4191
    %v4816 = vunpack.c.h.b16 %v4191
    %v4817 = vunpack.c.l.b16 %v4192
    %v4818 = vunpack.c.h.b16 %v4192
    %v4819 = vunpack.c.l.b16 %v4193
    %v4820 = vunpack.c.h.b16 %v4193
    %v4821 = vunpack.c.l.b16 %v4194
    %v4822 = vunpack.c.h.b16 %v4194
    %v4823 = vunpack.c.l.b16 %v4195
    %v4824 = vunpack.c.h.b16 %v4195
    %v4825 = vunpack.c.l.b16 %v4196
    %v4826 = vunpack.c.h.b16 %v4196
    %v4827 = vunpack.c.l.b16 %v4197
    %v4828 = vunpack.c.h.b16 %v4197
    %v4829 = vunpack.c.l.b16 %v4198
    %v4830 = vunpack.c.h.b16 %v4198
    %v4831 = vunpack.c.l.b16 %v4199
    %v4832 = vunpack.c.h.b16 %v4199
    %v4833 = vunpack.c.l.b16 %v4200
    %v4834 = vunpack.c.h.b16 %v4200
    %v4835 = vunpack.c.l.b16 %v4201
    %v4836 = vunpack.c.h.b16 %v4201
    %v4837 = vunpack.c.l.b16 %v4202
    %v4838 = vunpack.c.h.b16 %v4202
    %v4839 = vunpack.c.l.b16 %v4203
    %v4840 = vunpack.c.h.b16 %v4203
    %v4841 = vunpack.c.l.b16 %v4204
    %v4842 = vunpack.c.h.b16 %v4204
    %v4843 = vunpack.c.l.b16 %v4205
    %v4844 = vunpack.c.h.b16 %v4205
    %v4845 = vunpack.c.l.b16 %v4206
    %v4846 = vunpack.c.h.b16 %v4206
    %v4847 = vunpack.c.l.b16 %v4207
    %v4848 = vunpack.c.h.b16 %v4207
    %v4849 = vunpack.c.l.b16 %v4208
    %v4850 = vunpack.c.h.b16 %v4208
    %v4851 = vunpack.c.l.b16 %v4209
    %v4852 = vunpack.c.h.b16 %v4209
    %v4853 = vunpack.c.l.b16 %v4210
    %v4854 = vunpack.c.h.b16 %v4210
    %v4855 = vunpack.c.l.b16 %v4211
    %v4856 = vunpack.c.h.b16 %v4211
    %v4857 = vunpack.c.l.b16 %v4212
    %v4858 = vunpack.c.h.b16 %v4212
    %v4859 = vunpack.c.l.b16 %v4213
    %v4860 = vunpack.c.h.b16 %v4213
    %v4861 = vunpack.c.l.b16 %v4214
    %v4862 = vunpack.c.h.b16 %v4214
    %v4863 = vunpack.c.l.b16 %v4215
    %v4864 = vunpack.c.h.b16 %v4215
    %v4865 = vunpack.c.l.b16 %v4216
    %v4866 = vunpack.c.h.b16 %v4216
    %v4867 = vunpack.c.l.b16 %v4217
    %v4868 = vunpack.c.h.b16 %v4217
    %v4869 = vunpack.c.l.b16 %v4218
    %v4870 = vunpack.c.h.b16 %v4218
    %v4871 = vunpack.c.l.b16 %v4219
    %v4872 = vunpack.c.h.b16 %v4219
    %v4873 = vunpack.c.l.b16 %v4220
    %v4874 = vunpack.c.h.b16 %v4220
    %v4875 = vunpack.c.l.b16 %v4221
    %v4876 = vunpack.c.h.b16 %v4221
    %v4877 = vunpack.c.l.b16 %v4222
    %v4878 = vunpack.c.h.b16 %v4222
    %v4879 = vunpack.c.l.b16 %v4223
    %v4880 = vunpack.c.h.b16 %v4223
    %v4881 = vunpack.c.l.b16 %v4224
    %v4882 = vunpack.c.h.b16 %v4224
    %v4883 = vunpack.c.l.b16 %v4225
    %v4884 = vunpack.c.h.b16 %v4225
    %v4885 = vunpack.c.l.b16 %v4226
    %v4886 = vunpack.c.h.b16 %v4226
    %v4887 = vunpack.c.l.b16 %v4227
    %v4888 = vunpack.c.h.b16 %v4227
    %v4889 = vunpack.c.l.b16 %v4228
    %v4890 = vunpack.c.h.b16 %v4228
    %v4891 = vunpack.c.l.b16 %v4229
    %v4892 = vunpack.c.h.b16 %v4229
    %v4893 = vunpack.c.l.b16 %v4230
    %v4894 = vunpack.c.h.b16 %v4230
    %v4895 = vunpack.c.l.b16 %v4231
    %v4896 = vunpack.c.h.b16 %v4231
    %v4897 = vunpack.c.l.b16 %v4232
    %v4898 = vunpack.c.h.b16 %v4232
    %v4899 = vunpack.c.l.b16 %v4233
    %v4900 = vunpack.c.h.b16 %v4233
    %v4901 = vunpack.c.l.b16 %v4234
    %v4902 = vunpack.c.h.b16 %v4234
    %v4903 = vunpack.c.l.b16 %v4235
    %v4904 = vunpack.c.h.b16 %v4235
    %v4905 = vunpack.c.l.b16 %v4236
    %v4906 = vunpack.c.h.b16 %v4236
    %v4907 = vunpack.c.l.b16 %v4237
    %v4908 = vunpack.c.h.b16 %v4237
    %v4909 = vunpack.c.l.b16 %v4238
    %v4910 = vunpack.c.h.b16 %v4238
    %v4911 = vunpack.c.l.b16 %v4239
    %v4912 = vunpack.c.h.b16 %v4239
    %v4913 = vunpack.c.l.b16 %v4240
    %v4914 = vunpack.c.h.b16 %v4240
    %v4915 = vunpack.c.l.b16 %v4241
    %v4916 = vunpack.c.h.b16 %v4241
    %v4917 = vunpack.c.l.b16 %v4242
    %v4918 = vunpack.c.h.b16 %v4242
    %v4919 = vunpack.c.l.b16 %v4243
    %v4920 = vunpack.c.h.b16 %v4243
    %v4921 = vunpack.c.l.b16 %v4244
    %v4922 = vunpack.c.h.b16 %v4244
    %v4923 = vunpack.c.l.b16 %v4245
    %v4924 = vunpack.c.h.b16 %v4245
    %v4925 = vunpack.c.l.b16 %v4246
    %v4926 = vunpack.c.h.b16 %v4246
    %v4927 = vunpack.c.l.b16 %v4247
    %v4928 = vunpack.c.h.b16 %v4247
    %v4929 = vunpack.c.l.b16 %v4248
    %v4930 = vunpack.c.h.b16 %v4248
    %v4931 = vunpack.c.l.b16 %v4249
    %v4932 = vunpack.c.h.b16 %v4249
    %v4933 = vunpack.c.l.b16 %v4250
    %v4934 = vunpack.c.h.b16 %v4250
    %v4935 = vunpack.c.l.b16 %v4251
    %v4936 = vunpack.c.h.b16 %v4251
    %v4937 = vunpack.c.l.b16 %v4252
    %v4938 = vunpack.c.h.b16 %v4252
    %v4939 = vunpack.c.l.b16 %v4253
    %v4940 = vunpack.c.h.b16 %v4253
    %v4941 = vunpack.c.l.b16 %v4254
    %v4942 = vunpack.c.h.b16 %v4254
    %v4943 = vunpack.c.l.b16 %v4255
    %v4944 = vunpack.c.h.b16 %v4255
    %v4945 = vunpack.c.l.b16 %v4256
    %v4946 = vunpack.c.h.b16 %v4256
    %v4947 = vunpack.c.l.b16 %v4257
    %v4948 = vunpack.c.h.b16 %v4257
    %v4949 = vunpack.c.l.b16 %v4258
    %v4950 = vunpack.c.h.b16 %v4258
    %v4951 = vunpack.c.l.b16 %v4259
    %v4952 = vunpack.c.h.b16 %v4259
    %v4953 = vunpack.c.l.b16 %v4260
    %v4954 = vunpack.c.h.b16 %v4260
    %v4955 = vunpack.c.l.b16 %v4261
    %v4956 = vunpack.c.h.b16 %v4261
    %v4957 = vunpack.c.l.b16 %v4262
    %v4958 = vunpack.c.h.b16 %v4262
    %v4959 = vunpack.c.l.b16 %v4263
    %v4960 = vunpack.c.h.b16 %v4263
    %v4961 = vunpack.c.l.b16 %v4264
    %v4962 = vunpack.c.h.b16 %v4264
    %v4963 = vunpack.c.l.b16 %v4265
    %v4964 = vunpack.c.h.b16 %v4265
    %v4965 = vunpack.c.l.b16 %v4266
    %v4966 = vunpack.c.h.b16 %v4266
    %v4967 = vunpack.c.l.b16 %v4267
    %v4968 = vunpack.c.h.b16 %v4267
    %v4969 = vunpack.c.l.b16 %v4268
    %v4970 = vunpack.c.h.b16 %v4268
    %v4971 = vunpack.c.l.b16 %v4269
    %v4972 = vunpack.c.h.b16 %v4269
    %v4973 = vunpack.c.l.b16 %v4270
    %v4974 = vunpack.c.h.b16 %v4270
    %v4975 = vunpack.c.l.b16 %v4271
    %v4976 = vunpack.c.h.b16 %v4271
    %v4977 = vunpack.c.l.b16 %v4272
    %v4978 = vunpack.c.h.b16 %v4272
    %v4979 = vunpack.c.l.b16 %v4273
    %v4980 = vunpack.c.h.b16 %v4273
    %v4981 = vunpack.c.l.b16 %v4274
    %v4982 = vunpack.c.h.b16 %v4274
    %v4983 = vunpack.c.l.b16 %v4275
    %v4984 = vunpack.c.h.b16 %v4275
    %v4985 = vunpack.c.l.b16 %v4276
    %v4986 = vunpack.c.h.b16 %v4276
    %v4987 = vunpack.c.l.b16 %v4277
    %v4988 = vunpack.c.h.b16 %v4277
    %v4989 = vunpack.c.l.b16 %v4278
    %v4990 = vunpack.c.h.b16 %v4278
    %v4991 = vunpack.c.l.b16 %v4279
    %v4992 = vunpack.c.h.b16 %v4279
    %v4993 = vunpack.c.l.b16 %v4280
    %v4994 = vunpack.c.h.b16 %v4280
    %v4995 = vunpack.c.l.b16 %v4281
    %v4996 = vunpack.c.h.b16 %v4281
    %v4997 = vunpack.c.l.b16 %v4282
    %v4998 = vunpack.c.h.b16 %v4282
    %v4999 = vunpack.c.l.b16 %v4283
    %v5000 = vunpack.c.h.b16 %v4283
    %v5001 = vunpack.c.l.b16 %v4284
    %v5002 = vunpack.c.h.b16 %v4284
    %v5003 = vunpack.c.l.b16 %v4285
    %v5004 = vunpack.c.h.b16 %v4285
    %v5005 = vunpack.c.l.b16 %v4286
    %v5006 = vunpack.c.h.b16 %v4286
    %v5007 = vunpack.c.l.b16 %v4287
    %v5008 = vunpack.c.h.b16 %v4287
    %v5009 = vunpack.c.l.b16 %v4288
    %v5010 = vunpack.c.h.b16 %v4288
    %v5011 = vunpack.c.l.b16 %v4289
    %v5012 = vunpack.c.h.b16 %v4289
    %v5013 = vunpack.c.l.b16 %v4290
    %v5014 = vunpack.c.h.b16 %v4290
    %v5015 = vunpack.c.l.b16 %v4291
    %v5016 = vunpack.c.h.b16 %v4291
    %v5017 = vunpack.c.l.b16 %v4292
    %v5018 = vunpack.c.h.b16 %v4292
    %v5019 = vunpack.c.l.b16 %v4293
    %v5020 = vunpack.c.h.b16 %v4293
    %v5021 = vunpack.c.l.b16 %v4294
    %v5022 = vunpack.c.h.b16 %v4294
    %v5023 = vunpack.c.l.b16 %v4295
    %v5024 = vunpack.c.h.b16 %v4295
    %v5025 = vunpack.c.l.b16 %v4296
    %v5026 = vunpack.c.h.b16 %v4296
    %v5027 = vunpack.c.l.b16 %v4297
    %v5028 = vunpack.c.h.b16 %v4297
    %v5029 = vunpack.c.l.b16 %v4298
    %v5030 = vunpack.c.h.b16 %v4298
    %v5031 = vunpack.c.l.b16 %v4299
    %v5032 = vunpack.c.h.b16 %v4299
    %v5033 = vunpack.c.l.b16 %v4300
    %v5034 = vunpack.c.h.b16 %v4300
    %v5035 = vunpack.c.l.b16 %v4301
    %v5036 = vunpack.c.h.b16 %v4301
    %v5037 = vunpack.c.l.b16 %v4302
    %v5038 = vunpack.c.h.b16 %v4302
    %v5039 = vunpack.c.l.b16 %v4303
    %v5040 = vunpack.c.h.b16 %v4303
    %v5041 = vunpack.c.l.b16 %v4304
    %v5042 = vunpack.c.h.b16 %v4304
    %v5043 = vunpack.c.l.b16 %v4305
    %v5044 = vunpack.c.h.b16 %v4305
    %v5045 = vunpack.c.l.b16 %v4306
    %v5046 = vunpack.c.h.b16 %v4306
    %v5047 = vunpack.c.l.b16 %v4307
    %v5048 = vunpack.c.h.b16 %v4307
    %v5049 = vunpack.c.l.b16 %v4308
    %v5050 = vunpack.c.h.b16 %v4308
    %v5051 = vunpack.c.l.b16 %v4309
    %v5052 = vunpack.c.h.b16 %v4309
    %v5053 = vunpack.c.l.b16 %v4310
    %v5054 = vunpack.c.h.b16 %v4310
    %v5055 = vunpack.c.l.b16 %v4311
    %v5056 = vunpack.c.h.b16 %v4311
    %v5057 = vunpack.c.l.b16 %v4312
    %v5058 = vunpack.c.h.b16 %v4312
    %v5059 = vunpack.c.l.b16 %v4313
    %v5060 = vunpack.c.h.b16 %v4313
    %v5061 = vunpack.c.l.b16 %v4314
    %v5062 = vunpack.c.h.b16 %v4314
    %v5063 = vunpack.c.l.b16 %v4315
    %v5064 = vunpack.c.h.b16 %v4315
    %v5065 = vunpack.c.l.b16 %v4316
    %v5066 = vunpack.c.h.b16 %v4316
    %v5067 = vunpack.c.l.b16 %v4317
    %v5068 = vunpack.c.h.b16 %v4317
    %v5069 = vunpack.c.l.b16 %v4318
    %v5070 = vunpack.c.h.b16 %v4318
    %v5071 = vunpack.c.l.b16 %v4319
    %v5072 = vunpack.c.h.b16 %v4319
    %v5073 = vunpack.c.l.b16 %v4320
    %v5074 = vunpack.c.h.b16 %v4320
    %v5075 = vunpack.c.l.b16 %v4321
    %v5076 = vunpack.c.h.b16 %v4321
    %v5077 = vunpack.c.l.b16 %v4322
    %v5078 = vunpack.c.h.b16 %v4322
    %v5079 = vunpack.c.l.b16 %v4323
    %v5080 = vunpack.c.h.b16 %v4323
    %v5081 = vunpack.c.l.b16 %v4324
    %v5082 = vunpack.c.h.b16 %v4324
    %v5083 = vunpack.c.l.b16 %v4325
    %v5084 = vunpack.c.h.b16 %v4325
    %v5085 = vunpack.c.l.b16 %v4326
    %v5086 = vunpack.c.h.b16 %v4326
    %v5087 = vunpack.c.l.b16 %v4327
    %v5088 = vunpack.c.h.b16 %v4327
    %v5089 = vunpack.c.l.b16 %v4328
    %v5090 = vunpack.c.h.b16 %v4328
    %v5091 = vunpack.c.l.b16 %v4329
    %v5092 = vunpack.c.h.b16 %v4329
    %v5093 = vunpack.c.l.b16 %v4330
    %v5094 = vunpack.c.h.b16 %v4330
    %v5095 = vunpack.c.l.b16 %v4331
    %v5096 = vunpack.c.h.b16 %v4331
    %v5097 = vunpack.c.l.b16 %v4332
    %v5098 = vunpack.c.h.b16 %v4332
    %v5099 = vunpack.c.l.b16 %v4333
    %v5100 = vunpack.c.h.b16 %v4333
    %v5101 = vunpack.c.l.b16 %v4334
    %v5102 = vunpack.c.h.b16 %v4334
    %v5103 = vunpack.c.l.b16 %v4335
    %v5104 = vunpack.c.h.b16 %v4335
    %v5105 = vunpack.c.l.b16 %v4336
    %v5106 = vunpack.c.h.b16 %v4336
    %v5107 = vunpack.c.l.b16 %v4337
    %v5108 = vunpack.c.h.b16 %v4337
    %v5109 = vunpack.c.l.b16 %v4338
    %v5110 = vunpack.c.h.b16 %v4338
    %v5111 = vunpack.c.l.b16 %v4339
    %v5112 = vunpack.c.h.b16 %v4339
    %v5113 = vunpack.c.l.b16 %v4340
    %v5114 = vunpack.c.h.b16 %v4340
    %v5115 = vunpack.c.l.b16 %v4341
    %v5116 = vunpack.c.h.b16 %v4341
    %v5117 = vunpack.c.l.b16 %v4342
    %v5118 = vunpack.c.h.b16 %v4342
    %v5119 = vunpack.c.l.b16 %v4343
    %v5120 = vunpack.c.h.b16 %v4343
    %v5121 = vunpack.c.l.b16 %v4344
    %v5122 = vunpack.c.h.b16 %v4344
    %v5123 = vunpack.c.l.b16 %v4345
    %v5124 = vunpack.c.h.b16 %v4345
    %v5125 = vunpack.c.l.b16 %v4346
    %v5126 = vunpack.c.h.b16 %v4346
    %v5127 = vunpack.c.l.b16 %v4347
    %v5128 = vunpack.c.h.b16 %v4347
    %v5129 = vunpack.c.l.b16 %v4348
    %v5130 = vunpack.c.h.b16 %v4348
    %v5131 = vunpack.c.l.b16 %v4349
    %v5132 = vunpack.c.h.b16 %v4349
    %v5133 = vunpack.c.l.b16 %v4350
    %v5134 = vunpack.c.h.b16 %v4350
    %v5135 = vunpack.c.l.b16 %v4351
    %v5136 = vunpack.c.h.b16 %v4351
    %v5137 = vunpack.c.l.b16 %v4352
    %v5138 = vunpack.c.h.b16 %v4352
    %v5139 = vunpack.c.l.b16 %v4353
    %v5140 = vunpack.c.h.b16 %v4353
    %v5141 = vunpack.c.l.b16 %v4354
    %v5142 = vunpack.c.h.b16 %v4354
    %v5143 = vunpack.c.l.b16 %v4355
    %v5144 = vunpack.c.h.b16 %v4355
    %v5145 = vunpack.c.l.b16 %v4356
    %v5146 = vunpack.c.h.b16 %v4356
    %v5147 = vunpack.c.l.b16 %v4357
    %v5148 = vunpack.c.h.b16 %v4357
    %v5149 = vunpack.c.l.b16 %v4358
    %v5150 = vunpack.c.h.b16 %v4358
    %v5151 = vunpack.c.l.b16 %v4359
    %v5152 = vunpack.c.h.b16 %v4359
    %v5153 = vunpack.c.l.b16 %v4360
    %v5154 = vunpack.c.h.b16 %v4360
    %v5155 = vunpack.c.l.b16 %v4361
    %v5156 = vunpack.c.h.b16 %v4361
    %v5157 = vunpack.c.l.b16 %v4362
    %v5158 = vunpack.c.h.b16 %v4362
    %v5159 = vunpack.c.l.b16 %v4363
    %v5160 = vunpack.c.h.b16 %v4363
    %v5161 = vunpack.c.l.b16 %v4364
    %v5162 = vunpack.c.h.b16 %v4364
    %v5163 = vunpack.c.l.b16 %v4365
    %v5164 = vunpack.c.h.b16 %v4365
    %v5165 = vunpack.c.l.b16 %v4366
    %v5166 = vunpack.c.h.b16 %v4366
    %v5167 = vunpack.c.l.b16 %v4367
    %v5168 = vunpack.c.h.b16 %v4367
    %v5169 = vunpack.c.l.b16 %v4368
    %v5170 = vunpack.c.h.b16 %v4368
    %v5171 = vunpack.c.l.b16 %v4369
    %v5172 = vunpack.c.h.b16 %v4369
    %v5173 = vunpack.c.l.b16 %v4370
    %v5174 = vunpack.c.h.b16 %v4370
    %v5175 = vunpack.c.l.b16 %v4371
    %v5176 = vunpack.c.h.b16 %v4371
    %v5177 = vunpack.c.l.b16 %v4372
    %v5178 = vunpack.c.h.b16 %v4372
    %v5179 = vunpack.c.l.b16 %v4373
    %v5180 = vunpack.c.h.b16 %v4373
    %v5181 = vunpack.c.l.b16 %v4374
    %v5182 = vunpack.c.h.b16 %v4374
    %v5183 = vunpack.c.l.b16 %v4375
    %v5184 = vunpack.c.h.b16 %v4375
    %v5185 = vunpack.c.l.b16 %v4376
    %v5186 = vunpack.c.h.b16 %v4376
    %v5187 = vpack.c.b16 %v4683, %v4675
    %v5188 = vpack.c.b16 %v4684, %v4676
    %v5189 = vpack.c.b16 %v4685, %v4677
    %v5190 = vpack.c.b16 %v4686, %v4678
    %v5191 = vpack.c.b16 %v4687, %v4679
    %v5192 = vpack.c.b16 %v4688, %v4680
    %v5193 = vpack.c.b16 %v4689, %v4681
    %v5194 = vpack.c.b16 %v4690, %v4682
    %v5195 = vpack.c.b16 %v4699, %v4691
    %v5196 = vpack.c.b16 %v4700, %v4692
    %v5197 = vpack.c.b16 %v4701, %v4693
    %v5198 = vpack.c.b16 %v4702, %v4694
    %v5199 = vpack.c.b16 %v4703, %v4695
    %v5200 = vpack.c.b16 %v4704, %v4696
    %v5201 = vpack.c.b16 %v4705, %v4697
    %v5202 = vpack.c.b16 %v4706, %v4698
    %v5203 = vpack.c.b16 %v4715, %v4707
    %v5204 = vpack.c.b16 %v4716, %v4708
    %v5205 = vpack.c.b16 %v4717, %v4709
    %v5206 = vpack.c.b16 %v4718, %v4710
    %v5207 = vpack.c.b16 %v4719, %v4711
    %v5208 = vpack.c.b16 %v4720, %v4712
    %v5209 = vpack.c.b16 %v4721, %v4713
    %v5210 = vpack.c.b16 %v4722, %v4714
    %v5211 = vpack.c.b16 %v4731, %v4723
    %v5212 = vpack.c.b16 %v4732, %v4724
    %v5213 = vpack.c.b16 %v4733, %v4725
    %v5214 = vpack.c.b16 %v4734, %v4726
    %v5215 = vpack.c.b16 %v4735, %v4727
    %v5216 = vpack.c.b16 %v4736, %v4728
    %v5217 = vpack.c.b16 %v4737, %v4729
    %v5218 = vpack.c.b16 %v4738, %v4730
    %v5219 = vpack.c.b16 %v4747, %v4739
    %v5220 = vpack.c.b16 %v4748, %v4740
    %v5221 = vpack.c.b16 %v4749, %v4741
    %v5222 = vpack.c.b16 %v4750, %v4742
    %v5223 = vpack.c.b16 %v4751, %v4743
    %v5224 = vpack.c.b16 %v4752, %v4744
    %v5225 = vpack.c.b16 %v4753, %v4745
    %v5226 = vpack.c.b16 %v4754, %v4746
    %v5227 = vpack.c.b16 %v4763, %v4755
    %v5228 = vpack.c.b16 %v4764, %v4756
    %v5229 = vpack.c.b16 %v4765, %v4757
    %v5230 = vpack.c.b16 %v4766, %v4758
    %v5231 = vpack.c.b16 %v4767, %v4759
    %v5232 = vpack.c.b16 %v4768, %v4760
    %v5233 = vpack.c.b16 %v4769, %v4761
    %v5234 = vpack.c.b16 %v4770, %v4762
    %v5235 = vpack.c.b16 %v4779, %v4771
    %v5236 = vpack.c.b16 %v4780, %v4772
    %v5237 = vpack.c.b16 %v4781, %v4773
    %v5238 = vpack.c.b16 %v4782, %v4774
    %v5239 = vpack.c.b16 %v4783, %v4775
    %v5240 = vpack.c.b16 %v4784, %v4776
    %v5241 = vpack.c.b16 %v4785, %v4777
    %v5242 = vpack.c.b16 %v4786, %v4778
    %v5243 = vpack.c.b16 %v4795, %v4787
    %v5244 = vpack.c.b16 %v4796, %v4788
    %v5245 = vpack.c.b16 %v4797, %v4789
    %v5246 = vpack.c.b16 %v4798, %v4790
    %v5247 = vpack.c.b16 %v4799, %v4791
    %v5248 = vpack.c.b16 %v4800, %v4792
    %v5249 = vpack.c.b16 %v4801, %v4793
    %v5250 = vpack.c.b16 %v4802, %v4794
    %v5251 = vpack.c.b16 %v4811, %v4803
    %v5252 = vpack.c.b16 %v4812, %v4804
    %v5253 = vpack.c.b16 %v4813, %v4805
    %v5254 = vpack.c.b16 %v4814, %v4806
    %v5255 = vpack.c.b16 %v4815, %v4807
    %v5256 = vpack.c.b16 %v4816, %v4808
    %v5257 = vpack.c.b16 %v4817, %v4809
    %v5258 = vpack.c.b16 %v4818, %v4810
    %v5259 = vpack.c.b16 %v4827, %v4819
    %v5260 = vpack.c.b16 %v4828, %v4820
    %v5261 = vpack.c.b16 %v4829, %v4821
    %v5262 = vpack.c.b16 %v4830, %v4822
    %v5263 = vpack.c.b16 %v4831, %v4823
    %v5264 = vpack.c.b16 %v4832, %v4824
    %v5265 = vpack.c.b16 %v4833, %v4825
    %v5266 = vpack.c.b16 %v4834, %v4826
    %v5267 = vpack.c.b16 %v4843, %v4835
    %v5268 = vpack.c.b16 %v4844, %v4836
    %v5269 = vpack.c.b16 %v4845, %v4837
    %v5270 = vpack.c.b16 %v4846, %v4838
    %v5271 = vpack.c.b16 %v4847, %v4839
    %v5272 = vpack.c.b16 %v4848, %v4840
    %v5273 = vpack.c.b16 %v4849, %v4841
    %v5274 = vpack.c.b16 %v4850, %v4842
    %v5275 = vpack.c.b16 %v4859, %v4851
    %v5276 = vpack.c.b16 %v4860, %v4852
    %v5277 = vpack.c.b16 %v4861, %v4853
    %v5278 = vpack.c.b16 %v4862, %v4854
    %v5279 = vpack.c.b16 %v4863, %v4855
    %v5280 = vpack.c.b16 %v4864, %v4856
    %v5281 = vpack.c.b16 %v4865, %v4857
    %v5282 = vpack.c.b16 %v4866, %v4858
    %v5283 = vpack.c.b16 %v4875, %v4867
    %v5284 = vpack.c.b16 %v4876, %v4868
    %v5285 = vpack.c.b16 %v4877, %v4869
    %v5286 = vpack.c.b16 %v4878, %v4870
    %v5287 = vpack.c.b16 %v4879, %v4871
    %v5288 = vpack.c.b16 %v4880, %v4872
    %v5289 = vpack.c.b16 %v4881, %v4873
    %v5290 = vpack.c.b16 %v4882, %v4874
    %v5291 = vpack.c.b16 %v4891, %v4883
    %v5292 = vpack.c.b16 %v4892, %v4884
    %v5293 = vpack.c.b16 %v4893, %v4885
    %v5294 = vpack.c.b16 %v4894, %v4886
    %v5295 = vpack.c.b16 %v4895, %v4887
    %v5296 = vpack.c.b16 %v4896, %v4888
    %v5297 = vpack.c.b16 %v4897, %v4889
    %v5298 = vpack.c.b16 %v4898, %v4890
    %v5299 = vpack.c.b16 %v4907, %v4899
    %v5300 = vpack.c.b16 %v4908, %v4900
    %v5301 = vpack.c.b16 %v4909, %v4901
    %v5302 = vpack.c.b16 %v4910, %v4902
    %v5303 = vpack.c.b16 %v4911, %v4903
    %v5304 = vpack.c.b16 %v4912, %v4904
    %v5305 = vpack.c.b16 %v4913, %v4905
    %v5306 = vpack.c.b16 %v4914, %v4906
    %v5307 = vpack.c.b16 %v4923, %v4915
    %v5308 = vpack.c.b16 %v4924, %v4916
    %v5309 = vpack.c.b16 %v4925, %v4917
    %v5310 = vpack.c.b16 %v4926, %v4918
    %v5311 = vpack.c.b16 %v4927, %v4919
    %v5312 = vpack.c.b16 %v4928, %v4920
    %v5313 = vpack.c.b16 %v4929, %v4921
    %v5314 = vpack.c.b16 %v4930, %v4922
    %v5315 = vpack.c.b16 %v4939, %v4931
    %v5316 = vpack.c.b16 %v4940, %v4932
    %v5317 = vpack.c.b16 %v4941, %v4933
    %v5318 = vpack.c.b16 %v4942, %v4934
    %v5319 = vpack.c.b16 %v4943, %v4935
    %v5320 = vpack.c.b16 %v4944, %v4936
    %v5321 = vpack.c.b16 %v4945, %v4937
    %v5322 = vpack.c.b16 %v4946, %v4938
    %v5323 = vpack.c.b16 %v4955, %v4947
    %v5324 = vpack.c.b16 %v4956, %v4948
    %v5325 = vpack.c.b16 %v4957, %v4949
    %v5326 = vpack.c.b16 %v4958, %v4950
    %v5327 = vpack.c.b16 %v4959, %v4951
    %v5328 = vpack.c.b16 %v4960, %v4952
    %v5329 = vpack.c.b16 %v4961, %v4953
    %v5330 = vpack.c.b16 %v4962, %v4954
    %v5331 = vpack.c.b16 %v4971, %v4963
    %v5332 = vpack.c.b16 %v4972, %v4964
    %v5333 = vpack.c.b16 %v4973, %v4965
    %v5334 = vpack.c.b16 %v4974, %v4966
    %v5335 = vpack.c.b16 %v4975, %v4967
    %v5336 = vpack.c.b16 %v4976, %v4968
    %v5337 = vpack.c.b16 %v4977, %v4969
    %v5338 = vpack.c.b16 %v4978, %v4970
    %v5339 = vpack.c.b16 %v4987, %v4979
    %v5340 = vpack.c.b16 %v4988, %v4980
    %v5341 = vpack.c.b16 %v4989, %v4981
    %v5342 = vpack.c.b16 %v4990, %v4982
    %v5343 = vpack.c.b16 %v4991, %v4983
    %v5344 = vpack.c.b16 %v4992, %v4984
    %v5345 = vpack.c.b16 %v4993, %v4985
    %v5346 = vpack.c.b16 %v4994, %v4986
    %v5347 = vpack.c.b16 %v5003, %v4995
    %v5348 = vpack.c.b16 %v5004, %v4996
    %v5349 = vpack.c.b16 %v5005, %v4997
    %v5350 = vpack.c.b16 %v5006, %v4998
    %v5351 = vpack.c.b16 %v5007, %v4999
    %v5352 = vpack.c.b16 %v5008, %v5000
    %v5353 = vpack.c.b16 %v5009, %v5001
    %v5354 = vpack.c.b16 %v5010, %v5002
    %v5355 = vpack.c.b16 %v5019, %v5011
    %v5356 = vpack.c.b16 %v5020, %v5012
    %v5357 = vpack.c.b16 %v5021, %v5013
    %v5358 = vpack.c.b16 %v5022, %v5014
    %v5359 = vpack.c.b16 %v5023, %v5015
    %v5360 = vpack.c.b16 %v5024, %v5016
    %v5361 = vpack.c.b16 %v5025, %v5017
    %v5362 = vpack.c.b16 %v5026, %v5018
    %v5363 = vpack.c.b16 %v5035, %v5027
    %v5364 = vpack.c.b16 %v5036, %v5028
    %v5365 = vpack.c.b16 %v5037, %v5029
    %v5366 = vpack.c.b16 %v5038, %v5030
    %v5367 = vpack.c.b16 %v5039, %v5031
    %v5368 = vpack.c.b16 %v5040, %v5032
    %v5369 = vpack.c.b16 %v5041, %v5033
    %v5370 = vpack.c.b16 %v5042, %v5034
    %v5371 = vpack.c.b16 %v5051, %v5043
    %v5372 = vpack.c.b16 %v5052, %v5044
    %v5373 = vpack.c.b16 %v5053, %v5045
    %v5374 = vpack.c.b16 %v5054, %v5046
    %v5375 = vpack.c.b16 %v5055, %v5047
    %v5376 = vpack.c.b16 %v5056, %v5048
    %v5377 = vpack.c.b16 %v5057, %v5049
    %v5378 = vpack.c.b16 %v5058, %v5050
    %v5379 = vpack.c.b16 %v5067, %v5059
    %v5380 = vpack.c.b16 %v5068, %v5060
    %v5381 = vpack.c.b16 %v5069, %v5061
    %v5382 = vpack.c.b16 %v5070, %v5062
    %v5383 = vpack.c.b16 %v5071, %v5063
    %v5384 = vpack.c.b16 %v5072, %v5064
    %v5385 = vpack.c.b16 %v5073, %v5065
    %v5386 = vpack.c.b16 %v5074, %v5066
    %v5387 = vpack.c.b16 %v5083, %v5075
    %v5388 = vpack.c.b16 %v5084, %v5076
    %v5389 = vpack.c.b16 %v5085, %v5077
    %v5390 = vpack.c.b16 %v5086, %v5078
    %v5391 = vpack.c.b16 %v5087, %v5079
    %v5392 = vpack.c.b16 %v5088, %v5080
    %v5393 = vpack.c.b16 %v5089, %v5081
    %v5394 = vpack.c.b16 %v5090, %v5082
    %v5395 = vpack.c.b16 %v5099, %v5091
    %v5396 = vpack.c.b16 %v5100, %v5092
    %v5397 = vpack.c.b16 %v5101, %v5093
    %v5398 = vpack.c.b16 %v5102, %v5094
    %v5399 = vpack.c.b16 %v5103, %v5095
    %v5400 = vpack.c.b16 %v5104, %v5096
    %v5401 = vpack.c.b16 %v5105, %v5097
    %v5402 = vpack.c.b16 %v5106, %v5098
    %v5403 = vpack.c.b16 %v5115, %v5107
    %v5404 = vpack.c.b16 %v5116, %v5108
    %v5405 = vpack.c.b16 %v5117, %v5109
    %v5406 = vpack.c.b16 %v5118, %v5110
    %v5407 = vpack.c.b16 %v5119, %v5111
    %v5408 = vpack.c.b16 %v5120, %v5112
    %v5409 = vpack.c.b16 %v5121, %v5113
    %v5410 = vpack.c.b16 %v5122, %v5114
    %v5411 = vpack.c.b16 %v5131, %v5123
    %v5412 = vpack.c.b16 %v5132, %v5124
    %v5413 = vpack.c.b16 %v5133, %v5125
    %v5414 = vpack.c.b16 %v5134, %v5126
    %v5415 = vpack.c.b16 %v5135, %v5127
    %v5416 = vpack.c.b16 %v5136, %v5128
    %v5417 = vpack.c.b16 %v5137, %v5129
    %v5418 = vpack.c.b16 %v5138, %v5130
    %v5419 = vpack.c.b16 %v5147, %v5139
    %v5420 = vpack.c.b16 %v5148, %v5140
    %v5421 = vpack.c.b16 %v5149, %v5141
    %v5422 = vpack.c.b16 %v5150, %v5142
    %v5423 = vpack.c.b16 %v5151, %v5143
    %v5424 = vpack.c.b16 %v5152, %v5144
    %v5425 = vpack.c.b16 %v5153, %v5145
    %v5426 = vpack.c.b16 %v5154, %v5146
    %v5427 = vpack.c.b16 %v5163, %v5155
    %v5428 = vpack.c.b16 %v5164, %v5156
    %v5429 = vpack.c.b16 %v5165, %v5157
    %v5430 = vpack.c.b16 %v5166, %v5158
    %v5431 = vpack.c.b16 %v5167, %v5159
    %v5432 = vpack.c.b16 %v5168, %v5160
    %v5433 = vpack.c.b16 %v5169, %v5161
    %v5434 = vpack.c.b16 %v5170, %v5162
    %v5435 = vpack.c.b16 %v5179, %v5171
    %v5436 = vpack.c.b16 %v5180, %v5172
    %v5437 = vpack.c.b16 %v5181, %v5173
    %v5438 = vpack.c.b16 %v5182, %v5174
    %v5439 = vpack.c.b16 %v5183, %v5175
    %v5440 = vpack.c.b16 %v5184, %v5176
    %v5441 = vpack.c.b16 %v5185, %v5177
    %v5442 = vpack.c.b16 %v5186, %v5178
    %5699 = vmatprep.subr.bf16.mxu0 %v5188
    %5700 = vmatpush1.bf16.msra.mxu0 %v5187
    %5701 = vmatprep.subr.bf16.mxu0 %v5196
    %5702 = vmatpush1.bf16.msra.mxu0 %v5195
    %5703 = vmatprep.subr.bf16.mxu0 %v5204
    %5704 = vmatpush1.bf16.msra.mxu0 %v5203
    %5705 = vmatprep.subr.bf16.mxu0 %v5212
    %5706 = vmatpush1.bf16.msra.mxu0 %v5211
    %5707 = vmatprep.subr.bf16.mxu0 %v5220
    %5708 = vmatpush1.bf16.msra.mxu0 %v5219
    %5709 = vmatprep.subr.bf16.mxu0 %v5228
    %5710 = vmatpush1.bf16.msra.mxu0 %v5227
    %5711 = vmatprep.subr.bf16.mxu0 %v5236
    %5712 = vmatpush1.bf16.msra.mxu0 %v5235
    %5713 = vmatprep.subr.bf16.mxu0 %v5244
    %5714 = vmatpush1.bf16.msra.mxu0 %v5243
    %5715 = vmatprep.subr.bf16.mxu0 %v5252
    %5716 = vmatpush1.bf16.msra.mxu0 %v5251
    %5717 = vmatprep.subr.bf16.mxu0 %v5260
    %5718 = vmatpush1.bf16.msra.mxu0 %v5259
    %5719 = vmatprep.subr.bf16.mxu0 %v5268
    %5720 = vmatpush1.bf16.msra.mxu0 %v5267
    %5721 = vmatprep.subr.bf16.mxu0 %v5276
    %5722 = vmatpush1.bf16.msra.mxu0 %v5275
    %5723 = vmatprep.subr.bf16.mxu0 %v5284
    %5724 = vmatpush1.bf16.msra.mxu0 %v5283
    %5725 = vmatprep.subr.bf16.mxu0 %v5292
    %5726 = vmatpush1.bf16.msra.mxu0 %v5291
    %5727 = vmatprep.subr.bf16.mxu0 %v5300
    %5728 = vmatpush1.bf16.msra.mxu0 %v5299
    %5729 = vmatprep.subr.bf16.mxu0 %v5308
    %5730 = vmatpush1.bf16.msra.mxu0 %v5307
    %5731 = vmatprep.mubr.bf16.mxu0 %v3994
    %5732 = vmatmul.mubr.bf16.gmra.mrb[0].mxu0 %v3993
    %v5733 = vpop.f32.mrb[0].mxu0
    %v5734 = vadd.f32 %v4382, %v5733
    %v5735 = vpop.f32.mrb[0].mxu0
    %v5736 = vadd.f32 %v4386, %v5735
    %v5737 = vpop.f32.mrb[0].mxu0
    %v5738 = vadd.f32 %v4382, %v5737
    %v5739 = vpop.f32.mrb[0].mxu0
    %v5740 = vadd.f32 %v4386, %v5739
    %5741 = vmatprep.mubr.bf16.mxu0 %v3998
    %5742 = vmatmul.mubr.bf16.gmra.mrb[0].mxu0 %v3997
    %v5743 = vpop.f32.mrb[0].mxu0
    %v5744 = vadd.f32 %v4382, %v5743
    %v5745 = vpop.f32.mrb[0].mxu0
    %v5746 = vadd.f32 %v4386, %v5745
    %v5747 = vpop.f32.mrb[0].mxu0
    %v5748 = vadd.f32 %v4382, %v5747
    %v5749 = vpop.f32.mrb[0].mxu0
    %v5750 = vadd.f32 %v4386, %v5749
    %5751 = vmatprep.mubr.bf16.mxu0 %v4002
    %5752 = vmatmul.mubr.bf16.gmra.mrb[0].mxu0 %v4001
    %v5753 = vpop.f32.mrb[0].mxu0
    %v5754 = vadd.f32 %v4382, %v5753
    %v5755 = vpop.f32.mrb[0].mxu0
    %v5756 = vadd.f32 %v4386, %v5755
    %v5757 = vpop.f32.mrb[0].mxu0
    %v5758 = vadd.f32 %v4382, %v5757
    %v5759 = vpop.f32.mrb[0].mxu0
    %v5760 = vadd.f32 %v4386, %v5759
    %5761 = vmatprep.mubr.bf16.mxu0 %v4006
    %5762 = vmatmul.mubr.bf16.gmra.mrb[0].mxu0 %v4005
    %v5763 = vpop.f32.mrb[0].mxu0
    %v5764 = vadd.f32 %v4382, %v5763
    %v5765 = vpop.f32.mrb[0].mxu0
    %v5766 = vadd.f32 %v4386, %v5765
    %v5767 = vpop.f32.mrb[0].mxu0
    %v5768 = vadd.f32 %v4382, %v5767
    %v5769 = vpop.f32.mrb[0].mxu0
    %v5770 = vadd.f32 %v4386, %v5769
    %5771 = vmatprep.mubr.bf16.mxu0 %v4010
    %5772 = vmatmul.mubr.bf16.gmra.mrb[0].mxu0 %v4009
    %v5773 = vpop.f32.mrb[0].mxu0
    %v5774 = vadd.f32 %v4382, %v5773
    %v5775 = vpop.f32.mrb[0].mxu0
    %v5776 = vadd.f32 %v4386, %v5775
    %v5777 = vpop.f32.mrb[0].mxu0
    %v5778 = vadd.f32 %v4382, %v5777
    %v5779 = vpop.f32.mrb[0].mxu0
    %v5780 = vadd.f32 %v4386, %v5779
    %5781 = vmatprep.mubr.bf16.mxu0 %v4014
    %5782 = vmatmul.mubr.bf16.gmra.mrb[0].mxu0 %v4013
    %v5783 = vpop.f32.mrb[0].mxu0
    %v5784 = vadd.f32 %v4382, %v5783
    %v5785 = vpop.f32.mrb[0].mxu0
    %v5786 = vadd.f32 %v4386, %v5785
    %v5787 = vpop.f32.mrb[0].mxu0
    %v5788 = vadd.f32 %v4382, %v5787
    %v5789 = vpop.f32.mrb[0].mxu0
    %v5790 = vadd.f32 %v4386, %v5789
    %5791 = vmatprep.mubr.bf16.mxu0 %v4018
    %5792 = vmatmul.mubr.bf16.gmra.mrb[0].mxu0 %v4017
    %v5793 = vpop.f32.mrb[0].mxu0
    %v5794 = vadd.f32 %v4382, %v5793
    %v5795 = vpop.f32.mrb[0].mxu0
    %v5796 = vadd.f32 %v4386, %v5795
    %v5797 = vpop.f32.mrb[0].mxu0
    %v5798 = vadd.f32 %v4382, %v5797
    %v5799 = vpop.f32.mrb[0].mxu0
    %v5800 = vadd.f32 %v4386, %v5799
    %5801 = vmatprep.mubr.bf16.mxu0 %v4022
    %5802 = vmatmul.mubr.bf16.gmra.mrb[0].mxu0 %v4021
    %v5803 = vpop.f32.mrb[0].mxu0
    %v5804 = vadd.f32 %v4382, %v5803
    %v5805 = vpop.f32.mrb[0].mxu0
    %v5806 = vadd.f32 %v4386, %v5805
    %v5807 = vpop.f32.mrb[0].mxu0
    %v5808 = vadd.f32 %v4382, %v5807
    %v5809 = vpop.f32.mrb[0].mxu0
    %v5810 = vadd.f32 %v4386, %v5809
    %5811 = vmatprep.mubr.bf16.mxu0 %v4026
    %5812 = vmatmul.mubr.bf16.gmra.mrb[0].mxu0 %v4025
    %v5813 = vpop.f32.mrb[0].mxu0
    %v5814 = vadd.f32 %v4382, %v5813
    %v5815 = vpop.f32.mrb[0].mxu0
    %v5816 = vadd.f32 %v4386, %v5815
    %v5817 = vpop.f32.mrb[0].mxu0
    %v5818 = vadd.f32 %v4382, %v5817
    %v5819 = vpop.f32.mrb[0].mxu0
    %v5820 = vadd.f32 %v4386, %v5819
    %5821 = vmatprep.mubr.bf16.mxu0 %v4030
    %5822 = vmatmul.mubr.bf16.gmra.mrb[0].mxu0 %v4029
    %v5823 = vpop.f32.mrb[0].mxu0
    %v5824 = vadd.f32 %v4382, %v5823
    %v5825 = vpop.f32.mrb[0].mxu0
    %v5826 = vadd.f32 %v4386, %v5825
    %v5827 = vpop.f32.mrb[0].mxu0
    %v5828 = vadd.f32 %v4382, %v5827
    %v5829 = vpop.f32.mrb[0].mxu0
    %v5830 = vadd.f32 %v4386, %v5829
    %5831 = vmatprep.mubr.bf16.mxu0 %v4034
    %5832 = vmatmul.mubr.bf16.gmra.mrb[0].mxu0 %v4033
    %v5833 = vpop.f32.mrb[0].mxu0
    %v5834 = vadd.f32 %v4382, %v5833
    %v5835 = vpop.f32.mrb[0].mxu0
    %v5836 = vadd.f32 %v4386, %v5835
    %v5837 = vpop.f32.mrb[0].mxu0
    %v5838 = vadd.f32 %v4382, %v5837
    %v5839 = vpop.f32.mrb[0].mxu0
    %v5840 = vadd.f32 %v4386, %v5839
    %5841 = vmatprep.mubr.bf16.mxu0 %v4038
    %5842 = vmatmul.mubr.bf16.gmra.mrb[0].mxu0 %v4037
    %v5843 = vpop.f32.mrb[0].mxu0
    %v5844 = vadd.f32 %v4382, %v5843
    %v5845 = vpop.f32.mrb[0].mxu0
    %v5846 = vadd.f32 %v4386, %v5845
    %v5847 = vpop.f32.mrb[0].mxu0
    %v5848 = vadd.f32 %v4382, %v5847
    %v5849 = vpop.f32.mrb[0].mxu0
    %v5850 = vadd.f32 %v4386, %v5849
    %5851 = vmatprep.mubr.bf16.mxu0 %v4042
    %5852 = vmatmul.mubr.bf16.gmra.mrb[0].mxu0 %v4041
    %v5853 = vpop.f32.mrb[0].mxu0
    %v5854 = vadd.f32 %v4382, %v5853
    %v5855 = vpop.f32.mrb[0].mxu0
    %v5856 = vadd.f32 %v4386, %v5855
    %v5857 = vpop.f32.mrb[0].mxu0
    %v5858 = vadd.f32 %v4382, %v5857
    %v5859 = vpop.f32.mrb[0].mxu0
    %v5860 = vadd.f32 %v4386, %v5859
    %5861 = vmatprep.mubr.bf16.mxu0 %v4046
    %5862 = vmatmul.mubr.bf16.gmra.mrb[0].mxu0 %v4045
    %v5863 = vpop.f32.mrb[0].mxu0
    %v5864 = vadd.f32 %v4382, %v5863
    %v5865 = vpop.f32.mrb[0].mxu0
    %v5866 = vadd.f32 %v4386, %v5865
    %v5867 = vpop.f32.mrb[0].mxu0
    %v5868 = vadd.f32 %v4382, %v5867
    %v5869 = vpop.f32.mrb[0].mxu0
    %v5870 = vadd.f32 %v4386, %v5869
    %5871 = vmatprep.mubr.bf16.mxu0 %v4050
    %5872 = vmatmul.mubr.bf16.gmra.mrb[0].mxu0 %v4049
    %v5873 = vpop.f32.mrb[0].mxu0
    %v5874 = vadd.f32 %v4382, %v5873
    %v5875 = vpop.f32.mrb[0].mxu0
    %v5876 = vadd.f32 %v4386, %v5875
    %v5877 = vpop.f32.mrb[0].mxu0
    %v5878 = vadd.f32 %v4382, %v5877
    %v5879 = vpop.f32.mrb[0].mxu0
    %v5880 = vadd.f32 %v4386, %v5879
    %5881 = vmatprep.mubr.bf16.mxu0 %v4054
    %5882 = vmatmul.mubr.bf16.gmra.mrb[0].mxu0 %v4053
    %v5883 = vpop.f32.mrb[0].mxu0
    %v5884 = vadd.f32 %v4382, %v5883
    %v5885 = vpop.f32.mrb[0].mxu0
    %v5886 = vadd.f32 %v4386, %v5885
    %v5887 = vpop.f32.mrb[0].mxu0
    %v5888 = vadd.f32 %v4382, %v5887
    %v5889 = vpop.f32.mrb[0].mxu0
    %v5890 = vadd.f32 %v4386, %v5889
    %5891 = vmatprep.mubr.bf16.mxu0 %v4058
    %5892 = vmatmul.mubr.bf16.gmra.mrb[0].mxu0 %v4057
    %v5893 = vpop.f32.mrb[0].mxu0
    %v5894 = vadd.f32 %v4382, %v5893
    %v5895 = vpop.f32.mrb[0].mxu0
    %v5896 = vadd.f32 %v4386, %v5895
    %v5897 = vpop.f32.mrb[0].mxu0
    %v5898 = vadd.f32 %v4382, %v5897
    %v5899 = vpop.f32.mrb[0].mxu0
    %v5900 = vadd.f32 %v4386, %v5899
    %5901 = vmatprep.mubr.bf16.mxu0 %v4062
    %5902 = vmatmul.mubr.bf16.gmra.mrb[0].mxu0 %v4061
    %v5903 = vpop.f32.mrb[0].mxu0
    %v5904 = vadd.f32 %v4382, %v5903
    %v5905 = vpop.f32.mrb[0].mxu0
    %v5906 = vadd.f32 %v4386, %v5905
    %v5907 = vpop.f32.mrb[0].mxu0
    %v5908 = vadd.f32 %v4382, %v5907
    %v5909 = vpop.f32.mrb[0].mxu0
    %v5910 = vadd.f32 %v4386, %v5909
    %5911 = vmatprep.mubr.bf16.mxu0 %v4066
    %5912 = vmatmul.mubr.bf16.gmra.mrb[0].mxu0 %v4065
    %v5913 = vpop.f32.mrb[0].mxu0
    %v5914 = vadd.f32 %v4382, %v5913
    %v5915 = vpop.f32.mrb[0].mxu0
    %v5916 = vadd.f32 %v4386, %v5915
    %v5917 = vpop.f32.mrb[0].mxu0
    %v5918 = vadd.f32 %v4382, %v5917
    %v5919 = vpop.f32.mrb[0].mxu0
    %v5920 = vadd.f32 %v4386, %v5919
    %5921 = vmatprep.mubr.bf16.mxu0 %v4070
    %5922 = vmatmul.mubr.bf16.gmra.mrb[0].mxu0 %v4069
    %v5923 = vpop.f32.mrb[0].mxu0
    %v5924 = vadd.f32 %v4382, %v5923
    %v5925 = vpop.f32.mrb[0].mxu0
    %v5926 = vadd.f32 %v4386, %v5925
    %v5927 = vpop.f32.mrb[0].mxu0
    %v5928 = vadd.f32 %v4382, %v5927
    %v5929 = vpop.f32.mrb[0].mxu0
    %v5930 = vadd.f32 %v4386, %v5929
    %5931 = vmatprep.mubr.bf16.mxu0 %v4074
    %5932 = vmatmul.mubr.bf16.gmra.mrb[0].mxu0 %v4073
    %v5933 = vpop.f32.mrb[0].mxu0
    %v5934 = vadd.f32 %v4382, %v5933
    %v5935 = vpop.f32.mrb[0].mxu0
    %v5936 = vadd.f32 %v4386, %v5935
    %v5937 = vpop.f32.mrb[0].mxu0
    %v5938 = vadd.f32 %v4382, %v5937
    %v5939 = vpop.f32.mrb[0].mxu0
    %v5940 = vadd.f32 %v4386, %v5939
    %5941 = vmatprep.mubr.bf16.mxu0 %v4078
    %5942 = vmatmul.mubr.bf16.gmra.mrb[0].mxu0 %v4077
    %v5943 = vpop.f32.mrb[0].mxu0
    %v5944 = vadd.f32 %v4382, %v5943
    %v5945 = vpop.f32.mrb[0].mxu0
    %v5946 = vadd.f32 %v4386, %v5945
    %v5947 = vpop.f32.mrb[0].mxu0
    %v5948 = vadd.f32 %v4382, %v5947
    %v5949 = vpop.f32.mrb[0].mxu0
    %v5950 = vadd.f32 %v4386, %v5949
    %5951 = vmatprep.mubr.bf16.mxu0 %v4082
    %5952 = vmatmul.mubr.bf16.gmra.mrb[0].mxu0 %v4081
    %v5953 = vpop.f32.mrb[0].mxu0
    %v5954 = vadd.f32 %v4382, %v5953
    %v5955 = vpop.f32.mrb[0].mxu0
    %v5956 = vadd.f32 %v4386, %v5955
    %v5957 = vpop.f32.mrb[0].mxu0
    %v5958 = vadd.f32 %v4382, %v5957
    %v5959 = vpop.f32.mrb[0].mxu0
    %v5960 = vadd.f32 %v4386, %v5959
    %5961 = vmatprep.mubr.bf16.mxu0 %v4086
    %5962 = vmatmul.mubr.bf16.gmra.mrb[0].mxu0 %v4085
    %v5963 = vpop.f32.mrb[0].mxu0
    %v5964 = vadd.f32 %v4382, %v5963
    %v5965 = vpop.f32.mrb[0].mxu0
    %v5966 = vadd.f32 %v4386, %v5965
    %v5967 = vpop.f32.mrb[0].mxu0
    %v5968 = vadd.f32 %v4382, %v5967
    %v5969 = vpop.f32.mrb[0].mxu0
    %v5970 = vadd.f32 %v4386, %v5969
    %5971 = vmatprep.mubr.bf16.mxu0 %v4090
    %5972 = vmatmul.mubr.bf16.gmra.mrb[0].mxu0 %v4089
    %v5973 = vpop.f32.mrb[0].mxu0
    %v5974 = vadd.f32 %v4382, %v5973
    %v5975 = vpop.f32.mrb[0].mxu0
    %v5976 = vadd.f32 %v4386, %v5975
    %v5977 = vpop.f32.mrb[0].mxu0
    %v5978 = vadd.f32 %v4382, %v5977
    %v5979 = vpop.f32.mrb[0].mxu0
    %v5980 = vadd.f32 %v4386, %v5979
    %5981 = vmatprep.mubr.bf16.mxu0 %v4094
    %5982 = vmatmul.mubr.bf16.gmra.mrb[0].mxu0 %v4093
    %v5983 = vpop.f32.mrb[0].mxu0
    %v5984 = vadd.f32 %v4382, %v5983
    %v5985 = vpop.f32.mrb[0].mxu0
    %v5986 = vadd.f32 %v4386, %v5985
    %v5987 = vpop.f32.mrb[0].mxu0
    %v5988 = vadd.f32 %v4382, %v5987
    %v5989 = vpop.f32.mrb[0].mxu0
    %v5990 = vadd.f32 %v4386, %v5989
    %5991 = vmatprep.mubr.bf16.mxu0 %v4098
    %5992 = vmatmul.mubr.bf16.gmra.mrb[0].mxu0 %v4097
    %v5993 = vpop.f32.mrb[0].mxu0
    %v5994 = vadd.f32 %v4382, %v5993
    %v5995 = vpop.f32.mrb[0].mxu0
    %v5996 = vadd.f32 %v4386, %v5995
    %v5997 = vpop.f32.mrb[0].mxu0
    %v5998 = vadd.f32 %v4382, %v5997
    %v5999 = vpop.f32.mrb[0].mxu0
    %v6000 = vadd.f32 %v4386, %v5999
    %6001 = vmatprep.mubr.bf16.mxu0 %v4102
    %6002 = vmatmul.mubr.bf16.gmra.mrb[0].mxu0 %v4101
    %v6003 = vpop.f32.mrb[0].mxu0
    %v6004 = vadd.f32 %v4382, %v6003
    %v6005 = vpop.f32.mrb[0].mxu0
    %v6006 = vadd.f32 %v4386, %v6005
    %v6007 = vpop.f32.mrb[0].mxu0
    %v6008 = vadd.f32 %v4382, %v6007
    %v6009 = vpop.f32.mrb[0].mxu0
    %v6010 = vadd.f32 %v4386, %v6009
    %6011 = vmatprep.mubr.bf16.mxu0 %v4106
    %6012 = vmatmul.mubr.bf16.gmra.mrb[0].mxu0 %v4105
    %v6013 = vpop.f32.mrb[0].mxu0
    %v6014 = vadd.f32 %v4382, %v6013
    %v6015 = vpop.f32.mrb[0].mxu0
    %v6016 = vadd.f32 %v4386, %v6015
    %v6017 = vpop.f32.mrb[0].mxu0
    %v6018 = vadd.f32 %v4382, %v6017
    %v6019 = vpop.f32.mrb[0].mxu0
    %v6020 = vadd.f32 %v4386, %v6019
    %6021 = vmatprep.mubr.bf16.mxu0 %v4110
    %6022 = vmatmul.mubr.bf16.gmra.mrb[0].mxu0 %v4109
    %v6023 = vpop.f32.mrb[0].mxu0
    %v6024 = vadd.f32 %v4382, %v6023
    %v6025 = vpop.f32.mrb[0].mxu0
    %v6026 = vadd.f32 %v4386, %v6025
    %v6027 = vpop.f32.mrb[0].mxu0
    %v6028 = vadd.f32 %v4382, %v6027
    %v6029 = vpop.f32.mrb[0].mxu0
    %v6030 = vadd.f32 %v4386, %v6029
    %6031 = vmatprep.mubr.bf16.mxu0 %v4114
    %6032 = vmatmul.mubr.bf16.gmra.mrb[0].mxu0 %v4113
    %v6033 = vpop.f32.mrb[0].mxu0
    %v6034 = vadd.f32 %v4382, %v6033
    %v6035 = vpop.f32.mrb[0].mxu0
    %v6036 = vadd.f32 %v4386, %v6035
    %v6037 = vpop.f32.mrb[0].mxu0
    %v6038 = vadd.f32 %v4382, %v6037
    %v6039 = vpop.f32.mrb[0].mxu0
    %v6040 = vadd.f32 %v4386, %v6039
    %6041 = vmatprep.mubr.bf16.mxu0 %v4118
    %6042 = vmatmul.mubr.bf16.gmra.mrb[0].mxu0 %v4117
    %v6043 = vpop.f32.mrb[0].mxu0
    %v6044 = vadd.f32 %v4382, %v6043
    %v6045 = vpop.f32.mrb[0].mxu0
    %v6046 = vadd.f32 %v4386, %v6045
    %v6047 = vpop.f32.mrb[0].mxu0
    %v6048 = vadd.f32 %v4382, %v6047
    %v6049 = vpop.f32.mrb[0].mxu0
    %v6050 = vadd.f32 %v4386, %v6049
    %6051 = vdwg.mxu0
    %6052 = vmatprep.subr.bf16.mxu0 %v5316
    %6053 = vmatpush1.bf16.msra.mxu0 %v5315
    %6054 = vmatprep.subr.bf16.mxu0 %v5324
    %6055 = vmatpush1.bf16.msra.mxu0 %v5323
    %6056 = vmatprep.subr.bf16.mxu0 %v5332
    %6057 = vmatpush1.bf16.msra.mxu0 %v5331
    %6058 = vmatprep.subr.bf16.mxu0 %v5340
    %6059 = vmatpush1.bf16.msra.mxu0 %v5339
    %6060 = vmatprep.subr.bf16.mxu0 %v5348
    %6061 = vmatpush1.bf16.msra.mxu0 %v5347
    %6062 = vmatprep.subr.bf16.mxu0 %v5356
    %6063 = vmatpush1.bf16.msra.mxu0 %v5355
    %6064 = vmatprep.subr.bf16.mxu0 %v5364
    %6065 = vmatpush1.bf16.msra.mxu0 %v5363
    %6066 = vmatprep.subr.bf16.mxu0 %v5372
    %6067 = vmatpush1.bf16.msra.mxu0 %v5371
    %6068 = vmatprep.subr.bf16.mxu0 %v5380
    %6069 = vmatpush1.bf16.msra.mxu0 %v5379
    %6070 = vmatprep.subr.bf16.mxu0 %v5388
    %6071 = vmatpush1.bf16.msra.mxu0 %v5387
    %6072 = vmatprep.subr.bf16.mxu0 %v5396
    %6073 = vmatpush1.bf16.msra.mxu0 %v5395
    %6074 = vmatprep.subr.bf16.mxu0 %v5404
    %6075 = vmatpush1.bf16.msra.mxu0 %v5403
    %6076 = vmatprep.subr.bf16.mxu0 %v5412
    %6077 = vmatpush1.bf16.msra.mxu0 %v5411
    %6078 = vmatprep.subr.bf16.mxu0 %v5420
    %6079 = vmatpush1.bf16.msra.mxu0 %v5419
    %6080 = vmatprep.subr.bf16.mxu0 %v5428
    %6081 = vmatpush1.bf16.msra.mxu0 %v5427
    %6082 = vmatprep.subr.bf16.mxu0 %v5436
    %6083 = vmatpush1.bf16.msra.mxu0 %v5435
    %6084 = vmatprep.mubr.bf16.mxu0 %v3996
    %6085 = vmatmul.mubr.bf16.gmra.mrb[0].mxu0 %v3995
    %v6086 = vpop.f32.mrb[0].mxu0
    %v6087 = vadd.f32 %v5734, %v6086
    %v6088 = vpop.f32.mrb[0].mxu0
    %v6089 = vadd.f32 %v5736, %v6088
    %v6090 = vpop.f32.mrb[0].mxu0
    %v6091 = vadd.f32 %v5738, %v6090
    %v6092 = vpop.f32.mrb[0].mxu0
    %v6093 = vadd.f32 %v5740, %v6092
    %6094 = vmatprep.mubr.bf16.mxu0 %v4000
    %6095 = vmatmul.mubr.bf16.gmra.mrb[0].mxu0 %v3999
    %v6096 = vpop.f32.mrb[0].mxu0
    %v6097 = vadd.f32 %v5744, %v6096
    %v6098 = vpop.f32.mrb[0].mxu0
    %v6099 = vadd.f32 %v5746, %v6098
    %v6100 = vpop.f32.mrb[0].mxu0
    %v6101 = vadd.f32 %v5748, %v6100
    %v6102 = vpop.f32.mrb[0].mxu0
    %v6103 = vadd.f32 %v5750, %v6102
    %6104 = vmatprep.mubr.bf16.mxu0 %v4004
    %6105 = vmatmul.mubr.bf16.gmra.mrb[0].mxu0 %v4003
    %v6106 = vpop.f32.mrb[0].mxu0
    %v6107 = vadd.f32 %v5754, %v6106
    %v6108 = vpop.f32.mrb[0].mxu0
    %v6109 = vadd.f32 %v5756, %v6108
    %v6110 = vpop.f32.mrb[0].mxu0
    %v6111 = vadd.f32 %v5758, %v6110
    %v6112 = vpop.f32.mrb[0].mxu0
    %v6113 = vadd.f32 %v5760, %v6112
    %6114 = vmatprep.mubr.bf16.mxu0 %v4008
    %6115 = vmatmul.mubr.bf16.gmra.mrb[0].mxu0 %v4007
    %v6116 = vpop.f32.mrb[0].mxu0
    %v6117 = vadd.f32 %v5764, %v6116
    %v6118 = vpop.f32.mrb[0].mxu0
    %v6119 = vadd.f32 %v5766, %v6118
    %v6120 = vpop.f32.mrb[0].mxu0
    %v6121 = vadd.f32 %v5768, %v6120
    %v6122 = vpop.f32.mrb[0].mxu0
    %v6123 = vadd.f32 %v5770, %v6122
    %6124 = vmatprep.mubr.bf16.mxu0 %v4012
    %6125 = vmatmul.mubr.bf16.gmra.mrb[0].mxu0 %v4011
    %v6126 = vpop.f32.mrb[0].mxu0
    %v6127 = vadd.f32 %v5774, %v6126
    %v6128 = vpop.f32.mrb[0].mxu0
    %v6129 = vadd.f32 %v5776, %v6128
    %v6130 = vpop.f32.mrb[0].mxu0
    %v6131 = vadd.f32 %v5778, %v6130
    %v6132 = vpop.f32.mrb[0].mxu0
    %v6133 = vadd.f32 %v5780, %v6132
    %6134 = vmatprep.mubr.bf16.mxu0 %v4016
    %6135 = vmatmul.mubr.bf16.gmra.mrb[0].mxu0 %v4015
    %v6136 = vpop.f32.mrb[0].mxu0
    %v6137 = vadd.f32 %v5784, %v6136
    %v6138 = vpop.f32.mrb[0].mxu0
    %v6139 = vadd.f32 %v5786, %v6138
    %v6140 = vpop.f32.mrb[0].mxu0
    %v6141 = vadd.f32 %v5788, %v6140
    %v6142 = vpop.f32.mrb[0].mxu0
    %v6143 = vadd.f32 %v5790, %v6142
    %6144 = vmatprep.mubr.bf16.mxu0 %v4020
    %6145 = vmatmul.mubr.bf16.gmra.mrb[0].mxu0 %v4019
    %v6146 = vpop.f32.mrb[0].mxu0
    %v6147 = vadd.f32 %v5794, %v6146
    %v6148 = vpop.f32.mrb[0].mxu0
    %v6149 = vadd.f32 %v5796, %v6148
    %v6150 = vpop.f32.mrb[0].mxu0
    %v6151 = vadd.f32 %v5798, %v6150
    %v6152 = vpop.f32.mrb[0].mxu0
    %v6153 = vadd.f32 %v5800, %v6152
    %6154 = vmatprep.mubr.bf16.mxu0 %v4024
    %6155 = vmatmul.mubr.bf16.gmra.mrb[0].mxu0 %v4023
    %v6156 = vpop.f32.mrb[0].mxu0
    %v6157 = vadd.f32 %v5804, %v6156
    %v6158 = vpop.f32.mrb[0].mxu0
    %v6159 = vadd.f32 %v5806, %v6158
    %v6160 = vpop.f32.mrb[0].mxu0
    %v6161 = vadd.f32 %v5808, %v6160
    %v6162 = vpop.f32.mrb[0].mxu0
    %v6163 = vadd.f32 %v5810, %v6162
    %6164 = vmatprep.mubr.bf16.mxu0 %v4028
    %6165 = vmatmul.mubr.bf16.gmra.mrb[0].mxu0 %v4027
    %v6166 = vpop.f32.mrb[0].mxu0
    %v6167 = vadd.f32 %v5814, %v6166
    %v6168 = vpop.f32.mrb[0].mxu0
    %v6169 = vadd.f32 %v5816, %v6168
    %v6170 = vpop.f32.mrb[0].mxu0
    %v6171 = vadd.f32 %v5818, %v6170
    %v6172 = vpop.f32.mrb[0].mxu0
    %v6173 = vadd.f32 %v5820, %v6172
    %6174 = vmatprep.mubr.bf16.mxu0 %v4032
    %6175 = vmatmul.mubr.bf16.gmra.mrb[0].mxu0 %v4031
    %v6176 = vpop.f32.mrb[0].mxu0
    %v6177 = vadd.f32 %v5824, %v6176
    %v6178 = vpop.f32.mrb[0].mxu0
    %v6179 = vadd.f32 %v5826, %v6178
    %v6180 = vpop.f32.mrb[0].mxu0
    %v6181 = vadd.f32 %v5828, %v6180
    %v6182 = vpop.f32.mrb[0].mxu0
    %v6183 = vadd.f32 %v5830, %v6182
    %6184 = vmatprep.mubr.bf16.mxu0 %v4036
    %6185 = vmatmul.mubr.bf16.gmra.mrb[0].mxu0 %v4035
    %v6186 = vpop.f32.mrb[0].mxu0
    %v6187 = vadd.f32 %v5834, %v6186
    %v6188 = vpop.f32.mrb[0].mxu0
    %v6189 = vadd.f32 %v5836, %v6188
    %v6190 = vpop.f32.mrb[0].mxu0
    %v6191 = vadd.f32 %v5838, %v6190
    %v6192 = vpop.f32.mrb[0].mxu0
    %v6193 = vadd.f32 %v5840, %v6192
    %6194 = vmatprep.mubr.bf16.mxu0 %v4040
    %6195 = vmatmul.mubr.bf16.gmra.mrb[0].mxu0 %v4039
    %v6196 = vpop.f32.mrb[0].mxu0
    %v6197 = vadd.f32 %v5844, %v6196
    %v6198 = vpop.f32.mrb[0].mxu0
    %v6199 = vadd.f32 %v5846, %v6198
    %v6200 = vpop.f32.mrb[0].mxu0
    %v6201 = vadd.f32 %v5848, %v6200
    %v6202 = vpop.f32.mrb[0].mxu0
    %v6203 = vadd.f32 %v5850, %v6202
    %6204 = vmatprep.mubr.bf16.mxu0 %v4044
    %6205 = vmatmul.mubr.bf16.gmra.mrb[0].mxu0 %v4043
    %v6206 = vpop.f32.mrb[0].mxu0
    %v6207 = vadd.f32 %v5854, %v6206
    %v6208 = vpop.f32.mrb[0].mxu0
    %v6209 = vadd.f32 %v5856, %v6208
    %v6210 = vpop.f32.mrb[0].mxu0
    %v6211 = vadd.f32 %v5858, %v6210
    %v6212 = vpop.f32.mrb[0].mxu0
    %v6213 = vadd.f32 %v5860, %v6212
    %6214 = vmatprep.mubr.bf16.mxu0 %v4048
    %6215 = vmatmul.mubr.bf16.gmra.mrb[0].mxu0 %v4047
    %v6216 = vpop.f32.mrb[0].mxu0
    %v6217 = vadd.f32 %v5864, %v6216
    %v6218 = vpop.f32.mrb[0].mxu0
    %v6219 = vadd.f32 %v5866, %v6218
    %v6220 = vpop.f32.mrb[0].mxu0
    %v6221 = vadd.f32 %v5868, %v6220
    %v6222 = vpop.f32.mrb[0].mxu0
    %v6223 = vadd.f32 %v5870, %v6222
    %6224 = vmatprep.mubr.bf16.mxu0 %v4052
    %6225 = vmatmul.mubr.bf16.gmra.mrb[0].mxu0 %v4051
    %v6226 = vpop.f32.mrb[0].mxu0
    %v6227 = vadd.f32 %v5874, %v6226
    %v6228 = vpop.f32.mrb[0].mxu0
    %v6229 = vadd.f32 %v5876, %v6228
    %v6230 = vpop.f32.mrb[0].mxu0
    %v6231 = vadd.f32 %v5878, %v6230
    %v6232 = vpop.f32.mrb[0].mxu0
    %v6233 = vadd.f32 %v5880, %v6232
    %6234 = vmatprep.mubr.bf16.mxu0 %v4056
    %6235 = vmatmul.mubr.bf16.gmra.mrb[0].mxu0 %v4055
    %v6236 = vpop.f32.mrb[0].mxu0
    %v6237 = vadd.f32 %v5884, %v6236
    %v6238 = vpop.f32.mrb[0].mxu0
    %v6239 = vadd.f32 %v5886, %v6238
    %v6240 = vpop.f32.mrb[0].mxu0
    %v6241 = vadd.f32 %v5888, %v6240
    %v6242 = vpop.f32.mrb[0].mxu0
    %v6243 = vadd.f32 %v5890, %v6242
    %6244 = vmatprep.mubr.bf16.mxu0 %v4060
    %6245 = vmatmul.mubr.bf16.gmra.mrb[0].mxu0 %v4059
    %v6246 = vpop.f32.mrb[0].mxu0
    %v6247 = vadd.f32 %v5894, %v6246
    %v6248 = vpop.f32.mrb[0].mxu0
    %v6249 = vadd.f32 %v5896, %v6248
    %v6250 = vpop.f32.mrb[0].mxu0
    %v6251 = vadd.f32 %v5898, %v6250
    %v6252 = vpop.f32.mrb[0].mxu0
    %v6253 = vadd.f32 %v5900, %v6252
    %6254 = vmatprep.mubr.bf16.mxu0 %v4064
    %6255 = vmatmul.mubr.bf16.gmra.mrb[0].mxu0 %v4063
    %v6256 = vpop.f32.mrb[0].mxu0
    %v6257 = vadd.f32 %v5904, %v6256
    %v6258 = vpop.f32.mrb[0].mxu0
    %v6259 = vadd.f32 %v5906, %v6258
    %v6260 = vpop.f32.mrb[0].mxu0
    %v6261 = vadd.f32 %v5908, %v6260
    %v6262 = vpop.f32.mrb[0].mxu0
    %v6263 = vadd.f32 %v5910, %v6262
    %6264 = vmatprep.mubr.bf16.mxu0 %v4068
    %6265 = vmatmul.mubr.bf16.gmra.mrb[0].mxu0 %v4067
    %v6266 = vpop.f32.mrb[0].mxu0
    %v6267 = vadd.f32 %v5914, %v6266
    %v6268 = vpop.f32.mrb[0].mxu0
    %v6269 = vadd.f32 %v5916, %v6268
    %v6270 = vpop.f32.mrb[0].mxu0
    %v6271 = vadd.f32 %v5918, %v6270
    %v6272 = vpop.f32.mrb[0].mxu0
    %v6273 = vadd.f32 %v5920, %v6272
    %6274 = vmatprep.mubr.bf16.mxu0 %v4072
    %6275 = vmatmul.mubr.bf16.gmra.mrb[0].mxu0 %v4071
    %v6276 = vpop.f32.mrb[0].mxu0
    %v6277 = vadd.f32 %v5924, %v6276
    %v6278 = vpop.f32.mrb[0].mxu0
    %v6279 = vadd.f32 %v5926, %v6278
    %v6280 = vpop.f32.mrb[0].mxu0
    %v6281 = vadd.f32 %v5928, %v6280
    %v6282 = vpop.f32.mrb[0].mxu0
    %v6283 = vadd.f32 %v5930, %v6282
    %6284 = vmatprep.mubr.bf16.mxu0 %v4076
    %6285 = vmatmul.mubr.bf16.gmra.mrb[0].mxu0 %v4075
    %v6286 = vpop.f32.mrb[0].mxu0
    %v6287 = vadd.f32 %v5934, %v6286
    %v6288 = vpop.f32.mrb[0].mxu0
    %v6289 = vadd.f32 %v5936, %v6288
    %v6290 = vpop.f32.mrb[0].mxu0
    %v6291 = vadd.f32 %v5938, %v6290
    %v6292 = vpop.f32.mrb[0].mxu0
    %v6293 = vadd.f32 %v5940, %v6292
    %6294 = vmatprep.mubr.bf16.mxu0 %v4080
    %6295 = vmatmul.mubr.bf16.gmra.mrb[0].mxu0 %v4079
    %v6296 = vpop.f32.mrb[0].mxu0
    %v6297 = vadd.f32 %v5944, %v6296
    %v6298 = vpop.f32.mrb[0].mxu0
    %v6299 = vadd.f32 %v5946, %v6298
    %v6300 = vpop.f32.mrb[0].mxu0
    %v6301 = vadd.f32 %v5948, %v6300
    %v6302 = vpop.f32.mrb[0].mxu0
    %v6303 = vadd.f32 %v5950, %v6302
    %6304 = vmatprep.mubr.bf16.mxu0 %v4084
    %6305 = vmatmul.mubr.bf16.gmra.mrb[0].mxu0 %v4083
    %v6306 = vpop.f32.mrb[0].mxu0
    %v6307 = vadd.f32 %v5954, %v6306
    %v6308 = vpop.f32.mrb[0].mxu0
    %v6309 = vadd.f32 %v5956, %v6308
    %v6310 = vpop.f32.mrb[0].mxu0
    %v6311 = vadd.f32 %v5958, %v6310
    %v6312 = vpop.f32.mrb[0].mxu0
    %v6313 = vadd.f32 %v5960, %v6312
    %6314 = vmatprep.mubr.bf16.mxu0 %v4088
    %6315 = vmatmul.mubr.bf16.gmra.mrb[0].mxu0 %v4087
    %v6316 = vpop.f32.mrb[0].mxu0
    %v6317 = vadd.f32 %v5964, %v6316
    %v6318 = vpop.f32.mrb[0].mxu0
    %v6319 = vadd.f32 %v5966, %v6318
    %v6320 = vpop.f32.mrb[0].mxu0
    %v6321 = vadd.f32 %v5968, %v6320
    %v6322 = vpop.f32.mrb[0].mxu0
    %v6323 = vadd.f32 %v5970, %v6322
    %6324 = vmatprep.mubr.bf16.mxu0 %v4092
    %6325 = vmatmul.mubr.bf16.gmra.mrb[0].mxu0 %v4091
    %v6326 = vpop.f32.mrb[0].mxu0
    %v6327 = vadd.f32 %v5974, %v6326
    %v6328 = vpop.f32.mrb[0].mxu0
    %v6329 = vadd.f32 %v5976, %v6328
    %v6330 = vpop.f32.mrb[0].mxu0
    %v6331 = vadd.f32 %v5978, %v6330
    %v6332 = vpop.f32.mrb[0].mxu0
    %v6333 = vadd.f32 %v5980, %v6332
    %6334 = vmatprep.mubr.bf16.mxu0 %v4096
    %6335 = vmatmul.mubr.bf16.gmra.mrb[0].mxu0 %v4095
    %v6336 = vpop.f32.mrb[0].mxu0
    %v6337 = vadd.f32 %v5984, %v6336
    %v6338 = vpop.f32.mrb[0].mxu0
    %v6339 = vadd.f32 %v5986, %v6338
    %v6340 = vpop.f32.mrb[0].mxu0
    %v6341 = vadd.f32 %v5988, %v6340
    %v6342 = vpop.f32.mrb[0].mxu0
    %v6343 = vadd.f32 %v5990, %v6342
    %6344 = vmatprep.mubr.bf16.mxu0 %v4100
    %6345 = vmatmul.mubr.bf16.gmra.mrb[0].mxu0 %v4099
    %v6346 = vpop.f32.mrb[0].mxu0
    %v6347 = vadd.f32 %v5994, %v6346
    %v6348 = vpop.f32.mrb[0].mxu0
    %v6349 = vadd.f32 %v5996, %v6348
    %v6350 = vpop.f32.mrb[0].mxu0
    %v6351 = vadd.f32 %v5998, %v6350
    %v6352 = vpop.f32.mrb[0].mxu0
    %v6353 = vadd.f32 %v6000, %v6352
    %6354 = vmatprep.mubr.bf16.mxu0 %v4104
    %6355 = vmatmul.mubr.bf16.gmra.mrb[0].mxu0 %v4103
    %v6356 = vpop.f32.mrb[0].mxu0
    %v6357 = vadd.f32 %v6004, %v6356
    %v6358 = vpop.f32.mrb[0].mxu0
    %v6359 = vadd.f32 %v6006, %v6358
    %v6360 = vpop.f32.mrb[0].mxu0
    %v6361 = vadd.f32 %v6008, %v6360
    %v6362 = vpop.f32.mrb[0].mxu0
    %v6363 = vadd.f32 %v6010, %v6362
    %6364 = vmatprep.mubr.bf16.mxu0 %v4108
    %6365 = vmatmul.mubr.bf16.gmra.mrb[0].mxu0 %v4107
    %v6366 = vpop.f32.mrb[0].mxu0
    %v6367 = vadd.f32 %v6014, %v6366
    %v6368 = vpop.f32.mrb[0].mxu0
    %v6369 = vadd.f32 %v6016, %v6368
    %v6370 = vpop.f32.mrb[0].mxu0
    %v6371 = vadd.f32 %v6018, %v6370
    %v6372 = vpop.f32.mrb[0].mxu0
    %v6373 = vadd.f32 %v6020, %v6372
    %6374 = vmatprep.mubr.bf16.mxu0 %v4112
    %6375 = vmatmul.mubr.bf16.gmra.mrb[0].mxu0 %v4111
    %v6376 = vpop.f32.mrb[0].mxu0
    %v6377 = vadd.f32 %v6024, %v6376
    %v6378 = vpop.f32.mrb[0].mxu0
    %v6379 = vadd.f32 %v6026, %v6378
    %v6380 = vpop.f32.mrb[0].mxu0
    %v6381 = vadd.f32 %v6028, %v6380
    %v6382 = vpop.f32.mrb[0].mxu0
    %v6383 = vadd.f32 %v6030, %v6382
    %6384 = vmatprep.mubr.bf16.mxu0 %v4116
    %6385 = vmatmul.mubr.bf16.gmra.mrb[0].mxu0 %v4115
    %v6386 = vpop.f32.mrb[0].mxu0
    %v6387 = vadd.f32 %v6034, %v6386
    %v6388 = vpop.f32.mrb[0].mxu0
    %v6389 = vadd.f32 %v6036, %v6388
    %v6390 = vpop.f32.mrb[0].mxu0
    %v6391 = vadd.f32 %v6038, %v6390
    %v6392 = vpop.f32.mrb[0].mxu0
    %v6393 = vadd.f32 %v6040, %v6392
    %6394 = vmatprep.mubr.bf16.mxu0 %v4120
    %6395 = vmatmul.mubr.bf16.gmra.mrb[0].mxu0 %v4119
    %v6396 = vpop.f32.mrb[0].mxu0
    %v6397 = vadd.f32 %v6044, %v6396
    %v6398 = vpop.f32.mrb[0].mxu0
    %v6399 = vadd.f32 %v6046, %v6398
    %v6400 = vpop.f32.mrb[0].mxu0
    %v6401 = vadd.f32 %v6048, %v6400
    %v6402 = vpop.f32.mrb[0].mxu0
    %v6403 = vadd.f32 %v6050, %v6402
    %6404 = vdwg.mxu0
    %6405 = vmatprep.subr.bf16.mxu0 %v5190
    %6406 = vmatpush1.bf16.msra.mxu0 %v5189
    %6407 = vmatprep.subr.bf16.mxu0 %v5198
    %6408 = vmatpush1.bf16.msra.mxu0 %v5197
    %6409 = vmatprep.subr.bf16.mxu0 %v5206
    %6410 = vmatpush1.bf16.msra.mxu0 %v5205
    %6411 = vmatprep.subr.bf16.mxu0 %v5214
    %6412 = vmatpush1.bf16.msra.mxu0 %v5213
    %6413 = vmatprep.subr.bf16.mxu0 %v5222
    %6414 = vmatpush1.bf16.msra.mxu0 %v5221
    %6415 = vmatprep.subr.bf16.mxu0 %v5230
    %6416 = vmatpush1.bf16.msra.mxu0 %v5229
    %6417 = vmatprep.subr.bf16.mxu0 %v5238
    %6418 = vmatpush1.bf16.msra.mxu0 %v5237
    %6419 = vmatprep.subr.bf16.mxu0 %v5246
    %6420 = vmatpush1.bf16.msra.mxu0 %v5245
    %6421 = vmatprep.subr.bf16.mxu0 %v5254
    %6422 = vmatpush1.bf16.msra.mxu0 %v5253
    %6423 = vmatprep.subr.bf16.mxu0 %v5262
    %6424 = vmatpush1.bf16.msra.mxu0 %v5261
    %6425 = vmatprep.subr.bf16.mxu0 %v5270
    %6426 = vmatpush1.bf16.msra.mxu0 %v5269
    %6427 = vmatprep.subr.bf16.mxu0 %v5278
    %6428 = vmatpush1.bf16.msra.mxu0 %v5277
    %6429 = vmatprep.subr.bf16.mxu0 %v5286
    %6430 = vmatpush1.bf16.msra.mxu0 %v5285
    %6431 = vmatprep.subr.bf16.mxu0 %v5294
    %6432 = vmatpush1.bf16.msra.mxu0 %v5293
    %6433 = vmatprep.subr.bf16.mxu0 %v5302
    %6434 = vmatpush1.bf16.msra.mxu0 %v5301
    %6435 = vmatprep.subr.bf16.mxu0 %v5310
    %6436 = vmatpush1.bf16.msra.mxu0 %v5309
    %6437 = vmatprep.mubr.bf16.mxu0 %v3994
    %6438 = vmatmul.mubr.bf16.gmra.mrb[0].mxu0 %v3993
    %v6439 = vpop.f32.mrb[0].mxu0
    %v6440 = vadd.f32 %v4390, %v6439
    %v6441 = vpop.f32.mrb[0].mxu0
    %v6442 = vadd.f32 %v4394, %v6441
    %v6443 = vpop.f32.mrb[0].mxu0
    %v6444 = vadd.f32 %v4390, %v6443
    %v6445 = vpop.f32.mrb[0].mxu0
    %v6446 = vadd.f32 %v4394, %v6445
    %6447 = vmatprep.mubr.bf16.mxu0 %v3998
    %6448 = vmatmul.mubr.bf16.gmra.mrb[0].mxu0 %v3997
    %v6449 = vpop.f32.mrb[0].mxu0
    %v6450 = vadd.f32 %v4390, %v6449
    %v6451 = vpop.f32.mrb[0].mxu0
    %v6452 = vadd.f32 %v4394, %v6451
    %v6453 = vpop.f32.mrb[0].mxu0
    %v6454 = vadd.f32 %v4390, %v6453
    %v6455 = vpop.f32.mrb[0].mxu0
    %v6456 = vadd.f32 %v4394, %v6455
    %6457 = vmatprep.mubr.bf16.mxu0 %v4002
    %6458 = vmatmul.mubr.bf16.gmra.mrb[0].mxu0 %v4001
    %v6459 = vpop.f32.mrb[0].mxu0
    %v6460 = vadd.f32 %v4390, %v6459
    %v6461 = vpop.f32.mrb[0].mxu0
    %v6462 = vadd.f32 %v4394, %v6461
    %v6463 = vpop.f32.mrb[0].mxu0
    %v6464 = vadd.f32 %v4390, %v6463
    %v6465 = vpop.f32.mrb[0].mxu0
    %v6466 = vadd.f32 %v4394, %v6465
    %6467 = vmatprep.mubr.bf16.mxu0 %v4006
    %6468 = vmatmul.mubr.bf16.gmra.mrb[0].mxu0 %v4005
    %v6469 = vpop.f32.mrb[0].mxu0
    %v6470 = vadd.f32 %v4390, %v6469
    %v6471 = vpop.f32.mrb[0].mxu0
    %v6472 = vadd.f32 %v4394, %v6471
    %v6473 = vpop.f32.mrb[0].mxu0
    %v6474 = vadd.f32 %v4390, %v6473
    %v6475 = vpop.f32.mrb[0].mxu0
    %v6476 = vadd.f32 %v4394, %v6475
    %6477 = vmatprep.mubr.bf16.mxu0 %v4010
    %6478 = vmatmul.mubr.bf16.gmra.mrb[0].mxu0 %v4009
    %v6479 = vpop.f32.mrb[0].mxu0
    %v6480 = vadd.f32 %v4390, %v6479
    %v6481 = vpop.f32.mrb[0].mxu0
    %v6482 = vadd.f32 %v4394, %v6481
    %v6483 = vpop.f32.mrb[0].mxu0
    %v6484 = vadd.f32 %v4390, %v6483
    %v6485 = vpop.f32.mrb[0].mxu0
    %v6486 = vadd.f32 %v4394, %v6485
    %6487 = vmatprep.mubr.bf16.mxu0 %v4014
    %6488 = vmatmul.mubr.bf16.gmra.mrb[0].mxu0 %v4013
    %v6489 = vpop.f32.mrb[0].mxu0
    %v6490 = vadd.f32 %v4390, %v6489
    %v6491 = vpop.f32.mrb[0].mxu0
    %v6492 = vadd.f32 %v4394, %v6491
    %v6493 = vpop.f32.mrb[0].mxu0
    %v6494 = vadd.f32 %v4390, %v6493
    %v6495 = vpop.f32.mrb[0].mxu0
    %v6496 = vadd.f32 %v4394, %v6495
    %6497 = vmatprep.mubr.bf16.mxu0 %v4018
    %6498 = vmatmul.mubr.bf16.gmra.mrb[0].mxu0 %v4017
    %v6499 = vpop.f32.mrb[0].mxu0
    %v6500 = vadd.f32 %v4390, %v6499
    %v6501 = vpop.f32.mrb[0].mxu0
    %v6502 = vadd.f32 %v4394, %v6501
    %v6503 = vpop.f32.mrb[0].mxu0
    %v6504 = vadd.f32 %v4390, %v6503
    %v6505 = vpop.f32.mrb[0].mxu0
    %v6506 = vadd.f32 %v4394, %v6505
    %6507 = vmatprep.mubr.bf16.mxu0 %v4022
    %6508 = vmatmul.mubr.bf16.gmra.mrb[0].mxu0 %v4021
    %v6509 = vpop.f32.mrb[0].mxu0
    %v6510 = vadd.f32 %v4390, %v6509
    %v6511 = vpop.f32.mrb[0].mxu0
    %v6512 = vadd.f32 %v4394, %v6511
    %v6513 = vpop.f32.mrb[0].mxu0
    %v6514 = vadd.f32 %v4390, %v6513
    %v6515 = vpop.f32.mrb[0].mxu0
    %v6516 = vadd.f32 %v4394, %v6515
    %6517 = vmatprep.mubr.bf16.mxu0 %v4026
    %6518 = vmatmul.mubr.bf16.gmra.mrb[0].mxu0 %v4025
    %v6519 = vpop.f32.mrb[0].mxu0
    %v6520 = vadd.f32 %v4390, %v6519
    %v6521 = vpop.f32.mrb[0].mxu0
    %v6522 = vadd.f32 %v4394, %v6521
    %v6523 = vpop.f32.mrb[0].mxu0
    %v6524 = vadd.f32 %v4390, %v6523
    %v6525 = vpop.f32.mrb[0].mxu0
    %v6526 = vadd.f32 %v4394, %v6525
    %6527 = vmatprep.mubr.bf16.mxu0 %v4030
    %6528 = vmatmul.mubr.bf16.gmra.mrb[0].mxu0 %v4029
    %v6529 = vpop.f32.mrb[0].mxu0
    %v6530 = vadd.f32 %v4390, %v6529
    %v6531 = vpop.f32.mrb[0].mxu0
    %v6532 = vadd.f32 %v4394, %v6531
    %v6533 = vpop.f32.mrb[0].mxu0
    %v6534 = vadd.f32 %v4390, %v6533
    %v6535 = vpop.f32.mrb[0].mxu0
    %v6536 = vadd.f32 %v4394, %v6535
    %6537 = vmatprep.mubr.bf16.mxu0 %v4034
    %6538 = vmatmul.mubr.bf16.gmra.mrb[0].mxu0 %v4033
    %v6539 = vpop.f32.mrb[0].mxu0
    %v6540 = vadd.f32 %v4390, %v6539
    %v6541 = vpop.f32.mrb[0].mxu0
    %v6542 = vadd.f32 %v4394, %v6541
    %v6543 = vpop.f32.mrb[0].mxu0
    %v6544 = vadd.f32 %v4390, %v6543
    %v6545 = vpop.f32.mrb[0].mxu0
    %v6546 = vadd.f32 %v4394, %v6545
    %6547 = vmatprep.mubr.bf16.mxu0 %v4038
    %6548 = vmatmul.mubr.bf16.gmra.mrb[0].mxu0 %v4037
    %v6549 = vpop.f32.mrb[0].mxu0
    %v6550 = vadd.f32 %v4390, %v6549
    %v6551 = vpop.f32.mrb[0].mxu0
    %v6552 = vadd.f32 %v4394, %v6551
    %v6553 = vpop.f32.mrb[0].mxu0
    %v6554 = vadd.f32 %v4390, %v6553
    %v6555 = vpop.f32.mrb[0].mxu0
    %v6556 = vadd.f32 %v4394, %v6555
    %6557 = vmatprep.mubr.bf16.mxu0 %v4042
    %6558 = vmatmul.mubr.bf16.gmra.mrb[0].mxu0 %v4041
    %v6559 = vpop.f32.mrb[0].mxu0
    %v6560 = vadd.f32 %v4390, %v6559
    %v6561 = vpop.f32.mrb[0].mxu0
    %v6562 = vadd.f32 %v4394, %v6561
    %v6563 = vpop.f32.mrb[0].mxu0
    %v6564 = vadd.f32 %v4390, %v6563
    %v6565 = vpop.f32.mrb[0].mxu0
    %v6566 = vadd.f32 %v4394, %v6565
    %6567 = vmatprep.mubr.bf16.mxu0 %v4046
    %6568 = vmatmul.mubr.bf16.gmra.mrb[0].mxu0 %v4045
    %v6569 = vpop.f32.mrb[0].mxu0
    %v6570 = vadd.f32 %v4390, %v6569
    %v6571 = vpop.f32.mrb[0].mxu0
    %v6572 = vadd.f32 %v4394, %v6571
    %v6573 = vpop.f32.mrb[0].mxu0
    %v6574 = vadd.f32 %v4390, %v6573
    %v6575 = vpop.f32.mrb[0].mxu0
    %v6576 = vadd.f32 %v4394, %v6575
    %6577 = vmatprep.mubr.bf16.mxu0 %v4050
    %6578 = vmatmul.mubr.bf16.gmra.mrb[0].mxu0 %v4049
    %v6579 = vpop.f32.mrb[0].mxu0
    %v6580 = vadd.f32 %v4390, %v6579
    %v6581 = vpop.f32.mrb[0].mxu0
    %v6582 = vadd.f32 %v4394, %v6581
    %v6583 = vpop.f32.mrb[0].mxu0
    %v6584 = vadd.f32 %v4390, %v6583
    %v6585 = vpop.f32.mrb[0].mxu0
    %v6586 = vadd.f32 %v4394, %v6585
    %6587 = vmatprep.mubr.bf16.mxu0 %v4054
    %6588 = vmatmul.mubr.bf16.gmra.mrb[0].mxu0 %v4053
    %v6589 = vpop.f32.mrb[0].mxu0
    %v6590 = vadd.f32 %v4390, %v6589
    %v6591 = vpop.f32.mrb[0].mxu0
    %v6592 = vadd.f32 %v4394, %v6591
    %v6593 = vpop.f32.mrb[0].mxu0
    %v6594 = vadd.f32 %v4390, %v6593
    %v6595 = vpop.f32.mrb[0].mxu0
    %v6596 = vadd.f32 %v4394, %v6595
    %6597 = vmatprep.mubr.bf16.mxu0 %v4058
    %6598 = vmatmul.mubr.bf16.gmra.mrb[0].mxu0 %v4057
    %v6599 = vpop.f32.mrb[0].mxu0
    %v6600 = vadd.f32 %v4390, %v6599
    %v6601 = vpop.f32.mrb[0].mxu0
    %v6602 = vadd.f32 %v4394, %v6601
    %v6603 = vpop.f32.mrb[0].mxu0
    %v6604 = vadd.f32 %v4390, %v6603
    %v6605 = vpop.f32.mrb[0].mxu0
    %v6606 = vadd.f32 %v4394, %v6605
    %6607 = vmatprep.mubr.bf16.mxu0 %v4062
    %6608 = vmatmul.mubr.bf16.gmra.mrb[0].mxu0 %v4061
    %v6609 = vpop.f32.mrb[0].mxu0
    %v6610 = vadd.f32 %v4390, %v6609
    %v6611 = vpop.f32.mrb[0].mxu0
    %v6612 = vadd.f32 %v4394, %v6611
    %v6613 = vpop.f32.mrb[0].mxu0
    %v6614 = vadd.f32 %v4390, %v6613
    %v6615 = vpop.f32.mrb[0].mxu0
    %v6616 = vadd.f32 %v4394, %v6615
    %6617 = vmatprep.mubr.bf16.mxu0 %v4066
    %6618 = vmatmul.mubr.bf16.gmra.mrb[0].mxu0 %v4065
    %v6619 = vpop.f32.mrb[0].mxu0
    %v6620 = vadd.f32 %v4390, %v6619
    %v6621 = vpop.f32.mrb[0].mxu0
    %v6622 = vadd.f32 %v4394, %v6621
    %v6623 = vpop.f32.mrb[0].mxu0
    %v6624 = vadd.f32 %v4390, %v6623
    %v6625 = vpop.f32.mrb[0].mxu0
    %v6626 = vadd.f32 %v4394, %v6625
    %6627 = vmatprep.mubr.bf16.mxu0 %v4070
    %6628 = vmatmul.mubr.bf16.gmra.mrb[0].mxu0 %v4069
    %v6629 = vpop.f32.mrb[0].mxu0
    %v6630 = vadd.f32 %v4390, %v6629
    %v6631 = vpop.f32.mrb[0].mxu0
    %v6632 = vadd.f32 %v4394, %v6631
    %v6633 = vpop.f32.mrb[0].mxu0
    %v6634 = vadd.f32 %v4390, %v6633
    %v6635 = vpop.f32.mrb[0].mxu0
    %v6636 = vadd.f32 %v4394, %v6635
    %6637 = vmatprep.mubr.bf16.mxu0 %v4074
    %6638 = vmatmul.mubr.bf16.gmra.mrb[0].mxu0 %v4073
    %v6639 = vpop.f32.mrb[0].mxu0
    %v6640 = vadd.f32 %v4390, %v6639
    %v6641 = vpop.f32.mrb[0].mxu0
    %v6642 = vadd.f32 %v4394, %v6641
    %v6643 = vpop.f32.mrb[0].mxu0
    %v6644 = vadd.f32 %v4390, %v6643
    %v6645 = vpop.f32.mrb[0].mxu0
    %v6646 = vadd.f32 %v4394, %v6645
    %6647 = vmatprep.mubr.bf16.mxu0 %v4078
    %6648 = vmatmul.mubr.bf16.gmra.mrb[0].mxu0 %v4077
    %v6649 = vpop.f32.mrb[0].mxu0
    %v6650 = vadd.f32 %v4390, %v6649
    %v6651 = vpop.f32.mrb[0].mxu0
    %v6652 = vadd.f32 %v4394, %v6651
    %v6653 = vpop.f32.mrb[0].mxu0
    %v6654 = vadd.f32 %v4390, %v6653
    %v6655 = vpop.f32.mrb[0].mxu0
    %v6656 = vadd.f32 %v4394, %v6655
    %6657 = vmatprep.mubr.bf16.mxu0 %v4082
    %6658 = vmatmul.mubr.bf16.gmra.mrb[0].mxu0 %v4081
    %v6659 = vpop.f32.mrb[0].mxu0
    %v6660 = vadd.f32 %v4390, %v6659
    %v6661 = vpop.f32.mrb[0].mxu0
    %v6662 = vadd.f32 %v4394, %v6661
    %v6663 = vpop.f32.mrb[0].mxu0
    %v6664 = vadd.f32 %v4390, %v6663
    %v6665 = vpop.f32.mrb[0].mxu0
    %v6666 = vadd.f32 %v4394, %v6665
    %6667 = vmatprep.mubr.bf16.mxu0 %v4086
    %6668 = vmatmul.mubr.bf16.gmra.mrb[0].mxu0 %v4085
    %v6669 = vpop.f32.mrb[0].mxu0
    %v6670 = vadd.f32 %v4390, %v6669
    %v6671 = vpop.f32.mrb[0].mxu0
    %v6672 = vadd.f32 %v4394, %v6671
    %v6673 = vpop.f32.mrb[0].mxu0
    %v6674 = vadd.f32 %v4390, %v6673
    %v6675 = vpop.f32.mrb[0].mxu0
    %v6676 = vadd.f32 %v4394, %v6675
    %6677 = vmatprep.mubr.bf16.mxu0 %v4090
    %6678 = vmatmul.mubr.bf16.gmra.mrb[0].mxu0 %v4089
    %v6679 = vpop.f32.mrb[0].mxu0
    %v6680 = vadd.f32 %v4390, %v6679
    %v6681 = vpop.f32.mrb[0].mxu0
    %v6682 = vadd.f32 %v4394, %v6681
    %v6683 = vpop.f32.mrb[0].mxu0
    %v6684 = vadd.f32 %v4390, %v6683
    %v6685 = vpop.f32.mrb[0].mxu0
    %v6686 = vadd.f32 %v4394, %v6685
    %6687 = vmatprep.mubr.bf16.mxu0 %v4094
    %6688 = vmatmul.mubr.bf16.gmra.mrb[0].mxu0 %v4093
    %v6689 = vpop.f32.mrb[0].mxu0
    %v6690 = vadd.f32 %v4390, %v6689
    %v6691 = vpop.f32.mrb[0].mxu0
    %v6692 = vadd.f32 %v4394, %v6691
    %v6693 = vpop.f32.mrb[0].mxu0
    %v6694 = vadd.f32 %v4390, %v6693
    %v6695 = vpop.f32.mrb[0].mxu0
    %v6696 = vadd.f32 %v4394, %v6695
    %6697 = vmatprep.mubr.bf16.mxu0 %v4098
    %6698 = vmatmul.mubr.bf16.gmra.mrb[0].mxu0 %v4097
    %v6699 = vpop.f32.mrb[0].mxu0
    %v6700 = vadd.f32 %v4390, %v6699
    %v6701 = vpop.f32.mrb[0].mxu0
    %v6702 = vadd.f32 %v4394, %v6701
    %v6703 = vpop.f32.mrb[0].mxu0
    %v6704 = vadd.f32 %v4390, %v6703
    %v6705 = vpop.f32.mrb[0].mxu0
    %v6706 = vadd.f32 %v4394, %v6705
    %6707 = vmatprep.mubr.bf16.mxu0 %v4102
    %6708 = vmatmul.mubr.bf16.gmra.mrb[0].mxu0 %v4101
    %v6709 = vpop.f32.mrb[0].mxu0
    %v6710 = vadd.f32 %v4390, %v6709
    %v6711 = vpop.f32.mrb[0].mxu0
    %v6712 = vadd.f32 %v4394, %v6711
    %v6713 = vpop.f32.mrb[0].mxu0
    %v6714 = vadd.f32 %v4390, %v6713
    %v6715 = vpop.f32.mrb[0].mxu0
    %v6716 = vadd.f32 %v4394, %v6715
    %6717 = vmatprep.mubr.bf16.mxu0 %v4106
    %6718 = vmatmul.mubr.bf16.gmra.mrb[0].mxu0 %v4105
    %v6719 = vpop.f32.mrb[0].mxu0
    %v6720 = vadd.f32 %v4390, %v6719
    %v6721 = vpop.f32.mrb[0].mxu0
    %v6722 = vadd.f32 %v4394, %v6721
    %v6723 = vpop.f32.mrb[0].mxu0
    %v6724 = vadd.f32 %v4390, %v6723
    %v6725 = vpop.f32.mrb[0].mxu0
    %v6726 = vadd.f32 %v4394, %v6725
    %6727 = vmatprep.mubr.bf16.mxu0 %v4110
    %6728 = vmatmul.mubr.bf16.gmra.mrb[0].mxu0 %v4109
    %v6729 = vpop.f32.mrb[0].mxu0
    %v6730 = vadd.f32 %v4390, %v6729
    %v6731 = vpop.f32.mrb[0].mxu0
    %v6732 = vadd.f32 %v4394, %v6731
    %v6733 = vpop.f32.mrb[0].mxu0
    %v6734 = vadd.f32 %v4390, %v6733
    %v6735 = vpop.f32.mrb[0].mxu0
    %v6736 = vadd.f32 %v4394, %v6735
    %6737 = vmatprep.mubr.bf16.mxu0 %v4114
    %6738 = vmatmul.mubr.bf16.gmra.mrb[0].mxu0 %v4113
    %v6739 = vpop.f32.mrb[0].mxu0
    %v6740 = vadd.f32 %v4390, %v6739
    %v6741 = vpop.f32.mrb[0].mxu0
    %v6742 = vadd.f32 %v4394, %v6741
    %v6743 = vpop.f32.mrb[0].mxu0
    %v6744 = vadd.f32 %v4390, %v6743
    %v6745 = vpop.f32.mrb[0].mxu0
    %v6746 = vadd.f32 %v4394, %v6745
    %6747 = vmatprep.mubr.bf16.mxu0 %v4118
    %6748 = vmatmul.mubr.bf16.gmra.mrb[0].mxu0 %v4117
    %v6749 = vpop.f32.mrb[0].mxu0
    %v6750 = vadd.f32 %v4390, %v6749
    %v6751 = vpop.f32.mrb[0].mxu0
    %v6752 = vadd.f32 %v4394, %v6751
    %v6753 = vpop.f32.mrb[0].mxu0
    %v6754 = vadd.f32 %v4390, %v6753
    %v6755 = vpop.f32.mrb[0].mxu0
    %v6756 = vadd.f32 %v4394, %v6755
    %6757 = vdwg.mxu0
    %6758 = vmatprep.subr.bf16.mxu0 %v5318
    %6759 = vmatpush1.bf16.msra.mxu0 %v5317
    %6760 = vmatprep.subr.bf16.mxu0 %v5326
    %6761 = vmatpush1.bf16.msra.mxu0 %v5325
    %6762 = vmatprep.subr.bf16.mxu0 %v5334
    %6763 = vmatpush1.bf16.msra.mxu0 %v5333
    %6764 = vmatprep.subr.bf16.mxu0 %v5342
    %6765 = vmatpush1.bf16.msra.mxu0 %v5341
    %6766 = vmatprep.subr.bf16.mxu0 %v5350
    %6767 = vmatpush1.bf16.msra.mxu0 %v5349
    %6768 = vmatprep.subr.bf16.mxu0 %v5358
    %6769 = vmatpush1.bf16.msra.mxu0 %v5357
    %6770 = vmatprep.subr.bf16.mxu0 %v5366
    %6771 = vmatpush1.bf16.msra.mxu0 %v5365
    %6772 = vmatprep.subr.bf16.mxu0 %v5374
    %6773 = vmatpush1.bf16.msra.mxu0 %v5373
    %6774 = vmatprep.subr.bf16.mxu0 %v5382
    %6775 = vmatpush1.bf16.msra.mxu0 %v5381
    %6776 = vmatprep.subr.bf16.mxu0 %v5390
    %6777 = vmatpush1.bf16.msra.mxu0 %v5389
    %6778 = vmatprep.subr.bf16.mxu0 %v5398
    %6779 = vmatpush1.bf16.msra.mxu0 %v5397
    %6780 = vmatprep.subr.bf16.mxu0 %v5406
    %6781 = vmatpush1.bf16.msra.mxu0 %v5405
    %6782 = vmatprep.subr.bf16.mxu0 %v5414
    %6783 = vmatpush1.bf16.msra.mxu0 %v5413
    %6784 = vmatprep.subr.bf16.mxu0 %v5422
    %6785 = vmatpush1.bf16.msra.mxu0 %v5421
    %6786 = vmatprep.subr.bf16.mxu0 %v5430
    %6787 = vmatpush1.bf16.msra.mxu0 %v5429
    %6788 = vmatprep.subr.bf16.mxu0 %v5438
    %6789 = vmatpush1.bf16.msra.mxu0 %v5437
    %6790 = vmatprep.mubr.bf16.mxu0 %v3996
    %6791 = vmatmul.mubr.bf16.gmra.mrb[0].mxu0 %v3995
    %v6792 = vpop.f32.mrb[0].mxu0
    %v6793 = vadd.f32 %v6440, %v6792
    %v6794 = vpop.f32.mrb[0].mxu0
    %v6795 = vadd.f32 %v6442, %v6794
    %v6796 = vpop.f32.mrb[0].mxu0
    %v6797 = vadd.f32 %v6444, %v6796
    %v6798 = vpop.f32.mrb[0].mxu0
    %v6799 = vadd.f32 %v6446, %v6798
    %6800 = vmatprep.mubr.bf16.mxu0 %v4000
    %6801 = vmatmul.mubr.bf16.gmra.mrb[0].mxu0 %v3999
    %v6802 = vpop.f32.mrb[0].mxu0
    %v6803 = vadd.f32 %v6450, %v6802
    %v6804 = vpop.f32.mrb[0].mxu0
    %v6805 = vadd.f32 %v6452, %v6804
    %v6806 = vpop.f32.mrb[0].mxu0
    %v6807 = vadd.f32 %v6454, %v6806
    %v6808 = vpop.f32.mrb[0].mxu0
    %v6809 = vadd.f32 %v6456, %v6808
    %6810 = vmatprep.mubr.bf16.mxu0 %v4004
    %6811 = vmatmul.mubr.bf16.gmra.mrb[0].mxu0 %v4003
    %v6812 = vpop.f32.mrb[0].mxu0
    %v6813 = vadd.f32 %v6460, %v6812
    %v6814 = vpop.f32.mrb[0].mxu0
    %v6815 = vadd.f32 %v6462, %v6814
    %v6816 = vpop.f32.mrb[0].mxu0
    %v6817 = vadd.f32 %v6464, %v6816
    %v6818 = vpop.f32.mrb[0].mxu0
    %v6819 = vadd.f32 %v6466, %v6818
    %6820 = vmatprep.mubr.bf16.mxu0 %v4008
    %6821 = vmatmul.mubr.bf16.gmra.mrb[0].mxu0 %v4007
    %v6822 = vpop.f32.mrb[0].mxu0
    %v6823 = vadd.f32 %v6470, %v6822
    %v6824 = vpop.f32.mrb[0].mxu0
    %v6825 = vadd.f32 %v6472, %v6824
    %v6826 = vpop.f32.mrb[0].mxu0
    %v6827 = vadd.f32 %v6474, %v6826
    %v6828 = vpop.f32.mrb[0].mxu0
    %v6829 = vadd.f32 %v6476, %v6828
    %6830 = vmatprep.mubr.bf16.mxu0 %v4012
    %6831 = vmatmul.mubr.bf16.gmra.mrb[0].mxu0 %v4011
    %v6832 = vpop.f32.mrb[0].mxu0
    %v6833 = vadd.f32 %v6480, %v6832
    %v6834 = vpop.f32.mrb[0].mxu0
    %v6835 = vadd.f32 %v6482, %v6834
    %v6836 = vpop.f32.mrb[0].mxu0
    %v6837 = vadd.f32 %v6484, %v6836
    %v6838 = vpop.f32.mrb[0].mxu0
    %v6839 = vadd.f32 %v6486, %v6838
    %6840 = vmatprep.mubr.bf16.mxu0 %v4016
    %6841 = vmatmul.mubr.bf16.gmra.mrb[0].mxu0 %v4015
    %v6842 = vpop.f32.mrb[0].mxu0
    %v6843 = vadd.f32 %v6490, %v6842
    %v6844 = vpop.f32.mrb[0].mxu0
    %v6845 = vadd.f32 %v6492, %v6844
    %v6846 = vpop.f32.mrb[0].mxu0
    %v6847 = vadd.f32 %v6494, %v6846
    %v6848 = vpop.f32.mrb[0].mxu0
    %v6849 = vadd.f32 %v6496, %v6848
    %6850 = vmatprep.mubr.bf16.mxu0 %v4020
    %6851 = vmatmul.mubr.bf16.gmra.mrb[0].mxu0 %v4019
    %v6852 = vpop.f32.mrb[0].mxu0
    %v6853 = vadd.f32 %v6500, %v6852
    %v6854 = vpop.f32.mrb[0].mxu0
    %v6855 = vadd.f32 %v6502, %v6854
    %v6856 = vpop.f32.mrb[0].mxu0
    %v6857 = vadd.f32 %v6504, %v6856
    %v6858 = vpop.f32.mrb[0].mxu0
    %v6859 = vadd.f32 %v6506, %v6858
    %6860 = vmatprep.mubr.bf16.mxu0 %v4024
    %6861 = vmatmul.mubr.bf16.gmra.mrb[0].mxu0 %v4023
    %v6862 = vpop.f32.mrb[0].mxu0
    %v6863 = vadd.f32 %v6510, %v6862
    %v6864 = vpop.f32.mrb[0].mxu0
    %v6865 = vadd.f32 %v6512, %v6864
    %v6866 = vpop.f32.mrb[0].mxu0
    %v6867 = vadd.f32 %v6514, %v6866
    %v6868 = vpop.f32.mrb[0].mxu0
    %v6869 = vadd.f32 %v6516, %v6868
    %6870 = vmatprep.mubr.bf16.mxu0 %v4028
    %6871 = vmatmul.mubr.bf16.gmra.mrb[0].mxu0 %v4027
    %v6872 = vpop.f32.mrb[0].mxu0
    %v6873 = vadd.f32 %v6520, %v6872
    %v6874 = vpop.f32.mrb[0].mxu0
    %v6875 = vadd.f32 %v6522, %v6874
    %v6876 = vpop.f32.mrb[0].mxu0
    %v6877 = vadd.f32 %v6524, %v6876
    %v6878 = vpop.f32.mrb[0].mxu0
    %v6879 = vadd.f32 %v6526, %v6878
    %6880 = vmatprep.mubr.bf16.mxu0 %v4032
    %6881 = vmatmul.mubr.bf16.gmra.mrb[0].mxu0 %v4031
    %v6882 = vpop.f32.mrb[0].mxu0
    %v6883 = vadd.f32 %v6530, %v6882
    %v6884 = vpop.f32.mrb[0].mxu0
    %v6885 = vadd.f32 %v6532, %v6884
    %v6886 = vpop.f32.mrb[0].mxu0
    %v6887 = vadd.f32 %v6534, %v6886
    %v6888 = vpop.f32.mrb[0].mxu0
    %v6889 = vadd.f32 %v6536, %v6888
    %6890 = vmatprep.mubr.bf16.mxu0 %v4036
    %6891 = vmatmul.mubr.bf16.gmra.mrb[0].mxu0 %v4035
    %v6892 = vpop.f32.mrb[0].mxu0
    %v6893 = vadd.f32 %v6540, %v6892
    %v6894 = vpop.f32.mrb[0].mxu0
    %v6895 = vadd.f32 %v6542, %v6894
    %v6896 = vpop.f32.mrb[0].mxu0
    %v6897 = vadd.f32 %v6544, %v6896
    %v6898 = vpop.f32.mrb[0].mxu0
    %v6899 = vadd.f32 %v6546, %v6898
    %6900 = vmatprep.mubr.bf16.mxu0 %v4040
    %6901 = vmatmul.mubr.bf16.gmra.mrb[0].mxu0 %v4039
    %v6902 = vpop.f32.mrb[0].mxu0
    %v6903 = vadd.f32 %v6550, %v6902
    %v6904 = vpop.f32.mrb[0].mxu0
    %v6905 = vadd.f32 %v6552, %v6904
    %v6906 = vpop.f32.mrb[0].mxu0
    %v6907 = vadd.f32 %v6554, %v6906
    %v6908 = vpop.f32.mrb[0].mxu0
    %v6909 = vadd.f32 %v6556, %v6908
    %6910 = vmatprep.mubr.bf16.mxu0 %v4044
    %6911 = vmatmul.mubr.bf16.gmra.mrb[0].mxu0 %v4043
    %v6912 = vpop.f32.mrb[0].mxu0
    %v6913 = vadd.f32 %v6560, %v6912
    %v6914 = vpop.f32.mrb[0].mxu0
    %v6915 = vadd.f32 %v6562, %v6914
    %v6916 = vpop.f32.mrb[0].mxu0
    %v6917 = vadd.f32 %v6564, %v6916
    %v6918 = vpop.f32.mrb[0].mxu0
    %v6919 = vadd.f32 %v6566, %v6918
    %6920 = vmatprep.mubr.bf16.mxu0 %v4048
    %6921 = vmatmul.mubr.bf16.gmra.mrb[0].mxu0 %v4047
    %v6922 = vpop.f32.mrb[0].mxu0
    %v6923 = vadd.f32 %v6570, %v6922
    %v6924 = vpop.f32.mrb[0].mxu0
    %v6925 = vadd.f32 %v6572, %v6924
    %v6926 = vpop.f32.mrb[0].mxu0
    %v6927 = vadd.f32 %v6574, %v6926
    %v6928 = vpop.f32.mrb[0].mxu0
    %v6929 = vadd.f32 %v6576, %v6928
    %6930 = vmatprep.mubr.bf16.mxu0 %v4052
    %6931 = vmatmul.mubr.bf16.gmra.mrb[0].mxu0 %v4051
    %v6932 = vpop.f32.mrb[0].mxu0
    %v6933 = vadd.f32 %v6580, %v6932
    %v6934 = vpop.f32.mrb[0].mxu0
    %v6935 = vadd.f32 %v6582, %v6934
    %v6936 = vpop.f32.mrb[0].mxu0
    %v6937 = vadd.f32 %v6584, %v6936
    %v6938 = vpop.f32.mrb[0].mxu0
    %v6939 = vadd.f32 %v6586, %v6938
    %6940 = vmatprep.mubr.bf16.mxu0 %v4056
    %6941 = vmatmul.mubr.bf16.gmra.mrb[0].mxu0 %v4055
    %v6942 = vpop.f32.mrb[0].mxu0
    %v6943 = vadd.f32 %v6590, %v6942
    %v6944 = vpop.f32.mrb[0].mxu0
    %v6945 = vadd.f32 %v6592, %v6944
    %v6946 = vpop.f32.mrb[0].mxu0
    %v6947 = vadd.f32 %v6594, %v6946
    %v6948 = vpop.f32.mrb[0].mxu0
    %v6949 = vadd.f32 %v6596, %v6948
    %6950 = vmatprep.mubr.bf16.mxu0 %v4060
    %6951 = vmatmul.mubr.bf16.gmra.mrb[0].mxu0 %v4059
    %v6952 = vpop.f32.mrb[0].mxu0
    %v6953 = vadd.f32 %v6600, %v6952
    %v6954 = vpop.f32.mrb[0].mxu0
    %v6955 = vadd.f32 %v6602, %v6954
    %v6956 = vpop.f32.mrb[0].mxu0
    %v6957 = vadd.f32 %v6604, %v6956
    %v6958 = vpop.f32.mrb[0].mxu0
    %v6959 = vadd.f32 %v6606, %v6958
    %6960 = vmatprep.mubr.bf16.mxu0 %v4064
    %6961 = vmatmul.mubr.bf16.gmra.mrb[0].mxu0 %v4063
    %v6962 = vpop.f32.mrb[0].mxu0
    %v6963 = vadd.f32 %v6610, %v6962
    %v6964 = vpop.f32.mrb[0].mxu0
    %v6965 = vadd.f32 %v6612, %v6964
    %v6966 = vpop.f32.mrb[0].mxu0
    %v6967 = vadd.f32 %v6614, %v6966
    %v6968 = vpop.f32.mrb[0].mxu0
    %v6969 = vadd.f32 %v6616, %v6968
    %6970 = vmatprep.mubr.bf16.mxu0 %v4068
    %6971 = vmatmul.mubr.bf16.gmra.mrb[0].mxu0 %v4067
    %v6972 = vpop.f32.mrb[0].mxu0
    %v6973 = vadd.f32 %v6620, %v6972
    %v6974 = vpop.f32.mrb[0].mxu0
    %v6975 = vadd.f32 %v6622, %v6974
    %v6976 = vpop.f32.mrb[0].mxu0
    %v6977 = vadd.f32 %v6624, %v6976
    %v6978 = vpop.f32.mrb[0].mxu0
    %v6979 = vadd.f32 %v6626, %v6978
    %6980 = vmatprep.mubr.bf16.mxu0 %v4072
    %6981 = vmatmul.mubr.bf16.gmra.mrb[0].mxu0 %v4071
    %v6982 = vpop.f32.mrb[0].mxu0
    %v6983 = vadd.f32 %v6630, %v6982
    %v6984 = vpop.f32.mrb[0].mxu0
    %v6985 = vadd.f32 %v6632, %v6984
    %v6986 = vpop.f32.mrb[0].mxu0
    %v6987 = vadd.f32 %v6634, %v6986
    %v6988 = vpop.f32.mrb[0].mxu0
    %v6989 = vadd.f32 %v6636, %v6988
    %6990 = vmatprep.mubr.bf16.mxu0 %v4076
    %6991 = vmatmul.mubr.bf16.gmra.mrb[0].mxu0 %v4075
    %v6992 = vpop.f32.mrb[0].mxu0
    %v6993 = vadd.f32 %v6640, %v6992
    %v6994 = vpop.f32.mrb[0].mxu0
    %v6995 = vadd.f32 %v6642, %v6994
    %v6996 = vpop.f32.mrb[0].mxu0
    %v6997 = vadd.f32 %v6644, %v6996
    %v6998 = vpop.f32.mrb[0].mxu0
    %v6999 = vadd.f32 %v6646, %v6998
    %7000 = vmatprep.mubr.bf16.mxu0 %v4080
    %7001 = vmatmul.mubr.bf16.gmra.mrb[0].mxu0 %v4079
    %v7002 = vpop.f32.mrb[0].mxu0
    %v7003 = vadd.f32 %v6650, %v7002
    %v7004 = vpop.f32.mrb[0].mxu0
    %v7005 = vadd.f32 %v6652, %v7004
    %v7006 = vpop.f32.mrb[0].mxu0
    %v7007 = vadd.f32 %v6654, %v7006
    %v7008 = vpop.f32.mrb[0].mxu0
    %v7009 = vadd.f32 %v6656, %v7008
    %7010 = vmatprep.mubr.bf16.mxu0 %v4084
    %7011 = vmatmul.mubr.bf16.gmra.mrb[0].mxu0 %v4083
    %v7012 = vpop.f32.mrb[0].mxu0
    %v7013 = vadd.f32 %v6660, %v7012
    %v7014 = vpop.f32.mrb[0].mxu0
    %v7015 = vadd.f32 %v6662, %v7014
    %v7016 = vpop.f32.mrb[0].mxu0
    %v7017 = vadd.f32 %v6664, %v7016
    %v7018 = vpop.f32.mrb[0].mxu0
    %v7019 = vadd.f32 %v6666, %v7018
    %7020 = vmatprep.mubr.bf16.mxu0 %v4088
    %7021 = vmatmul.mubr.bf16.gmra.mrb[0].mxu0 %v4087
    %v7022 = vpop.f32.mrb[0].mxu0
    %v7023 = vadd.f32 %v6670, %v7022
    %v7024 = vpop.f32.mrb[0].mxu0
    %v7025 = vadd.f32 %v6672, %v7024
    %v7026 = vpop.f32.mrb[0].mxu0
    %v7027 = vadd.f32 %v6674, %v7026
    %v7028 = vpop.f32.mrb[0].mxu0
    %v7029 = vadd.f32 %v6676, %v7028
    %7030 = vmatprep.mubr.bf16.mxu0 %v4092
    %7031 = vmatmul.mubr.bf16.gmra.mrb[0].mxu0 %v4091
    %v7032 = vpop.f32.mrb[0].mxu0
    %v7033 = vadd.f32 %v6680, %v7032
    %v7034 = vpop.f32.mrb[0].mxu0
    %v7035 = vadd.f32 %v6682, %v7034
    %v7036 = vpop.f32.mrb[0].mxu0
    %v7037 = vadd.f32 %v6684, %v7036
    %v7038 = vpop.f32.mrb[0].mxu0
    %v7039 = vadd.f32 %v6686, %v7038
    %7040 = vmatprep.mubr.bf16.mxu0 %v4096
    %7041 = vmatmul.mubr.bf16.gmra.mrb[0].mxu0 %v4095
    %v7042 = vpop.f32.mrb[0].mxu0
    %v7043 = vadd.f32 %v6690, %v7042
    %v7044 = vpop.f32.mrb[0].mxu0
    %v7045 = vadd.f32 %v6692, %v7044
    %v7046 = vpop.f32.mrb[0].mxu0
    %v7047 = vadd.f32 %v6694, %v7046
    %v7048 = vpop.f32.mrb[0].mxu0
    %v7049 = vadd.f32 %v6696, %v7048
    %7050 = vmatprep.mubr.bf16.mxu0 %v4100
    %7051 = vmatmul.mubr.bf16.gmra.mrb[0].mxu0 %v4099
    %v7052 = vpop.f32.mrb[0].mxu0
    %v7053 = vadd.f32 %v6700, %v7052
    %v7054 = vpop.f32.mrb[0].mxu0
    %v7055 = vadd.f32 %v6702, %v7054
    %v7056 = vpop.f32.mrb[0].mxu0
    %v7057 = vadd.f32 %v6704, %v7056
    %v7058 = vpop.f32.mrb[0].mxu0
    %v7059 = vadd.f32 %v6706, %v7058
    %7060 = vmatprep.mubr.bf16.mxu0 %v4104
    %7061 = vmatmul.mubr.bf16.gmra.mrb[0].mxu0 %v4103
    %v7062 = vpop.f32.mrb[0].mxu0
    %v7063 = vadd.f32 %v6710, %v7062
    %v7064 = vpop.f32.mrb[0].mxu0
    %v7065 = vadd.f32 %v6712, %v7064
    %v7066 = vpop.f32.mrb[0].mxu0
    %v7067 = vadd.f32 %v6714, %v7066
    %v7068 = vpop.f32.mrb[0].mxu0
    %v7069 = vadd.f32 %v6716, %v7068
    %7070 = vmatprep.mubr.bf16.mxu0 %v4108
    %7071 = vmatmul.mubr.bf16.gmra.mrb[0].mxu0 %v4107
    %v7072 = vpop.f32.mrb[0].mxu0
    %v7073 = vadd.f32 %v6720, %v7072
    %v7074 = vpop.f32.mrb[0].mxu0
    %v7075 = vadd.f32 %v6722, %v7074
    %v7076 = vpop.f32.mrb[0].mxu0
    %v7077 = vadd.f32 %v6724, %v7076
    %v7078 = vpop.f32.mrb[0].mxu0
    %v7079 = vadd.f32 %v6726, %v7078
    %7080 = vmatprep.mubr.bf16.mxu0 %v4112
    %7081 = vmatmul.mubr.bf16.gmra.mrb[0].mxu0 %v4111
    %v7082 = vpop.f32.mrb[0].mxu0
    %v7083 = vadd.f32 %v6730, %v7082
    %v7084 = vpop.f32.mrb[0].mxu0
    %v7085 = vadd.f32 %v6732, %v7084
    %v7086 = vpop.f32.mrb[0].mxu0
    %v7087 = vadd.f32 %v6734, %v7086
    %v7088 = vpop.f32.mrb[0].mxu0
    %v7089 = vadd.f32 %v6736, %v7088
    %7090 = vmatprep.mubr.bf16.mxu0 %v4116
    %7091 = vmatmul.mubr.bf16.gmra.mrb[0].mxu0 %v4115
    %v7092 = vpop.f32.mrb[0].mxu0
    %v7093 = vadd.f32 %v6740, %v7092
    %v7094 = vpop.f32.mrb[0].mxu0
    %v7095 = vadd.f32 %v6742, %v7094
    %v7096 = vpop.f32.mrb[0].mxu0
    %v7097 = vadd.f32 %v6744, %v7096
    %v7098 = vpop.f32.mrb[0].mxu0
    %v7099 = vadd.f32 %v6746, %v7098
    %7100 = vmatprep.mubr.bf16.mxu0 %v4120
    %7101 = vmatmul.mubr.bf16.gmra.mrb[0].mxu0 %v4119
    %v7102 = vpop.f32.mrb[0].mxu0
    %v7103 = vadd.f32 %v6750, %v7102
    %v7104 = vpop.f32.mrb[0].mxu0
    %v7105 = vadd.f32 %v6752, %v7104
    %v7106 = vpop.f32.mrb[0].mxu0
    %v7107 = vadd.f32 %v6754, %v7106
    %v7108 = vpop.f32.mrb[0].mxu0
    %v7109 = vadd.f32 %v6756, %v7108
    %7110 = vdwg.mxu0
    %7111 = vmatprep.subr.bf16.mxu0 %v5192
    %7112 = vmatpush1.bf16.msra.mxu0 %v5191
    %7113 = vmatprep.subr.bf16.mxu0 %v5200
    %7114 = vmatpush1.bf16.msra.mxu0 %v5199
    %7115 = vmatprep.subr.bf16.mxu0 %v5208
    %7116 = vmatpush1.bf16.msra.mxu0 %v5207
    %7117 = vmatprep.subr.bf16.mxu0 %v5216
    %7118 = vmatpush1.bf16.msra.mxu0 %v5215
    %7119 = vmatprep.subr.bf16.mxu0 %v5224
    %7120 = vmatpush1.bf16.msra.mxu0 %v5223
    %7121 = vmatprep.subr.bf16.mxu0 %v5232
    %7122 = vmatpush1.bf16.msra.mxu0 %v5231
    %7123 = vmatprep.subr.bf16.mxu0 %v5240
    %7124 = vmatpush1.bf16.msra.mxu0 %v5239
    %7125 = vmatprep.subr.bf16.mxu0 %v5248
    %7126 = vmatpush1.bf16.msra.mxu0 %v5247
    %7127 = vmatprep.subr.bf16.mxu0 %v5256
    %7128 = vmatpush1.bf16.msra.mxu0 %v5255
    %7129 = vmatprep.subr.bf16.mxu0 %v5264
    %7130 = vmatpush1.bf16.msra.mxu0 %v5263
    %7131 = vmatprep.subr.bf16.mxu0 %v5272
    %7132 = vmatpush1.bf16.msra.mxu0 %v5271
    %7133 = vmatprep.subr.bf16.mxu0 %v5280
    %7134 = vmatpush1.bf16.msra.mxu0 %v5279
    %7135 = vmatprep.subr.bf16.mxu0 %v5288
    %7136 = vmatpush1.bf16.msra.mxu0 %v5287
    %7137 = vmatprep.subr.bf16.mxu0 %v5296
    %7138 = vmatpush1.bf16.msra.mxu0 %v5295
    %7139 = vmatprep.subr.bf16.mxu0 %v5304
    %7140 = vmatpush1.bf16.msra.mxu0 %v5303
    %7141 = vmatprep.subr.bf16.mxu0 %v5312
    %7142 = vmatpush1.bf16.msra.mxu0 %v5311
    %7143 = vmatprep.mubr.bf16.mxu0 %v3994
    %7144 = vmatmul.mubr.bf16.gmra.mrb[0].mxu0 %v3993
    %v7145 = vpop.f32.mrb[0].mxu0
    %v7146 = vadd.f32 %v4398, %v7145
    %v7147 = vpop.f32.mrb[0].mxu0
    %v7148 = vadd.f32 %v4402, %v7147
    %v7149 = vpop.f32.mrb[0].mxu0
    %v7150 = vadd.f32 %v4398, %v7149
    %v7151 = vpop.f32.mrb[0].mxu0
    %v7152 = vadd.f32 %v4402, %v7151
    %7153 = vmatprep.mubr.bf16.mxu0 %v3998
    %7154 = vmatmul.mubr.bf16.gmra.mrb[0].mxu0 %v3997
    %v7155 = vpop.f32.mrb[0].mxu0
    %v7156 = vadd.f32 %v4398, %v7155
    %v7157 = vpop.f32.mrb[0].mxu0
    %v7158 = vadd.f32 %v4402, %v7157
    %v7159 = vpop.f32.mrb[0].mxu0
    %v7160 = vadd.f32 %v4398, %v7159
    %v7161 = vpop.f32.mrb[0].mxu0
    %v7162 = vadd.f32 %v4402, %v7161
    %7163 = vmatprep.mubr.bf16.mxu0 %v4002
    %7164 = vmatmul.mubr.bf16.gmra.mrb[0].mxu0 %v4001
    %v7165 = vpop.f32.mrb[0].mxu0
    %v7166 = vadd.f32 %v4398, %v7165
    %v7167 = vpop.f32.mrb[0].mxu0
    %v7168 = vadd.f32 %v4402, %v7167
    %v7169 = vpop.f32.mrb[0].mxu0
    %v7170 = vadd.f32 %v4398, %v7169
    %v7171 = vpop.f32.mrb[0].mxu0
    %v7172 = vadd.f32 %v4402, %v7171
    %7173 = vmatprep.mubr.bf16.mxu0 %v4006
    %7174 = vmatmul.mubr.bf16.gmra.mrb[0].mxu0 %v4005
    %v7175 = vpop.f32.mrb[0].mxu0
    %v7176 = vadd.f32 %v4398, %v7175
    %v7177 = vpop.f32.mrb[0].mxu0
    %v7178 = vadd.f32 %v4402, %v7177
    %v7179 = vpop.f32.mrb[0].mxu0
    %v7180 = vadd.f32 %v4398, %v7179
    %v7181 = vpop.f32.mrb[0].mxu0
    %v7182 = vadd.f32 %v4402, %v7181
    %7183 = vmatprep.mubr.bf16.mxu0 %v4010
    %7184 = vmatmul.mubr.bf16.gmra.mrb[0].mxu0 %v4009
    %v7185 = vpop.f32.mrb[0].mxu0
    %v7186 = vadd.f32 %v4398, %v7185
    %v7187 = vpop.f32.mrb[0].mxu0
    %v7188 = vadd.f32 %v4402, %v7187
    %v7189 = vpop.f32.mrb[0].mxu0
    %v7190 = vadd.f32 %v4398, %v7189
    %v7191 = vpop.f32.mrb[0].mxu0
    %v7192 = vadd.f32 %v4402, %v7191
    %7193 = vmatprep.mubr.bf16.mxu0 %v4014
    %7194 = vmatmul.mubr.bf16.gmra.mrb[0].mxu0 %v4013
    %v7195 = vpop.f32.mrb[0].mxu0
    %v7196 = vadd.f32 %v4398, %v7195
    %v7197 = vpop.f32.mrb[0].mxu0
    %v7198 = vadd.f32 %v4402, %v7197
    %v7199 = vpop.f32.mrb[0].mxu0
    %v7200 = vadd.f32 %v4398, %v7199
    %v7201 = vpop.f32.mrb[0].mxu0
    %v7202 = vadd.f32 %v4402, %v7201
    %7203 = vmatprep.mubr.bf16.mxu0 %v4018
    %7204 = vmatmul.mubr.bf16.gmra.mrb[0].mxu0 %v4017
    %v7205 = vpop.f32.mrb[0].mxu0
    %v7206 = vadd.f32 %v4398, %v7205
    %v7207 = vpop.f32.mrb[0].mxu0
    %v7208 = vadd.f32 %v4402, %v7207
    %v7209 = vpop.f32.mrb[0].mxu0
    %v7210 = vadd.f32 %v4398, %v7209
    %v7211 = vpop.f32.mrb[0].mxu0
    %v7212 = vadd.f32 %v4402, %v7211
    %7213 = vmatprep.mubr.bf16.mxu0 %v4022
    %7214 = vmatmul.mubr.bf16.gmra.mrb[0].mxu0 %v4021
    %v7215 = vpop.f32.mrb[0].mxu0
    %v7216 = vadd.f32 %v4398, %v7215
    %v7217 = vpop.f32.mrb[0].mxu0
    %v7218 = vadd.f32 %v4402, %v7217
    %v7219 = vpop.f32.mrb[0].mxu0
    %v7220 = vadd.f32 %v4398, %v7219
    %v7221 = vpop.f32.mrb[0].mxu0
    %v7222 = vadd.f32 %v4402, %v7221
    %7223 = vmatprep.mubr.bf16.mxu0 %v4026
    %7224 = vmatmul.mubr.bf16.gmra.mrb[0].mxu0 %v4025
    %v7225 = vpop.f32.mrb[0].mxu0
    %v7226 = vadd.f32 %v4398, %v7225
    %v7227 = vpop.f32.mrb[0].mxu0
    %v7228 = vadd.f32 %v4402, %v7227
    %v7229 = vpop.f32.mrb[0].mxu0
    %v7230 = vadd.f32 %v4398, %v7229
    %v7231 = vpop.f32.mrb[0].mxu0
    %v7232 = vadd.f32 %v4402, %v7231
    %7233 = vmatprep.mubr.bf16.mxu0 %v4030
    %7234 = vmatmul.mubr.bf16.gmra.mrb[0].mxu0 %v4029
    %v7235 = vpop.f32.mrb[0].mxu0
    %v7236 = vadd.f32 %v4398, %v7235
    %v7237 = vpop.f32.mrb[0].mxu0
    %v7238 = vadd.f32 %v4402, %v7237
    %v7239 = vpop.f32.mrb[0].mxu0
    %v7240 = vadd.f32 %v4398, %v7239
    %v7241 = vpop.f32.mrb[0].mxu0
    %v7242 = vadd.f32 %v4402, %v7241
    %7243 = vmatprep.mubr.bf16.mxu0 %v4034
    %7244 = vmatmul.mubr.bf16.gmra.mrb[0].mxu0 %v4033
    %v7245 = vpop.f32.mrb[0].mxu0
    %v7246 = vadd.f32 %v4398, %v7245
    %v7247 = vpop.f32.mrb[0].mxu0
    %v7248 = vadd.f32 %v4402, %v7247
    %v7249 = vpop.f32.mrb[0].mxu0
    %v7250 = vadd.f32 %v4398, %v7249
    %v7251 = vpop.f32.mrb[0].mxu0
    %v7252 = vadd.f32 %v4402, %v7251
    %7253 = vmatprep.mubr.bf16.mxu0 %v4038
    %7254 = vmatmul.mubr.bf16.gmra.mrb[0].mxu0 %v4037
    %v7255 = vpop.f32.mrb[0].mxu0
    %v7256 = vadd.f32 %v4398, %v7255
    %v7257 = vpop.f32.mrb[0].mxu0
    %v7258 = vadd.f32 %v4402, %v7257
    %v7259 = vpop.f32.mrb[0].mxu0
    %v7260 = vadd.f32 %v4398, %v7259
    %v7261 = vpop.f32.mrb[0].mxu0
    %v7262 = vadd.f32 %v4402, %v7261
    %7263 = vmatprep.mubr.bf16.mxu0 %v4042
    %7264 = vmatmul.mubr.bf16.gmra.mrb[0].mxu0 %v4041
    %v7265 = vpop.f32.mrb[0].mxu0
    %v7266 = vadd.f32 %v4398, %v7265
    %v7267 = vpop.f32.mrb[0].mxu0
    %v7268 = vadd.f32 %v4402, %v7267
    %v7269 = vpop.f32.mrb[0].mxu0
    %v7270 = vadd.f32 %v4398, %v7269
    %v7271 = vpop.f32.mrb[0].mxu0
    %v7272 = vadd.f32 %v4402, %v7271
    %7273 = vmatprep.mubr.bf16.mxu0 %v4046
    %7274 = vmatmul.mubr.bf16.gmra.mrb[0].mxu0 %v4045
    %v7275 = vpop.f32.mrb[0].mxu0
    %v7276 = vadd.f32 %v4398, %v7275
    %v7277 = vpop.f32.mrb[0].mxu0
    %v7278 = vadd.f32 %v4402, %v7277
    %v7279 = vpop.f32.mrb[0].mxu0
    %v7280 = vadd.f32 %v4398, %v7279
    %v7281 = vpop.f32.mrb[0].mxu0
    %v7282 = vadd.f32 %v4402, %v7281
    %7283 = vmatprep.mubr.bf16.mxu0 %v4050
    %7284 = vmatmul.mubr.bf16.gmra.mrb[0].mxu0 %v4049
    %v7285 = vpop.f32.mrb[0].mxu0
    %v7286 = vadd.f32 %v4398, %v7285
    %v7287 = vpop.f32.mrb[0].mxu0
    %v7288 = vadd.f32 %v4402, %v7287
    %v7289 = vpop.f32.mrb[0].mxu0
    %v7290 = vadd.f32 %v4398, %v7289
    %v7291 = vpop.f32.mrb[0].mxu0
    %v7292 = vadd.f32 %v4402, %v7291
    %7293 = vmatprep.mubr.bf16.mxu0 %v4054
    %7294 = vmatmul.mubr.bf16.gmra.mrb[0].mxu0 %v4053
    %v7295 = vpop.f32.mrb[0].mxu0
    %v7296 = vadd.f32 %v4398, %v7295
    %v7297 = vpop.f32.mrb[0].mxu0
    %v7298 = vadd.f32 %v4402, %v7297
    %v7299 = vpop.f32.mrb[0].mxu0
    %v7300 = vadd.f32 %v4398, %v7299
    %v7301 = vpop.f32.mrb[0].mxu0
    %v7302 = vadd.f32 %v4402, %v7301
    %7303 = vmatprep.mubr.bf16.mxu0 %v4058
    %7304 = vmatmul.mubr.bf16.gmra.mrb[0].mxu0 %v4057
    %v7305 = vpop.f32.mrb[0].mxu0
    %v7306 = vadd.f32 %v4398, %v7305
    %v7307 = vpop.f32.mrb[0].mxu0
    %v7308 = vadd.f32 %v4402, %v7307
    %v7309 = vpop.f32.mrb[0].mxu0
    %v7310 = vadd.f32 %v4398, %v7309
    %v7311 = vpop.f32.mrb[0].mxu0
    %v7312 = vadd.f32 %v4402, %v7311
    %7313 = vmatprep.mubr.bf16.mxu0 %v4062
    %7314 = vmatmul.mubr.bf16.gmra.mrb[0].mxu0 %v4061
    %v7315 = vpop.f32.mrb[0].mxu0
    %v7316 = vadd.f32 %v4398, %v7315
    %v7317 = vpop.f32.mrb[0].mxu0
    %v7318 = vadd.f32 %v4402, %v7317
    %v7319 = vpop.f32.mrb[0].mxu0
    %v7320 = vadd.f32 %v4398, %v7319
    %v7321 = vpop.f32.mrb[0].mxu0
    %v7322 = vadd.f32 %v4402, %v7321
    %7323 = vmatprep.mubr.bf16.mxu0 %v4066
    %7324 = vmatmul.mubr.bf16.gmra.mrb[0].mxu0 %v4065
    %v7325 = vpop.f32.mrb[0].mxu0
    %v7326 = vadd.f32 %v4398, %v7325
    %v7327 = vpop.f32.mrb[0].mxu0
    %v7328 = vadd.f32 %v4402, %v7327
    %v7329 = vpop.f32.mrb[0].mxu0
    %v7330 = vadd.f32 %v4398, %v7329
    %v7331 = vpop.f32.mrb[0].mxu0
    %v7332 = vadd.f32 %v4402, %v7331
    %7333 = vmatprep.mubr.bf16.mxu0 %v4070
    %7334 = vmatmul.mubr.bf16.gmra.mrb[0].mxu0 %v4069
    %v7335 = vpop.f32.mrb[0].mxu0
    %v7336 = vadd.f32 %v4398, %v7335
    %v7337 = vpop.f32.mrb[0].mxu0
    %v7338 = vadd.f32 %v4402, %v7337
    %v7339 = vpop.f32.mrb[0].mxu0
    %v7340 = vadd.f32 %v4398, %v7339
    %v7341 = vpop.f32.mrb[0].mxu0
    %v7342 = vadd.f32 %v4402, %v7341
    %7343 = vmatprep.mubr.bf16.mxu0 %v4074
    %7344 = vmatmul.mubr.bf16.gmra.mrb[0].mxu0 %v4073
    %v7345 = vpop.f32.mrb[0].mxu0
    %v7346 = vadd.f32 %v4398, %v7345
    %v7347 = vpop.f32.mrb[0].mxu0
    %v7348 = vadd.f32 %v4402, %v7347
    %v7349 = vpop.f32.mrb[0].mxu0
    %v7350 = vadd.f32 %v4398, %v7349
    %v7351 = vpop.f32.mrb[0].mxu0
    %v7352 = vadd.f32 %v4402, %v7351
    %7353 = vmatprep.mubr.bf16.mxu0 %v4078
    %7354 = vmatmul.mubr.bf16.gmra.mrb[0].mxu0 %v4077
    %v7355 = vpop.f32.mrb[0].mxu0
    %v7356 = vadd.f32 %v4398, %v7355
    %v7357 = vpop.f32.mrb[0].mxu0
    %v7358 = vadd.f32 %v4402, %v7357
    %v7359 = vpop.f32.mrb[0].mxu0
    %v7360 = vadd.f32 %v4398, %v7359
    %v7361 = vpop.f32.mrb[0].mxu0
    %v7362 = vadd.f32 %v4402, %v7361
    %7363 = vmatprep.mubr.bf16.mxu0 %v4082
    %7364 = vmatmul.mubr.bf16.gmra.mrb[0].mxu0 %v4081
    %v7365 = vpop.f32.mrb[0].mxu0
    %v7366 = vadd.f32 %v4398, %v7365
    %v7367 = vpop.f32.mrb[0].mxu0
    %v7368 = vadd.f32 %v4402, %v7367
    %v7369 = vpop.f32.mrb[0].mxu0
    %v7370 = vadd.f32 %v4398, %v7369
    %v7371 = vpop.f32.mrb[0].mxu0
    %v7372 = vadd.f32 %v4402, %v7371
    %7373 = vmatprep.mubr.bf16.mxu0 %v4086
    %7374 = vmatmul.mubr.bf16.gmra.mrb[0].mxu0 %v4085
    %v7375 = vpop.f32.mrb[0].mxu0
    %v7376 = vadd.f32 %v4398, %v7375
    %v7377 = vpop.f32.mrb[0].mxu0
    %v7378 = vadd.f32 %v4402, %v7377
    %v7379 = vpop.f32.mrb[0].mxu0
    %v7380 = vadd.f32 %v4398, %v7379
    %v7381 = vpop.f32.mrb[0].mxu0
    %v7382 = vadd.f32 %v4402, %v7381
    %7383 = vmatprep.mubr.bf16.mxu0 %v4090
    %7384 = vmatmul.mubr.bf16.gmra.mrb[0].mxu0 %v4089
    %v7385 = vpop.f32.mrb[0].mxu0
    %v7386 = vadd.f32 %v4398, %v7385
    %v7387 = vpop.f32.mrb[0].mxu0
    %v7388 = vadd.f32 %v4402, %v7387
    %v7389 = vpop.f32.mrb[0].mxu0
    %v7390 = vadd.f32 %v4398, %v7389
    %v7391 = vpop.f32.mrb[0].mxu0
    %v7392 = vadd.f32 %v4402, %v7391
    %7393 = vmatprep.mubr.bf16.mxu0 %v4094
    %7394 = vmatmul.mubr.bf16.gmra.mrb[0].mxu0 %v4093
    %v7395 = vpop.f32.mrb[0].mxu0
    %v7396 = vadd.f32 %v4398, %v7395
    %v7397 = vpop.f32.mrb[0].mxu0
    %v7398 = vadd.f32 %v4402, %v7397
    %v7399 = vpop.f32.mrb[0].mxu0
    %v7400 = vadd.f32 %v4398, %v7399
    %v7401 = vpop.f32.mrb[0].mxu0
    %v7402 = vadd.f32 %v4402, %v7401
    %7403 = vmatprep.mubr.bf16.mxu0 %v4098
    %7404 = vmatmul.mubr.bf16.gmra.mrb[0].mxu0 %v4097
    %v7405 = vpop.f32.mrb[0].mxu0
    %v7406 = vadd.f32 %v4398, %v7405
    %v7407 = vpop.f32.mrb[0].mxu0
    %v7408 = vadd.f32 %v4402, %v7407
    %v7409 = vpop.f32.mrb[0].mxu0
    %v7410 = vadd.f32 %v4398, %v7409
    %v7411 = vpop.f32.mrb[0].mxu0
    %v7412 = vadd.f32 %v4402, %v7411
    %7413 = vmatprep.mubr.bf16.mxu0 %v4102
    %7414 = vmatmul.mubr.bf16.gmra.mrb[0].mxu0 %v4101
    %v7415 = vpop.f32.mrb[0].mxu0
    %v7416 = vadd.f32 %v4398, %v7415
    %v7417 = vpop.f32.mrb[0].mxu0
    %v7418 = vadd.f32 %v4402, %v7417
    %v7419 = vpop.f32.mrb[0].mxu0
    %v7420 = vadd.f32 %v4398, %v7419
    %v7421 = vpop.f32.mrb[0].mxu0
    %v7422 = vadd.f32 %v4402, %v7421
    %7423 = vmatprep.mubr.bf16.mxu0 %v4106
    %7424 = vmatmul.mubr.bf16.gmra.mrb[0].mxu0 %v4105
    %v7425 = vpop.f32.mrb[0].mxu0
    %v7426 = vadd.f32 %v4398, %v7425
    %v7427 = vpop.f32.mrb[0].mxu0
    %v7428 = vadd.f32 %v4402, %v7427
    %v7429 = vpop.f32.mrb[0].mxu0
    %v7430 = vadd.f32 %v4398, %v7429
    %v7431 = vpop.f32.mrb[0].mxu0
    %v7432 = vadd.f32 %v4402, %v7431
    %7433 = vmatprep.mubr.bf16.mxu0 %v4110
    %7434 = vmatmul.mubr.bf16.gmra.mrb[0].mxu0 %v4109
    %v7435 = vpop.f32.mrb[0].mxu0
    %v7436 = vadd.f32 %v4398, %v7435
    %v7437 = vpop.f32.mrb[0].mxu0
    %v7438 = vadd.f32 %v4402, %v7437
    %v7439 = vpop.f32.mrb[0].mxu0
    %v7440 = vadd.f32 %v4398, %v7439
    %v7441 = vpop.f32.mrb[0].mxu0
    %v7442 = vadd.f32 %v4402, %v7441
    %7443 = vmatprep.mubr.bf16.mxu0 %v4114
    %7444 = vmatmul.mubr.bf16.gmra.mrb[0].mxu0 %v4113
    %v7445 = vpop.f32.mrb[0].mxu0
    %v7446 = vadd.f32 %v4398, %v7445
    %v7447 = vpop.f32.mrb[0].mxu0
    %v7448 = vadd.f32 %v4402, %v7447
    %v7449 = vpop.f32.mrb[0].mxu0
    %v7450 = vadd.f32 %v4398, %v7449
    %v7451 = vpop.f32.mrb[0].mxu0
    %v7452 = vadd.f32 %v4402, %v7451
    %7453 = vmatprep.mubr.bf16.mxu0 %v4118
    %7454 = vmatmul.mubr.bf16.gmra.mrb[0].mxu0 %v4117
    %v7455 = vpop.f32.mrb[0].mxu0
    %v7456 = vadd.f32 %v4398, %v7455
    %v7457 = vpop.f32.mrb[0].mxu0
    %v7458 = vadd.f32 %v4402, %v7457
    %v7459 = vpop.f32.mrb[0].mxu0
    %v7460 = vadd.f32 %v4398, %v7459
    %v7461 = vpop.f32.mrb[0].mxu0
    %v7462 = vadd.f32 %v4402, %v7461
    %7463 = vdwg.mxu0
    %7464 = vmatprep.subr.bf16.mxu0 %v5320
    %7465 = vmatpush1.bf16.msra.mxu0 %v5319
    %7466 = vmatprep.subr.bf16.mxu0 %v5328
    %7467 = vmatpush1.bf16.msra.mxu0 %v5327
    %7468 = vmatprep.subr.bf16.mxu0 %v5336
    %7469 = vmatpush1.bf16.msra.mxu0 %v5335
    %7470 = vmatprep.subr.bf16.mxu0 %v5344
    %7471 = vmatpush1.bf16.msra.mxu0 %v5343
    %7472 = vmatprep.subr.bf16.mxu0 %v5352
    %7473 = vmatpush1.bf16.msra.mxu0 %v5351
    %7474 = vmatprep.subr.bf16.mxu0 %v5360
    %7475 = vmatpush1.bf16.msra.mxu0 %v5359
    %7476 = vmatprep.subr.bf16.mxu0 %v5368
    %7477 = vmatpush1.bf16.msra.mxu0 %v5367
    %7478 = vmatprep.subr.bf16.mxu0 %v5376
    %7479 = vmatpush1.bf16.msra.mxu0 %v5375
    %7480 = vmatprep.subr.bf16.mxu0 %v5384
    %7481 = vmatpush1.bf16.msra.mxu0 %v5383
    %7482 = vmatprep.subr.bf16.mxu0 %v5392
    %7483 = vmatpush1.bf16.msra.mxu0 %v5391
    %7484 = vmatprep.subr.bf16.mxu0 %v5400
    %7485 = vmatpush1.bf16.msra.mxu0 %v5399
    %7486 = vmatprep.subr.bf16.mxu0 %v5408
    %7487 = vmatpush1.bf16.msra.mxu0 %v5407
    %7488 = vmatprep.subr.bf16.mxu0 %v5416
    %7489 = vmatpush1.bf16.msra.mxu0 %v5415
    %7490 = vmatprep.subr.bf16.mxu0 %v5424
    %7491 = vmatpush1.bf16.msra.mxu0 %v5423
    %7492 = vmatprep.subr.bf16.mxu0 %v5432
    %7493 = vmatpush1.bf16.msra.mxu0 %v5431
    %7494 = vmatprep.subr.bf16.mxu0 %v5440
    %7495 = vmatpush1.bf16.msra.mxu0 %v5439
    %7496 = vmatprep.mubr.bf16.mxu0 %v3996
    %7497 = vmatmul.mubr.bf16.gmra.mrb[0].mxu0 %v3995
    %v7498 = vpop.f32.mrb[0].mxu0
    %v7499 = vadd.f32 %v7146, %v7498
    %v7500 = vpop.f32.mrb[0].mxu0
    %v7501 = vadd.f32 %v7148, %v7500
    %v7502 = vpop.f32.mrb[0].mxu0
    %v7503 = vadd.f32 %v7150, %v7502
    %v7504 = vpop.f32.mrb[0].mxu0
    %v7505 = vadd.f32 %v7152, %v7504
    %7506 = vmatprep.mubr.bf16.mxu0 %v4000
    %7507 = vmatmul.mubr.bf16.gmra.mrb[0].mxu0 %v3999
    %v7508 = vpop.f32.mrb[0].mxu0
    %v7509 = vadd.f32 %v7156, %v7508
    %v7510 = vpop.f32.mrb[0].mxu0
    %v7511 = vadd.f32 %v7158, %v7510
    %v7512 = vpop.f32.mrb[0].mxu0
    %v7513 = vadd.f32 %v7160, %v7512
    %v7514 = vpop.f32.mrb[0].mxu0
    %v7515 = vadd.f32 %v7162, %v7514
    %7516 = vmatprep.mubr.bf16.mxu0 %v4004
    %7517 = vmatmul.mubr.bf16.gmra.mrb[0].mxu0 %v4003
    %v7518 = vpop.f32.mrb[0].mxu0
    %v7519 = vadd.f32 %v7166, %v7518
    %v7520 = vpop.f32.mrb[0].mxu0
    %v7521 = vadd.f32 %v7168, %v7520
    %v7522 = vpop.f32.mrb[0].mxu0
    %v7523 = vadd.f32 %v7170, %v7522
    %v7524 = vpop.f32.mrb[0].mxu0
    %v7525 = vadd.f32 %v7172, %v7524
    %7526 = vmatprep.mubr.bf16.mxu0 %v4008
    %7527 = vmatmul.mubr.bf16.gmra.mrb[0].mxu0 %v4007
    %v7528 = vpop.f32.mrb[0].mxu0
    %v7529 = vadd.f32 %v7176, %v7528
    %v7530 = vpop.f32.mrb[0].mxu0
    %v7531 = vadd.f32 %v7178, %v7530
    %v7532 = vpop.f32.mrb[0].mxu0
    %v7533 = vadd.f32 %v7180, %v7532
    %v7534 = vpop.f32.mrb[0].mxu0
    %v7535 = vadd.f32 %v7182, %v7534
    %7536 = vmatprep.mubr.bf16.mxu0 %v4012
    %7537 = vmatmul.mubr.bf16.gmra.mrb[0].mxu0 %v4011
    %v7538 = vpop.f32.mrb[0].mxu0
    %v7539 = vadd.f32 %v7186, %v7538
    %v7540 = vpop.f32.mrb[0].mxu0
    %v7541 = vadd.f32 %v7188, %v7540
    %v7542 = vpop.f32.mrb[0].mxu0
    %v7543 = vadd.f32 %v7190, %v7542
    %v7544 = vpop.f32.mrb[0].mxu0
    %v7545 = vadd.f32 %v7192, %v7544
    %7546 = vmatprep.mubr.bf16.mxu0 %v4016
    %7547 = vmatmul.mubr.bf16.gmra.mrb[0].mxu0 %v4015
    %v7548 = vpop.f32.mrb[0].mxu0
    %v7549 = vadd.f32 %v7196, %v7548
    %v7550 = vpop.f32.mrb[0].mxu0
    %v7551 = vadd.f32 %v7198, %v7550
    %v7552 = vpop.f32.mrb[0].mxu0
    %v7553 = vadd.f32 %v7200, %v7552
    %v7554 = vpop.f32.mrb[0].mxu0
    %v7555 = vadd.f32 %v7202, %v7554
    %7556 = vmatprep.mubr.bf16.mxu0 %v4020
    %7557 = vmatmul.mubr.bf16.gmra.mrb[0].mxu0 %v4019
    %v7558 = vpop.f32.mrb[0].mxu0
    %v7559 = vadd.f32 %v7206, %v7558
    %v7560 = vpop.f32.mrb[0].mxu0
    %v7561 = vadd.f32 %v7208, %v7560
    %v7562 = vpop.f32.mrb[0].mxu0
    %v7563 = vadd.f32 %v7210, %v7562
    %v7564 = vpop.f32.mrb[0].mxu0
    %v7565 = vadd.f32 %v7212, %v7564
    %7566 = vmatprep.mubr.bf16.mxu0 %v4024
    %7567 = vmatmul.mubr.bf16.gmra.mrb[0].mxu0 %v4023
    %v7568 = vpop.f32.mrb[0].mxu0
    %v7569 = vadd.f32 %v7216, %v7568
    %v7570 = vpop.f32.mrb[0].mxu0
    %v7571 = vadd.f32 %v7218, %v7570
    %v7572 = vpop.f32.mrb[0].mxu0
    %v7573 = vadd.f32 %v7220, %v7572
    %v7574 = vpop.f32.mrb[0].mxu0
    %v7575 = vadd.f32 %v7222, %v7574
    %7576 = vmatprep.mubr.bf16.mxu0 %v4028
    %7577 = vmatmul.mubr.bf16.gmra.mrb[0].mxu0 %v4027
    %v7578 = vpop.f32.mrb[0].mxu0
    %v7579 = vadd.f32 %v7226, %v7578
    %v7580 = vpop.f32.mrb[0].mxu0
    %v7581 = vadd.f32 %v7228, %v7580
    %v7582 = vpop.f32.mrb[0].mxu0
    %v7583 = vadd.f32 %v7230, %v7582
    %v7584 = vpop.f32.mrb[0].mxu0
    %v7585 = vadd.f32 %v7232, %v7584
    %7586 = vmatprep.mubr.bf16.mxu0 %v4032
    %7587 = vmatmul.mubr.bf16.gmra.mrb[0].mxu0 %v4031
    %v7588 = vpop.f32.mrb[0].mxu0
    %v7589 = vadd.f32 %v7236, %v7588
    %v7590 = vpop.f32.mrb[0].mxu0
    %v7591 = vadd.f32 %v7238, %v7590
    %v7592 = vpop.f32.mrb[0].mxu0
    %v7593 = vadd.f32 %v7240, %v7592
    %v7594 = vpop.f32.mrb[0].mxu0
    %v7595 = vadd.f32 %v7242, %v7594
    %7596 = vmatprep.mubr.bf16.mxu0 %v4036
    %7597 = vmatmul.mubr.bf16.gmra.mrb[0].mxu0 %v4035
    %v7598 = vpop.f32.mrb[0].mxu0
    %v7599 = vadd.f32 %v7246, %v7598
    %v7600 = vpop.f32.mrb[0].mxu0
    %v7601 = vadd.f32 %v7248, %v7600
    %v7602 = vpop.f32.mrb[0].mxu0
    %v7603 = vadd.f32 %v7250, %v7602
    %v7604 = vpop.f32.mrb[0].mxu0
    %v7605 = vadd.f32 %v7252, %v7604
    %7606 = vmatprep.mubr.bf16.mxu0 %v4040
    %7607 = vmatmul.mubr.bf16.gmra.mrb[0].mxu0 %v4039
    %v7608 = vpop.f32.mrb[0].mxu0
    %v7609 = vadd.f32 %v7256, %v7608
    %v7610 = vpop.f32.mrb[0].mxu0
    %v7611 = vadd.f32 %v7258, %v7610
    %v7612 = vpop.f32.mrb[0].mxu0
    %v7613 = vadd.f32 %v7260, %v7612
    %v7614 = vpop.f32.mrb[0].mxu0
    %v7615 = vadd.f32 %v7262, %v7614
    %7616 = vmatprep.mubr.bf16.mxu0 %v4044
    %7617 = vmatmul.mubr.bf16.gmra.mrb[0].mxu0 %v4043
    %v7618 = vpop.f32.mrb[0].mxu0
    %v7619 = vadd.f32 %v7266, %v7618
    %v7620 = vpop.f32.mrb[0].mxu0
    %v7621 = vadd.f32 %v7268, %v7620
    %v7622 = vpop.f32.mrb[0].mxu0
    %v7623 = vadd.f32 %v7270, %v7622
    %v7624 = vpop.f32.mrb[0].mxu0
    %v7625 = vadd.f32 %v7272, %v7624
    %7626 = vmatprep.mubr.bf16.mxu0 %v4048
    %7627 = vmatmul.mubr.bf16.gmra.mrb[0].mxu0 %v4047
    %v7628 = vpop.f32.mrb[0].mxu0
    %v7629 = vadd.f32 %v7276, %v7628
    %v7630 = vpop.f32.mrb[0].mxu0
    %v7631 = vadd.f32 %v7278, %v7630
    %v7632 = vpop.f32.mrb[0].mxu0
    %v7633 = vadd.f32 %v7280, %v7632
    %v7634 = vpop.f32.mrb[0].mxu0
    %v7635 = vadd.f32 %v7282, %v7634
    %7636 = vmatprep.mubr.bf16.mxu0 %v4052
    %7637 = vmatmul.mubr.bf16.gmra.mrb[0].mxu0 %v4051
    %v7638 = vpop.f32.mrb[0].mxu0
    %v7639 = vadd.f32 %v7286, %v7638
    %v7640 = vpop.f32.mrb[0].mxu0
    %v7641 = vadd.f32 %v7288, %v7640
    %v7642 = vpop.f32.mrb[0].mxu0
    %v7643 = vadd.f32 %v7290, %v7642
    %v7644 = vpop.f32.mrb[0].mxu0
    %v7645 = vadd.f32 %v7292, %v7644
    %7646 = vmatprep.mubr.bf16.mxu0 %v4056
    %7647 = vmatmul.mubr.bf16.gmra.mrb[0].mxu0 %v4055
    %v7648 = vpop.f32.mrb[0].mxu0
    %v7649 = vadd.f32 %v7296, %v7648
    %v7650 = vpop.f32.mrb[0].mxu0
    %v7651 = vadd.f32 %v7298, %v7650
    %v7652 = vpop.f32.mrb[0].mxu0
    %v7653 = vadd.f32 %v7300, %v7652
    %v7654 = vpop.f32.mrb[0].mxu0
    %v7655 = vadd.f32 %v7302, %v7654
    %7656 = vmatprep.mubr.bf16.mxu0 %v4060
    %7657 = vmatmul.mubr.bf16.gmra.mrb[0].mxu0 %v4059
    %v7658 = vpop.f32.mrb[0].mxu0
    %v7659 = vadd.f32 %v7306, %v7658
    %v7660 = vpop.f32.mrb[0].mxu0
    %v7661 = vadd.f32 %v7308, %v7660
    %v7662 = vpop.f32.mrb[0].mxu0
    %v7663 = vadd.f32 %v7310, %v7662
    %v7664 = vpop.f32.mrb[0].mxu0
    %v7665 = vadd.f32 %v7312, %v7664
    %7666 = vmatprep.mubr.bf16.mxu0 %v4064
    %7667 = vmatmul.mubr.bf16.gmra.mrb[0].mxu0 %v4063
    %v7668 = vpop.f32.mrb[0].mxu0
    %v7669 = vadd.f32 %v7316, %v7668
    %v7670 = vpop.f32.mrb[0].mxu0
    %v7671 = vadd.f32 %v7318, %v7670
    %v7672 = vpop.f32.mrb[0].mxu0
    %v7673 = vadd.f32 %v7320, %v7672
    %v7674 = vpop.f32.mrb[0].mxu0
    %v7675 = vadd.f32 %v7322, %v7674
    %7676 = vmatprep.mubr.bf16.mxu0 %v4068
    %7677 = vmatmul.mubr.bf16.gmra.mrb[0].mxu0 %v4067
    %v7678 = vpop.f32.mrb[0].mxu0
    %v7679 = vadd.f32 %v7326, %v7678
    %v7680 = vpop.f32.mrb[0].mxu0
    %v7681 = vadd.f32 %v7328, %v7680
    %v7682 = vpop.f32.mrb[0].mxu0
    %v7683 = vadd.f32 %v7330, %v7682
    %v7684 = vpop.f32.mrb[0].mxu0
    %v7685 = vadd.f32 %v7332, %v7684
    %7686 = vmatprep.mubr.bf16.mxu0 %v4072
    %7687 = vmatmul.mubr.bf16.gmra.mrb[0].mxu0 %v4071
    %v7688 = vpop.f32.mrb[0].mxu0
    %v7689 = vadd.f32 %v7336, %v7688
    %v7690 = vpop.f32.mrb[0].mxu0
    %v7691 = vadd.f32 %v7338, %v7690
    %v7692 = vpop.f32.mrb[0].mxu0
    %v7693 = vadd.f32 %v7340, %v7692
    %v7694 = vpop.f32.mrb[0].mxu0
    %v7695 = vadd.f32 %v7342, %v7694
    %7696 = vmatprep.mubr.bf16.mxu0 %v4076
    %7697 = vmatmul.mubr.bf16.gmra.mrb[0].mxu0 %v4075
    %v7698 = vpop.f32.mrb[0].mxu0
    %v7699 = vadd.f32 %v7346, %v7698
    %v7700 = vpop.f32.mrb[0].mxu0
    %v7701 = vadd.f32 %v7348, %v7700
    %v7702 = vpop.f32.mrb[0].mxu0
    %v7703 = vadd.f32 %v7350, %v7702
    %v7704 = vpop.f32.mrb[0].mxu0
    %v7705 = vadd.f32 %v7352, %v7704
    %7706 = vmatprep.mubr.bf16.mxu0 %v4080
    %7707 = vmatmul.mubr.bf16.gmra.mrb[0].mxu0 %v4079
    %v7708 = vpop.f32.mrb[0].mxu0
    %v7709 = vadd.f32 %v7356, %v7708
    %v7710 = vpop.f32.mrb[0].mxu0
    %v7711 = vadd.f32 %v7358, %v7710
    %v7712 = vpop.f32.mrb[0].mxu0
    %v7713 = vadd.f32 %v7360, %v7712
    %v7714 = vpop.f32.mrb[0].mxu0
    %v7715 = vadd.f32 %v7362, %v7714
    %7716 = vmatprep.mubr.bf16.mxu0 %v4084
    %7717 = vmatmul.mubr.bf16.gmra.mrb[0].mxu0 %v4083
    %v7718 = vpop.f32.mrb[0].mxu0
    %v7719 = vadd.f32 %v7366, %v7718
    %v7720 = vpop.f32.mrb[0].mxu0
    %v7721 = vadd.f32 %v7368, %v7720
    %v7722 = vpop.f32.mrb[0].mxu0
    %v7723 = vadd.f32 %v7370, %v7722
    %v7724 = vpop.f32.mrb[0].mxu0
    %v7725 = vadd.f32 %v7372, %v7724
    %7726 = vmatprep.mubr.bf16.mxu0 %v4088
    %7727 = vmatmul.mubr.bf16.gmra.mrb[0].mxu0 %v4087
    %v7728 = vpop.f32.mrb[0].mxu0
    %v7729 = vadd.f32 %v7376, %v7728
    %v7730 = vpop.f32.mrb[0].mxu0
    %v7731 = vadd.f32 %v7378, %v7730
    %v7732 = vpop.f32.mrb[0].mxu0
    %v7733 = vadd.f32 %v7380, %v7732
    %v7734 = vpop.f32.mrb[0].mxu0
    %v7735 = vadd.f32 %v7382, %v7734
    %7736 = vmatprep.mubr.bf16.mxu0 %v4092
    %7737 = vmatmul.mubr.bf16.gmra.mrb[0].mxu0 %v4091
    %v7738 = vpop.f32.mrb[0].mxu0
    %v7739 = vadd.f32 %v7386, %v7738
    %v7740 = vpop.f32.mrb[0].mxu0
    %v7741 = vadd.f32 %v7388, %v7740
    %v7742 = vpop.f32.mrb[0].mxu0
    %v7743 = vadd.f32 %v7390, %v7742
    %v7744 = vpop.f32.mrb[0].mxu0
    %v7745 = vadd.f32 %v7392, %v7744
    %7746 = vmatprep.mubr.bf16.mxu0 %v4096
    %7747 = vmatmul.mubr.bf16.gmra.mrb[0].mxu0 %v4095
    %v7748 = vpop.f32.mrb[0].mxu0
    %v7749 = vadd.f32 %v7396, %v7748
    %v7750 = vpop.f32.mrb[0].mxu0
    %v7751 = vadd.f32 %v7398, %v7750
    %v7752 = vpop.f32.mrb[0].mxu0
    %v7753 = vadd.f32 %v7400, %v7752
    %v7754 = vpop.f32.mrb[0].mxu0
    %v7755 = vadd.f32 %v7402, %v7754
    %7756 = vmatprep.mubr.bf16.mxu0 %v4100
    %7757 = vmatmul.mubr.bf16.gmra.mrb[0].mxu0 %v4099
    %v7758 = vpop.f32.mrb[0].mxu0
    %v7759 = vadd.f32 %v7406, %v7758
    %v7760 = vpop.f32.mrb[0].mxu0
    %v7761 = vadd.f32 %v7408, %v7760
    %v7762 = vpop.f32.mrb[0].mxu0
    %v7763 = vadd.f32 %v7410, %v7762
    %v7764 = vpop.f32.mrb[0].mxu0
    %v7765 = vadd.f32 %v7412, %v7764
    %7766 = vmatprep.mubr.bf16.mxu0 %v4104
    %7767 = vmatmul.mubr.bf16.gmra.mrb[0].mxu0 %v4103
    %v7768 = vpop.f32.mrb[0].mxu0
    %v7769 = vadd.f32 %v7416, %v7768
    %v7770 = vpop.f32.mrb[0].mxu0
    %v7771 = vadd.f32 %v7418, %v7770
    %v7772 = vpop.f32.mrb[0].mxu0
    %v7773 = vadd.f32 %v7420, %v7772
    %v7774 = vpop.f32.mrb[0].mxu0
    %v7775 = vadd.f32 %v7422, %v7774
    %7776 = vmatprep.mubr.bf16.mxu0 %v4108
    %7777 = vmatmul.mubr.bf16.gmra.mrb[0].mxu0 %v4107
    %v7778 = vpop.f32.mrb[0].mxu0
    %v7779 = vadd.f32 %v7426, %v7778
    %v7780 = vpop.f32.mrb[0].mxu0
    %v7781 = vadd.f32 %v7428, %v7780
    %v7782 = vpop.f32.mrb[0].mxu0
    %v7783 = vadd.f32 %v7430, %v7782
    %v7784 = vpop.f32.mrb[0].mxu0
    %v7785 = vadd.f32 %v7432, %v7784
    %7786 = vmatprep.mubr.bf16.mxu0 %v4112
    %7787 = vmatmul.mubr.bf16.gmra.mrb[0].mxu0 %v4111
    %v7788 = vpop.f32.mrb[0].mxu0
    %v7789 = vadd.f32 %v7436, %v7788
    %v7790 = vpop.f32.mrb[0].mxu0
    %v7791 = vadd.f32 %v7438, %v7790
    %v7792 = vpop.f32.mrb[0].mxu0
    %v7793 = vadd.f32 %v7440, %v7792
    %v7794 = vpop.f32.mrb[0].mxu0
    %v7795 = vadd.f32 %v7442, %v7794
    %7796 = vmatprep.mubr.bf16.mxu0 %v4116
    %7797 = vmatmul.mubr.bf16.gmra.mrb[0].mxu0 %v4115
    %v7798 = vpop.f32.mrb[0].mxu0
    %v7799 = vadd.f32 %v7446, %v7798
    %v7800 = vpop.f32.mrb[0].mxu0
    %v7801 = vadd.f32 %v7448, %v7800
    %v7802 = vpop.f32.mrb[0].mxu0
    %v7803 = vadd.f32 %v7450, %v7802
    %v7804 = vpop.f32.mrb[0].mxu0
    %v7805 = vadd.f32 %v7452, %v7804
    %7806 = vmatprep.mubr.bf16.mxu0 %v4120
    %7807 = vmatmul.mubr.bf16.gmra.mrb[0].mxu0 %v4119
    %v7808 = vpop.f32.mrb[0].mxu0
    %v7809 = vadd.f32 %v7456, %v7808
    %v7810 = vpop.f32.mrb[0].mxu0
    %v7811 = vadd.f32 %v7458, %v7810
    %v7812 = vpop.f32.mrb[0].mxu0
    %v7813 = vadd.f32 %v7460, %v7812
    %v7814 = vpop.f32.mrb[0].mxu0
    %v7815 = vadd.f32 %v7462, %v7814
    %7816 = vdwg.mxu0
    %7817 = vmatprep.subr.bf16.mxu0 %v5194
    %7818 = vmatpush1.bf16.msra.mxu0 %v5193
    %7819 = vmatprep.subr.bf16.mxu0 %v5202
    %7820 = vmatpush1.bf16.msra.mxu0 %v5201
    %7821 = vmatprep.subr.bf16.mxu0 %v5210
    %7822 = vmatpush1.bf16.msra.mxu0 %v5209
    %7823 = vmatprep.subr.bf16.mxu0 %v5218
    %7824 = vmatpush1.bf16.msra.mxu0 %v5217
    %7825 = vmatprep.subr.bf16.mxu0 %v5226
    %7826 = vmatpush1.bf16.msra.mxu0 %v5225
    %7827 = vmatprep.subr.bf16.mxu0 %v5234
    %7828 = vmatpush1.bf16.msra.mxu0 %v5233
    %7829 = vmatprep.subr.bf16.mxu0 %v5242
    %7830 = vmatpush1.bf16.msra.mxu0 %v5241
    %7831 = vmatprep.subr.bf16.mxu0 %v5250
    %7832 = vmatpush1.bf16.msra.mxu0 %v5249
    %7833 = vmatprep.subr.bf16.mxu0 %v5258
    %7834 = vmatpush1.bf16.msra.mxu0 %v5257
    %7835 = vmatprep.subr.bf16.mxu0 %v5266
    %7836 = vmatpush1.bf16.msra.mxu0 %v5265
    %7837 = vmatprep.subr.bf16.mxu0 %v5274
    %7838 = vmatpush1.bf16.msra.mxu0 %v5273
    %7839 = vmatprep.subr.bf16.mxu0 %v5282
    %7840 = vmatpush1.bf16.msra.mxu0 %v5281
    %7841 = vmatprep.subr.bf16.mxu0 %v5290
    %7842 = vmatpush1.bf16.msra.mxu0 %v5289
    %7843 = vmatprep.subr.bf16.mxu0 %v5298
    %7844 = vmatpush1.bf16.msra.mxu0 %v5297
    %7845 = vmatprep.subr.bf16.mxu0 %v5306
    %7846 = vmatpush1.bf16.msra.mxu0 %v5305
    %7847 = vmatprep.subr.bf16.mxu0 %v5314
    %7848 = vmatpush1.bf16.msra.mxu0 %v5313
    %7849 = vmatprep.mubr.bf16.mxu0 %v3994
    %7850 = vmatmul.mubr.bf16.gmra.mrb[0].mxu0 %v3993
    %v7851 = vpop.f32.mrb[0].mxu0
    %v7852 = vadd.f32 %v4406, %v7851
    %v7853 = vpop.f32.mrb[0].mxu0
    %v7854 = vadd.f32 %v4410, %v7853
    %v7855 = vpop.f32.mrb[0].mxu0
    %v7856 = vadd.f32 %v4406, %v7855
    %v7857 = vpop.f32.mrb[0].mxu0
    %v7858 = vadd.f32 %v4410, %v7857
    %7859 = vmatprep.mubr.bf16.mxu0 %v3998
    %7860 = vmatmul.mubr.bf16.gmra.mrb[0].mxu0 %v3997
    %v7861 = vpop.f32.mrb[0].mxu0
    %v7862 = vadd.f32 %v4406, %v7861
    %v7863 = vpop.f32.mrb[0].mxu0
    %v7864 = vadd.f32 %v4410, %v7863
    %v7865 = vpop.f32.mrb[0].mxu0
    %v7866 = vadd.f32 %v4406, %v7865
    %v7867 = vpop.f32.mrb[0].mxu0
    %v7868 = vadd.f32 %v4410, %v7867
    %7869 = vmatprep.mubr.bf16.mxu0 %v4002
    %7870 = vmatmul.mubr.bf16.gmra.mrb[0].mxu0 %v4001
    %v7871 = vpop.f32.mrb[0].mxu0
    %v7872 = vadd.f32 %v4406, %v7871
    %v7873 = vpop.f32.mrb[0].mxu0
    %v7874 = vadd.f32 %v4410, %v7873
    %v7875 = vpop.f32.mrb[0].mxu0
    %v7876 = vadd.f32 %v4406, %v7875
    %v7877 = vpop.f32.mrb[0].mxu0
    %v7878 = vadd.f32 %v4410, %v7877
    %7879 = vmatprep.mubr.bf16.mxu0 %v4006
    %7880 = vmatmul.mubr.bf16.gmra.mrb[0].mxu0 %v4005
    %v7881 = vpop.f32.mrb[0].mxu0
    %v7882 = vadd.f32 %v4406, %v7881
    %v7883 = vpop.f32.mrb[0].mxu0
    %v7884 = vadd.f32 %v4410, %v7883
    %v7885 = vpop.f32.mrb[0].mxu0
    %v7886 = vadd.f32 %v4406, %v7885
    %v7887 = vpop.f32.mrb[0].mxu0
    %v7888 = vadd.f32 %v4410, %v7887
    %7889 = vmatprep.mubr.bf16.mxu0 %v4010
    %7890 = vmatmul.mubr.bf16.gmra.mrb[0].mxu0 %v4009
    %v7891 = vpop.f32.mrb[0].mxu0
    %v7892 = vadd.f32 %v4406, %v7891
    %v7893 = vpop.f32.mrb[0].mxu0
    %v7894 = vadd.f32 %v4410, %v7893
    %v7895 = vpop.f32.mrb[0].mxu0
    %v7896 = vadd.f32 %v4406, %v7895
    %v7897 = vpop.f32.mrb[0].mxu0
    %v7898 = vadd.f32 %v4410, %v7897
    %7899 = vmatprep.mubr.bf16.mxu0 %v4014
    %7900 = vmatmul.mubr.bf16.gmra.mrb[0].mxu0 %v4013
    %v7901 = vpop.f32.mrb[0].mxu0
    %v7902 = vadd.f32 %v4406, %v7901
    %v7903 = vpop.f32.mrb[0].mxu0
    %v7904 = vadd.f32 %v4410, %v7903
    %v7905 = vpop.f32.mrb[0].mxu0
    %v7906 = vadd.f32 %v4406, %v7905
    %v7907 = vpop.f32.mrb[0].mxu0
    %v7908 = vadd.f32 %v4410, %v7907
    %7909 = vmatprep.mubr.bf16.mxu0 %v4018
    %7910 = vmatmul.mubr.bf16.gmra.mrb[0].mxu0 %v4017
    %v7911 = vpop.f32.mrb[0].mxu0
    %v7912 = vadd.f32 %v4406, %v7911
    %v7913 = vpop.f32.mrb[0].mxu0
    %v7914 = vadd.f32 %v4410, %v7913
    %v7915 = vpop.f32.mrb[0].mxu0
    %v7916 = vadd.f32 %v4406, %v7915
    %v7917 = vpop.f32.mrb[0].mxu0
    %v7918 = vadd.f32 %v4410, %v7917
    %7919 = vmatprep.mubr.bf16.mxu0 %v4022
    %7920 = vmatmul.mubr.bf16.gmra.mrb[0].mxu0 %v4021
    %v7921 = vpop.f32.mrb[0].mxu0
    %v7922 = vadd.f32 %v4406, %v7921
    %v7923 = vpop.f32.mrb[0].mxu0
    %v7924 = vadd.f32 %v4410, %v7923
    %v7925 = vpop.f32.mrb[0].mxu0
    %v7926 = vadd.f32 %v4406, %v7925
    %v7927 = vpop.f32.mrb[0].mxu0
    %v7928 = vadd.f32 %v4410, %v7927
    %7929 = vmatprep.mubr.bf16.mxu0 %v4026
    %7930 = vmatmul.mubr.bf16.gmra.mrb[0].mxu0 %v4025
    %v7931 = vpop.f32.mrb[0].mxu0
    %v7932 = vadd.f32 %v4406, %v7931
    %v7933 = vpop.f32.mrb[0].mxu0
    %v7934 = vadd.f32 %v4410, %v7933
    %v7935 = vpop.f32.mrb[0].mxu0
    %v7936 = vadd.f32 %v4406, %v7935
    %v7937 = vpop.f32.mrb[0].mxu0
    %v7938 = vadd.f32 %v4410, %v7937
    %7939 = vmatprep.mubr.bf16.mxu0 %v4030
    %7940 = vmatmul.mubr.bf16.gmra.mrb[0].mxu0 %v4029
    %v7941 = vpop.f32.mrb[0].mxu0
    %v7942 = vadd.f32 %v4406, %v7941
    %v7943 = vpop.f32.mrb[0].mxu0
    %v7944 = vadd.f32 %v4410, %v7943
    %v7945 = vpop.f32.mrb[0].mxu0
    %v7946 = vadd.f32 %v4406, %v7945
    %v7947 = vpop.f32.mrb[0].mxu0
    %v7948 = vadd.f32 %v4410, %v7947
    %7949 = vmatprep.mubr.bf16.mxu0 %v4034
    %7950 = vmatmul.mubr.bf16.gmra.mrb[0].mxu0 %v4033
    %v7951 = vpop.f32.mrb[0].mxu0
    %v7952 = vadd.f32 %v4406, %v7951
    %v7953 = vpop.f32.mrb[0].mxu0
    %v7954 = vadd.f32 %v4410, %v7953
    %v7955 = vpop.f32.mrb[0].mxu0
    %v7956 = vadd.f32 %v4406, %v7955
    %v7957 = vpop.f32.mrb[0].mxu0
    %v7958 = vadd.f32 %v4410, %v7957
    %7959 = vmatprep.mubr.bf16.mxu0 %v4038
    %7960 = vmatmul.mubr.bf16.gmra.mrb[0].mxu0 %v4037
    %v7961 = vpop.f32.mrb[0].mxu0
    %v7962 = vadd.f32 %v4406, %v7961
    %v7963 = vpop.f32.mrb[0].mxu0
    %v7964 = vadd.f32 %v4410, %v7963
    %v7965 = vpop.f32.mrb[0].mxu0
    %v7966 = vadd.f32 %v4406, %v7965
    %v7967 = vpop.f32.mrb[0].mxu0
    %v7968 = vadd.f32 %v4410, %v7967
    %7969 = vmatprep.mubr.bf16.mxu0 %v4042
    %7970 = vmatmul.mubr.bf16.gmra.mrb[0].mxu0 %v4041
    %v7971 = vpop.f32.mrb[0].mxu0
    %v7972 = vadd.f32 %v4406, %v7971
    %v7973 = vpop.f32.mrb[0].mxu0
    %v7974 = vadd.f32 %v4410, %v7973
    %v7975 = vpop.f32.mrb[0].mxu0
    %v7976 = vadd.f32 %v4406, %v7975
    %v7977 = vpop.f32.mrb[0].mxu0
    %v7978 = vadd.f32 %v4410, %v7977
    %7979 = vmatprep.mubr.bf16.mxu0 %v4046
    %7980 = vmatmul.mubr.bf16.gmra.mrb[0].mxu0 %v4045
    %v7981 = vpop.f32.mrb[0].mxu0
    %v7982 = vadd.f32 %v4406, %v7981
    %v7983 = vpop.f32.mrb[0].mxu0
    %v7984 = vadd.f32 %v4410, %v7983
    %v7985 = vpop.f32.mrb[0].mxu0
    %v7986 = vadd.f32 %v4406, %v7985
    %v7987 = vpop.f32.mrb[0].mxu0
    %v7988 = vadd.f32 %v4410, %v7987
    %7989 = vmatprep.mubr.bf16.mxu0 %v4050
    %7990 = vmatmul.mubr.bf16.gmra.mrb[0].mxu0 %v4049
    %v7991 = vpop.f32.mrb[0].mxu0
    %v7992 = vadd.f32 %v4406, %v7991
    %v7993 = vpop.f32.mrb[0].mxu0
    %v7994 = vadd.f32 %v4410, %v7993
    %v7995 = vpop.f32.mrb[0].mxu0
    %v7996 = vadd.f32 %v4406, %v7995
    %v7997 = vpop.f32.mrb[0].mxu0
    %v7998 = vadd.f32 %v4410, %v7997
    %7999 = vmatprep.mubr.bf16.mxu0 %v4054
    %8000 = vmatmul.mubr.bf16.gmra.mrb[0].mxu0 %v4053
    %v8001 = vpop.f32.mrb[0].mxu0
    %v8002 = vadd.f32 %v4406, %v8001
    %v8003 = vpop.f32.mrb[0].mxu0
    %v8004 = vadd.f32 %v4410, %v8003
    %v8005 = vpop.f32.mrb[0].mxu0
    %v8006 = vadd.f32 %v4406, %v8005
    %v8007 = vpop.f32.mrb[0].mxu0
    %v8008 = vadd.f32 %v4410, %v8007
    %8009 = vmatprep.mubr.bf16.mxu0 %v4058
    %8010 = vmatmul.mubr.bf16.gmra.mrb[0].mxu0 %v4057
    %v8011 = vpop.f32.mrb[0].mxu0
    %v8012 = vadd.f32 %v4406, %v8011
    %v8013 = vpop.f32.mrb[0].mxu0
    %v8014 = vadd.f32 %v4410, %v8013
    %v8015 = vpop.f32.mrb[0].mxu0
    %v8016 = vadd.f32 %v4406, %v8015
    %v8017 = vpop.f32.mrb[0].mxu0
    %v8018 = vadd.f32 %v4410, %v8017
    %8019 = vmatprep.mubr.bf16.mxu0 %v4062
    %8020 = vmatmul.mubr.bf16.gmra.mrb[0].mxu0 %v4061
    %v8021 = vpop.f32.mrb[0].mxu0
    %v8022 = vadd.f32 %v4406, %v8021
    %v8023 = vpop.f32.mrb[0].mxu0
    %v8024 = vadd.f32 %v4410, %v8023
    %v8025 = vpop.f32.mrb[0].mxu0
    %v8026 = vadd.f32 %v4406, %v8025
    %v8027 = vpop.f32.mrb[0].mxu0
    %v8028 = vadd.f32 %v4410, %v8027
    %8029 = vmatprep.mubr.bf16.mxu0 %v4066
    %8030 = vmatmul.mubr.bf16.gmra.mrb[0].mxu0 %v4065
    %v8031 = vpop.f32.mrb[0].mxu0
    %v8032 = vadd.f32 %v4406, %v8031
    %v8033 = vpop.f32.mrb[0].mxu0
    %v8034 = vadd.f32 %v4410, %v8033
    %v8035 = vpop.f32.mrb[0].mxu0
    %v8036 = vadd.f32 %v4406, %v8035
    %v8037 = vpop.f32.mrb[0].mxu0
    %v8038 = vadd.f32 %v4410, %v8037
    %8039 = vmatprep.mubr.bf16.mxu0 %v4070
    %8040 = vmatmul.mubr.bf16.gmra.mrb[0].mxu0 %v4069
    %v8041 = vpop.f32.mrb[0].mxu0
    %v8042 = vadd.f32 %v4406, %v8041
    %v8043 = vpop.f32.mrb[0].mxu0
    %v8044 = vadd.f32 %v4410, %v8043
    %v8045 = vpop.f32.mrb[0].mxu0
    %v8046 = vadd.f32 %v4406, %v8045
    %v8047 = vpop.f32.mrb[0].mxu0
    %v8048 = vadd.f32 %v4410, %v8047
    %8049 = vmatprep.mubr.bf16.mxu0 %v4074
    %8050 = vmatmul.mubr.bf16.gmra.mrb[0].mxu0 %v4073
    %v8051 = vpop.f32.mrb[0].mxu0
    %v8052 = vadd.f32 %v4406, %v8051
    %v8053 = vpop.f32.mrb[0].mxu0
    %v8054 = vadd.f32 %v4410, %v8053
    %v8055 = vpop.f32.mrb[0].mxu0
    %v8056 = vadd.f32 %v4406, %v8055
    %v8057 = vpop.f32.mrb[0].mxu0
    %v8058 = vadd.f32 %v4410, %v8057
    %8059 = vmatprep.mubr.bf16.mxu0 %v4078
    %8060 = vmatmul.mubr.bf16.gmra.mrb[0].mxu0 %v4077
    %v8061 = vpop.f32.mrb[0].mxu0
    %v8062 = vadd.f32 %v4406, %v8061
    %v8063 = vpop.f32.mrb[0].mxu0
    %v8064 = vadd.f32 %v4410, %v8063
    %v8065 = vpop.f32.mrb[0].mxu0
    %v8066 = vadd.f32 %v4406, %v8065
    %v8067 = vpop.f32.mrb[0].mxu0
    %v8068 = vadd.f32 %v4410, %v8067
    %8069 = vmatprep.mubr.bf16.mxu0 %v4082
    %8070 = vmatmul.mubr.bf16.gmra.mrb[0].mxu0 %v4081
    %v8071 = vpop.f32.mrb[0].mxu0
    %v8072 = vadd.f32 %v4406, %v8071
    %v8073 = vpop.f32.mrb[0].mxu0
    %v8074 = vadd.f32 %v4410, %v8073
    %v8075 = vpop.f32.mrb[0].mxu0
    %v8076 = vadd.f32 %v4406, %v8075
    %v8077 = vpop.f32.mrb[0].mxu0
    %v8078 = vadd.f32 %v4410, %v8077
    %8079 = vmatprep.mubr.bf16.mxu0 %v4086
    %8080 = vmatmul.mubr.bf16.gmra.mrb[0].mxu0 %v4085
    %v8081 = vpop.f32.mrb[0].mxu0
    %v8082 = vadd.f32 %v4406, %v8081
    %v8083 = vpop.f32.mrb[0].mxu0
    %v8084 = vadd.f32 %v4410, %v8083
    %v8085 = vpop.f32.mrb[0].mxu0
    %v8086 = vadd.f32 %v4406, %v8085
    %v8087 = vpop.f32.mrb[0].mxu0
    %v8088 = vadd.f32 %v4410, %v8087
    %8089 = vmatprep.mubr.bf16.mxu0 %v4090
    %8090 = vmatmul.mubr.bf16.gmra.mrb[0].mxu0 %v4089
    %v8091 = vpop.f32.mrb[0].mxu0
    %v8092 = vadd.f32 %v4406, %v8091
    %v8093 = vpop.f32.mrb[0].mxu0
    %v8094 = vadd.f32 %v4410, %v8093
    %v8095 = vpop.f32.mrb[0].mxu0
    %v8096 = vadd.f32 %v4406, %v8095
    %v8097 = vpop.f32.mrb[0].mxu0
    %v8098 = vadd.f32 %v4410, %v8097
    %8099 = vmatprep.mubr.bf16.mxu0 %v4094
    %8100 = vmatmul.mubr.bf16.gmra.mrb[0].mxu0 %v4093
    %v8101 = vpop.f32.mrb[0].mxu0
    %v8102 = vadd.f32 %v4406, %v8101
    %v8103 = vpop.f32.mrb[0].mxu0
    %v8104 = vadd.f32 %v4410, %v8103
    %v8105 = vpop.f32.mrb[0].mxu0
    %v8106 = vadd.f32 %v4406, %v8105
    %v8107 = vpop.f32.mrb[0].mxu0
    %v8108 = vadd.f32 %v4410, %v8107
    %8109 = vmatprep.mubr.bf16.mxu0 %v4098
    %8110 = vmatmul.mubr.bf16.gmra.mrb[0].mxu0 %v4097
    %v8111 = vpop.f32.mrb[0].mxu0
    %v8112 = vadd.f32 %v4406, %v8111
    %v8113 = vpop.f32.mrb[0].mxu0
    %v8114 = vadd.f32 %v4410, %v8113
    %v8115 = vpop.f32.mrb[0].mxu0
    %v8116 = vadd.f32 %v4406, %v8115
    %v8117 = vpop.f32.mrb[0].mxu0
    %v8118 = vadd.f32 %v4410, %v8117
    %8119 = vmatprep.mubr.bf16.mxu0 %v4102
    %8120 = vmatmul.mubr.bf16.gmra.mrb[0].mxu0 %v4101
    %v8121 = vpop.f32.mrb[0].mxu0
    %v8122 = vadd.f32 %v4406, %v8121
    %v8123 = vpop.f32.mrb[0].mxu0
    %v8124 = vadd.f32 %v4410, %v8123
    %v8125 = vpop.f32.mrb[0].mxu0
    %v8126 = vadd.f32 %v4406, %v8125
    %v8127 = vpop.f32.mrb[0].mxu0
    %v8128 = vadd.f32 %v4410, %v8127
    %8129 = vmatprep.mubr.bf16.mxu0 %v4106
    %8130 = vmatmul.mubr.bf16.gmra.mrb[0].mxu0 %v4105
    %v8131 = vpop.f32.mrb[0].mxu0
    %v8132 = vadd.f32 %v4406, %v8131
    %v8133 = vpop.f32.mrb[0].mxu0
    %v8134 = vadd.f32 %v4410, %v8133
    %v8135 = vpop.f32.mrb[0].mxu0
    %v8136 = vadd.f32 %v4406, %v8135
    %v8137 = vpop.f32.mrb[0].mxu0
    %v8138 = vadd.f32 %v4410, %v8137
    %8139 = vmatprep.mubr.bf16.mxu0 %v4110
    %8140 = vmatmul.mubr.bf16.gmra.mrb[0].mxu0 %v4109
    %v8141 = vpop.f32.mrb[0].mxu0
    %v8142 = vadd.f32 %v4406, %v8141
    %v8143 = vpop.f32.mrb[0].mxu0
    %v8144 = vadd.f32 %v4410, %v8143
    %v8145 = vpop.f32.mrb[0].mxu0
    %v8146 = vadd.f32 %v4406, %v8145
    %v8147 = vpop.f32.mrb[0].mxu0
    %v8148 = vadd.f32 %v4410, %v8147
    %8149 = vmatprep.mubr.bf16.mxu0 %v4114
    %8150 = vmatmul.mubr.bf16.gmra.mrb[0].mxu0 %v4113
    %v8151 = vpop.f32.mrb[0].mxu0
    %v8152 = vadd.f32 %v4406, %v8151
    %v8153 = vpop.f32.mrb[0].mxu0
    %v8154 = vadd.f32 %v4410, %v8153
    %v8155 = vpop.f32.mrb[0].mxu0
    %v8156 = vadd.f32 %v4406, %v8155
    %v8157 = vpop.f32.mrb[0].mxu0
    %v8158 = vadd.f32 %v4410, %v8157
    %8159 = vmatprep.mubr.bf16.mxu0 %v4118
    %8160 = vmatmul.mubr.bf16.gmra.mrb[0].mxu0 %v4117
    %v8161 = vpop.f32.mrb[0].mxu0
    %v8162 = vadd.f32 %v4406, %v8161
    %v8163 = vpop.f32.mrb[0].mxu0
    %v8164 = vadd.f32 %v4410, %v8163
    %v8165 = vpop.f32.mrb[0].mxu0
    %v8166 = vadd.f32 %v4406, %v8165
    %v8167 = vpop.f32.mrb[0].mxu0
    %v8168 = vadd.f32 %v4410, %v8167
    %8169 = vdwg.mxu0
    %8170 = vmatprep.subr.bf16.mxu0 %v5322
    %8171 = vmatpush1.bf16.msra.mxu0 %v5321
    %8172 = vmatprep.subr.bf16.mxu0 %v5330
    %8173 = vmatpush1.bf16.msra.mxu0 %v5329
    %8174 = vmatprep.subr.bf16.mxu0 %v5338
    %8175 = vmatpush1.bf16.msra.mxu0 %v5337
    %8176 = vmatprep.subr.bf16.mxu0 %v5346
    %8177 = vmatpush1.bf16.msra.mxu0 %v5345
    %8178 = vmatprep.subr.bf16.mxu0 %v5354
    %8179 = vmatpush1.bf16.msra.mxu0 %v5353
    %8180 = vmatprep.subr.bf16.mxu0 %v5362
    %8181 = vmatpush1.bf16.msra.mxu0 %v5361
    %8182 = vmatprep.subr.bf16.mxu0 %v5370
    %8183 = vmatpush1.bf16.msra.mxu0 %v5369
    %8184 = vmatprep.subr.bf16.mxu0 %v5378
    %8185 = vmatpush1.bf16.msra.mxu0 %v5377
    %8186 = vmatprep.subr.bf16.mxu0 %v5386
    %8187 = vmatpush1.bf16.msra.mxu0 %v5385
    %8188 = vmatprep.subr.bf16.mxu0 %v5394
    %8189 = vmatpush1.bf16.msra.mxu0 %v5393
    %8190 = vmatprep.subr.bf16.mxu0 %v5402
    %8191 = vmatpush1.bf16.msra.mxu0 %v5401
    %8192 = vmatprep.subr.bf16.mxu0 %v5410
    %8193 = vmatpush1.bf16.msra.mxu0 %v5409
    %8194 = vmatprep.subr.bf16.mxu0 %v5418
    %8195 = vmatpush1.bf16.msra.mxu0 %v5417
    %8196 = vmatprep.subr.bf16.mxu0 %v5426
    %8197 = vmatpush1.bf16.msra.mxu0 %v5425
    %8198 = vmatprep.subr.bf16.mxu0 %v5434
    %8199 = vmatpush1.bf16.msra.mxu0 %v5433
    %8200 = vmatprep.subr.bf16.mxu0 %v5442
    %8201 = vmatpush1.bf16.msra.mxu0 %v5441
    %8202 = vmatprep.mubr.bf16.mxu0 %v3996
    %8203 = vmatmul.mubr.bf16.gmra.mrb[0].mxu0 %v3995
    %v8204 = vpop.f32.mrb[0].mxu0
    %v8205 = vadd.f32 %v7852, %v8204
    %v8206 = vpop.f32.mrb[0].mxu0
    %v8207 = vadd.f32 %v7854, %v8206
    %v8208 = vpop.f32.mrb[0].mxu0
    %v8209 = vadd.f32 %v7856, %v8208
    %v8210 = vpop.f32.mrb[0].mxu0
    %v8211 = vadd.f32 %v7858, %v8210
    %8212 = vmatprep.mubr.bf16.mxu0 %v4000
    %8213 = vmatmul.mubr.bf16.gmra.mrb[0].mxu0 %v3999
    %v8214 = vpop.f32.mrb[0].mxu0
    %v8215 = vadd.f32 %v7862, %v8214
    %v8216 = vpop.f32.mrb[0].mxu0
    %v8217 = vadd.f32 %v7864, %v8216
    %v8218 = vpop.f32.mrb[0].mxu0
    %v8219 = vadd.f32 %v7866, %v8218
    %v8220 = vpop.f32.mrb[0].mxu0
    %v8221 = vadd.f32 %v7868, %v8220
    %8222 = vmatprep.mubr.bf16.mxu0 %v4004
    %8223 = vmatmul.mubr.bf16.gmra.mrb[0].mxu0 %v4003
    %v8224 = vpop.f32.mrb[0].mxu0
    %v8225 = vadd.f32 %v7872, %v8224
    %v8226 = vpop.f32.mrb[0].mxu0
    %v8227 = vadd.f32 %v7874, %v8226
    %v8228 = vpop.f32.mrb[0].mxu0
    %v8229 = vadd.f32 %v7876, %v8228
    %v8230 = vpop.f32.mrb[0].mxu0
    %v8231 = vadd.f32 %v7878, %v8230
    %8232 = vmatprep.mubr.bf16.mxu0 %v4008
    %8233 = vmatmul.mubr.bf16.gmra.mrb[0].mxu0 %v4007
    %v8234 = vpop.f32.mrb[0].mxu0
    %v8235 = vadd.f32 %v7882, %v8234
    %v8236 = vpop.f32.mrb[0].mxu0
    %v8237 = vadd.f32 %v7884, %v8236
    %v8238 = vpop.f32.mrb[0].mxu0
    %v8239 = vadd.f32 %v7886, %v8238
    %v8240 = vpop.f32.mrb[0].mxu0
    %v8241 = vadd.f32 %v7888, %v8240
    %8242 = vmatprep.mubr.bf16.mxu0 %v4012
    %8243 = vmatmul.mubr.bf16.gmra.mrb[0].mxu0 %v4011
    %v8244 = vpop.f32.mrb[0].mxu0
    %v8245 = vadd.f32 %v7892, %v8244
    %v8246 = vpop.f32.mrb[0].mxu0
    %v8247 = vadd.f32 %v7894, %v8246
    %v8248 = vpop.f32.mrb[0].mxu0
    %v8249 = vadd.f32 %v7896, %v8248
    %v8250 = vpop.f32.mrb[0].mxu0
    %v8251 = vadd.f32 %v7898, %v8250
    %8252 = vmatprep.mubr.bf16.mxu0 %v4016
    %8253 = vmatmul.mubr.bf16.gmra.mrb[0].mxu0 %v4015
    %v8254 = vpop.f32.mrb[0].mxu0
    %v8255 = vadd.f32 %v7902, %v8254
    %v8256 = vpop.f32.mrb[0].mxu0
    %v8257 = vadd.f32 %v7904, %v8256
    %v8258 = vpop.f32.mrb[0].mxu0
    %v8259 = vadd.f32 %v7906, %v8258
    %v8260 = vpop.f32.mrb[0].mxu0
    %v8261 = vadd.f32 %v7908, %v8260
    %8262 = vmatprep.mubr.bf16.mxu0 %v4020
    %8263 = vmatmul.mubr.bf16.gmra.mrb[0].mxu0 %v4019
    %v8264 = vpop.f32.mrb[0].mxu0
    %v8265 = vadd.f32 %v7912, %v8264
    %v8266 = vpop.f32.mrb[0].mxu0
    %v8267 = vadd.f32 %v7914, %v8266
    %v8268 = vpop.f32.mrb[0].mxu0
    %v8269 = vadd.f32 %v7916, %v8268
    %v8270 = vpop.f32.mrb[0].mxu0
    %v8271 = vadd.f32 %v7918, %v8270
    %8272 = vmatprep.mubr.bf16.mxu0 %v4024
    %8273 = vmatmul.mubr.bf16.gmra.mrb[0].mxu0 %v4023
    %v8274 = vpop.f32.mrb[0].mxu0
    %v8275 = vadd.f32 %v7922, %v8274
    %v8276 = vpop.f32.mrb[0].mxu0
    %v8277 = vadd.f32 %v7924, %v8276
    %v8278 = vpop.f32.mrb[0].mxu0
    %v8279 = vadd.f32 %v7926, %v8278
    %v8280 = vpop.f32.mrb[0].mxu0
    %v8281 = vadd.f32 %v7928, %v8280
    %8282 = vmatprep.mubr.bf16.mxu0 %v4028
    %8283 = vmatmul.mubr.bf16.gmra.mrb[0].mxu0 %v4027
    %v8284 = vpop.f32.mrb[0].mxu0
    %v8285 = vadd.f32 %v7932, %v8284
    %v8286 = vpop.f32.mrb[0].mxu0
    %v8287 = vadd.f32 %v7934, %v8286
    %v8288 = vpop.f32.mrb[0].mxu0
    %v8289 = vadd.f32 %v7936, %v8288
    %v8290 = vpop.f32.mrb[0].mxu0
    %v8291 = vadd.f32 %v7938, %v8290
    %8292 = vmatprep.mubr.bf16.mxu0 %v4032
    %8293 = vmatmul.mubr.bf16.gmra.mrb[0].mxu0 %v4031
    %v8294 = vpop.f32.mrb[0].mxu0
    %v8295 = vadd.f32 %v7942, %v8294
    %v8296 = vpop.f32.mrb[0].mxu0
    %v8297 = vadd.f32 %v7944, %v8296
    %v8298 = vpop.f32.mrb[0].mxu0
    %v8299 = vadd.f32 %v7946, %v8298
    %v8300 = vpop.f32.mrb[0].mxu0
    %v8301 = vadd.f32 %v7948, %v8300
    %8302 = vmatprep.mubr.bf16.mxu0 %v4036
    %8303 = vmatmul.mubr.bf16.gmra.mrb[0].mxu0 %v4035
    %v8304 = vpop.f32.mrb[0].mxu0
    %v8305 = vadd.f32 %v7952, %v8304
    %v8306 = vpop.f32.mrb[0].mxu0
    %v8307 = vadd.f32 %v7954, %v8306
    %v8308 = vpop.f32.mrb[0].mxu0
    %v8309 = vadd.f32 %v7956, %v8308
    %v8310 = vpop.f32.mrb[0].mxu0
    %v8311 = vadd.f32 %v7958, %v8310
    %8312 = vmatprep.mubr.bf16.mxu0 %v4040
    %8313 = vmatmul.mubr.bf16.gmra.mrb[0].mxu0 %v4039
    %v8314 = vpop.f32.mrb[0].mxu0
    %v8315 = vadd.f32 %v7962, %v8314
    %v8316 = vpop.f32.mrb[0].mxu0
    %v8317 = vadd.f32 %v7964, %v8316
    %v8318 = vpop.f32.mrb[0].mxu0
    %v8319 = vadd.f32 %v7966, %v8318
    %v8320 = vpop.f32.mrb[0].mxu0
    %v8321 = vadd.f32 %v7968, %v8320
    %8322 = vmatprep.mubr.bf16.mxu0 %v4044
    %8323 = vmatmul.mubr.bf16.gmra.mrb[0].mxu0 %v4043
    %v8324 = vpop.f32.mrb[0].mxu0
    %v8325 = vadd.f32 %v7972, %v8324
    %v8326 = vpop.f32.mrb[0].mxu0
    %v8327 = vadd.f32 %v7974, %v8326
    %v8328 = vpop.f32.mrb[0].mxu0
    %v8329 = vadd.f32 %v7976, %v8328
    %v8330 = vpop.f32.mrb[0].mxu0
    %v8331 = vadd.f32 %v7978, %v8330
    %8332 = vmatprep.mubr.bf16.mxu0 %v4048
    %8333 = vmatmul.mubr.bf16.gmra.mrb[0].mxu0 %v4047
    %v8334 = vpop.f32.mrb[0].mxu0
    %v8335 = vadd.f32 %v7982, %v8334
    %v8336 = vpop.f32.mrb[0].mxu0
    %v8337 = vadd.f32 %v7984, %v8336
    %v8338 = vpop.f32.mrb[0].mxu0
    %v8339 = vadd.f32 %v7986, %v8338
    %v8340 = vpop.f32.mrb[0].mxu0
    %v8341 = vadd.f32 %v7988, %v8340
    %8342 = vmatprep.mubr.bf16.mxu0 %v4052
    %8343 = vmatmul.mubr.bf16.gmra.mrb[0].mxu0 %v4051
    %v8344 = vpop.f32.mrb[0].mxu0
    %v8345 = vadd.f32 %v7992, %v8344
    %v8346 = vpop.f32.mrb[0].mxu0
    %v8347 = vadd.f32 %v7994, %v8346
    %v8348 = vpop.f32.mrb[0].mxu0
    %v8349 = vadd.f32 %v7996, %v8348
    %v8350 = vpop.f32.mrb[0].mxu0
    %v8351 = vadd.f32 %v7998, %v8350
    %8352 = vmatprep.mubr.bf16.mxu0 %v4056
    %8353 = vmatmul.mubr.bf16.gmra.mrb[0].mxu0 %v4055
    %v8354 = vpop.f32.mrb[0].mxu0
    %v8355 = vadd.f32 %v8002, %v8354
    %v8356 = vpop.f32.mrb[0].mxu0
    %v8357 = vadd.f32 %v8004, %v8356
    %v8358 = vpop.f32.mrb[0].mxu0
    %v8359 = vadd.f32 %v8006, %v8358
    %v8360 = vpop.f32.mrb[0].mxu0
    %v8361 = vadd.f32 %v8008, %v8360
    %8362 = vmatprep.mubr.bf16.mxu0 %v4060
    %8363 = vmatmul.mubr.bf16.gmra.mrb[0].mxu0 %v4059
    %v8364 = vpop.f32.mrb[0].mxu0
    %v8365 = vadd.f32 %v8012, %v8364
    %v8366 = vpop.f32.mrb[0].mxu0
    %v8367 = vadd.f32 %v8014, %v8366
    %v8368 = vpop.f32.mrb[0].mxu0
    %v8369 = vadd.f32 %v8016, %v8368
    %v8370 = vpop.f32.mrb[0].mxu0
    %v8371 = vadd.f32 %v8018, %v8370
    %8372 = vmatprep.mubr.bf16.mxu0 %v4064
    %8373 = vmatmul.mubr.bf16.gmra.mrb[0].mxu0 %v4063
    %v8374 = vpop.f32.mrb[0].mxu0
    %v8375 = vadd.f32 %v8022, %v8374
    %v8376 = vpop.f32.mrb[0].mxu0
    %v8377 = vadd.f32 %v8024, %v8376
    %v8378 = vpop.f32.mrb[0].mxu0
    %v8379 = vadd.f32 %v8026, %v8378
    %v8380 = vpop.f32.mrb[0].mxu0
    %v8381 = vadd.f32 %v8028, %v8380
    %8382 = vmatprep.mubr.bf16.mxu0 %v4068
    %8383 = vmatmul.mubr.bf16.gmra.mrb[0].mxu0 %v4067
    %v8384 = vpop.f32.mrb[0].mxu0
    %v8385 = vadd.f32 %v8032, %v8384
    %v8386 = vpop.f32.mrb[0].mxu0
    %v8387 = vadd.f32 %v8034, %v8386
    %v8388 = vpop.f32.mrb[0].mxu0
    %v8389 = vadd.f32 %v8036, %v8388
    %v8390 = vpop.f32.mrb[0].mxu0
    %v8391 = vadd.f32 %v8038, %v8390
    %8392 = vmatprep.mubr.bf16.mxu0 %v4072
    %8393 = vmatmul.mubr.bf16.gmra.mrb[0].mxu0 %v4071
    %v8394 = vpop.f32.mrb[0].mxu0
    %v8395 = vadd.f32 %v8042, %v8394
    %v8396 = vpop.f32.mrb[0].mxu0
    %v8397 = vadd.f32 %v8044, %v8396
    %v8398 = vpop.f32.mrb[0].mxu0
    %v8399 = vadd.f32 %v8046, %v8398
    %v8400 = vpop.f32.mrb[0].mxu0
    %v8401 = vadd.f32 %v8048, %v8400
    %8402 = vmatprep.mubr.bf16.mxu0 %v4076
    %8403 = vmatmul.mubr.bf16.gmra.mrb[0].mxu0 %v4075
    %v8404 = vpop.f32.mrb[0].mxu0
    %v8405 = vadd.f32 %v8052, %v8404
    %v8406 = vpop.f32.mrb[0].mxu0
    %v8407 = vadd.f32 %v8054, %v8406
    %v8408 = vpop.f32.mrb[0].mxu0
    %v8409 = vadd.f32 %v8056, %v8408
    %v8410 = vpop.f32.mrb[0].mxu0
    %v8411 = vadd.f32 %v8058, %v8410
    %8412 = vmatprep.mubr.bf16.mxu0 %v4080
    %8413 = vmatmul.mubr.bf16.gmra.mrb[0].mxu0 %v4079
    %v8414 = vpop.f32.mrb[0].mxu0
    %v8415 = vadd.f32 %v8062, %v8414
    %v8416 = vpop.f32.mrb[0].mxu0
    %v8417 = vadd.f32 %v8064, %v8416
    %v8418 = vpop.f32.mrb[0].mxu0
    %v8419 = vadd.f32 %v8066, %v8418
    %v8420 = vpop.f32.mrb[0].mxu0
    %v8421 = vadd.f32 %v8068, %v8420
    %8422 = vmatprep.mubr.bf16.mxu0 %v4084
    %8423 = vmatmul.mubr.bf16.gmra.mrb[0].mxu0 %v4083
    %v8424 = vpop.f32.mrb[0].mxu0
    %v8425 = vadd.f32 %v8072, %v8424
    %v8426 = vpop.f32.mrb[0].mxu0
    %v8427 = vadd.f32 %v8074, %v8426
    %v8428 = vpop.f32.mrb[0].mxu0
    %v8429 = vadd.f32 %v8076, %v8428
    %v8430 = vpop.f32.mrb[0].mxu0
    %v8431 = vadd.f32 %v8078, %v8430
    %8432 = vmatprep.mubr.bf16.mxu0 %v4088
    %8433 = vmatmul.mubr.bf16.gmra.mrb[0].mxu0 %v4087
    %v8434 = vpop.f32.mrb[0].mxu0
    %v8435 = vadd.f32 %v8082, %v8434
    %v8436 = vpop.f32.mrb[0].mxu0
    %v8437 = vadd.f32 %v8084, %v8436
    %v8438 = vpop.f32.mrb[0].mxu0
    %v8439 = vadd.f32 %v8086, %v8438
    %v8440 = vpop.f32.mrb[0].mxu0
    %v8441 = vadd.f32 %v8088, %v8440
    %8442 = vmatprep.mubr.bf16.mxu0 %v4092
    %8443 = vmatmul.mubr.bf16.gmra.mrb[0].mxu0 %v4091
    %v8444 = vpop.f32.mrb[0].mxu0
    %v8445 = vadd.f32 %v8092, %v8444
    %v8446 = vpop.f32.mrb[0].mxu0
    %v8447 = vadd.f32 %v8094, %v8446
    %v8448 = vpop.f32.mrb[0].mxu0
    %v8449 = vadd.f32 %v8096, %v8448
    %v8450 = vpop.f32.mrb[0].mxu0
    %v8451 = vadd.f32 %v8098, %v8450
    %8452 = vmatprep.mubr.bf16.mxu0 %v4096
    %8453 = vmatmul.mubr.bf16.gmra.mrb[0].mxu0 %v4095
    %v8454 = vpop.f32.mrb[0].mxu0
    %v8455 = vadd.f32 %v8102, %v8454
    %v8456 = vpop.f32.mrb[0].mxu0
    %v8457 = vadd.f32 %v8104, %v8456
    %v8458 = vpop.f32.mrb[0].mxu0
    %v8459 = vadd.f32 %v8106, %v8458
    %v8460 = vpop.f32.mrb[0].mxu0
    %v8461 = vadd.f32 %v8108, %v8460
    %8462 = vmatprep.mubr.bf16.mxu0 %v4100
    %8463 = vmatmul.mubr.bf16.gmra.mrb[0].mxu0 %v4099
    %v8464 = vpop.f32.mrb[0].mxu0
    %v8465 = vadd.f32 %v8112, %v8464
    %v8466 = vpop.f32.mrb[0].mxu0
    %v8467 = vadd.f32 %v8114, %v8466
    %v8468 = vpop.f32.mrb[0].mxu0
    %v8469 = vadd.f32 %v8116, %v8468
    %v8470 = vpop.f32.mrb[0].mxu0
    %v8471 = vadd.f32 %v8118, %v8470
    %8472 = vmatprep.mubr.bf16.mxu0 %v4104
    %8473 = vmatmul.mubr.bf16.gmra.mrb[0].mxu0 %v4103
    %v8474 = vpop.f32.mrb[0].mxu0
    %v8475 = vadd.f32 %v8122, %v8474
    %v8476 = vpop.f32.mrb[0].mxu0
    %v8477 = vadd.f32 %v8124, %v8476
    %v8478 = vpop.f32.mrb[0].mxu0
    %v8479 = vadd.f32 %v8126, %v8478
    %v8480 = vpop.f32.mrb[0].mxu0
    %v8481 = vadd.f32 %v8128, %v8480
    %8482 = vmatprep.mubr.bf16.mxu0 %v4108
    %8483 = vmatmul.mubr.bf16.gmra.mrb[0].mxu0 %v4107
    %v8484 = vpop.f32.mrb[0].mxu0
    %v8485 = vadd.f32 %v8132, %v8484
    %v8486 = vpop.f32.mrb[0].mxu0
    %v8487 = vadd.f32 %v8134, %v8486
    %v8488 = vpop.f32.mrb[0].mxu0
    %v8489 = vadd.f32 %v8136, %v8488
    %v8490 = vpop.f32.mrb[0].mxu0
    %v8491 = vadd.f32 %v8138, %v8490
    %8492 = vmatprep.mubr.bf16.mxu0 %v4112
    %8493 = vmatmul.mubr.bf16.gmra.mrb[0].mxu0 %v4111
    %v8494 = vpop.f32.mrb[0].mxu0
    %v8495 = vadd.f32 %v8142, %v8494
    %v8496 = vpop.f32.mrb[0].mxu0
    %v8497 = vadd.f32 %v8144, %v8496
    %v8498 = vpop.f32.mrb[0].mxu0
    %v8499 = vadd.f32 %v8146, %v8498
    %v8500 = vpop.f32.mrb[0].mxu0
    %v8501 = vadd.f32 %v8148, %v8500
    %8502 = vmatprep.mubr.bf16.mxu0 %v4116
    %8503 = vmatmul.mubr.bf16.gmra.mrb[0].mxu0 %v4115
    %v8504 = vpop.f32.mrb[0].mxu0
    %v8505 = vadd.f32 %v8152, %v8504
    %v8506 = vpop.f32.mrb[0].mxu0
    %v8507 = vadd.f32 %v8154, %v8506
    %v8508 = vpop.f32.mrb[0].mxu0
    %v8509 = vadd.f32 %v8156, %v8508
    %v8510 = vpop.f32.mrb[0].mxu0
    %v8511 = vadd.f32 %v8158, %v8510
    %8512 = vmatprep.mubr.bf16.mxu0 %v4120
    %8513 = vmatmul.mubr.bf16.gmra.mrb[0].mxu0 %v4119
    %v8514 = vpop.f32.mrb[0].mxu0
    %v8515 = vadd.f32 %v8162, %v8514
    %v8516 = vpop.f32.mrb[0].mxu0
    %v8517 = vadd.f32 %v8164, %v8516
    %v8518 = vpop.f32.mrb[0].mxu0
    %v8519 = vadd.f32 %v8166, %v8518
    %v8520 = vpop.f32.mrb[0].mxu0
    %v8521 = vadd.f32 %v8168, %v8520
    %8522 = vdwg.mxu0
    %v8523 = vmax.f32 %v6087, %v6091
    %v8524 = vmax.f32 %v8523, %v6097
    %v8525 = vmax.f32 %v8524, %v6101
    %v8526 = vmax.f32 %v8525, %v6107
    %v8527 = vmax.f32 %v8526, %v6111
    %v8528 = vmax.f32 %v8527, %v6117
    %v8529 = vmax.f32 %v8528, %v6121
    %v8530 = vmax.f32 %v8529, %v6127
    %v8531 = vmax.f32 %v8530, %v6131
    %v8532 = vmax.f32 %v8531, %v6137
    %v8533 = vmax.f32 %v8532, %v6141
    %v8534 = vmax.f32 %v8533, %v6147
    %v8535 = vmax.f32 %v8534, %v6151
    %v8536 = vmax.f32 %v8535, %v6157
    %v8537 = vmax.f32 %v8536, %v6161
    %v8538 = vmax.f32 %v8537, %v6167
    %v8539 = vmax.f32 %v8538, %v6171
    %v8540 = vmax.f32 %v8539, %v6177
    %v8541 = vmax.f32 %v8540, %v6181
    %v8542 = vmax.f32 %v8541, %v6187
    %v8543 = vmax.f32 %v8542, %v6191
    %v8544 = vmax.f32 %v8543, %v6197
    %v8545 = vmax.f32 %v8544, %v6201
    %v8546 = vmax.f32 %v8545, %v6207
    %v8547 = vmax.f32 %v8546, %v6211
    %v8548 = vmax.f32 %v8547, %v6217
    %v8549 = vmax.f32 %v8548, %v6221
    %v8550 = vmax.f32 %v8549, %v6227
    %v8551 = vmax.f32 %v8550, %v6231
    %v8552 = vmax.f32 %v8551, %v6237
    %v8553 = vmax.f32 %v8552, %v6241
    %v8554 = vmax.f32 %v6089, %v6093
    %v8555 = vmax.f32 %v8554, %v6099
    %v8556 = vmax.f32 %v8555, %v6103
    %v8557 = vmax.f32 %v8556, %v6109
    %v8558 = vmax.f32 %v8557, %v6113
    %v8559 = vmax.f32 %v8558, %v6119
    %v8560 = vmax.f32 %v8559, %v6123
    %v8561 = vmax.f32 %v8560, %v6129
    %v8562 = vmax.f32 %v8561, %v6133
    %v8563 = vmax.f32 %v8562, %v6139
    %v8564 = vmax.f32 %v8563, %v6143
    %v8565 = vmax.f32 %v8564, %v6149
    %v8566 = vmax.f32 %v8565, %v6153
    %v8567 = vmax.f32 %v8566, %v6159
    %v8568 = vmax.f32 %v8567, %v6163
    %v8569 = vmax.f32 %v8568, %v6169
    %v8570 = vmax.f32 %v8569, %v6173
    %v8571 = vmax.f32 %v8570, %v6179
    %v8572 = vmax.f32 %v8571, %v6183
    %v8573 = vmax.f32 %v8572, %v6189
    %v8574 = vmax.f32 %v8573, %v6193
    %v8575 = vmax.f32 %v8574, %v6199
    %v8576 = vmax.f32 %v8575, %v6203
    %v8577 = vmax.f32 %v8576, %v6209
    %v8578 = vmax.f32 %v8577, %v6213
    %v8579 = vmax.f32 %v8578, %v6219
    %v8580 = vmax.f32 %v8579, %v6223
    %v8581 = vmax.f32 %v8580, %v6229
    %v8582 = vmax.f32 %v8581, %v6233
    %v8583 = vmax.f32 %v8582, %v6239
    %v8584 = vmax.f32 %v8583, %v6243
    %v8585 = vmax.f32 %v6793, %v6797
    %v8586 = vmax.f32 %v8585, %v6803
    %v8587 = vmax.f32 %v8586, %v6807
    %v8588 = vmax.f32 %v8587, %v6813
    %v8589 = vmax.f32 %v8588, %v6817
    %v8590 = vmax.f32 %v8589, %v6823
    %v8591 = vmax.f32 %v8590, %v6827
    %v8592 = vmax.f32 %v8591, %v6833
    %v8593 = vmax.f32 %v8592, %v6837
    %v8594 = vmax.f32 %v8593, %v6843
    %v8595 = vmax.f32 %v8594, %v6847
    %v8596 = vmax.f32 %v8595, %v6853
    %v8597 = vmax.f32 %v8596, %v6857
    %v8598 = vmax.f32 %v8597, %v6863
    %v8599 = vmax.f32 %v8598, %v6867
    %v8600 = vmax.f32 %v8599, %v6873
    %v8601 = vmax.f32 %v8600, %v6877
    %v8602 = vmax.f32 %v8601, %v6883
    %v8603 = vmax.f32 %v8602, %v6887
    %v8604 = vmax.f32 %v8603, %v6893
    %v8605 = vmax.f32 %v8604, %v6897
    %v8606 = vmax.f32 %v8605, %v6903
    %v8607 = vmax.f32 %v8606, %v6907
    %v8608 = vmax.f32 %v8607, %v6913
    %v8609 = vmax.f32 %v8608, %v6917
    %v8610 = vmax.f32 %v8609, %v6923
    %v8611 = vmax.f32 %v8610, %v6927
    %v8612 = vmax.f32 %v8611, %v6933
    %v8613 = vmax.f32 %v8612, %v6937
    %v8614 = vmax.f32 %v8613, %v6943
    %v8615 = vmax.f32 %v8614, %v6947
    %v8616 = vmax.f32 %v6795, %v6799
    %v8617 = vmax.f32 %v8616, %v6805
    %v8618 = vmax.f32 %v8617, %v6809
    %v8619 = vmax.f32 %v8618, %v6815
    %v8620 = vmax.f32 %v8619, %v6819
    %v8621 = vmax.f32 %v8620, %v6825
    %v8622 = vmax.f32 %v8621, %v6829
    %v8623 = vmax.f32 %v8622, %v6835
    %v8624 = vmax.f32 %v8623, %v6839
    %v8625 = vmax.f32 %v8624, %v6845
    %v8626 = vmax.f32 %v8625, %v6849
    %v8627 = vmax.f32 %v8626, %v6855
    %v8628 = vmax.f32 %v8627, %v6859
    %v8629 = vmax.f32 %v8628, %v6865
    %v8630 = vmax.f32 %v8629, %v6869
    %v8631 = vmax.f32 %v8630, %v6875
    %v8632 = vmax.f32 %v8631, %v6879
    %v8633 = vmax.f32 %v8632, %v6885
    %v8634 = vmax.f32 %v8633, %v6889
    %v8635 = vmax.f32 %v8634, %v6895
    %v8636 = vmax.f32 %v8635, %v6899
    %v8637 = vmax.f32 %v8636, %v6905
    %v8638 = vmax.f32 %v8637, %v6909
    %v8639 = vmax.f32 %v8638, %v6915
    %v8640 = vmax.f32 %v8639, %v6919
    %v8641 = vmax.f32 %v8640, %v6925
    %v8642 = vmax.f32 %v8641, %v6929
    %v8643 = vmax.f32 %v8642, %v6935
    %v8644 = vmax.f32 %v8643, %v6939
    %v8645 = vmax.f32 %v8644, %v6945
    %v8646 = vmax.f32 %v8645, %v6949
    %v8647 = vmax.f32 %v7499, %v7503
    %v8648 = vmax.f32 %v8647, %v7509
    %v8649 = vmax.f32 %v8648, %v7513
    %v8650 = vmax.f32 %v8649, %v7519
    %v8651 = vmax.f32 %v8650, %v7523
    %v8652 = vmax.f32 %v8651, %v7529
    %v8653 = vmax.f32 %v8652, %v7533
    %v8654 = vmax.f32 %v8653, %v7539
    %v8655 = vmax.f32 %v8654, %v7543
    %v8656 = vmax.f32 %v8655, %v7549
    %v8657 = vmax.f32 %v8656, %v7553
    %v8658 = vmax.f32 %v8657, %v7559
    %v8659 = vmax.f32 %v8658, %v7563
    %v8660 = vmax.f32 %v8659, %v7569
    %v8661 = vmax.f32 %v8660, %v7573
    %v8662 = vmax.f32 %v8661, %v7579
    %v8663 = vmax.f32 %v8662, %v7583
    %v8664 = vmax.f32 %v8663, %v7589
    %v8665 = vmax.f32 %v8664, %v7593
    %v8666 = vmax.f32 %v8665, %v7599
    %v8667 = vmax.f32 %v8666, %v7603
    %v8668 = vmax.f32 %v8667, %v7609
    %v8669 = vmax.f32 %v8668, %v7613
    %v8670 = vmax.f32 %v8669, %v7619
    %v8671 = vmax.f32 %v8670, %v7623
    %v8672 = vmax.f32 %v8671, %v7629
    %v8673 = vmax.f32 %v8672, %v7633
    %v8674 = vmax.f32 %v8673, %v7639
    %v8675 = vmax.f32 %v8674, %v7643
    %v8676 = vmax.f32 %v8675, %v7649
    %v8677 = vmax.f32 %v8676, %v7653
    %v8678 = vmax.f32 %v7501, %v7505
    %v8679 = vmax.f32 %v8678, %v7511
    %v8680 = vmax.f32 %v8679, %v7515
    %v8681 = vmax.f32 %v8680, %v7521
    %v8682 = vmax.f32 %v8681, %v7525
    %v8683 = vmax.f32 %v8682, %v7531
    %v8684 = vmax.f32 %v8683, %v7535
    %v8685 = vmax.f32 %v8684, %v7541
    %v8686 = vmax.f32 %v8685, %v7545
    %v8687 = vmax.f32 %v8686, %v7551
    %v8688 = vmax.f32 %v8687, %v7555
    %v8689 = vmax.f32 %v8688, %v7561
    %v8690 = vmax.f32 %v8689, %v7565
    %v8691 = vmax.f32 %v8690, %v7571
    %v8692 = vmax.f32 %v8691, %v7575
    %v8693 = vmax.f32 %v8692, %v7581
    %v8694 = vmax.f32 %v8693, %v7585
    %v8695 = vmax.f32 %v8694, %v7591
    %v8696 = vmax.f32 %v8695, %v7595
    %v8697 = vmax.f32 %v8696, %v7601
    %v8698 = vmax.f32 %v8697, %v7605
    %v8699 = vmax.f32 %v8698, %v7611
    %v8700 = vmax.f32 %v8699, %v7615
    %v8701 = vmax.f32 %v8700, %v7621
    %v8702 = vmax.f32 %v8701, %v7625
    %v8703 = vmax.f32 %v8702, %v7631
    %v8704 = vmax.f32 %v8703, %v7635
    %v8705 = vmax.f32 %v8704, %v7641
    %v8706 = vmax.f32 %v8705, %v7645
    %v8707 = vmax.f32 %v8706, %v7651
    %v8708 = vmax.f32 %v8707, %v7655
    %v8709 = vmax.f32 %v8205, %v8209
    %v8710 = vmax.f32 %v8709, %v8215
    %v8711 = vmax.f32 %v8710, %v8219
    %v8712 = vmax.f32 %v8711, %v8225
    %v8713 = vmax.f32 %v8712, %v8229
    %v8714 = vmax.f32 %v8713, %v8235
    %v8715 = vmax.f32 %v8714, %v8239
    %v8716 = vmax.f32 %v8715, %v8245
    %v8717 = vmax.f32 %v8716, %v8249
    %v8718 = vmax.f32 %v8717, %v8255
    %v8719 = vmax.f32 %v8718, %v8259
    %v8720 = vmax.f32 %v8719, %v8265
    %v8721 = vmax.f32 %v8720, %v8269
    %v8722 = vmax.f32 %v8721, %v8275
    %v8723 = vmax.f32 %v8722, %v8279
    %v8724 = vmax.f32 %v8723, %v8285
    %v8725 = vmax.f32 %v8724, %v8289
    %v8726 = vmax.f32 %v8725, %v8295
    %v8727 = vmax.f32 %v8726, %v8299
    %v8728 = vmax.f32 %v8727, %v8305
    %v8729 = vmax.f32 %v8728, %v8309
    %v8730 = vmax.f32 %v8729, %v8315
    %v8731 = vmax.f32 %v8730, %v8319
    %v8732 = vmax.f32 %v8731, %v8325
    %v8733 = vmax.f32 %v8732, %v8329
    %v8734 = vmax.f32 %v8733, %v8335
    %v8735 = vmax.f32 %v8734, %v8339
    %v8736 = vmax.f32 %v8735, %v8345
    %v8737 = vmax.f32 %v8736, %v8349
    %v8738 = vmax.f32 %v8737, %v8355
    %v8739 = vmax.f32 %v8738, %v8359
    %v8740 = vmax.f32 %v8207, %v8211
    %v8741 = vmax.f32 %v8740, %v8217
    %v8742 = vmax.f32 %v8741, %v8221
    %v8743 = vmax.f32 %v8742, %v8227
    %v8744 = vmax.f32 %v8743, %v8231
    %v8745 = vmax.f32 %v8744, %v8237
    %v8746 = vmax.f32 %v8745, %v8241
    %v8747 = vmax.f32 %v8746, %v8247
    %v8748 = vmax.f32 %v8747, %v8251
    %v8749 = vmax.f32 %v8748, %v8257
    %v8750 = vmax.f32 %v8749, %v8261
    %v8751 = vmax.f32 %v8750, %v8267
    %v8752 = vmax.f32 %v8751, %v8271
    %v8753 = vmax.f32 %v8752, %v8277
    %v8754 = vmax.f32 %v8753, %v8281
    %v8755 = vmax.f32 %v8754, %v8287
    %v8756 = vmax.f32 %v8755, %v8291
    %v8757 = vmax.f32 %v8756, %v8297
    %v8758 = vmax.f32 %v8757, %v8301
    %v8759 = vmax.f32 %v8758, %v8307
    %v8760 = vmax.f32 %v8759, %v8311
    %v8761 = vmax.f32 %v8760, %v8317
    %v8762 = vmax.f32 %v8761, %v8321
    %v8763 = vmax.f32 %v8762, %v8327
    %v8764 = vmax.f32 %v8763, %v8331
    %v8765 = vmax.f32 %v8764, %v8337
    %v8766 = vmax.f32 %v8765, %v8341
    %v8767 = vmax.f32 %v8766, %v8347
    %v8768 = vmax.f32 %v8767, %v8351
    %v8769 = vmax.f32 %v8768, %v8357
    %v8770 = vmax.f32 %v8769, %v8361
    %v8771 = vmax.f32 %v6247, %v6251
    %v8772 = vmax.f32 %v8771, %v6257
    %v8773 = vmax.f32 %v8772, %v6261
    %v8774 = vmax.f32 %v8773, %v6267
    %v8775 = vmax.f32 %v8774, %v6271
    %v8776 = vmax.f32 %v8775, %v6277
    %v8777 = vmax.f32 %v8776, %v6281
    %v8778 = vmax.f32 %v8777, %v6287
    %v8779 = vmax.f32 %v8778, %v6291
    %v8780 = vmax.f32 %v8779, %v6297
    %v8781 = vmax.f32 %v8780, %v6301
    %v8782 = vmax.f32 %v8781, %v6307
    %v8783 = vmax.f32 %v8782, %v6311
    %v8784 = vmax.f32 %v8783, %v6317
    %v8785 = vmax.f32 %v8784, %v6321
    %v8786 = vmax.f32 %v8785, %v6327
    %v8787 = vmax.f32 %v8786, %v6331
    %v8788 = vmax.f32 %v8787, %v6337
    %v8789 = vmax.f32 %v8788, %v6341
    %v8790 = vmax.f32 %v8789, %v6347
    %v8791 = vmax.f32 %v8790, %v6351
    %v8792 = vmax.f32 %v8791, %v6357
    %v8793 = vmax.f32 %v8792, %v6361
    %v8794 = vmax.f32 %v8793, %v6367
    %v8795 = vmax.f32 %v8794, %v6371
    %v8796 = vmax.f32 %v8795, %v6377
    %v8797 = vmax.f32 %v8796, %v6381
    %v8798 = vmax.f32 %v8797, %v6387
    %v8799 = vmax.f32 %v8798, %v6391
    %v8800 = vmax.f32 %v8799, %v6397
    %v8801 = vmax.f32 %v8800, %v6401
    %v8802 = vmax.f32 %v6249, %v6253
    %v8803 = vmax.f32 %v8802, %v6259
    %v8804 = vmax.f32 %v8803, %v6263
    %v8805 = vmax.f32 %v8804, %v6269
    %v8806 = vmax.f32 %v8805, %v6273
    %v8807 = vmax.f32 %v8806, %v6279
    %v8808 = vmax.f32 %v8807, %v6283
    %v8809 = vmax.f32 %v8808, %v6289
    %v8810 = vmax.f32 %v8809, %v6293
    %v8811 = vmax.f32 %v8810, %v6299
    %v8812 = vmax.f32 %v8811, %v6303
    %v8813 = vmax.f32 %v8812, %v6309
    %v8814 = vmax.f32 %v8813, %v6313
    %v8815 = vmax.f32 %v8814, %v6319
    %v8816 = vmax.f32 %v8815, %v6323
    %v8817 = vmax.f32 %v8816, %v6329
    %v8818 = vmax.f32 %v8817, %v6333
    %v8819 = vmax.f32 %v8818, %v6339
    %v8820 = vmax.f32 %v8819, %v6343
    %v8821 = vmax.f32 %v8820, %v6349
    %v8822 = vmax.f32 %v8821, %v6353
    %v8823 = vmax.f32 %v8822, %v6359
    %v8824 = vmax.f32 %v8823, %v6363
    %v8825 = vmax.f32 %v8824, %v6369
    %v8826 = vmax.f32 %v8825, %v6373
    %v8827 = vmax.f32 %v8826, %v6379
    %v8828 = vmax.f32 %v8827, %v6383
    %v8829 = vmax.f32 %v8828, %v6389
    %v8830 = vmax.f32 %v8829, %v6393
    %v8831 = vmax.f32 %v8830, %v6399
    %v8832 = vmax.f32 %v8831, %v6403
    %v8833 = vmax.f32 %v6953, %v6957
    %v8834 = vmax.f32 %v8833, %v6963
    %v8835 = vmax.f32 %v8834, %v6967
    %v8836 = vmax.f32 %v8835, %v6973
    %v8837 = vmax.f32 %v8836, %v6977
    %v8838 = vmax.f32 %v8837, %v6983
    %v8839 = vmax.f32 %v8838, %v6987
    %v8840 = vmax.f32 %v8839, %v6993
    %v8841 = vmax.f32 %v8840, %v6997
    %v8842 = vmax.f32 %v8841, %v7003
    %v8843 = vmax.f32 %v8842, %v7007
    %v8844 = vmax.f32 %v8843, %v7013
    %v8845 = vmax.f32 %v8844, %v7017
    %v8846 = vmax.f32 %v8845, %v7023
    %v8847 = vmax.f32 %v8846, %v7027
    %v8848 = vmax.f32 %v8847, %v7033
    %v8849 = vmax.f32 %v8848, %v7037
    %v8850 = vmax.f32 %v8849, %v7043
    %v8851 = vmax.f32 %v8850, %v7047
    %v8852 = vmax.f32 %v8851, %v7053
    %v8853 = vmax.f32 %v8852, %v7057
    %v8854 = vmax.f32 %v8853, %v7063
    %v8855 = vmax.f32 %v8854, %v7067
    %v8856 = vmax.f32 %v8855, %v7073
    %v8857 = vmax.f32 %v8856, %v7077
    %v8858 = vmax.f32 %v8857, %v7083
    %v8859 = vmax.f32 %v8858, %v7087
    %v8860 = vmax.f32 %v8859, %v7093
    %v8861 = vmax.f32 %v8860, %v7097
    %v8862 = vmax.f32 %v8861, %v7103
    %v8863 = vmax.f32 %v8862, %v7107
    %v8864 = vmax.f32 %v6955, %v6959
    %v8865 = vmax.f32 %v8864, %v6965
    %v8866 = vmax.f32 %v8865, %v6969
    %v8867 = vmax.f32 %v8866, %v6975
    %v8868 = vmax.f32 %v8867, %v6979
    %v8869 = vmax.f32 %v8868, %v6985
    %v8870 = vmax.f32 %v8869, %v6989
    %v8871 = vmax.f32 %v8870, %v6995
    %v8872 = vmax.f32 %v8871, %v6999
    %v8873 = vmax.f32 %v8872, %v7005
    %v8874 = vmax.f32 %v8873, %v7009
    %v8875 = vmax.f32 %v8874, %v7015
    %v8876 = vmax.f32 %v8875, %v7019
    %v8877 = vmax.f32 %v8876, %v7025
    %v8878 = vmax.f32 %v8877, %v7029
    %v8879 = vmax.f32 %v8878, %v7035
    %v8880 = vmax.f32 %v8879, %v7039
    %v8881 = vmax.f32 %v8880, %v7045
    %v8882 = vmax.f32 %v8881, %v7049
    %v8883 = vmax.f32 %v8882, %v7055
    %v8884 = vmax.f32 %v8883, %v7059
    %v8885 = vmax.f32 %v8884, %v7065
    %v8886 = vmax.f32 %v8885, %v7069
    %v8887 = vmax.f32 %v8886, %v7075
    %v8888 = vmax.f32 %v8887, %v7079
    %v8889 = vmax.f32 %v8888, %v7085
    %v8890 = vmax.f32 %v8889, %v7089
    %v8891 = vmax.f32 %v8890, %v7095
    %v8892 = vmax.f32 %v8891, %v7099
    %v8893 = vmax.f32 %v8892, %v7105
    %v8894 = vmax.f32 %v8893, %v7109
    %v8895 = vmax.f32 %v7659, %v7663
    %v8896 = vmax.f32 %v8895, %v7669
    %v8897 = vmax.f32 %v8896, %v7673
    %v8898 = vmax.f32 %v8897, %v7679
    %v8899 = vmax.f32 %v8898, %v7683
    %v8900 = vmax.f32 %v8899, %v7689
    %v8901 = vmax.f32 %v8900, %v7693
    %v8902 = vmax.f32 %v8901, %v7699
    %v8903 = vmax.f32 %v8902, %v7703
    %v8904 = vmax.f32 %v8903, %v7709
    %v8905 = vmax.f32 %v8904, %v7713
    %v8906 = vmax.f32 %v8905, %v7719
    %v8907 = vmax.f32 %v8906, %v7723
    %v8908 = vmax.f32 %v8907, %v7729
    %v8909 = vmax.f32 %v8908, %v7733
    %v8910 = vmax.f32 %v8909, %v7739
    %v8911 = vmax.f32 %v8910, %v7743
    %v8912 = vmax.f32 %v8911, %v7749
    %v8913 = vmax.f32 %v8912, %v7753
    %v8914 = vmax.f32 %v8913, %v7759
    %v8915 = vmax.f32 %v8914, %v7763
    %v8916 = vmax.f32 %v8915, %v7769
    %v8917 = vmax.f32 %v8916, %v7773
    %v8918 = vmax.f32 %v8917, %v7779
    %v8919 = vmax.f32 %v8918, %v7783
    %v8920 = vmax.f32 %v8919, %v7789
    %v8921 = vmax.f32 %v8920, %v7793
    %v8922 = vmax.f32 %v8921, %v7799
    %v8923 = vmax.f32 %v8922, %v7803
    %v8924 = vmax.f32 %v8923, %v7809
    %v8925 = vmax.f32 %v8924, %v7813
    %v8926 = vmax.f32 %v7661, %v7665
    %v8927 = vmax.f32 %v8926, %v7671
    %v8928 = vmax.f32 %v8927, %v7675
    %v8929 = vmax.f32 %v8928, %v7681
    %v8930 = vmax.f32 %v8929, %v7685
    %v8931 = vmax.f32 %v8930, %v7691
    %v8932 = vmax.f32 %v8931, %v7695
    %v8933 = vmax.f32 %v8932, %v7701
    %v8934 = vmax.f32 %v8933, %v7705
    %v8935 = vmax.f32 %v8934, %v7711
    %v8936 = vmax.f32 %v8935, %v7715
    %v8937 = vmax.f32 %v8936, %v7721
    %v8938 = vmax.f32 %v8937, %v7725
    %v8939 = vmax.f32 %v8938, %v7731
    %v8940 = vmax.f32 %v8939, %v7735
    %v8941 = vmax.f32 %v8940, %v7741
    %v8942 = vmax.f32 %v8941, %v7745
    %v8943 = vmax.f32 %v8942, %v7751
    %v8944 = vmax.f32 %v8943, %v7755
    %v8945 = vmax.f32 %v8944, %v7761
    %v8946 = vmax.f32 %v8945, %v7765
    %v8947 = vmax.f32 %v8946, %v7771
    %v8948 = vmax.f32 %v8947, %v7775
    %v8949 = vmax.f32 %v8948, %v7781
    %v8950 = vmax.f32 %v8949, %v7785
    %v8951 = vmax.f32 %v8950, %v7791
    %v8952 = vmax.f32 %v8951, %v7795
    %v8953 = vmax.f32 %v8952, %v7801
    %v8954 = vmax.f32 %v8953, %v7805
    %v8955 = vmax.f32 %v8954, %v7811
    %v8956 = vmax.f32 %v8955, %v7815
    %v8957 = vmax.f32 %v8365, %v8369
    %v8958 = vmax.f32 %v8957, %v8375
    %v8959 = vmax.f32 %v8958, %v8379
    %v8960 = vmax.f32 %v8959, %v8385
    %v8961 = vmax.f32 %v8960, %v8389
    %v8962 = vmax.f32 %v8961, %v8395
    %v8963 = vmax.f32 %v8962, %v8399
    %v8964 = vmax.f32 %v8963, %v8405
    %v8965 = vmax.f32 %v8964, %v8409
    %v8966 = vmax.f32 %v8965, %v8415
    %v8967 = vmax.f32 %v8966, %v8419
    %v8968 = vmax.f32 %v8967, %v8425
    %v8969 = vmax.f32 %v8968, %v8429
    %v8970 = vmax.f32 %v8969, %v8435
    %v8971 = vmax.f32 %v8970, %v8439
    %v8972 = vmax.f32 %v8971, %v8445
    %v8973 = vmax.f32 %v8972, %v8449
    %v8974 = vmax.f32 %v8973, %v8455
    %v8975 = vmax.f32 %v8974, %v8459
    %v8976 = vmax.f32 %v8975, %v8465
    %v8977 = vmax.f32 %v8976, %v8469
    %v8978 = vmax.f32 %v8977, %v8475
    %v8979 = vmax.f32 %v8978, %v8479
    %v8980 = vmax.f32 %v8979, %v8485
    %v8981 = vmax.f32 %v8980, %v8489
    %v8982 = vmax.f32 %v8981, %v8495
    %v8983 = vmax.f32 %v8982, %v8499
    %v8984 = vmax.f32 %v8983, %v8505
    %v8985 = vmax.f32 %v8984, %v8509
    %v8986 = vmax.f32 %v8985, %v8515
    %v8987 = vmax.f32 %v8986, %v8519
    %v8988 = vmax.f32 %v8367, %v8371
    %v8989 = vmax.f32 %v8988, %v8377
    %v8990 = vmax.f32 %v8989, %v8381
    %v8991 = vmax.f32 %v8990, %v8387
    %v8992 = vmax.f32 %v8991, %v8391
    %v8993 = vmax.f32 %v8992, %v8397
    %v8994 = vmax.f32 %v8993, %v8401
    %v8995 = vmax.f32 %v8994, %v8407
    %v8996 = vmax.f32 %v8995, %v8411
    %v8997 = vmax.f32 %v8996, %v8417
    %v8998 = vmax.f32 %v8997, %v8421
    %v8999 = vmax.f32 %v8998, %v8427
    %v9000 = vmax.f32 %v8999, %v8431
    %v9001 = vmax.f32 %v9000, %v8437
    %v9002 = vmax.f32 %v9001, %v8441
    %v9003 = vmax.f32 %v9002, %v8447
    %v9004 = vmax.f32 %v9003, %v8451
    %v9005 = vmax.f32 %v9004, %v8457
    %v9006 = vmax.f32 %v9005, %v8461
    %v9007 = vmax.f32 %v9006, %v8467
    %v9008 = vmax.f32 %v9007, %v8471
    %v9009 = vmax.f32 %v9008, %v8477
    %v9010 = vmax.f32 %v9009, %v8481
    %v9011 = vmax.f32 %v9010, %v8487
    %v9012 = vmax.f32 %v9011, %v8491
    %v9013 = vmax.f32 %v9012, %v8497
    %v9014 = vmax.f32 %v9013, %v8501
    %v9015 = vmax.f32 %v9014, %v8507
    %v9016 = vmax.f32 %v9015, %v8511
    %v9017 = vmax.f32 %v9016, %v8517
    %v9018 = vmax.f32 %v9017, %v8521
    %p9019 = scmp.eq.s32.totalorder 0, 0
    // Predicated region
    $region46: #{encoder_forward.1} parent=1 // pred_check
      %p9020 = pneg %p9019
    $region47: #{encoder_forward.1} parent=1 // pred_check_branch
      %9022 = sbr.rel (%p9020) target = $region49
    $region48: #{encoder_forward.1} parent=1 // pred_region
      %9023 = vst [vmem:[#allocation2] sm:$0xff] %v8553
      %9024 = vst [vmem:[#allocation2 + $0x8] sm:$0xff] %v8584
      %9025 = vst [vmem:[#allocation2 + $0x10] sm:$0xff] %v8615
      %9026 = vst [vmem:[#allocation2 + $0x18] sm:$0xff] %v8646
      %9027 = vst [vmem:[#allocation2 + $0x20] sm:$0xff] %v8677
      %9028 = vst [vmem:[#allocation2 + $0x28] sm:$0xff] %v8708
      %9029 = vst [vmem:[#allocation2 + $0x30] sm:$0xff] %v8739
      %9030 = vst [vmem:[#allocation2 + $0x38] sm:$0xff] %v8770
      %s9031 = scalar_lea.vmem [#allocation2], 64
      %9032 = vst [vmem:[%s9031] sm:$0xff] %v8801
      %9033 = vst [vmem:[%s9031 + $0x8] sm:$0xff] %v8832
      %9034 = vst [vmem:[%s9031 + $0x10] sm:$0xff] %v8863
      %9035 = vst [vmem:[%s9031 + $0x18] sm:$0xff] %v8894
      %9036 = vst [vmem:[%s9031 + $0x20] sm:$0xff] %v8925
      %9037 = vst [vmem:[%s9031 + $0x28] sm:$0xff] %v8956
      %9038 = vst [vmem:[%s9031 + $0x30] sm:$0xff] %v8987
      %9039 = vst [vmem:[%s9031 + $0x38] sm:$0xff] %v9018
    $region49: #{encoder_forward.1} parent=1 // pred_fallthru
      _
    %p9040 = scmp.gt.s32.totalorder 0, 0
    // Predicated region
    $region50: #{encoder_forward.1} parent=1 // pred_check
      %p9041 = pneg %p9040
    $region51: #{encoder_forward.1} parent=1 // pred_check_branch
      %9043 = sbr.rel (%p9041) target = $region53
    $region52: #{encoder_forward.1} parent=1 // pred_region
      %v9044 = vld [vmem:[#allocation2] sm:$0xff]
      %v9045 = vld [vmem:[#allocation2 + $0x8] sm:$0xff]
      %v9046 = vld [vmem:[#allocation2 + $0x10] sm:$0xff]
      %v9047 = vld [vmem:[#allocation2 + $0x18] sm:$0xff]
      %v9048 = vld [vmem:[#allocation2 + $0x20] sm:$0xff]
      %v9049 = vld [vmem:[#allocation2 + $0x28] sm:$0xff]
      %v9050 = vld [vmem:[#allocation2 + $0x30] sm:$0xff]
      %v9051 = vld [vmem:[#allocation2 + $0x38] sm:$0xff]
      %v9052 = vmax.f32 %v9044, %v8553
      %v9053 = vmax.f32 %v9045, %v8584
      %v9054 = vmax.f32 %v9046, %v8615
      %v9055 = vmax.f32 %v9047, %v8646
      %v9056 = vmax.f32 %v9048, %v8677
      %v9057 = vmax.f32 %v9049, %v8708
      %v9058 = vmax.f32 %v9050, %v8739
      %v9059 = vmax.f32 %v9051, %v8770
      %9060 = vst [vmem:[#allocation2] sm:$0xff] %v9052
      %9061 = vst [vmem:[#allocation2 + $0x8] sm:$0xff] %v9053
      %9062 = vst [vmem:[#allocation2 + $0x10] sm:$0xff] %v9054
      %9063 = vst [vmem:[#allocation2 + $0x18] sm:$0xff] %v9055
      %9064 = vst [vmem:[#allocation2 + $0x20] sm:$0xff] %v9056
      %9065 = vst [vmem:[#allocation2 + $0x28] sm:$0xff] %v9057
      %9066 = vst [vmem:[#allocation2 + $0x30] sm:$0xff] %v9058
      %9067 = vst [vmem:[#allocation2 + $0x38] sm:$0xff] %v9059
      %s9068 = scalar_lea.vmem [#allocation2], 64
      %v9069 = vld [vmem:[%s9068] sm:$0xff]
      %v9070 = vld [vmem:[%s9068 + $0x8] sm:$0xff]
      %v9071 = vld [vmem:[%s9068 + $0x10] sm:$0xff]
      %v9072 = vld [vmem:[%s9068 + $0x18] sm:$0xff]
      %v9073 = vld [vmem:[%s9068 + $0x20] sm:$0xff]
      %v9074 = vld [vmem:[%s9068 + $0x28] sm:$0xff]
      %v9075 = vld [vmem:[%s9068 + $0x30] sm:$0xff]
      %v9076 = vld [vmem:[%s9068 + $0x38] sm:$0xff]
      %v9077 = vmax.f32 %v9069, %v8801
      %v9078 = vmax.f32 %v9070, %v8832
      %v9079 = vmax.f32 %v9071, %v8863
      %v9080 = vmax.f32 %v9072, %v8894
      %v9081 = vmax.f32 %v9073, %v8925
      %v9082 = vmax.f32 %v9074, %v8956
      %v9083 = vmax.f32 %v9075, %v8987
      %v9084 = vmax.f32 %v9076, %v9018
      %9085 = vst [vmem:[%s9068] sm:$0xff] %v9077
      %9086 = vst [vmem:[%s9068 + $0x8] sm:$0xff] %v9078
      %9087 = vst [vmem:[%s9068 + $0x10] sm:$0xff] %v9079
      %9088 = vst [vmem:[%s9068 + $0x18] sm:$0xff] %v9080
      %9089 = vst [vmem:[%s9068 + $0x20] sm:$0xff] %v9081
      %9090 = vst [vmem:[%s9068 + $0x28] sm:$0xff] %v9082
      %9091 = vst [vmem:[%s9068 + $0x30] sm:$0xff] %v9083
      %9092 = vst [vmem:[%s9068 + $0x38] sm:$0xff] %v9084
    $region53: #{encoder_forward.1} parent=1 // pred_fallthru
      _
    // Predicated region
    $region54: #{encoder_forward.1} parent=1 // pred_check
      %p9093 = pneg %p9019
    $region55: #{encoder_forward.1} parent=1 // pred_check_branch
      %9095 = sbr.rel (%p9093) target = $region57
    $region56: #{encoder_forward.1} parent=1 // pred_region
      %v9096 = vld [vmem:[#allocation2] sm:$0xff]
      %v9097 = vld [vmem:[#allocation2 + $0x8] sm:$0xff]
      %v9098 = vld [vmem:[#allocation2 + $0x10] sm:$0xff]
      %v9099 = vld [vmem:[#allocation2 + $0x18] sm:$0xff]
      %v9100 = vld [vmem:[#allocation2 + $0x20] sm:$0xff]
      %v9101 = vld [vmem:[#allocation2 + $0x28] sm:$0xff]
      %v9102 = vld [vmem:[#allocation2 + $0x30] sm:$0xff]
      %v9103 = vld [vmem:[#allocation2 + $0x38] sm:$0xff]
      %v9104 = vld [vmem:[#allocation2 + $0x40] sm:$0xff]
      %v9105 = vld [vmem:[#allocation2 + $0x48] sm:$0xff]
      %v9106 = vld [vmem:[#allocation2 + $0x50] sm:$0xff]
      %v9107 = vld [vmem:[#allocation2 + $0x58] sm:$0xff]
      %v9108 = vld [vmem:[#allocation2 + $0x60] sm:$0xff]
      %v9109 = vld [vmem:[#allocation2 + $0x68] sm:$0xff]
      %v9110 = vld [vmem:[#allocation2 + $0x70] sm:$0xff]
      %v9111 = vld [vmem:[#allocation2 + $0x78] sm:$0xff]
      %v9112 = vrot.slane %v9096, 4
      %v9113 = vmax.f32 %v9096, %v9112
      %v9114 = vrot.slane %v9113, 2
      %v9115 = vmax.f32 %v9113, %v9114
      %v9116 = vrot.slane %v9115, 1
      %v9117 = vmax.f32 %v9115, %v9116
      %v9118 = vrot.slane %v9097, 4
      %v9119 = vmax.f32 %v9097, %v9118
      %v9120 = vrot.slane %v9119, 2
      %v9121 = vmax.f32 %v9119, %v9120
      %v9122 = vrot.slane %v9121, 1
      %v9123 = vmax.f32 %v9121, %v9122
      %v9124 = vrot.slane %v9098, 4
      %v9125 = vmax.f32 %v9098, %v9124
      %v9126 = vrot.slane %v9125, 2
      %v9127 = vmax.f32 %v9125, %v9126
      %v9128 = vrot.slane %v9127, 1
      %v9129 = vmax.f32 %v9127, %v9128
      %v9130 = vrot.slane %v9099, 4
      %v9131 = vmax.f32 %v9099, %v9130
      %v9132 = vrot.slane %v9131, 2
      %v9133 = vmax.f32 %v9131, %v9132
      %v9134 = vrot.slane %v9133, 1
      %v9135 = vmax.f32 %v9133, %v9134
      %v9136 = vrot.slane %v9100, 4
      %v9137 = vmax.f32 %v9100, %v9136
      %v9138 = vrot.slane %v9137, 2
      %v9139 = vmax.f32 %v9137, %v9138
      %v9140 = vrot.slane %v9139, 1
      %v9141 = vmax.f32 %v9139, %v9140
      %v9142 = vrot.slane %v9101, 4
      %v9143 = vmax.f32 %v9101, %v9142
      %v9144 = vrot.slane %v9143, 2
      %v9145 = vmax.f32 %v9143, %v9144
      %v9146 = vrot.slane %v9145, 1
      %v9147 = vmax.f32 %v9145, %v9146
      %v9148 = vrot.slane %v9102, 4
      %v9149 = vmax.f32 %v9102, %v9148
      %v9150 = vrot.slane %v9149, 2
      %v9151 = vmax.f32 %v9149, %v9150
      %v9152 = vrot.slane %v9151, 1
      %v9153 = vmax.f32 %v9151, %v9152
      %v9154 = vrot.slane %v9103, 4
      %v9155 = vmax.f32 %v9103, %v9154
      %v9156 = vrot.slane %v9155, 2
      %v9157 = vmax.f32 %v9155, %v9156
      %v9158 = vrot.slane %v9157, 1
      %v9159 = vmax.f32 %v9157, %v9158
      %v9160 = vrot.slane %v9104, 4
      %v9161 = vmax.f32 %v9104, %v9160
      %v9162 = vrot.slane %v9161, 2
      %v9163 = vmax.f32 %v9161, %v9162
      %v9164 = vrot.slane %v9163, 1
      %v9165 = vmax.f32 %v9163, %v9164
      %v9166 = vrot.slane %v9105, 4
      %v9167 = vmax.f32 %v9105, %v9166
      %v9168 = vrot.slane %v9167, 2
      %v9169 = vmax.f32 %v9167, %v9168
      %v9170 = vrot.slane %v9169, 1
      %v9171 = vmax.f32 %v9169, %v9170
      %v9172 = vrot.slane %v9106, 4
      %v9173 = vmax.f32 %v9106, %v9172
      %v9174 = vrot.slane %v9173, 2
      %v9175 = vmax.f32 %v9173, %v9174
      %v9176 = vrot.slane %v9175, 1
      %v9177 = vmax.f32 %v9175, %v9176
      %v9178 = vrot.slane %v9107, 4
      %v9179 = vmax.f32 %v9107, %v9178
      %v9180 = vrot.slane %v9179, 2
      %v9181 = vmax.f32 %v9179, %v9180
      %v9182 = vrot.slane %v9181, 1
      %v9183 = vmax.f32 %v9181, %v9182
      %v9184 = vrot.slane %v9108, 4
      %v9185 = vmax.f32 %v9108, %v9184
      %v9186 = vrot.slane %v9185, 2
      %v9187 = vmax.f32 %v9185, %v9186
      %v9188 = vrot.slane %v9187, 1
      %v9189 = vmax.f32 %v9187, %v9188
      %v9190 = vrot.slane %v9109, 4
      %v9191 = vmax.f32 %v9109, %v9190
      %v9192 = vrot.slane %v9191, 2
      %v9193 = vmax.f32 %v9191, %v9192
      %v9194 = vrot.slane %v9193, 1
      %v9195 = vmax.f32 %v9193, %v9194
      %v9196 = vrot.slane %v9110, 4
      %v9197 = vmax.f32 %v9110, %v9196
      %v9198 = vrot.slane %v9197, 2
      %v9199 = vmax.f32 %v9197, %v9198
      %v9200 = vrot.slane %v9199, 1
      %v9201 = vmax.f32 %v9199, %v9200
      %v9202 = vrot.slane %v9111, 4
      %v9203 = vmax.f32 %v9111, %v9202
      %v9204 = vrot.slane %v9203, 2
      %v9205 = vmax.f32 %v9203, %v9204
      %v9206 = vrot.slane %v9205, 1
      %v9207 = vmax.f32 %v9205, %v9206
      %v9208 = vpack.c.bf16 %v9117, %v9117
      %v9209 = vpack.c.bf16 %v9123, %v9123
      %v9210 = vpack.c.bf16 %v9129, %v9129
      %v9211 = vpack.c.bf16 %v9135, %v9135
      %v9212 = vpack.c.bf16 %v9141, %v9141
      %v9213 = vpack.c.bf16 %v9147, %v9147
      %v9214 = vpack.c.bf16 %v9153, %v9153
      %v9215 = vpack.c.bf16 %v9159, %v9159
      %v9216 = vpack.c.bf16 %v9165, %v9165
      %v9217 = vpack.c.bf16 %v9171, %v9171
      %v9218 = vpack.c.bf16 %v9177, %v9177
      %v9219 = vpack.c.bf16 %v9183, %v9183
      %v9220 = vpack.c.bf16 %v9189, %v9189
      %v9221 = vpack.c.bf16 %v9195, %v9195
      %v9222 = vpack.c.bf16 %v9201, %v9201
      %v9223 = vpack.c.bf16 %v9207, %v9207
      %v9224 = vld [vmem:[#allocation3] sm:$0xff]
      %v9225 = vld [vmem:[#allocation3 + $0x8] sm:$0xff]
      %v9226 = vld [vmem:[#allocation3 + $0x10] sm:$0xff]
      %v9227 = vld [vmem:[#allocation3 + $0x18] sm:$0xff]
      %v9228 = vld [vmem:[#allocation3 + $0x20] sm:$0xff]
      %v9229 = vld [vmem:[#allocation3 + $0x28] sm:$0xff]
      %v9230 = vld [vmem:[#allocation3 + $0x30] sm:$0xff]
      %v9231 = vld [vmem:[#allocation3 + $0x38] sm:$0xff]
      %v9232 = vld [vmem:[#allocation3 + $0x40] sm:$0xff]
      %v9233 = vld [vmem:[#allocation3 + $0x48] sm:$0xff]
      %v9234 = vld [vmem:[#allocation3 + $0x50] sm:$0xff]
      %v9235 = vld [vmem:[#allocation3 + $0x58] sm:$0xff]
      %v9236 = vld [vmem:[#allocation3 + $0x60] sm:$0xff]
      %v9237 = vld [vmem:[#allocation3 + $0x68] sm:$0xff]
      %v9238 = vld [vmem:[#allocation3 + $0x70] sm:$0xff]
      %v9239 = vld [vmem:[#allocation3 + $0x78] sm:$0xff]
      %v9240 = vld [vmem:[#allocation3 + $0x80] sm:$0xff]
      %v9241 = vld [vmem:[#allocation3 + $0x88] sm:$0xff]
      %v9242 = vld [vmem:[#allocation3 + $0x90] sm:$0xff]
      %v9243 = vld [vmem:[#allocation3 + $0x98] sm:$0xff]
      %v9244 = vld [vmem:[#allocation3 + $0xa0] sm:$0xff]
      %v9245 = vld [vmem:[#allocation3 + $0xa8] sm:$0xff]
      %v9246 = vld [vmem:[#allocation3 + $0xb0] sm:$0xff]
      %v9247 = vld [vmem:[#allocation3 + $0xb8] sm:$0xff]
      %v9248 = vld [vmem:[#allocation3 + $0xc0] sm:$0xff]
      %v9249 = vld [vmem:[#allocation3 + $0xc8] sm:$0xff]
      %v9250 = vld [vmem:[#allocation3 + $0xd0] sm:$0xff]
      %v9251 = vld [vmem:[#allocation3 + $0xd8] sm:$0xff]
      %v9252 = vld [vmem:[#allocation3 + $0xe0] sm:$0xff]
      %v9253 = vld [vmem:[#allocation3 + $0xe8] sm:$0xff]
      %v9254 = vld [vmem:[#allocation3 + $0xf0] sm:$0xff]
      %v9255 = vld [vmem:[#allocation3 + $0xf8] sm:$0xff]
      %v9256 = vld [vmem:[#allocation3 + $0x100] sm:$0xff]
      %v9257 = vld [vmem:[#allocation3 + $0x108] sm:$0xff]
      %v9258 = vld [vmem:[#allocation3 + $0x110] sm:$0xff]
      %v9259 = vld [vmem:[#allocation3 + $0x118] sm:$0xff]
      %v9260 = vld [vmem:[#allocation3 + $0x120] sm:$0xff]
      %v9261 = vld [vmem:[#allocation3 + $0x128] sm:$0xff]
      %v9262 = vld [vmem:[#allocation3 + $0x130] sm:$0xff]
      %v9263 = vld [vmem:[#allocation3 + $0x138] sm:$0xff]
      %v9264 = vld [vmem:[#allocation3 + $0x140] sm:$0xff]
      %v9265 = vld [vmem:[#allocation3 + $0x148] sm:$0xff]
      %v9266 = vld [vmem:[#allocation3 + $0x150] sm:$0xff]
      %v9267 = vld [vmem:[#allocation3 + $0x158] sm:$0xff]
      %v9268 = vld [vmem:[#allocation3 + $0x160] sm:$0xff]
      %v9269 = vld [vmem:[#allocation3 + $0x168] sm:$0xff]
      %v9270 = vld [vmem:[#allocation3 + $0x170] sm:$0xff]
      %v9271 = vld [vmem:[#allocation3 + $0x178] sm:$0xff]
      %v9272 = vld [vmem:[#allocation3 + $0x180] sm:$0xff]
      %v9273 = vld [vmem:[#allocation3 + $0x188] sm:$0xff]
      %v9274 = vld [vmem:[#allocation3 + $0x190] sm:$0xff]
      %v9275 = vld [vmem:[#allocation3 + $0x198] sm:$0xff]
      %v9276 = vld [vmem:[#allocation3 + $0x1a0] sm:$0xff]
      %v9277 = vld [vmem:[#allocation3 + $0x1a8] sm:$0xff]
      %v9278 = vld [vmem:[#allocation3 + $0x1b0] sm:$0xff]
      %v9279 = vld [vmem:[#allocation3 + $0x1b8] sm:$0xff]
      %v9280 = vld [vmem:[#allocation3 + $0x1c0] sm:$0xff]
      %v9281 = vld [vmem:[#allocation3 + $0x1c8] sm:$0xff]
      %v9282 = vld [vmem:[#allocation3 + $0x1d0] sm:$0xff]
      %v9283 = vld [vmem:[#allocation3 + $0x1d8] sm:$0xff]
      %v9284 = vld [vmem:[#allocation3 + $0x1e0] sm:$0xff]
      %v9285 = vld [vmem:[#allocation3 + $0x1e8] sm:$0xff]
      %v9286 = vld [vmem:[#allocation3 + $0x1f0] sm:$0xff]
      %v9287 = vld [vmem:[#allocation3 + $0x1f8] sm:$0xff]
      %v9288 = vld [vmem:[#allocation3 + $0x200] sm:$0xff]
      %v9289 = vld [vmem:[#allocation3 + $0x208] sm:$0xff]
      %v9290 = vld [vmem:[#allocation3 + $0x210] sm:$0xff]
      %v9291 = vld [vmem:[#allocation3 + $0x218] sm:$0xff]
      %v9292 = vld [vmem:[#allocation3 + $0x220] sm:$0xff]
      %v9293 = vld [vmem:[#allocation3 + $0x228] sm:$0xff]
      %v9294 = vld [vmem:[#allocation3 + $0x230] sm:$0xff]
      %v9295 = vld [vmem:[#allocation3 + $0x238] sm:$0xff]
      %v9296 = vld [vmem:[#allocation3 + $0x240] sm:$0xff]
      %v9297 = vld [vmem:[#allocation3 + $0x248] sm:$0xff]
      %v9298 = vld [vmem:[#allocation3 + $0x250] sm:$0xff]
      %v9299 = vld [vmem:[#allocation3 + $0x258] sm:$0xff]
      %v9300 = vld [vmem:[#allocation3 + $0x260] sm:$0xff]
      %v9301 = vld [vmem:[#allocation3 + $0x268] sm:$0xff]
      %v9302 = vld [vmem:[#allocation3 + $0x270] sm:$0xff]
      %v9303 = vld [vmem:[#allocation3 + $0x278] sm:$0xff]
      %v9304 = vld [vmem:[#allocation3 + $0x280] sm:$0xff]
      %v9305 = vld [vmem:[#allocation3 + $0x288] sm:$0xff]
      %v9306 = vld [vmem:[#allocation3 + $0x290] sm:$0xff]
      %v9307 = vld [vmem:[#allocation3 + $0x298] sm:$0xff]
      %v9308 = vld [vmem:[#allocation3 + $0x2a0] sm:$0xff]
      %v9309 = vld [vmem:[#allocation3 + $0x2a8] sm:$0xff]
      %v9310 = vld [vmem:[#allocation3 + $0x2b0] sm:$0xff]
      %v9311 = vld [vmem:[#allocation3 + $0x2b8] sm:$0xff]
      %v9312 = vld [vmem:[#allocation3 + $0x2c0] sm:$0xff]
      %v9313 = vld [vmem:[#allocation3 + $0x2c8] sm:$0xff]
      %v9314 = vld [vmem:[#allocation3 + $0x2d0] sm:$0xff]
      %v9315 = vld [vmem:[#allocation3 + $0x2d8] sm:$0xff]
      %v9316 = vld [vmem:[#allocation3 + $0x2e0] sm:$0xff]
      %v9317 = vld [vmem:[#allocation3 + $0x2e8] sm:$0xff]
      %v9318 = vld [vmem:[#allocation3 + $0x2f0] sm:$0xff]
      %v9319 = vld [vmem:[#allocation3 + $0x2f8] sm:$0xff]
      %v9320 = vld [vmem:[#allocation3 + $0x300] sm:$0xff]
      %v9321 = vld [vmem:[#allocation3 + $0x308] sm:$0xff]
      %v9322 = vld [vmem:[#allocation3 + $0x310] sm:$0xff]
      %v9323 = vld [vmem:[#allocation3 + $0x318] sm:$0xff]
      %v9324 = vld [vmem:[#allocation3 + $0x320] sm:$0xff]
      %v9325 = vld [vmem:[#allocation3 + $0x328] sm:$0xff]
      %v9326 = vld [vmem:[#allocation3 + $0x330] sm:$0xff]
      %v9327 = vld [vmem:[#allocation3 + $0x338] sm:$0xff]
      %v9328 = vld [vmem:[#allocation3 + $0x340] sm:$0xff]
      %v9329 = vld [vmem:[#allocation3 + $0x348] sm:$0xff]
      %v9330 = vld [vmem:[#allocation3 + $0x350] sm:$0xff]
      %v9331 = vld [vmem:[#allocation3 + $0x358] sm:$0xff]
      %v9332 = vld [vmem:[#allocation3 + $0x360] sm:$0xff]
      %v9333 = vld [vmem:[#allocation3 + $0x368] sm:$0xff]
      %v9334 = vld [vmem:[#allocation3 + $0x370] sm:$0xff]
      %v9335 = vld [vmem:[#allocation3 + $0x378] sm:$0xff]
      %v9336 = vld [vmem:[#allocation3 + $0x380] sm:$0xff]
      %v9337 = vld [vmem:[#allocation3 + $0x388] sm:$0xff]
      %v9338 = vld [vmem:[#allocation3 + $0x390] sm:$0xff]
      %v9339 = vld [vmem:[#allocation3 + $0x398] sm:$0xff]
      %v9340 = vld [vmem:[#allocation3 + $0x3a0] sm:$0xff]
      %v9341 = vld [vmem:[#allocation3 + $0x3a8] sm:$0xff]
      %v9342 = vld [vmem:[#allocation3 + $0x3b0] sm:$0xff]
      %v9343 = vld [vmem:[#allocation3 + $0x3b8] sm:$0xff]
      %v9344 = vld [vmem:[#allocation3 + $0x3c0] sm:$0xff]
      %v9345 = vld [vmem:[#allocation3 + $0x3c8] sm:$0xff]
      %v9346 = vld [vmem:[#allocation3 + $0x3d0] sm:$0xff]
      %v9347 = vld [vmem:[#allocation3 + $0x3d8] sm:$0xff]
      %v9348 = vld [vmem:[#allocation3 + $0x3e0] sm:$0xff]
      %v9349 = vld [vmem:[#allocation3 + $0x3e8] sm:$0xff]
      %v9350 = vld [vmem:[#allocation3 + $0x3f0] sm:$0xff]
      %v9351 = vld [vmem:[#allocation3 + $0x3f8] sm:$0xff]
      %v9352 = vld [vmem:[#allocation3 + $0x400] sm:$0xff]
      %v9353 = vld [vmem:[#allocation3 + $0x408] sm:$0xff]
      %v9354 = vld [vmem:[#allocation3 + $0x410] sm:$0xff]
      %v9355 = vld [vmem:[#allocation3 + $0x418] sm:$0xff]
      %v9356 = vld [vmem:[#allocation3 + $0x420] sm:$0xff]
      %v9357 = vld [vmem:[#allocation3 + $0x428] sm:$0xff]
      %v9358 = vld [vmem:[#allocation3 + $0x430] sm:$0xff]
      %v9359 = vld [vmem:[#allocation3 + $0x438] sm:$0xff]
      %v9360 = vld [vmem:[#allocation3 + $0x440] sm:$0xff]
      %v9361 = vld [vmem:[#allocation3 + $0x448] sm:$0xff]
      %v9362 = vld [vmem:[#allocation3 + $0x450] sm:$0xff]
      %v9363 = vld [vmem:[#allocation3 + $0x458] sm:$0xff]
      %v9364 = vld [vmem:[#allocation3 + $0x460] sm:$0xff]
      %v9365 = vld [vmem:[#allocation3 + $0x468] sm:$0xff]
      %v9366 = vld [vmem:[#allocation3 + $0x470] sm:$0xff]
      %v9367 = vld [vmem:[#allocation3 + $0x478] sm:$0xff]
      %v9368 = vld [vmem:[#allocation3 + $0x480] sm:$0xff]
      %v9369 = vld [vmem:[#allocation3 + $0x488] sm:$0xff]
      %v9370 = vld [vmem:[#allocation3 + $0x490] sm:$0xff]
      %v9371 = vld [vmem:[#allocation3 + $0x498] sm:$0xff]
      %v9372 = vld [vmem:[#allocation3 + $0x4a0] sm:$0xff]
      %v9373 = vld [vmem:[#allocation3 + $0x4a8] sm:$0xff]
      %v9374 = vld [vmem:[#allocation3 + $0x4b0] sm:$0xff]
      %v9375 = vld [vmem:[#allocation3 + $0x4b8] sm:$0xff]
      %v9376 = vld [vmem:[#allocation3 + $0x4c0] sm:$0xff]
      %v9377 = vld [vmem:[#allocation3 + $0x4c8] sm:$0xff]
      %v9378 = vld [vmem:[#allocation3 + $0x4d0] sm:$0xff]
      %v9379 = vld [vmem:[#allocation3 + $0x4d8] sm:$0xff]
      %v9380 = vld [vmem:[#allocation3 + $0x4e0] sm:$0xff]
      %v9381 = vld [vmem:[#allocation3 + $0x4e8] sm:$0xff]
      %v9382 = vld [vmem:[#allocation3 + $0x4f0] sm:$0xff]
      %v9383 = vld [vmem:[#allocation3 + $0x4f8] sm:$0xff]
      %v9384 = vld [vmem:[#allocation3 + $0x500] sm:$0xff]
      %v9385 = vld [vmem:[#allocation3 + $0x508] sm:$0xff]
      %v9386 = vld [vmem:[#allocation3 + $0x510] sm:$0xff]
      %v9387 = vld [vmem:[#allocation3 + $0x518] sm:$0xff]
      %v9388 = vld [vmem:[#allocation3 + $0x520] sm:$0xff]
      %v9389 = vld [vmem:[#allocation3 + $0x528] sm:$0xff]
      %v9390 = vld [vmem:[#allocation3 + $0x530] sm:$0xff]
      %v9391 = vld [vmem:[#allocation3 + $0x538] sm:$0xff]
      %v9392 = vld [vmem:[#allocation3 + $0x540] sm:$0xff]
      %v9393 = vld [vmem:[#allocation3 + $0x548] sm:$0xff]
      %v9394 = vld [vmem:[#allocation3 + $0x550] sm:$0xff]
      %v9395 = vld [vmem:[#allocation3 + $0x558] sm:$0xff]
      %v9396 = vld [vmem:[#allocation3 + $0x560] sm:$0xff]
      %v9397 = vld [vmem:[#allocation3 + $0x568] sm:$0xff]
      %v9398 = vld [vmem:[#allocation3 + $0x570] sm:$0xff]
      %v9399 = vld [vmem:[#allocation3 + $0x578] sm:$0xff]
      %v9400 = vld [vmem:[#allocation3 + $0x580] sm:$0xff]
      %v9401 = vld [vmem:[#allocation3 + $0x588] sm:$0xff]
      %v9402 = vld [vmem:[#allocation3 + $0x590] sm:$0xff]
      %v9403 = vld [vmem:[#allocation3 + $0x598] sm:$0xff]
      %v9404 = vld [vmem:[#allocation3 + $0x5a0] sm:$0xff]
      %v9405 = vld [vmem:[#allocation3 + $0x5a8] sm:$0xff]
      %v9406 = vld [vmem:[#allocation3 + $0x5b0] sm:$0xff]
      %v9407 = vld [vmem:[#allocation3 + $0x5b8] sm:$0xff]
      %v9408 = vld [vmem:[#allocation3 + $0x5c0] sm:$0xff]
      %v9409 = vld [vmem:[#allocation3 + $0x5c8] sm:$0xff]
      %v9410 = vld [vmem:[#allocation3 + $0x5d0] sm:$0xff]
      %v9411 = vld [vmem:[#allocation3 + $0x5d8] sm:$0xff]
      %v9412 = vld [vmem:[#allocation3 + $0x5e0] sm:$0xff]
      %v9413 = vld [vmem:[#allocation3 + $0x5e8] sm:$0xff]
      %v9414 = vld [vmem:[#allocation3 + $0x5f0] sm:$0xff]
      %v9415 = vld [vmem:[#allocation3 + $0x5f8] sm:$0xff]
      %v9416 = vld [vmem:[#allocation3 + $0x600] sm:$0xff]
      %v9417 = vld [vmem:[#allocation3 + $0x608] sm:$0xff]
      %v9418 = vld [vmem:[#allocation3 + $0x610] sm:$0xff]
      %v9419 = vld [vmem:[#allocation3 + $0x618] sm:$0xff]
      %v9420 = vld [vmem:[#allocation3 + $0x620] sm:$0xff]
      %v9421 = vld [vmem:[#allocation3 + $0x628] sm:$0xff]
      %v9422 = vld [vmem:[#allocation3 + $0x630] sm:$0xff]
      %v9423 = vld [vmem:[#allocation3 + $0x638] sm:$0xff]
      %v9424 = vld [vmem:[#allocation3 + $0x640] sm:$0xff]
      %v9425 = vld [vmem:[#allocation3 + $0x648] sm:$0xff]
      %v9426 = vld [vmem:[#allocation3 + $0x650] sm:$0xff]
      %v9427 = vld [vmem:[#allocation3 + $0x658] sm:$0xff]
      %v9428 = vld [vmem:[#allocation3 + $0x660] sm:$0xff]
      %v9429 = vld [vmem:[#allocation3 + $0x668] sm:$0xff]
      %v9430 = vld [vmem:[#allocation3 + $0x670] sm:$0xff]
      %v9431 = vld [vmem:[#allocation3 + $0x678] sm:$0xff]
      %v9432 = vld [vmem:[#allocation3 + $0x680] sm:$0xff]
      %v9433 = vld [vmem:[#allocation3 + $0x688] sm:$0xff]
      %v9434 = vld [vmem:[#allocation3 + $0x690] sm:$0xff]
      %v9435 = vld [vmem:[#allocation3 + $0x698] sm:$0xff]
      %v9436 = vld [vmem:[#allocation3 + $0x6a0] sm:$0xff]
      %v9437 = vld [vmem:[#allocation3 + $0x6a8] sm:$0xff]
      %v9438 = vld [vmem:[#allocation3 + $0x6b0] sm:$0xff]
      %v9439 = vld [vmem:[#allocation3 + $0x6b8] sm:$0xff]
      %v9440 = vld [vmem:[#allocation3 + $0x6c0] sm:$0xff]
      %v9441 = vld [vmem:[#allocation3 + $0x6c8] sm:$0xff]
      %v9442 = vld [vmem:[#allocation3 + $0x6d0] sm:$0xff]
      %v9443 = vld [vmem:[#allocation3 + $0x6d8] sm:$0xff]
      %v9444 = vld [vmem:[#allocation3 + $0x6e0] sm:$0xff]
      %v9445 = vld [vmem:[#allocation3 + $0x6e8] sm:$0xff]
      %v9446 = vld [vmem:[#allocation3 + $0x6f0] sm:$0xff]
      %v9447 = vld [vmem:[#allocation3 + $0x6f8] sm:$0xff]
      %v9448 = vld [vmem:[#allocation3 + $0x700] sm:$0xff]
      %v9449 = vld [vmem:[#allocation3 + $0x708] sm:$0xff]
      %v9450 = vld [vmem:[#allocation3 + $0x710] sm:$0xff]
      %v9451 = vld [vmem:[#allocation3 + $0x718] sm:$0xff]
      %v9452 = vld [vmem:[#allocation3 + $0x720] sm:$0xff]
      %v9453 = vld [vmem:[#allocation3 + $0x728] sm:$0xff]
      %v9454 = vld [vmem:[#allocation3 + $0x730] sm:$0xff]
      %v9455 = vld [vmem:[#allocation3 + $0x738] sm:$0xff]
      %v9456 = vld [vmem:[#allocation3 + $0x740] sm:$0xff]
      %v9457 = vld [vmem:[#allocation3 + $0x748] sm:$0xff]
      %v9458 = vld [vmem:[#allocation3 + $0x750] sm:$0xff]
      %v9459 = vld [vmem:[#allocation3 + $0x758] sm:$0xff]
      %v9460 = vld [vmem:[#allocation3 + $0x760] sm:$0xff]
      %v9461 = vld [vmem:[#allocation3 + $0x768] sm:$0xff]
      %v9462 = vld [vmem:[#allocation3 + $0x770] sm:$0xff]
      %v9463 = vld [vmem:[#allocation3 + $0x778] sm:$0xff]
      %v9464 = vld [vmem:[#allocation3 + $0x780] sm:$0xff]
      %v9465 = vld [vmem:[#allocation3 + $0x788] sm:$0xff]
      %v9466 = vld [vmem:[#allocation3 + $0x790] sm:$0xff]
      %v9467 = vld [vmem:[#allocation3 + $0x798] sm:$0xff]
      %v9468 = vld [vmem:[#allocation3 + $0x7a0] sm:$0xff]
      %v9469 = vld [vmem:[#allocation3 + $0x7a8] sm:$0xff]
      %v9470 = vld [vmem:[#allocation3 + $0x7b0] sm:$0xff]
      %v9471 = vld [vmem:[#allocation3 + $0x7b8] sm:$0xff]
      %v9472 = vld [vmem:[#allocation3 + $0x7c0] sm:$0xff]
      %v9473 = vld [vmem:[#allocation3 + $0x7c8] sm:$0xff]
      %v9474 = vld [vmem:[#allocation3 + $0x7d0] sm:$0xff]
      %v9475 = vld [vmem:[#allocation3 + $0x7d8] sm:$0xff]
      %v9476 = vld [vmem:[#allocation3 + $0x7e0] sm:$0xff]
      %v9477 = vld [vmem:[#allocation3 + $0x7e8] sm:$0xff]
      %v9478 = vld [vmem:[#allocation3 + $0x7f0] sm:$0xff]
      %v9479 = vld [vmem:[#allocation3 + $0x7f8] sm:$0xff]
      %v9480 = vld [vmem:[%s8 + $0x10] sm:$0xf]
      %v9482 = vlaneseq
      %v9483 = vshrl.u32 %v9482, 7
      %v9484 = vsub.s32 0, %v9483
      %v9485 = vrot.slane %v9480, %v9484
      %v9486 = vlaneseq
      %v9487 = vshrl.u32 %v9486, 7
      %v9488 = vsub.s32 1, %v9487
      %v9489 = vrot.slane %v9480, %v9488
      %v9490 = vlaneseq
      %v9491 = vshrl.u32 %v9490, 7
      %v9492 = vsub.s32 2, %v9491
      %v9493 = vrot.slane %v9480, %v9492
      %v9494 = vlaneseq
      %v9495 = vshrl.u32 %v9494, 7
      %v9496 = vsub.s32 3, %v9495
      %v9497 = vrot.slane %v9480, %v9496
      %v9518 = vunpack.c.l.b16 %v9208
      %v9519 = vunpack.c.l.b16 %v9209
      %v9520 = vunpack.c.l.b16 %v9210
      %v9521 = vunpack.c.l.b16 %v9211
      %v9522 = vunpack.c.l.b16 %v9212
      %v9523 = vunpack.c.l.b16 %v9213
      %v9524 = vunpack.c.l.b16 %v9214
      %v9525 = vunpack.c.l.b16 %v9215
      %v9526 = vunpack.c.l.b16 %v9216
      %v9527 = vunpack.c.l.b16 %v9217
      %v9528 = vunpack.c.l.b16 %v9218
      %v9529 = vunpack.c.l.b16 %v9219
      %v9530 = vunpack.c.l.b16 %v9220
      %v9531 = vunpack.c.l.b16 %v9221
      %v9532 = vunpack.c.l.b16 %v9222
      %v9533 = vunpack.c.l.b16 %v9223
      %vm9534 = vcmask 1041409
      %v9535 = vsel %vm9534, %v9526, %v9518
      %v9536 = vsel %vm9534, %v9527, %v9519
      %v9537 = vsel %vm9534, %v9528, %v9520
      %v9538 = vsel %vm9534, %v9529, %v9521
      %v9539 = vsel %vm9534, %v9530, %v9522
      %v9540 = vsel %vm9534, %v9531, %v9523
      %v9541 = vsel %vm9534, %v9532, %v9524
      %v9542 = vsel %vm9534, %v9533, %v9525
      %v9543 = vpack.c.b16 %v9535, %v9535
      %v9544 = vpack.c.b16 %v9536, %v9536
      %v9545 = vpack.c.b16 %v9537, %v9537
      %v9546 = vpack.c.b16 %v9538, %v9538
      %v9547 = vpack.c.b16 %v9539, %v9539
      %v9548 = vpack.c.b16 %v9540, %v9540
      %v9549 = vpack.c.b16 %v9541, %v9541
      %v9550 = vpack.c.b16 %v9542, %v9542
      %v9815 = vunpack.c.l.b16 %v9224
      %v9816 = vunpack.c.h.b16 %v9224
      %v9817 = vunpack.c.l.b16 %v9225
      %v9818 = vunpack.c.h.b16 %v9225
      %v9819 = vunpack.c.l.b16 %v9226
      %v9820 = vunpack.c.h.b16 %v9226
      %v9821 = vunpack.c.l.b16 %v9227
      %v9822 = vunpack.c.h.b16 %v9227
      %v9823 = vunpack.c.l.b16 %v9228
      %v9824 = vunpack.c.h.b16 %v9228
      %v9825 = vunpack.c.l.b16 %v9229
      %v9826 = vunpack.c.h.b16 %v9229
      %v9827 = vunpack.c.l.b16 %v9230
      %v9828 = vunpack.c.h.b16 %v9230
      %v9829 = vunpack.c.l.b16 %v9231
      %v9830 = vunpack.c.h.b16 %v9231
      %v9831 = vunpack.c.l.b16 %v9232
      %v9832 = vunpack.c.h.b16 %v9232
      %v9833 = vunpack.c.l.b16 %v9233
      %v9834 = vunpack.c.h.b16 %v9233
      %v9835 = vunpack.c.l.b16 %v9234
      %v9836 = vunpack.c.h.b16 %v9234
      %v9837 = vunpack.c.l.b16 %v9235
      %v9838 = vunpack.c.h.b16 %v9235
      %v9839 = vunpack.c.l.b16 %v9236
      %v9840 = vunpack.c.h.b16 %v9236
      %v9841 = vunpack.c.l.b16 %v9237
      %v9842 = vunpack.c.h.b16 %v9237
      %v9843 = vunpack.c.l.b16 %v9238
      %v9844 = vunpack.c.h.b16 %v9238
      %v9845 = vunpack.c.l.b16 %v9239
      %v9846 = vunpack.c.h.b16 %v9239
      %v9847 = vunpack.c.l.b16 %v9240
      %v9848 = vunpack.c.h.b16 %v9240
      %v9849 = vunpack.c.l.b16 %v9241
      %v9850 = vunpack.c.h.b16 %v9241
      %v9851 = vunpack.c.l.b16 %v9242
      %v9852 = vunpack.c.h.b16 %v9242
      %v9853 = vunpack.c.l.b16 %v9243
      %v9854 = vunpack.c.h.b16 %v9243
      %v9855 = vunpack.c.l.b16 %v9244
      %v9856 = vunpack.c.h.b16 %v9244
      %v9857 = vunpack.c.l.b16 %v9245
      %v9858 = vunpack.c.h.b16 %v9245
      %v9859 = vunpack.c.l.b16 %v9246
      %v9860 = vunpack.c.h.b16 %v9246
      %v9861 = vunpack.c.l.b16 %v9247
      %v9862 = vunpack.c.h.b16 %v9247
      %v9863 = vunpack.c.l.b16 %v9248
      %v9864 = vunpack.c.h.b16 %v9248
      %v9865 = vunpack.c.l.b16 %v9249
      %v9866 = vunpack.c.h.b16 %v9249
      %v9867 = vunpack.c.l.b16 %v9250
      %v9868 = vunpack.c.h.b16 %v9250
      %v9869 = vunpack.c.l.b16 %v9251
      %v9870 = vunpack.c.h.b16 %v9251
      %v9871 = vunpack.c.l.b16 %v9252
      %v9872 = vunpack.c.h.b16 %v9252
      %v9873 = vunpack.c.l.b16 %v9253
      %v9874 = vunpack.c.h.b16 %v9253
      %v9875 = vunpack.c.l.b16 %v9254
      %v9876 = vunpack.c.h.b16 %v9254
      %v9877 = vunpack.c.l.b16 %v9255
      %v9878 = vunpack.c.h.b16 %v9255
      %v9879 = vunpack.c.l.b16 %v9256
      %v9880 = vunpack.c.h.b16 %v9256
      %v9881 = vunpack.c.l.b16 %v9257
      %v9882 = vunpack.c.h.b16 %v9257
      %v9883 = vunpack.c.l.b16 %v9258
      %v9884 = vunpack.c.h.b16 %v9258
      %v9885 = vunpack.c.l.b16 %v9259
      %v9886 = vunpack.c.h.b16 %v9259
      %v9887 = vunpack.c.l.b16 %v9260
      %v9888 = vunpack.c.h.b16 %v9260
      %v9889 = vunpack.c.l.b16 %v9261
      %v9890 = vunpack.c.h.b16 %v9261
      %v9891 = vunpack.c.l.b16 %v9262
      %v9892 = vunpack.c.h.b16 %v9262
      %v9893 = vunpack.c.l.b16 %v9263
      %v9894 = vunpack.c.h.b16 %v9263
      %v9895 = vunpack.c.l.b16 %v9264
      %v9896 = vunpack.c.h.b16 %v9264
      %v9897 = vunpack.c.l.b16 %v9265
      %v9898 = vunpack.c.h.b16 %v9265
      %v9899 = vunpack.c.l.b16 %v9266
      %v9900 = vunpack.c.h.b16 %v9266
      %v9901 = vunpack.c.l.b16 %v9267
      %v9902 = vunpack.c.h.b16 %v9267
      %v9903 = vunpack.c.l.b16 %v9268
      %v9904 = vunpack.c.h.b16 %v9268
      %v9905 = vunpack.c.l.b16 %v9269
      %v9906 = vunpack.c.h.b16 %v9269
      %v9907 = vunpack.c.l.b16 %v9270
      %v9908 = vunpack.c.h.b16 %v9270
      %v9909 = vunpack.c.l.b16 %v9271
      %v9910 = vunpack.c.h.b16 %v9271
      %v9911 = vunpack.c.l.b16 %v9272
      %v9912 = vunpack.c.h.b16 %v9272
      %v9913 = vunpack.c.l.b16 %v9273
      %v9914 = vunpack.c.h.b16 %v9273
      %v9915 = vunpack.c.l.b16 %v9274
      %v9916 = vunpack.c.h.b16 %v9274
      %v9917 = vunpack.c.l.b16 %v9275
      %v9918 = vunpack.c.h.b16 %v9275
      %v9919 = vunpack.c.l.b16 %v9276
      %v9920 = vunpack.c.h.b16 %v9276
      %v9921 = vunpack.c.l.b16 %v9277
      %v9922 = vunpack.c.h.b16 %v9277
      %v9923 = vunpack.c.l.b16 %v9278
      %v9924 = vunpack.c.h.b16 %v9278
      %v9925 = vunpack.c.l.b16 %v9279
      %v9926 = vunpack.c.h.b16 %v9279
      %v9927 = vunpack.c.l.b16 %v9280
      %v9928 = vunpack.c.h.b16 %v9280
      %v9929 = vunpack.c.l.b16 %v9281
      %v9930 = vunpack.c.h.b16 %v9281
      %v9931 = vunpack.c.l.b16 %v9282
      %v9932 = vunpack.c.h.b16 %v9282
      %v9933 = vunpack.c.l.b16 %v9283
      %v9934 = vunpack.c.h.b16 %v9283
      %v9935 = vunpack.c.l.b16 %v9284
      %v9936 = vunpack.c.h.b16 %v9284
      %v9937 = vunpack.c.l.b16 %v9285
      %v9938 = vunpack.c.h.b16 %v9285
      %v9939 = vunpack.c.l.b16 %v9286
      %v9940 = vunpack.c.h.b16 %v9286
      %v9941 = vunpack.c.l.b16 %v9287
      %v9942 = vunpack.c.h.b16 %v9287
      %v9943 = vunpack.c.l.b16 %v9288
      %v9944 = vunpack.c.h.b16 %v9288
      %v9945 = vunpack.c.l.b16 %v9289
      %v9946 = vunpack.c.h.b16 %v9289
      %v9947 = vunpack.c.l.b16 %v9290
      %v9948 = vunpack.c.h.b16 %v9290
      %v9949 = vunpack.c.l.b16 %v9291
      %v9950 = vunpack.c.h.b16 %v9291
      %v9951 = vunpack.c.l.b16 %v9292
      %v9952 = vunpack.c.h.b16 %v9292
      %v9953 = vunpack.c.l.b16 %v9293
      %v9954 = vunpack.c.h.b16 %v9293
      %v9955 = vunpack.c.l.b16 %v9294
      %v9956 = vunpack.c.h.b16 %v9294
      %v9957 = vunpack.c.l.b16 %v9295
      %v9958 = vunpack.c.h.b16 %v9295
      %v9959 = vunpack.c.l.b16 %v9296
      %v9960 = vunpack.c.h.b16 %v9296
      %v9961 = vunpack.c.l.b16 %v9297
      %v9962 = vunpack.c.h.b16 %v9297
      %v9963 = vunpack.c.l.b16 %v9298
      %v9964 = vunpack.c.h.b16 %v9298
      %v9965 = vunpack.c.l.b16 %v9299
      %v9966 = vunpack.c.h.b16 %v9299
      %v9967 = vunpack.c.l.b16 %v9300
      %v9968 = vunpack.c.h.b16 %v9300
      %v9969 = vunpack.c.l.b16 %v9301
      %v9970 = vunpack.c.h.b16 %v9301
      %v9971 = vunpack.c.l.b16 %v9302
      %v9972 = vunpack.c.h.b16 %v9302
      %v9973 = vunpack.c.l.b16 %v9303
      %v9974 = vunpack.c.h.b16 %v9303
      %v9975 = vunpack.c.l.b16 %v9304
      %v9976 = vunpack.c.h.b16 %v9304
      %v9977 = vunpack.c.l.b16 %v9305
      %v9978 = vunpack.c.h.b16 %v9305
      %v9979 = vunpack.c.l.b16 %v9306
      %v9980 = vunpack.c.h.b16 %v9306
      %v9981 = vunpack.c.l.b16 %v9307
      %v9982 = vunpack.c.h.b16 %v9307
      %v9983 = vunpack.c.l.b16 %v9308
      %v9984 = vunpack.c.h.b16 %v9308
      %v9985 = vunpack.c.l.b16 %v9309
      %v9986 = vunpack.c.h.b16 %v9309
      %v9987 = vunpack.c.l.b16 %v9310
      %v9988 = vunpack.c.h.b16 %v9310
      %v9989 = vunpack.c.l.b16 %v9311
      %v9990 = vunpack.c.h.b16 %v9311
      %v9991 = vunpack.c.l.b16 %v9312
      %v9992 = vunpack.c.h.b16 %v9312
      %v9993 = vunpack.c.l.b16 %v9313
      %v9994 = vunpack.c.h.b16 %v9313
      %v9995 = vunpack.c.l.b16 %v9314
      %v9996 = vunpack.c.h.b16 %v9314
      %v9997 = vunpack.c.l.b16 %v9315
      %v9998 = vunpack.c.h.b16 %v9315
      %v9999 = vunpack.c.l.b16 %v9316
      %v10000 = vunpack.c.h.b16 %v9316
      %v10001 = vunpack.c.l.b16 %v9317
      %v10002 = vunpack.c.h.b16 %v9317
      %v10003 = vunpack.c.l.b16 %v9318
      %v10004 = vunpack.c.h.b16 %v9318
      %v10005 = vunpack.c.l.b16 %v9319
      %v10006 = vunpack.c.h.b16 %v9319
      %v10007 = vunpack.c.l.b16 %v9320
      %v10008 = vunpack.c.h.b16 %v9320
      %v10009 = vunpack.c.l.b16 %v9321
      %v10010 = vunpack.c.h.b16 %v9321
      %v10011 = vunpack.c.l.b16 %v9322
      %v10012 = vunpack.c.h.b16 %v9322
      %v10013 = vunpack.c.l.b16 %v9323
      %v10014 = vunpack.c.h.b16 %v9323
      %v10015 = vunpack.c.l.b16 %v9324
      %v10016 = vunpack.c.h.b16 %v9324
      %v10017 = vunpack.c.l.b16 %v9325
      %v10018 = vunpack.c.h.b16 %v9325
      %v10019 = vunpack.c.l.b16 %v9326
      %v10020 = vunpack.c.h.b16 %v9326
      %v10021 = vunpack.c.l.b16 %v9327
      %v10022 = vunpack.c.h.b16 %v9327
      %v10023 = vunpack.c.l.b16 %v9328
      %v10024 = vunpack.c.h.b16 %v9328
      %v10025 = vunpack.c.l.b16 %v9329
      %v10026 = vunpack.c.h.b16 %v9329
      %v10027 = vunpack.c.l.b16 %v9330
      %v10028 = vunpack.c.h.b16 %v9330
      %v10029 = vunpack.c.l.b16 %v9331
      %v10030 = vunpack.c.h.b16 %v9331
      %v10031 = vunpack.c.l.b16 %v9332
      %v10032 = vunpack.c.h.b16 %v9332
      %v10033 = vunpack.c.l.b16 %v9333
      %v10034 = vunpack.c.h.b16 %v9333
      %v10035 = vunpack.c.l.b16 %v9334
      %v10036 = vunpack.c.h.b16 %v9334
      %v10037 = vunpack.c.l.b16 %v9335
      %v10038 = vunpack.c.h.b16 %v9335
      %v10039 = vunpack.c.l.b16 %v9336
      %v10040 = vunpack.c.h.b16 %v9336
      %v10041 = vunpack.c.l.b16 %v9337
      %v10042 = vunpack.c.h.b16 %v9337
      %v10043 = vunpack.c.l.b16 %v9338
      %v10044 = vunpack.c.h.b16 %v9338
      %v10045 = vunpack.c.l.b16 %v9339
      %v10046 = vunpack.c.h.b16 %v9339
      %v10047 = vunpack.c.l.b16 %v9340
      %v10048 = vunpack.c.h.b16 %v9340
      %v10049 = vunpack.c.l.b16 %v9341
      %v10050 = vunpack.c.h.b16 %v9341
      %v10051 = vunpack.c.l.b16 %v9342
      %v10052 = vunpack.c.h.b16 %v9342
      %v10053 = vunpack.c.l.b16 %v9343
      %v10054 = vunpack.c.h.b16 %v9343
      %v10055 = vunpack.c.l.b16 %v9344
      %v10056 = vunpack.c.h.b16 %v9344
      %v10057 = vunpack.c.l.b16 %v9345
      %v10058 = vunpack.c.h.b16 %v9345
      %v10059 = vunpack.c.l.b16 %v9346
      %v10060 = vunpack.c.h.b16 %v9346
      %v10061 = vunpack.c.l.b16 %v9347
      %v10062 = vunpack.c.h.b16 %v9347
      %v10063 = vunpack.c.l.b16 %v9348
      %v10064 = vunpack.c.h.b16 %v9348
      %v10065 = vunpack.c.l.b16 %v9349
      %v10066 = vunpack.c.h.b16 %v9349
      %v10067 = vunpack.c.l.b16 %v9350
      %v10068 = vunpack.c.h.b16 %v9350
      %v10069 = vunpack.c.l.b16 %v9351
      %v10070 = vunpack.c.h.b16 %v9351
      %v10071 = vunpack.c.l.b16 %v9352
      %v10072 = vunpack.c.h.b16 %v9352
      %v10073 = vunpack.c.l.b16 %v9353
      %v10074 = vunpack.c.h.b16 %v9353
      %v10075 = vunpack.c.l.b16 %v9354
      %v10076 = vunpack.c.h.b16 %v9354
      %v10077 = vunpack.c.l.b16 %v9355
      %v10078 = vunpack.c.h.b16 %v9355
      %v10079 = vunpack.c.l.b16 %v9356
      %v10080 = vunpack.c.h.b16 %v9356
      %v10081 = vunpack.c.l.b16 %v9357
      %v10082 = vunpack.c.h.b16 %v9357
      %v10083 = vunpack.c.l.b16 %v9358
      %v10084 = vunpack.c.h.b16 %v9358
      %v10085 = vunpack.c.l.b16 %v9359
      %v10086 = vunpack.c.h.b16 %v9359
      %v10087 = vunpack.c.l.b16 %v9360
      %v10088 = vunpack.c.h.b16 %v9360
      %v10089 = vunpack.c.l.b16 %v9361
      %v10090 = vunpack.c.h.b16 %v9361
      %v10091 = vunpack.c.l.b16 %v9362
      %v10092 = vunpack.c.h.b16 %v9362
      %v10093 = vunpack.c.l.b16 %v9363
      %v10094 = vunpack.c.h.b16 %v9363
      %v10095 = vunpack.c.l.b16 %v9364
      %v10096 = vunpack.c.h.b16 %v9364
      %v10097 = vunpack.c.l.b16 %v9365
      %v10098 = vunpack.c.h.b16 %v9365
      %v10099 = vunpack.c.l.b16 %v9366
      %v10100 = vunpack.c.h.b16 %v9366
      %v10101 = vunpack.c.l.b16 %v9367
      %v10102 = vunpack.c.h.b16 %v9367
      %v10103 = vunpack.c.l.b16 %v9368
      %v10104 = vunpack.c.h.b16 %v9368
      %v10105 = vunpack.c.l.b16 %v9369
      %v10106 = vunpack.c.h.b16 %v9369
      %v10107 = vunpack.c.l.b16 %v9370
      %v10108 = vunpack.c.h.b16 %v9370
      %v10109 = vunpack.c.l.b16 %v9371
      %v10110 = vunpack.c.h.b16 %v9371
      %v10111 = vunpack.c.l.b16 %v9372
      %v10112 = vunpack.c.h.b16 %v9372
      %v10113 = vunpack.c.l.b16 %v9373
      %v10114 = vunpack.c.h.b16 %v9373
      %v10115 = vunpack.c.l.b16 %v9374
      %v10116 = vunpack.c.h.b16 %v9374
      %v10117 = vunpack.c.l.b16 %v9375
      %v10118 = vunpack.c.h.b16 %v9375
      %v10119 = vunpack.c.l.b16 %v9376
      %v10120 = vunpack.c.h.b16 %v9376
      %v10121 = vunpack.c.l.b16 %v9377
      %v10122 = vunpack.c.h.b16 %v9377
      %v10123 = vunpack.c.l.b16 %v9378
      %v10124 = vunpack.c.h.b16 %v9378
      %v10125 = vunpack.c.l.b16 %v9379
      %v10126 = vunpack.c.h.b16 %v9379
      %v10127 = vunpack.c.l.b16 %v9380
      %v10128 = vunpack.c.h.b16 %v9380
      %v10129 = vunpack.c.l.b16 %v9381
      %v10130 = vunpack.c.h.b16 %v9381
      %v10131 = vunpack.c.l.b16 %v9382
      %v10132 = vunpack.c.h.b16 %v9382
      %v10133 = vunpack.c.l.b16 %v9383
      %v10134 = vunpack.c.h.b16 %v9383
      %v10135 = vunpack.c.l.b16 %v9384
      %v10136 = vunpack.c.h.b16 %v9384
      %v10137 = vunpack.c.l.b16 %v9385
      %v10138 = vunpack.c.h.b16 %v9385
      %v10139 = vunpack.c.l.b16 %v9386
      %v10140 = vunpack.c.h.b16 %v9386
      %v10141 = vunpack.c.l.b16 %v9387
      %v10142 = vunpack.c.h.b16 %v9387
      %v10143 = vunpack.c.l.b16 %v9388
      %v10144 = vunpack.c.h.b16 %v9388
      %v10145 = vunpack.c.l.b16 %v9389
      %v10146 = vunpack.c.h.b16 %v9389
      %v10147 = vunpack.c.l.b16 %v9390
      %v10148 = vunpack.c.h.b16 %v9390
      %v10149 = vunpack.c.l.b16 %v9391
      %v10150 = vunpack.c.h.b16 %v9391
      %v10151 = vunpack.c.l.b16 %v9392
      %v10152 = vunpack.c.h.b16 %v9392
      %v10153 = vunpack.c.l.b16 %v9393
      %v10154 = vunpack.c.h.b16 %v9393
      %v10155 = vunpack.c.l.b16 %v9394
      %v10156 = vunpack.c.h.b16 %v9394
      %v10157 = vunpack.c.l.b16 %v9395
      %v10158 = vunpack.c.h.b16 %v9395
      %v10159 = vunpack.c.l.b16 %v9396
      %v10160 = vunpack.c.h.b16 %v9396
      %v10161 = vunpack.c.l.b16 %v9397
      %v10162 = vunpack.c.h.b16 %v9397
      %v10163 = vunpack.c.l.b16 %v9398
      %v10164 = vunpack.c.h.b16 %v9398
      %v10165 = vunpack.c.l.b16 %v9399
      %v10166 = vunpack.c.h.b16 %v9399
      %v10167 = vunpack.c.l.b16 %v9400
      %v10168 = vunpack.c.h.b16 %v9400
      %v10169 = vunpack.c.l.b16 %v9401
      %v10170 = vunpack.c.h.b16 %v9401
      %v10171 = vunpack.c.l.b16 %v9402
      %v10172 = vunpack.c.h.b16 %v9402
      %v10173 = vunpack.c.l.b16 %v9403
      %v10174 = vunpack.c.h.b16 %v9403
      %v10175 = vunpack.c.l.b16 %v9404
      %v10176 = vunpack.c.h.b16 %v9404
      %v10177 = vunpack.c.l.b16 %v9405
      %v10178 = vunpack.c.h.b16 %v9405
      %v10179 = vunpack.c.l.b16 %v9406
      %v10180 = vunpack.c.h.b16 %v9406
      %v10181 = vunpack.c.l.b16 %v9407
      %v10182 = vunpack.c.h.b16 %v9407
      %v10183 = vunpack.c.l.b16 %v9408
      %v10184 = vunpack.c.h.b16 %v9408
      %v10185 = vunpack.c.l.b16 %v9409
      %v10186 = vunpack.c.h.b16 %v9409
      %v10187 = vunpack.c.l.b16 %v9410
      %v10188 = vunpack.c.h.b16 %v9410
      %v10189 = vunpack.c.l.b16 %v9411
      %v10190 = vunpack.c.h.b16 %v9411
      %v10191 = vunpack.c.l.b16 %v9412
      %v10192 = vunpack.c.h.b16 %v9412
      %v10193 = vunpack.c.l.b16 %v9413
      %v10194 = vunpack.c.h.b16 %v9413
      %v10195 = vunpack.c.l.b16 %v9414
      %v10196 = vunpack.c.h.b16 %v9414
      %v10197 = vunpack.c.l.b16 %v9415
      %v10198 = vunpack.c.h.b16 %v9415
      %v10199 = vunpack.c.l.b16 %v9416
      %v10200 = vunpack.c.h.b16 %v9416
      %v10201 = vunpack.c.l.b16 %v9417
      %v10202 = vunpack.c.h.b16 %v9417
      %v10203 = vunpack.c.l.b16 %v9418
      %v10204 = vunpack.c.h.b16 %v9418
      %v10205 = vunpack.c.l.b16 %v9419
      %v10206 = vunpack.c.h.b16 %v9419
      %v10207 = vunpack.c.l.b16 %v9420
      %v10208 = vunpack.c.h.b16 %v9420
      %v10209 = vunpack.c.l.b16 %v9421
      %v10210 = vunpack.c.h.b16 %v9421
      %v10211 = vunpack.c.l.b16 %v9422
      %v10212 = vunpack.c.h.b16 %v9422
      %v10213 = vunpack.c.l.b16 %v9423
      %v10214 = vunpack.c.h.b16 %v9423
      %v10215 = vunpack.c.l.b16 %v9424
      %v10216 = vunpack.c.h.b16 %v9424
      %v10217 = vunpack.c.l.b16 %v9425
      %v10218 = vunpack.c.h.b16 %v9425
      %v10219 = vunpack.c.l.b16 %v9426
      %v10220 = vunpack.c.h.b16 %v9426
      %v10221 = vunpack.c.l.b16 %v9427
      %v10222 = vunpack.c.h.b16 %v9427
      %v10223 = vunpack.c.l.b16 %v9428
      %v10224 = vunpack.c.h.b16 %v9428
      %v10225 = vunpack.c.l.b16 %v9429
      %v10226 = vunpack.c.h.b16 %v9429
      %v10227 = vunpack.c.l.b16 %v9430
      %v10228 = vunpack.c.h.b16 %v9430
      %v10229 = vunpack.c.l.b16 %v9431
      %v10230 = vunpack.c.h.b16 %v9431
      %v10231 = vunpack.c.l.b16 %v9432
      %v10232 = vunpack.c.h.b16 %v9432
      %v10233 = vunpack.c.l.b16 %v9433
      %v10234 = vunpack.c.h.b16 %v9433
      %v10235 = vunpack.c.l.b16 %v9434
      %v10236 = vunpack.c.h.b16 %v9434
      %v10237 = vunpack.c.l.b16 %v9435
      %v10238 = vunpack.c.h.b16 %v9435
      %v10239 = vunpack.c.l.b16 %v9436
      %v10240 = vunpack.c.h.b16 %v9436
      %v10241 = vunpack.c.l.b16 %v9437
      %v10242 = vunpack.c.h.b16 %v9437
      %v10243 = vunpack.c.l.b16 %v9438
      %v10244 = vunpack.c.h.b16 %v9438
      %v10245 = vunpack.c.l.b16 %v9439
      %v10246 = vunpack.c.h.b16 %v9439
      %v10247 = vunpack.c.l.b16 %v9440
      %v10248 = vunpack.c.h.b16 %v9440
      %v10249 = vunpack.c.l.b16 %v9441
      %v10250 = vunpack.c.h.b16 %v9441
      %v10251 = vunpack.c.l.b16 %v9442
      %v10252 = vunpack.c.h.b16 %v9442
      %v10253 = vunpack.c.l.b16 %v9443
      %v10254 = vunpack.c.h.b16 %v9443
      %v10255 = vunpack.c.l.b16 %v9444
      %v10256 = vunpack.c.h.b16 %v9444
      %v10257 = vunpack.c.l.b16 %v9445
      %v10258 = vunpack.c.h.b16 %v9445
      %v10259 = vunpack.c.l.b16 %v9446
      %v10260 = vunpack.c.h.b16 %v9446
      %v10261 = vunpack.c.l.b16 %v9447
      %v10262 = vunpack.c.h.b16 %v9447
      %v10263 = vunpack.c.l.b16 %v9448
      %v10264 = vunpack.c.h.b16 %v9448
      %v10265 = vunpack.c.l.b16 %v9449
      %v10266 = vunpack.c.h.b16 %v9449
      %v10267 = vunpack.c.l.b16 %v9450
      %v10268 = vunpack.c.h.b16 %v9450
      %v10269 = vunpack.c.l.b16 %v9451
      %v10270 = vunpack.c.h.b16 %v9451
      %v10271 = vunpack.c.l.b16 %v9452
      %v10272 = vunpack.c.h.b16 %v9452
      %v10273 = vunpack.c.l.b16 %v9453
      %v10274 = vunpack.c.h.b16 %v9453
      %v10275 = vunpack.c.l.b16 %v9454
      %v10276 = vunpack.c.h.b16 %v9454
      %v10277 = vunpack.c.l.b16 %v9455
      %v10278 = vunpack.c.h.b16 %v9455
      %v10279 = vunpack.c.l.b16 %v9456
      %v10280 = vunpack.c.h.b16 %v9456
      %v10281 = vunpack.c.l.b16 %v9457
      %v10282 = vunpack.c.h.b16 %v9457
      %v10283 = vunpack.c.l.b16 %v9458
      %v10284 = vunpack.c.h.b16 %v9458
      %v10285 = vunpack.c.l.b16 %v9459
      %v10286 = vunpack.c.h.b16 %v9459
      %v10287 = vunpack.c.l.b16 %v9460
      %v10288 = vunpack.c.h.b16 %v9460
      %v10289 = vunpack.c.l.b16 %v9461
      %v10290 = vunpack.c.h.b16 %v9461
      %v10291 = vunpack.c.l.b16 %v9462
      %v10292 = vunpack.c.h.b16 %v9462
      %v10293 = vunpack.c.l.b16 %v9463
      %v10294 = vunpack.c.h.b16 %v9463
      %v10295 = vunpack.c.l.b16 %v9464
      %v10296 = vunpack.c.h.b16 %v9464
      %v10297 = vunpack.c.l.b16 %v9465
      %v10298 = vunpack.c.h.b16 %v9465
      %v10299 = vunpack.c.l.b16 %v9466
      %v10300 = vunpack.c.h.b16 %v9466
      %v10301 = vunpack.c.l.b16 %v9467
      %v10302 = vunpack.c.h.b16 %v9467
      %v10303 = vunpack.c.l.b16 %v9468
      %v10304 = vunpack.c.h.b16 %v9468
      %v10305 = vunpack.c.l.b16 %v9469
      %v10306 = vunpack.c.h.b16 %v9469
      %v10307 = vunpack.c.l.b16 %v9470
      %v10308 = vunpack.c.h.b16 %v9470
      %v10309 = vunpack.c.l.b16 %v9471
      %v10310 = vunpack.c.h.b16 %v9471
      %v10311 = vunpack.c.l.b16 %v9472
      %v10312 = vunpack.c.h.b16 %v9472
      %v10313 = vunpack.c.l.b16 %v9473
      %v10314 = vunpack.c.h.b16 %v9473
      %v10315 = vunpack.c.l.b16 %v9474
      %v10316 = vunpack.c.h.b16 %v9474
      %v10317 = vunpack.c.l.b16 %v9475
      %v10318 = vunpack.c.h.b16 %v9475
      %v10319 = vunpack.c.l.b16 %v9476
      %v10320 = vunpack.c.h.b16 %v9476
      %v10321 = vunpack.c.l.b16 %v9477
      %v10322 = vunpack.c.h.b16 %v9477
      %v10323 = vunpack.c.l.b16 %v9478
      %v10324 = vunpack.c.h.b16 %v9478
      %v10325 = vunpack.c.l.b16 %v9479
      %v10326 = vunpack.c.h.b16 %v9479
      %v10327 = vpack.c.b16 %v9819, %v9815
      %v10328 = vpack.c.b16 %v9820, %v9816
      %v10329 = vpack.c.b16 %v9821, %v9817
      %v10330 = vpack.c.b16 %v9822, %v9818
      %v10331 = vpack.c.b16 %v9827, %v9823
      %v10332 = vpack.c.b16 %v9828, %v9824
      %v10333 = vpack.c.b16 %v9829, %v9825
      %v10334 = vpack.c.b16 %v9830, %v9826
      %v10335 = vpack.c.b16 %v9835, %v9831
      %v10336 = vpack.c.b16 %v9836, %v9832
      %v10337 = vpack.c.b16 %v9837, %v9833
      %v10338 = vpack.c.b16 %v9838, %v9834
      %v10339 = vpack.c.b16 %v9843, %v9839
      %v10340 = vpack.c.b16 %v9844, %v9840
      %v10341 = vpack.c.b16 %v9845, %v9841
      %v10342 = vpack.c.b16 %v9846, %v9842
      %v10343 = vpack.c.b16 %v9851, %v9847
      %v10344 = vpack.c.b16 %v9852, %v9848
      %v10345 = vpack.c.b16 %v9853, %v9849
      %v10346 = vpack.c.b16 %v9854, %v9850
      %v10347 = vpack.c.b16 %v9859, %v9855
      %v10348 = vpack.c.b16 %v9860, %v9856
      %v10349 = vpack.c.b16 %v9861, %v9857
      %v10350 = vpack.c.b16 %v9862, %v9858
      %v10351 = vpack.c.b16 %v9867, %v9863
      %v10352 = vpack.c.b16 %v9868, %v9864
      %v10353 = vpack.c.b16 %v9869, %v9865
      %v10354 = vpack.c.b16 %v9870, %v9866
      %v10355 = vpack.c.b16 %v9875, %v9871
      %v10356 = vpack.c.b16 %v9876, %v9872
      %v10357 = vpack.c.b16 %v9877, %v9873
      %v10358 = vpack.c.b16 %v9878, %v9874
      %v10359 = vpack.c.b16 %v9883, %v9879
      %v10360 = vpack.c.b16 %v9884, %v9880
      %v10361 = vpack.c.b16 %v9885, %v9881
      %v10362 = vpack.c.b16 %v9886, %v9882
      %v10363 = vpack.c.b16 %v9891, %v9887
      %v10364 = vpack.c.b16 %v9892, %v9888
      %v10365 = vpack.c.b16 %v9893, %v9889
      %v10366 = vpack.c.b16 %v9894, %v9890
      %v10367 = vpack.c.b16 %v9899, %v9895
      %v10368 = vpack.c.b16 %v9900, %v9896
      %v10369 = vpack.c.b16 %v9901, %v9897
      %v10370 = vpack.c.b16 %v9902, %v9898
      %v10371 = vpack.c.b16 %v9907, %v9903
      %v10372 = vpack.c.b16 %v9908, %v9904
      %v10373 = vpack.c.b16 %v9909, %v9905
      %v10374 = vpack.c.b16 %v9910, %v9906
      %v10375 = vpack.c.b16 %v9915, %v9911
      %v10376 = vpack.c.b16 %v9916, %v9912
      %v10377 = vpack.c.b16 %v9917, %v9913
      %v10378 = vpack.c.b16 %v9918, %v9914
      %v10379 = vpack.c.b16 %v9923, %v9919
      %v10380 = vpack.c.b16 %v9924, %v9920
      %v10381 = vpack.c.b16 %v9925, %v9921
      %v10382 = vpack.c.b16 %v9926, %v9922
      %v10383 = vpack.c.b16 %v9931, %v9927
      %v10384 = vpack.c.b16 %v9932, %v9928
      %v10385 = vpack.c.b16 %v9933, %v9929
      %v10386 = vpack.c.b16 %v9934, %v9930
      %v10387 = vpack.c.b16 %v9939, %v9935
      %v10388 = vpack.c.b16 %v9940, %v9936
      %v10389 = vpack.c.b16 %v9941, %v9937
      %v10390 = vpack.c.b16 %v9942, %v9938
      %v10391 = vpack.c.b16 %v9947, %v9943
      %v10392 = vpack.c.b16 %v9948, %v9944
      %v10393 = vpack.c.b16 %v9949, %v9945
      %v10394 = vpack.c.b16 %v9950, %v9946
      %v10395 = vpack.c.b16 %v9955, %v9951
      %v10396 = vpack.c.b16 %v9956, %v9952
      %v10397 = vpack.c.b16 %v9957, %v9953
      %v10398 = vpack.c.b16 %v9958, %v9954
      %v10399 = vpack.c.b16 %v9963, %v9959
      %v10400 = vpack.c.b16 %v9964, %v9960
      %v10401 = vpack.c.b16 %v9965, %v9961
      %v10402 = vpack.c.b16 %v9966, %v9962
      %v10403 = vpack.c.b16 %v9971, %v9967
      %v10404 = vpack.c.b16 %v9972, %v9968
      %v10405 = vpack.c.b16 %v9973, %v9969
      %v10406 = vpack.c.b16 %v9974, %v9970
      %v10407 = vpack.c.b16 %v9979, %v9975
      %v10408 = vpack.c.b16 %v9980, %v9976
      %v10409 = vpack.c.b16 %v9981, %v9977
      %v10410 = vpack.c.b16 %v9982, %v9978
      %v10411 = vpack.c.b16 %v9987, %v9983
      %v10412 = vpack.c.b16 %v9988, %v9984
      %v10413 = vpack.c.b16 %v9989, %v9985
      %v10414 = vpack.c.b16 %v9990, %v9986
      %v10415 = vpack.c.b16 %v9995, %v9991
      %v10416 = vpack.c.b16 %v9996, %v9992
      %v10417 = vpack.c.b16 %v9997, %v9993
      %v10418 = vpack.c.b16 %v9998, %v9994
      %v10419 = vpack.c.b16 %v10003, %v9999
      %v10420 = vpack.c.b16 %v10004, %v10000
      %v10421 = vpack.c.b16 %v10005, %v10001
      %v10422 = vpack.c.b16 %v10006, %v10002
      %v10423 = vpack.c.b16 %v10011, %v10007
      %v10424 = vpack.c.b16 %v10012, %v10008
      %v10425 = vpack.c.b16 %v10013, %v10009
      %v10426 = vpack.c.b16 %v10014, %v10010
      %v10427 = vpack.c.b16 %v10019, %v10015
      %v10428 = vpack.c.b16 %v10020, %v10016
      %v10429 = vpack.c.b16 %v10021, %v10017
      %v10430 = vpack.c.b16 %v10022, %v10018
      %v10431 = vpack.c.b16 %v10027, %v10023
      %v10432 = vpack.c.b16 %v10028, %v10024
      %v10433 = vpack.c.b16 %v10029, %v10025
      %v10434 = vpack.c.b16 %v10030, %v10026
      %v10435 = vpack.c.b16 %v10035, %v10031
      %v10436 = vpack.c.b16 %v10036, %v10032
      %v10437 = vpack.c.b16 %v10037, %v10033
      %v10438 = vpack.c.b16 %v10038, %v10034
      %v10439 = vpack.c.b16 %v10043, %v10039
      %v10440 = vpack.c.b16 %v10044, %v10040
      %v10441 = vpack.c.b16 %v10045, %v10041
      %v10442 = vpack.c.b16 %v10046, %v10042
      %v10443 = vpack.c.b16 %v10051, %v10047
      %v10444 = vpack.c.b16 %v10052, %v10048
      %v10445 = vpack.c.b16 %v10053, %v10049
      %v10446 = vpack.c.b16 %v10054, %v10050
      %v10447 = vpack.c.b16 %v10059, %v10055
      %v10448 = vpack.c.b16 %v10060, %v10056
      %v10449 = vpack.c.b16 %v10061, %v10057
      %v10450 = vpack.c.b16 %v10062, %v10058
      %v10451 = vpack.c.b16 %v10067, %v10063
      %v10452 = vpack.c.b16 %v10068, %v10064
      %v10453 = vpack.c.b16 %v10069, %v10065
      %v10454 = vpack.c.b16 %v10070, %v10066
      %v10455 = vpack.c.b16 %v10075, %v10071
      %v10456 = vpack.c.b16 %v10076, %v10072
      %v10457 = vpack.c.b16 %v10077, %v10073
      %v10458 = vpack.c.b16 %v10078, %v10074
      %v10459 = vpack.c.b16 %v10083, %v10079
      %v10460 = vpack.c.b16 %v10084, %v10080
      %v10461 = vpack.c.b16 %v10085, %v10081
      %v10462 = vpack.c.b16 %v10086, %v10082
      %v10463 = vpack.c.b16 %v10091, %v10087
      %v10464 = vpack.c.b16 %v10092, %v10088
      %v10465 = vpack.c.b16 %v10093, %v10089
      %v10466 = vpack.c.b16 %v10094, %v10090
      %v10467 = vpack.c.b16 %v10099, %v10095
      %v10468 = vpack.c.b16 %v10100, %v10096
      %v10469 = vpack.c.b16 %v10101, %v10097
      %v10470 = vpack.c.b16 %v10102, %v10098
      %v10471 = vpack.c.b16 %v10107, %v10103
      %v10472 = vpack.c.b16 %v10108, %v10104
      %v10473 = vpack.c.b16 %v10109, %v10105
      %v10474 = vpack.c.b16 %v10110, %v10106
      %v10475 = vpack.c.b16 %v10115, %v10111
      %v10476 = vpack.c.b16 %v10116, %v10112
      %v10477 = vpack.c.b16 %v10117, %v10113
      %v10478 = vpack.c.b16 %v10118, %v10114
      %v10479 = vpack.c.b16 %v10123, %v10119
      %v10480 = vpack.c.b16 %v10124, %v10120
      %v10481 = vpack.c.b16 %v10125, %v10121
      %v10482 = vpack.c.b16 %v10126, %v10122
      %v10483 = vpack.c.b16 %v10131, %v10127
      %v10484 = vpack.c.b16 %v10132, %v10128
      %v10485 = vpack.c.b16 %v10133, %v10129
      %v10486 = vpack.c.b16 %v10134, %v10130
      %v10487 = vpack.c.b16 %v10139, %v10135
      %v10488 = vpack.c.b16 %v10140, %v10136
      %v10489 = vpack.c.b16 %v10141, %v10137
      %v10490 = vpack.c.b16 %v10142, %v10138
      %v10491 = vpack.c.b16 %v10147, %v10143
      %v10492 = vpack.c.b16 %v10148, %v10144
      %v10493 = vpack.c.b16 %v10149, %v10145
      %v10494 = vpack.c.b16 %v10150, %v10146
      %v10495 = vpack.c.b16 %v10155, %v10151
      %v10496 = vpack.c.b16 %v10156, %v10152
      %v10497 = vpack.c.b16 %v10157, %v10153
      %v10498 = vpack.c.b16 %v10158, %v10154
      %v10499 = vpack.c.b16 %v10163, %v10159
      %v10500 = vpack.c.b16 %v10164, %v10160
      %v10501 = vpack.c.b16 %v10165, %v10161
      %v10502 = vpack.c.b16 %v10166, %v10162
      %v10503 = vpack.c.b16 %v10171, %v10167
      %v10504 = vpack.c.b16 %v10172, %v10168
      %v10505 = vpack.c.b16 %v10173, %v10169
      %v10506 = vpack.c.b16 %v10174, %v10170
      %v10507 = vpack.c.b16 %v10179, %v10175
      %v10508 = vpack.c.b16 %v10180, %v10176
      %v10509 = vpack.c.b16 %v10181, %v10177
      %v10510 = vpack.c.b16 %v10182, %v10178
      %v10511 = vpack.c.b16 %v10187, %v10183
      %v10512 = vpack.c.b16 %v10188, %v10184
      %v10513 = vpack.c.b16 %v10189, %v10185
      %v10514 = vpack.c.b16 %v10190, %v10186
      %v10515 = vpack.c.b16 %v10195, %v10191
      %v10516 = vpack.c.b16 %v10196, %v10192
      %v10517 = vpack.c.b16 %v10197, %v10193
      %v10518 = vpack.c.b16 %v10198, %v10194
      %v10519 = vpack.c.b16 %v10203, %v10199
      %v10520 = vpack.c.b16 %v10204, %v10200
      %v10521 = vpack.c.b16 %v10205, %v10201
      %v10522 = vpack.c.b16 %v10206, %v10202
      %v10523 = vpack.c.b16 %v10211, %v10207
      %v10524 = vpack.c.b16 %v10212, %v10208
      %v10525 = vpack.c.b16 %v10213, %v10209
      %v10526 = vpack.c.b16 %v10214, %v10210
      %v10527 = vpack.c.b16 %v10219, %v10215
      %v10528 = vpack.c.b16 %v10220, %v10216
      %v10529 = vpack.c.b16 %v10221, %v10217
      %v10530 = vpack.c.b16 %v10222, %v10218
      %v10531 = vpack.c.b16 %v10227, %v10223
      %v10532 = vpack.c.b16 %v10228, %v10224
      %v10533 = vpack.c.b16 %v10229, %v10225
      %v10534 = vpack.c.b16 %v10230, %v10226
      %v10535 = vpack.c.b16 %v10235, %v10231
      %v10536 = vpack.c.b16 %v10236, %v10232
      %v10537 = vpack.c.b16 %v10237, %v10233
      %v10538 = vpack.c.b16 %v10238, %v10234
      %v10539 = vpack.c.b16 %v10243, %v10239
      %v10540 = vpack.c.b16 %v10244, %v10240
      %v10541 = vpack.c.b16 %v10245, %v10241
      %v10542 = vpack.c.b16 %v10246, %v10242
      %v10543 = vpack.c.b16 %v10251, %v10247
      %v10544 = vpack.c.b16 %v10252, %v10248
      %v10545 = vpack.c.b16 %v10253, %v10249
      %v10546 = vpack.c.b16 %v10254, %v10250
      %v10547 = vpack.c.b16 %v10259, %v10255
      %v10548 = vpack.c.b16 %v10260, %v10256
      %v10549 = vpack.c.b16 %v10261, %v10257
      %v10550 = vpack.c.b16 %v10262, %v10258
      %v10551 = vpack.c.b16 %v10267, %v10263
      %v10552 = vpack.c.b16 %v10268, %v10264
      %v10553 = vpack.c.b16 %v10269, %v10265
      %v10554 = vpack.c.b16 %v10270, %v10266
      %v10555 = vpack.c.b16 %v10275, %v10271
      %v10556 = vpack.c.b16 %v10276, %v10272
      %v10557 = vpack.c.b16 %v10277, %v10273
      %v10558 = vpack.c.b16 %v10278, %v10274
      %v10559 = vpack.c.b16 %v10283, %v10279
      %v10560 = vpack.c.b16 %v10284, %v10280
      %v10561 = vpack.c.b16 %v10285, %v10281
      %v10562 = vpack.c.b16 %v10286, %v10282
      %v10563 = vpack.c.b16 %v10291, %v10287
      %v10564 = vpack.c.b16 %v10292, %v10288
      %v10565 = vpack.c.b16 %v10293, %v10289
      %v10566 = vpack.c.b16 %v10294, %v10290
      %v10567 = vpack.c.b16 %v10299, %v10295
      %v10568 = vpack.c.b16 %v10300, %v10296
      %v10569 = vpack.c.b16 %v10301, %v10297
      %v10570 = vpack.c.b16 %v10302, %v10298
      %v10571 = vpack.c.b16 %v10307, %v10303
      %v10572 = vpack.c.b16 %v10308, %v10304
      %v10573 = vpack.c.b16 %v10309, %v10305
      %v10574 = vpack.c.b16 %v10310, %v10306
      %v10575 = vpack.c.b16 %v10315, %v10311
      %v10576 = vpack.c.b16 %v10316, %v10312
      %v10577 = vpack.c.b16 %v10317, %v10313
      %v10578 = vpack.c.b16 %v10318, %v10314
      %v10579 = vpack.c.b16 %v10323, %v10319
      %v10580 = vpack.c.b16 %v10324, %v10320
      %v10581 = vpack.c.b16 %v10325, %v10321
      %v10582 = vpack.c.b16 %v10326, %v10322
      %10839 = vmatprep.subr.bf16.mxu0 %v10328
      %10840 = vmatpush1.bf16.msra.mxu0 %v10327
      %10841 = vmatprep.subr.bf16.mxu0 %v10332
      %10842 = vmatpush1.bf16.msra.mxu0 %v10331
      %10843 = vmatprep.subr.bf16.mxu0 %v10336
      %10844 = vmatpush1.bf16.msra.mxu0 %v10335
      %10845 = vmatprep.subr.bf16.mxu0 %v10340
      %10846 = vmatpush1.bf16.msra.mxu0 %v10339
      %10847 = vmatprep.subr.bf16.mxu0 %v10344
      %10848 = vmatpush1.bf16.msra.mxu0 %v10343
      %10849 = vmatprep.subr.bf16.mxu0 %v10348
      %10850 = vmatpush1.bf16.msra.mxu0 %v10347
      %10851 = vmatprep.subr.bf16.mxu0 %v10352
      %10852 = vmatpush1.bf16.msra.mxu0 %v10351
      %10853 = vmatprep.subr.bf16.mxu0 %v10356
      %10854 = vmatpush1.bf16.msra.mxu0 %v10355
      %10855 = vmatprep.subr.bf16.mxu0 %v10360
      %10856 = vmatpush1.bf16.msra.mxu0 %v10359
      %10857 = vmatprep.subr.bf16.mxu0 %v10364
      %10858 = vmatpush1.bf16.msra.mxu0 %v10363
      %10859 = vmatprep.subr.bf16.mxu0 %v10368
      %10860 = vmatpush1.bf16.msra.mxu0 %v10367
      %10861 = vmatprep.subr.bf16.mxu0 %v10372
      %10862 = vmatpush1.bf16.msra.mxu0 %v10371
      %10863 = vmatprep.subr.bf16.mxu0 %v10376
      %10864 = vmatpush1.bf16.msra.mxu0 %v10375
      %10865 = vmatprep.subr.bf16.mxu0 %v10380
      %10866 = vmatpush1.bf16.msra.mxu0 %v10379
      %10867 = vmatprep.subr.bf16.mxu0 %v10384
      %10868 = vmatpush1.bf16.msra.mxu0 %v10383
      %10869 = vmatprep.subr.bf16.mxu0 %v10388
      %10870 = vmatpush1.bf16.msra.mxu0 %v10387
      %10871 = vmatprep.mubr.bf16.mxu0 %v9544
      %10872 = vmatmul.mubr.bf16.gmra.mrb[0].mxu0 %v9543
      %v10873 = vpop.f32.mrb[0].mxu0
      %v10874 = vadd.f32 %v9485, %v10873
      %v10875 = vpop.f32.mrb[0].mxu0
      %v10876 = vadd.f32 %v9489, %v10875
      %v10877 = vpop.f32.mrb[0].mxu0
      %v10878 = vpop.f32.mrb[0].mxu0
      %10879 = vdwg.mxu0
      %10880 = vmatprep.subr.bf16.mxu0 %v10392
      %10881 = vmatpush1.bf16.msra.mxu0 %v10391
      %10882 = vmatprep.subr.bf16.mxu0 %v10396
      %10883 = vmatpush1.bf16.msra.mxu0 %v10395
      %10884 = vmatprep.subr.bf16.mxu0 %v10400
      %10885 = vmatpush1.bf16.msra.mxu0 %v10399
      %10886 = vmatprep.subr.bf16.mxu0 %v10404
      %10887 = vmatpush1.bf16.msra.mxu0 %v10403
      %10888 = vmatprep.subr.bf16.mxu0 %v10408
      %10889 = vmatpush1.bf16.msra.mxu0 %v10407
      %10890 = vmatprep.subr.bf16.mxu0 %v10412
      %10891 = vmatpush1.bf16.msra.mxu0 %v10411
      %10892 = vmatprep.subr.bf16.mxu0 %v10416
      %10893 = vmatpush1.bf16.msra.mxu0 %v10415
      %10894 = vmatprep.subr.bf16.mxu0 %v10420
      %10895 = vmatpush1.bf16.msra.mxu0 %v10419
      %10896 = vmatprep.subr.bf16.mxu0 %v10424
      %10897 = vmatpush1.bf16.msra.mxu0 %v10423
      %10898 = vmatprep.subr.bf16.mxu0 %v10428
      %10899 = vmatpush1.bf16.msra.mxu0 %v10427
      %10900 = vmatprep.subr.bf16.mxu0 %v10432
      %10901 = vmatpush1.bf16.msra.mxu0 %v10431
      %10902 = vmatprep.subr.bf16.mxu0 %v10436
      %10903 = vmatpush1.bf16.msra.mxu0 %v10435
      %10904 = vmatprep.subr.bf16.mxu0 %v10440
      %10905 = vmatpush1.bf16.msra.mxu0 %v10439
      %10906 = vmatprep.subr.bf16.mxu0 %v10444
      %10907 = vmatpush1.bf16.msra.mxu0 %v10443
      %10908 = vmatprep.subr.bf16.mxu0 %v10448
      %10909 = vmatpush1.bf16.msra.mxu0 %v10447
      %10910 = vmatprep.subr.bf16.mxu0 %v10452
      %10911 = vmatpush1.bf16.msra.mxu0 %v10451
      %10912 = vmatprep.mubr.bf16.mxu0 %v9546
      %10913 = vmatmul.mubr.bf16.gmra.mrb[0].mxu0 %v9545
      %v10914 = vpop.f32.mrb[0].mxu0
      %v10915 = vadd.f32 %v10874, %v10914
      %v10916 = vpop.f32.mrb[0].mxu0
      %v10917 = vadd.f32 %v10876, %v10916
      %v10918 = vpop.f32.mrb[0].mxu0
      %v10919 = vpop.f32.mrb[0].mxu0
      %10920 = vdwg.mxu0
      %10921 = vmatprep.subr.bf16.mxu0 %v10456
      %10922 = vmatpush1.bf16.msra.mxu0 %v10455
      %10923 = vmatprep.subr.bf16.mxu0 %v10460
      %10924 = vmatpush1.bf16.msra.mxu0 %v10459
      %10925 = vmatprep.subr.bf16.mxu0 %v10464
      %10926 = vmatpush1.bf16.msra.mxu0 %v10463
      %10927 = vmatprep.subr.bf16.mxu0 %v10468
      %10928 = vmatpush1.bf16.msra.mxu0 %v10467
      %10929 = vmatprep.subr.bf16.mxu0 %v10472
      %10930 = vmatpush1.bf16.msra.mxu0 %v10471
      %10931 = vmatprep.subr.bf16.mxu0 %v10476
      %10932 = vmatpush1.bf16.msra.mxu0 %v10475
      %10933 = vmatprep.subr.bf16.mxu0 %v10480
      %10934 = vmatpush1.bf16.msra.mxu0 %v10479
      %10935 = vmatprep.subr.bf16.mxu0 %v10484
      %10936 = vmatpush1.bf16.msra.mxu0 %v10483
      %10937 = vmatprep.subr.bf16.mxu0 %v10488
      %10938 = vmatpush1.bf16.msra.mxu0 %v10487
      %10939 = vmatprep.subr.bf16.mxu0 %v10492
      %10940 = vmatpush1.bf16.msra.mxu0 %v10491
      %10941 = vmatprep.subr.bf16.mxu0 %v10496
      %10942 = vmatpush1.bf16.msra.mxu0 %v10495
      %10943 = vmatprep.subr.bf16.mxu0 %v10500
      %10944 = vmatpush1.bf16.msra.mxu0 %v10499
      %10945 = vmatprep.subr.bf16.mxu0 %v10504
      %10946 = vmatpush1.bf16.msra.mxu0 %v10503
      %10947 = vmatprep.subr.bf16.mxu0 %v10508
      %10948 = vmatpush1.bf16.msra.mxu0 %v10507
      %10949 = vmatprep.subr.bf16.mxu0 %v10512
      %10950 = vmatpush1.bf16.msra.mxu0 %v10511
      %10951 = vmatprep.subr.bf16.mxu0 %v10516
      %10952 = vmatpush1.bf16.msra.mxu0 %v10515
      %10953 = vmatprep.mubr.bf16.mxu0 %v9548
      %10954 = vmatmul.mubr.bf16.gmra.mrb[0].mxu0 %v9547
      %v10955 = vpop.f32.mrb[0].mxu0
      %v10956 = vadd.f32 %v10915, %v10955
      %v10957 = vpop.f32.mrb[0].mxu0
      %v10958 = vadd.f32 %v10917, %v10957
      %v10959 = vpop.f32.mrb[0].mxu0
      %v10960 = vpop.f32.mrb[0].mxu0
      %10961 = vdwg.mxu0
      %10962 = vmatprep.subr.bf16.mxu0 %v10520
      %10963 = vmatpush1.bf16.msra.mxu0 %v10519
      %10964 = vmatprep.subr.bf16.mxu0 %v10524
      %10965 = vmatpush1.bf16.msra.mxu0 %v10523
      %10966 = vmatprep.subr.bf16.mxu0 %v10528
      %10967 = vmatpush1.bf16.msra.mxu0 %v10527
      %10968 = vmatprep.subr.bf16.mxu0 %v10532
      %10969 = vmatpush1.bf16.msra.mxu0 %v10531
      %10970 = vmatprep.subr.bf16.mxu0 %v10536
      %10971 = vmatpush1.bf16.msra.mxu0 %v10535
      %10972 = vmatprep.subr.bf16.mxu0 %v10540
      %10973 = vmatpush1.bf16.msra.mxu0 %v10539
      %10974 = vmatprep.subr.bf16.mxu0 %v10544
      %10975 = vmatpush1.bf16.msra.mxu0 %v10543
      %10976 = vmatprep.subr.bf16.mxu0 %v10548
      %10977 = vmatpush1.bf16.msra.mxu0 %v10547
      %10978 = vmatprep.subr.bf16.mxu0 %v10552
      %10979 = vmatpush1.bf16.msra.mxu0 %v10551
      %10980 = vmatprep.subr.bf16.mxu0 %v10556
      %10981 = vmatpush1.bf16.msra.mxu0 %v10555
      %10982 = vmatprep.subr.bf16.mxu0 %v10560
      %10983 = vmatpush1.bf16.msra.mxu0 %v10559
      %10984 = vmatprep.subr.bf16.mxu0 %v10564
      %10985 = vmatpush1.bf16.msra.mxu0 %v10563
      %10986 = vmatprep.subr.bf16.mxu0 %v10568
      %10987 = vmatpush1.bf16.msra.mxu0 %v10567
      %10988 = vmatprep.subr.bf16.mxu0 %v10572
      %10989 = vmatpush1.bf16.msra.mxu0 %v10571
      %10990 = vmatprep.subr.bf16.mxu0 %v10576
      %10991 = vmatpush1.bf16.msra.mxu0 %v10575
      %10992 = vmatprep.subr.bf16.mxu0 %v10580
      %10993 = vmatpush1.bf16.msra.mxu0 %v10579
      %10994 = vmatprep.mubr.bf16.mxu0 %v9550
      %10995 = vmatmul.mubr.bf16.gmra.mrb[0].mxu0 %v9549
      %v10996 = vpop.f32.mrb[0].mxu0
      %v10997 = vadd.f32 %v10956, %v10996
      %v10998 = vpop.f32.mrb[0].mxu0
      %v10999 = vadd.f32 %v10958, %v10998
      %v11000 = vpop.f32.mrb[0].mxu0
      %v11001 = vpop.f32.mrb[0].mxu0
      %11002 = vdwg.mxu0
      %11003 = vmatprep.subr.bf16.mxu0 %v10330
      %11004 = vmatpush1.bf16.msra.mxu0 %v10329
      %11005 = vmatprep.subr.bf16.mxu0 %v10334
      %11006 = vmatpush1.bf16.msra.mxu0 %v10333
      %11007 = vmatprep.subr.bf16.mxu0 %v10338
      %11008 = vmatpush1.bf16.msra.mxu0 %v10337
      %11009 = vmatprep.subr.bf16.mxu0 %v10342
      %11010 = vmatpush1.bf16.msra.mxu0 %v10341
      %11011 = vmatprep.subr.bf16.mxu0 %v10346
      %11012 = vmatpush1.bf16.msra.mxu0 %v10345
      %11013 = vmatprep.subr.bf16.mxu0 %v10350
      %11014 = vmatpush1.bf16.msra.mxu0 %v10349
      %11015 = vmatprep.subr.bf16.mxu0 %v10354
      %11016 = vmatpush1.bf16.msra.mxu0 %v10353
      %11017 = vmatprep.subr.bf16.mxu0 %v10358
      %11018 = vmatpush1.bf16.msra.mxu0 %v10357
      %11019 = vmatprep.subr.bf16.mxu0 %v10362
      %11020 = vmatpush1.bf16.msra.mxu0 %v10361
      %11021 = vmatprep.subr.bf16.mxu0 %v10366
      %11022 = vmatpush1.bf16.msra.mxu0 %v10365
      %11023 = vmatprep.subr.bf16.mxu0 %v10370
      %11024 = vmatpush1.bf16.msra.mxu0 %v10369
      %11025 = vmatprep.subr.bf16.mxu0 %v10374
      %11026 = vmatpush1.bf16.msra.mxu0 %v10373
      %11027 = vmatprep.subr.bf16.mxu0 %v10378
      %11028 = vmatpush1.bf16.msra.mxu0 %v10377
      %11029 = vmatprep.subr.bf16.mxu0 %v10382
      %11030 = vmatpush1.bf16.msra.mxu0 %v10381
      %11031 = vmatprep.subr.bf16.mxu0 %v10386
      %11032 = vmatpush1.bf16.msra.mxu0 %v10385
      %11033 = vmatprep.subr.bf16.mxu0 %v10390
      %11034 = vmatpush1.bf16.msra.mxu0 %v10389
      %11035 = vmatprep.mubr.bf16.mxu0 %v9544
      %11036 = vmatmul.mubr.bf16.gmra.mrb[0].mxu0 %v9543
      %v11037 = vpop.f32.mrb[0].mxu0
      %v11038 = vadd.f32 %v9493, %v11037
      %v11039 = vpop.f32.mrb[0].mxu0
      %v11040 = vadd.f32 %v9497, %v11039
      %v11041 = vpop.f32.mrb[0].mxu0
      %v11042 = vpop.f32.mrb[0].mxu0
      %11043 = vdwg.mxu0
      %11044 = vmatprep.subr.bf16.mxu0 %v10394
      %11045 = vmatpush1.bf16.msra.mxu0 %v10393
      %11046 = vmatprep.subr.bf16.mxu0 %v10398
      %11047 = vmatpush1.bf16.msra.mxu0 %v10397
      %11048 = vmatprep.subr.bf16.mxu0 %v10402
      %11049 = vmatpush1.bf16.msra.mxu0 %v10401
      %11050 = vmatprep.subr.bf16.mxu0 %v10406
      %11051 = vmatpush1.bf16.msra.mxu0 %v10405
      %11052 = vmatprep.subr.bf16.mxu0 %v10410
      %11053 = vmatpush1.bf16.msra.mxu0 %v10409
      %11054 = vmatprep.subr.bf16.mxu0 %v10414
      %11055 = vmatpush1.bf16.msra.mxu0 %v10413
      %11056 = vmatprep.subr.bf16.mxu0 %v10418
      %11057 = vmatpush1.bf16.msra.mxu0 %v10417
      %11058 = vmatprep.subr.bf16.mxu0 %v10422
      %11059 = vmatpush1.bf16.msra.mxu0 %v10421
      %11060 = vmatprep.subr.bf16.mxu0 %v10426
      %11061 = vmatpush1.bf16.msra.mxu0 %v10425
      %11062 = vmatprep.subr.bf16.mxu0 %v10430
      %11063 = vmatpush1.bf16.msra.mxu0 %v10429
      %11064 = vmatprep.subr.bf16.mxu0 %v10434
      %11065 = vmatpush1.bf16.msra.mxu0 %v10433
      %11066 = vmatprep.subr.bf16.mxu0 %v10438
      %11067 = vmatpush1.bf16.msra.mxu0 %v10437
      %11068 = vmatprep.subr.bf16.mxu0 %v10442
      %11069 = vmatpush1.bf16.msra.mxu0 %v10441
      %11070 = vmatprep.subr.bf16.mxu0 %v10446
      %11071 = vmatpush1.bf16.msra.mxu0 %v10445
      %11072 = vmatprep.subr.bf16.mxu0 %v10450
      %11073 = vmatpush1.bf16.msra.mxu0 %v10449
      %11074 = vmatprep.subr.bf16.mxu0 %v10454
      %11075 = vmatpush1.bf16.msra.mxu0 %v10453
      %11076 = vmatprep.mubr.bf16.mxu0 %v9546
      %11077 = vmatmul.mubr.bf16.gmra.mrb[0].mxu0 %v9545
      %v11078 = vpop.f32.mrb[0].mxu0
      %v11079 = vadd.f32 %v11038, %v11078
      %v11080 = vpop.f32.mrb[0].mxu0
      %v11081 = vadd.f32 %v11040, %v11080
      %v11082 = vpop.f32.mrb[0].mxu0
      %v11083 = vpop.f32.mrb[0].mxu0
      %11084 = vdwg.mxu0
      %11085 = vmatprep.subr.bf16.mxu0 %v10458
      %11086 = vmatpush1.bf16.msra.mxu0 %v10457
      %11087 = vmatprep.subr.bf16.mxu0 %v10462
      %11088 = vmatpush1.bf16.msra.mxu0 %v10461
      %11089 = vmatprep.subr.bf16.mxu0 %v10466
      %11090 = vmatpush1.bf16.msra.mxu0 %v10465
      %11091 = vmatprep.subr.bf16.mxu0 %v10470
      %11092 = vmatpush1.bf16.msra.mxu0 %v10469
      %11093 = vmatprep.subr.bf16.mxu0 %v10474
      %11094 = vmatpush1.bf16.msra.mxu0 %v10473
      %11095 = vmatprep.subr.bf16.mxu0 %v10478
      %11096 = vmatpush1.bf16.msra.mxu0 %v10477
      %11097 = vmatprep.subr.bf16.mxu0 %v10482
      %11098 = vmatpush1.bf16.msra.mxu0 %v10481
      %11099 = vmatprep.subr.bf16.mxu0 %v10486
      %11100 = vmatpush1.bf16.msra.mxu0 %v10485
      %11101 = vmatprep.subr.bf16.mxu0 %v10490
      %11102 = vmatpush1.bf16.msra.mxu0 %v10489
      %11103 = vmatprep.subr.bf16.mxu0 %v10494
      %11104 = vmatpush1.bf16.msra.mxu0 %v10493
      %11105 = vmatprep.subr.bf16.mxu0 %v10498
      %11106 = vmatpush1.bf16.msra.mxu0 %v10497
      %11107 = vmatprep.subr.bf16.mxu0 %v10502
      %11108 = vmatpush1.bf16.msra.mxu0 %v10501
      %11109 = vmatprep.subr.bf16.mxu0 %v10506
      %11110 = vmatpush1.bf16.msra.mxu0 %v10505
      %11111 = vmatprep.subr.bf16.mxu0 %v10510
      %11112 = vmatpush1.bf16.msra.mxu0 %v10509
      %11113 = vmatprep.subr.bf16.mxu0 %v10514
      %11114 = vmatpush1.bf16.msra.mxu0 %v10513
      %11115 = vmatprep.subr.bf16.mxu0 %v10518
      %11116 = vmatpush1.bf16.msra.mxu0 %v10517
      %11117 = vmatprep.mubr.bf16.mxu0 %v9548
      %11118 = vmatmul.mubr.bf16.gmra.mrb[0].mxu0 %v9547
      %v11119 = vpop.f32.mrb[0].mxu0
      %v11120 = vadd.f32 %v11079, %v11119
      %v11121 = vpop.f32.mrb[0].mxu0
      %v11122 = vadd.f32 %v11081, %v11121
      %v11123 = vpop.f32.mrb[0].mxu0
      %v11124 = vpop.f32.mrb[0].mxu0
      %11125 = vdwg.mxu0
      %11126 = vmatprep.subr.bf16.mxu0 %v10522
      %11127 = vmatpush1.bf16.msra.mxu0 %v10521
      %11128 = vmatprep.subr.bf16.mxu0 %v10526
      %11129 = vmatpush1.bf16.msra.mxu0 %v10525
      %11130 = vmatprep.subr.bf16.mxu0 %v10530
      %11131 = vmatpush1.bf16.msra.mxu0 %v10529
      %11132 = vmatprep.subr.bf16.mxu0 %v10534
      %11133 = vmatpush1.bf16.msra.mxu0 %v10533
      %11134 = vmatprep.subr.bf16.mxu0 %v10538
      %11135 = vmatpush1.bf16.msra.mxu0 %v10537
      %11136 = vmatprep.subr.bf16.mxu0 %v10542
      %11137 = vmatpush1.bf16.msra.mxu0 %v10541
      %11138 = vmatprep.subr.bf16.mxu0 %v10546
      %11139 = vmatpush1.bf16.msra.mxu0 %v10545
      %11140 = vmatprep.subr.bf16.mxu0 %v10550
      %11141 = vmatpush1.bf16.msra.mxu0 %v10549
      %11142 = vmatprep.subr.bf16.mxu0 %v10554
      %11143 = vmatpush1.bf16.msra.mxu0 %v10553
      %11144 = vmatprep.subr.bf16.mxu0 %v10558
      %11145 = vmatpush1.bf16.msra.mxu0 %v10557
      %11146 = vmatprep.subr.bf16.mxu0 %v10562
      %11147 = vmatpush1.bf16.msra.mxu0 %v10561
      %11148 = vmatprep.subr.bf16.mxu0 %v10566
      %11149 = vmatpush1.bf16.msra.mxu0 %v10565
      %11150 = vmatprep.subr.bf16.mxu0 %v10570
      %11151 = vmatpush1.bf16.msra.mxu0 %v10569
      %11152 = vmatprep.subr.bf16.mxu0 %v10574
      %11153 = vmatpush1.bf16.msra.mxu0 %v10573
      %11154 = vmatprep.subr.bf16.mxu0 %v10578
      %11155 = vmatpush1.bf16.msra.mxu0 %v10577
      %11156 = vmatprep.subr.bf16.mxu0 %v10582
      %11157 = vmatpush1.bf16.msra.mxu0 %v10581
      %11158 = vmatprep.mubr.bf16.mxu0 %v9550
      %11159 = vmatmul.mubr.bf16.gmra.mrb[0].mxu0 %v9549
      %v11160 = vpop.f32.mrb[0].mxu0
      %v11161 = vadd.f32 %v11120, %v11160
      %v11162 = vpop.f32.mrb[0].mxu0
      %v11163 = vadd.f32 %v11122, %v11162
      %v11164 = vpop.f32.mrb[0].mxu0
      %v11165 = vpop.f32.mrb[0].mxu0
      %11166 = vdwg.mxu0
      %v11167 = vmax.f32 %v10997, 0.0
      %v11168 = vmax.f32 %v10999, 0.0
      %v11169 = vmax.f32 %v11161, 0.0
      %v11170 = vmax.f32 %v11163, 0.0
      %v11171 = vpack.c.bf16 %v11167, %v11167
      %v11172 = vpack.c.bf16 %v11168, %v11168
      %v11173 = vpack.c.bf16 %v11169, %v11169
      %v11174 = vpack.c.bf16 %v11170, %v11170
      %v11175 = vld [vmem:[%s7] sm:$0xff]
      %v11176 = vld [vmem:[%s7 + $0x8] sm:$0xff]
      %v11177 = vld [vmem:[%s7 + $0x10] sm:$0xff]
      %v11178 = vld [vmem:[%s7 + $0x18] sm:$0xff]
      %v11179 = vld [vmem:[%s7 + $0x20] sm:$0xff]
      %v11180 = vld [vmem:[%s7 + $0x28] sm:$0xff]
      %v11181 = vld [vmem:[%s7 + $0x30] sm:$0xff]
      %v11182 = vld [vmem:[%s7 + $0x38] sm:$0xff]
      %v11183 = vld [vmem:[%s7 + $0x40] sm:$0xff]
      %v11184 = vld [vmem:[%s7 + $0x48] sm:$0xff]
      %v11185 = vld [vmem:[%s7 + $0x50] sm:$0xff]
      %v11186 = vld [vmem:[%s7 + $0x58] sm:$0xff]
      %v11187 = vld [vmem:[%s7 + $0x60] sm:$0xff]
      %v11188 = vld [vmem:[%s7 + $0x68] sm:$0xff]
      %v11189 = vld [vmem:[%s7 + $0x70] sm:$0xff]
      %v11190 = vld [vmem:[%s7 + $0x78] sm:$0xff]
      %v11191 = vld [vmem:[%s7 + $0x80] sm:$0xff]
      %v11192 = vld [vmem:[%s7 + $0x88] sm:$0xff]
      %v11193 = vld [vmem:[%s7 + $0x90] sm:$0xff]
      %v11194 = vld [vmem:[%s7 + $0x98] sm:$0xff]
      %v11195 = vld [vmem:[%s7 + $0xa0] sm:$0xff]
      %v11196 = vld [vmem:[%s7 + $0xa8] sm:$0xff]
      %v11197 = vld [vmem:[%s7 + $0xb0] sm:$0xff]
      %v11198 = vld [vmem:[%s7 + $0xb8] sm:$0xff]
      %v11199 = vld [vmem:[%s7 + $0xc0] sm:$0xff]
      %v11200 = vld [vmem:[%s7 + $0xc8] sm:$0xff]
      %v11201 = vld [vmem:[%s7 + $0xd0] sm:$0xff]
      %v11202 = vld [vmem:[%s7 + $0xd8] sm:$0xff]
      %v11203 = vld [vmem:[%s7 + $0xe0] sm:$0xff]
      %v11204 = vld [vmem:[%s7 + $0xe8] sm:$0xff]
      %v11205 = vld [vmem:[%s7 + $0xf0] sm:$0xff]
      %v11206 = vld [vmem:[%s7 + $0xf8] sm:$0xff]
      %v11207 = vld [vmem:[%s7 + $0x100] sm:$0xff]
      %v11208 = vld [vmem:[%s7 + $0x108] sm:$0xff]
      %v11209 = vld [vmem:[%s7 + $0x110] sm:$0xff]
      %v11210 = vld [vmem:[%s7 + $0x118] sm:$0xff]
      %v11211 = vld [vmem:[%s7 + $0x120] sm:$0xff]
      %v11212 = vld [vmem:[%s7 + $0x128] sm:$0xff]
      %v11213 = vld [vmem:[%s7 + $0x130] sm:$0xff]
      %v11214 = vld [vmem:[%s7 + $0x138] sm:$0xff]
      %v11215 = vld [vmem:[%s7 + $0x140] sm:$0xff]
      %v11216 = vld [vmem:[%s7 + $0x148] sm:$0xff]
      %v11217 = vld [vmem:[%s7 + $0x150] sm:$0xff]
      %v11218 = vld [vmem:[%s7 + $0x158] sm:$0xff]
      %v11219 = vld [vmem:[%s7 + $0x160] sm:$0xff]
      %v11220 = vld [vmem:[%s7 + $0x168] sm:$0xff]
      %v11221 = vld [vmem:[%s7 + $0x170] sm:$0xff]
      %v11222 = vld [vmem:[%s7 + $0x178] sm:$0xff]
      %v11223 = vld [vmem:[%s7 + $0x180] sm:$0xff]
      %v11224 = vld [vmem:[%s7 + $0x188] sm:$0xff]
      %v11225 = vld [vmem:[%s7 + $0x190] sm:$0xff]
      %v11226 = vld [vmem:[%s7 + $0x198] sm:$0xff]
      %v11227 = vld [vmem:[%s7 + $0x1a0] sm:$0xff]
      %v11228 = vld [vmem:[%s7 + $0x1a8] sm:$0xff]
      %v11229 = vld [vmem:[%s7 + $0x1b0] sm:$0xff]
      %v11230 = vld [vmem:[%s7 + $0x1b8] sm:$0xff]
      %v11231 = vld [vmem:[%s7 + $0x1c0] sm:$0xff]
      %v11232 = vld [vmem:[%s7 + $0x1c8] sm:$0xff]
      %v11233 = vld [vmem:[%s7 + $0x1d0] sm:$0xff]
      %v11234 = vld [vmem:[%s7 + $0x1d8] sm:$0xff]
      %v11235 = vld [vmem:[%s7 + $0x1e0] sm:$0xff]
      %v11236 = vld [vmem:[%s7 + $0x1e8] sm:$0xff]
      %v11237 = vld [vmem:[%s7 + $0x1f0] sm:$0xff]
      %v11238 = vld [vmem:[%s7 + $0x1f8] sm:$0xff]
      %v11239 = vld [vmem:[%s8 + $0x14] sm:$0x3]
      %v11241 = vlaneseq
      %v11242 = vshrl.u32 %v11241, 7
      %v11243 = vsub.s32 0, %v11242
      %v11244 = vrot.slane %v11239, %v11243
      %v11245 = vlaneseq
      %v11246 = vshrl.u32 %v11245, 7
      %v11247 = vsub.s32 1, %v11246
      %v11248 = vrot.slane %v11239, %v11247
      %v11315 = vunpack.c.l.b16 %v11175
      %v11316 = vunpack.c.h.b16 %v11175
      %v11317 = vunpack.c.l.b16 %v11176
      %v11318 = vunpack.c.h.b16 %v11176
      %v11319 = vunpack.c.l.b16 %v11177
      %v11320 = vunpack.c.h.b16 %v11177
      %v11321 = vunpack.c.l.b16 %v11178
      %v11322 = vunpack.c.h.b16 %v11178
      %v11323 = vunpack.c.l.b16 %v11179
      %v11324 = vunpack.c.h.b16 %v11179
      %v11325 = vunpack.c.l.b16 %v11180
      %v11326 = vunpack.c.h.b16 %v11180
      %v11327 = vunpack.c.l.b16 %v11181
      %v11328 = vunpack.c.h.b16 %v11181
      %v11329 = vunpack.c.l.b16 %v11182
      %v11330 = vunpack.c.h.b16 %v11182
      %v11331 = vunpack.c.l.b16 %v11183
      %v11332 = vunpack.c.h.b16 %v11183
      %v11333 = vunpack.c.l.b16 %v11184
      %v11334 = vunpack.c.h.b16 %v11184
      %v11335 = vunpack.c.l.b16 %v11185
      %v11336 = vunpack.c.h.b16 %v11185
      %v11337 = vunpack.c.l.b16 %v11186
      %v11338 = vunpack.c.h.b16 %v11186
      %v11339 = vunpack.c.l.b16 %v11187
      %v11340 = vunpack.c.h.b16 %v11187
      %v11341 = vunpack.c.l.b16 %v11188
      %v11342 = vunpack.c.h.b16 %v11188
      %v11343 = vunpack.c.l.b16 %v11189
      %v11344 = vunpack.c.h.b16 %v11189
      %v11345 = vunpack.c.l.b16 %v11190
      %v11346 = vunpack.c.h.b16 %v11190
      %v11347 = vunpack.c.l.b16 %v11191
      %v11348 = vunpack.c.h.b16 %v11191
      %v11349 = vunpack.c.l.b16 %v11192
      %v11350 = vunpack.c.h.b16 %v11192
      %v11351 = vunpack.c.l.b16 %v11193
      %v11352 = vunpack.c.h.b16 %v11193
      %v11353 = vunpack.c.l.b16 %v11194
      %v11354 = vunpack.c.h.b16 %v11194
      %v11355 = vunpack.c.l.b16 %v11195
      %v11356 = vunpack.c.h.b16 %v11195
      %v11357 = vunpack.c.l.b16 %v11196
      %v11358 = vunpack.c.h.b16 %v11196
      %v11359 = vunpack.c.l.b16 %v11197
      %v11360 = vunpack.c.h.b16 %v11197
      %v11361 = vunpack.c.l.b16 %v11198
      %v11362 = vunpack.c.h.b16 %v11198
      %v11363 = vunpack.c.l.b16 %v11199
      %v11364 = vunpack.c.h.b16 %v11199
      %v11365 = vunpack.c.l.b16 %v11200
      %v11366 = vunpack.c.h.b16 %v11200
      %v11367 = vunpack.c.l.b16 %v11201
      %v11368 = vunpack.c.h.b16 %v11201
      %v11369 = vunpack.c.l.b16 %v11202
      %v11370 = vunpack.c.h.b16 %v11202
      %v11371 = vunpack.c.l.b16 %v11203
      %v11372 = vunpack.c.h.b16 %v11203
      %v11373 = vunpack.c.l.b16 %v11204
      %v11374 = vunpack.c.h.b16 %v11204
      %v11375 = vunpack.c.l.b16 %v11205
      %v11376 = vunpack.c.h.b16 %v11205
      %v11377 = vunpack.c.l.b16 %v11206
      %v11378 = vunpack.c.h.b16 %v11206
      %v11379 = vunpack.c.l.b16 %v11207
      %v11380 = vunpack.c.h.b16 %v11207
      %v11381 = vunpack.c.l.b16 %v11208
      %v11382 = vunpack.c.h.b16 %v11208
      %v11383 = vunpack.c.l.b16 %v11209
      %v11384 = vunpack.c.h.b16 %v11209
      %v11385 = vunpack.c.l.b16 %v11210
      %v11386 = vunpack.c.h.b16 %v11210
      %v11387 = vunpack.c.l.b16 %v11211
      %v11388 = vunpack.c.h.b16 %v11211
      %v11389 = vunpack.c.l.b16 %v11212
      %v11390 = vunpack.c.h.b16 %v11212
      %v11391 = vunpack.c.l.b16 %v11213
      %v11392 = vunpack.c.h.b16 %v11213
      %v11393 = vunpack.c.l.b16 %v11214
      %v11394 = vunpack.c.h.b16 %v11214
      %v11395 = vunpack.c.l.b16 %v11215
      %v11396 = vunpack.c.h.b16 %v11215
      %v11397 = vunpack.c.l.b16 %v11216
      %v11398 = vunpack.c.h.b16 %v11216
      %v11399 = vunpack.c.l.b16 %v11217
      %v11400 = vunpack.c.h.b16 %v11217
      %v11401 = vunpack.c.l.b16 %v11218
      %v11402 = vunpack.c.h.b16 %v11218
      %v11403 = vunpack.c.l.b16 %v11219
      %v11404 = vunpack.c.h.b16 %v11219
      %v11405 = vunpack.c.l.b16 %v11220
      %v11406 = vunpack.c.h.b16 %v11220
      %v11407 = vunpack.c.l.b16 %v11221
      %v11408 = vunpack.c.h.b16 %v11221
      %v11409 = vunpack.c.l.b16 %v11222
      %v11410 = vunpack.c.h.b16 %v11222
      %v11411 = vunpack.c.l.b16 %v11223
      %v11412 = vunpack.c.h.b16 %v11223
      %v11413 = vunpack.c.l.b16 %v11224
      %v11414 = vunpack.c.h.b16 %v11224
      %v11415 = vunpack.c.l.b16 %v11225
      %v11416 = vunpack.c.h.b16 %v11225
      %v11417 = vunpack.c.l.b16 %v11226
      %v11418 = vunpack.c.h.b16 %v11226
      %v11419 = vunpack.c.l.b16 %v11227
      %v11420 = vunpack.c.h.b16 %v11227
      %v11421 = vunpack.c.l.b16 %v11228
      %v11422 = vunpack.c.h.b16 %v11228
      %v11423 = vunpack.c.l.b16 %v11229
      %v11424 = vunpack.c.h.b16 %v11229
      %v11425 = vunpack.c.l.b16 %v11230
      %v11426 = vunpack.c.h.b16 %v11230
      %v11427 = vunpack.c.l.b16 %v11231
      %v11428 = vunpack.c.h.b16 %v11231
      %v11429 = vunpack.c.l.b16 %v11232
      %v11430 = vunpack.c.h.b16 %v11232
      %v11431 = vunpack.c.l.b16 %v11233
      %v11432 = vunpack.c.h.b16 %v11233
      %v11433 = vunpack.c.l.b16 %v11234
      %v11434 = vunpack.c.h.b16 %v11234
      %v11435 = vunpack.c.l.b16 %v11235
      %v11436 = vunpack.c.h.b16 %v11235
      %v11437 = vunpack.c.l.b16 %v11236
      %v11438 = vunpack.c.h.b16 %v11236
      %v11439 = vunpack.c.l.b16 %v11237
      %v11440 = vunpack.c.h.b16 %v11237
      %v11441 = vunpack.c.l.b16 %v11238
      %v11442 = vunpack.c.h.b16 %v11238
      %v11443 = vpack.c.b16 %v11317, %v11315
      %v11444 = vpack.c.b16 %v11318, %v11316
      %v11445 = vpack.c.b16 %v11321, %v11319
      %v11446 = vpack.c.b16 %v11322, %v11320
      %v11447 = vpack.c.b16 %v11325, %v11323
      %v11448 = vpack.c.b16 %v11326, %v11324
      %v11449 = vpack.c.b16 %v11329, %v11327
      %v11450 = vpack.c.b16 %v11330, %v11328
      %v11451 = vpack.c.b16 %v11333, %v11331
      %v11452 = vpack.c.b16 %v11334, %v11332
      %v11453 = vpack.c.b16 %v11337, %v11335
      %v11454 = vpack.c.b16 %v11338, %v11336
      %v11455 = vpack.c.b16 %v11341, %v11339
      %v11456 = vpack.c.b16 %v11342, %v11340
      %v11457 = vpack.c.b16 %v11345, %v11343
      %v11458 = vpack.c.b16 %v11346, %v11344
      %v11459 = vpack.c.b16 %v11349, %v11347
      %v11460 = vpack.c.b16 %v11350, %v11348
      %v11461 = vpack.c.b16 %v11353, %v11351
      %v11462 = vpack.c.b16 %v11354, %v11352
      %v11463 = vpack.c.b16 %v11357, %v11355
      %v11464 = vpack.c.b16 %v11358, %v11356
      %v11465 = vpack.c.b16 %v11361, %v11359
      %v11466 = vpack.c.b16 %v11362, %v11360
      %v11467 = vpack.c.b16 %v11365, %v11363
      %v11468 = vpack.c.b16 %v11366, %v11364
      %v11469 = vpack.c.b16 %v11369, %v11367
      %v11470 = vpack.c.b16 %v11370, %v11368
      %v11471 = vpack.c.b16 %v11373, %v11371
      %v11472 = vpack.c.b16 %v11374, %v11372
      %v11473 = vpack.c.b16 %v11377, %v11375
      %v11474 = vpack.c.b16 %v11378, %v11376
      %v11475 = vpack.c.b16 %v11381, %v11379
      %v11476 = vpack.c.b16 %v11382, %v11380
      %v11477 = vpack.c.b16 %v11385, %v11383
      %v11478 = vpack.c.b16 %v11386, %v11384
      %v11479 = vpack.c.b16 %v11389, %v11387
      %v11480 = vpack.c.b16 %v11390, %v11388
      %v11481 = vpack.c.b16 %v11393, %v11391
      %v11482 = vpack.c.b16 %v11394, %v11392
      %v11483 = vpack.c.b16 %v11397, %v11395
      %v11484 = vpack.c.b16 %v11398, %v11396
      %v11485 = vpack.c.b16 %v11401, %v11399
      %v11486 = vpack.c.b16 %v11402, %v11400
      %v11487 = vpack.c.b16 %v11405, %v11403
      %v11488 = vpack.c.b16 %v11406, %v11404
      %v11489 = vpack.c.b16 %v11409, %v11407
      %v11490 = vpack.c.b16 %v11410, %v11408
      %v11491 = vpack.c.b16 %v11413, %v11411
      %v11492 = vpack.c.b16 %v11414, %v11412
      %v11493 = vpack.c.b16 %v11417, %v11415
      %v11494 = vpack.c.b16 %v11418, %v11416
      %v11495 = vpack.c.b16 %v11421, %v11419
      %v11496 = vpack.c.b16 %v11422, %v11420
      %v11497 = vpack.c.b16 %v11425, %v11423
      %v11498 = vpack.c.b16 %v11426, %v11424
      %v11499 = vpack.c.b16 %v11429, %v11427
      %v11500 = vpack.c.b16 %v11430, %v11428
      %v11501 = vpack.c.b16 %v11433, %v11431
      %v11502 = vpack.c.b16 %v11434, %v11432
      %v11503 = vpack.c.b16 %v11437, %v11435
      %v11504 = vpack.c.b16 %v11438, %v11436
      %v11505 = vpack.c.b16 %v11441, %v11439
      %v11506 = vpack.c.b16 %v11442, %v11440
      %11571 = vmatprep.subr.bf16.mxu0 %v11444
      %11572 = vmatpush1.bf16.msra.mxu0 %v11443
      %11573 = vmatprep.subr.bf16.mxu0 %v11446
      %11574 = vmatpush1.bf16.msra.mxu0 %v11445
      %11575 = vmatprep.subr.bf16.mxu0 %v11448
      %11576 = vmatpush1.bf16.msra.mxu0 %v11447
      %11577 = vmatprep.subr.bf16.mxu0 %v11450
      %11578 = vmatpush1.bf16.msra.mxu0 %v11449
      %11579 = vmatprep.subr.bf16.mxu0 %v11452
      %11580 = vmatpush1.bf16.msra.mxu0 %v11451
      %11581 = vmatprep.subr.bf16.mxu0 %v11454
      %11582 = vmatpush1.bf16.msra.mxu0 %v11453
      %11583 = vmatprep.subr.bf16.mxu0 %v11456
      %11584 = vmatpush1.bf16.msra.mxu0 %v11455
      %11585 = vmatprep.subr.bf16.mxu0 %v11458
      %11586 = vmatpush1.bf16.msra.mxu0 %v11457
      %11587 = vmatprep.subr.bf16.mxu0 %v11460
      %11588 = vmatpush1.bf16.msra.mxu0 %v11459
      %11589 = vmatprep.subr.bf16.mxu0 %v11462
      %11590 = vmatpush1.bf16.msra.mxu0 %v11461
      %11591 = vmatprep.subr.bf16.mxu0 %v11464
      %11592 = vmatpush1.bf16.msra.mxu0 %v11463
      %11593 = vmatprep.subr.bf16.mxu0 %v11466
      %11594 = vmatpush1.bf16.msra.mxu0 %v11465
      %11595 = vmatprep.subr.bf16.mxu0 %v11468
      %11596 = vmatpush1.bf16.msra.mxu0 %v11467
      %11597 = vmatprep.subr.bf16.mxu0 %v11470
      %11598 = vmatpush1.bf16.msra.mxu0 %v11469
      %11599 = vmatprep.subr.bf16.mxu0 %v11472
      %11600 = vmatpush1.bf16.msra.mxu0 %v11471
      %11601 = vmatprep.subr.bf16.mxu0 %v11474
      %11602 = vmatpush1.bf16.msra.mxu0 %v11473
      %11603 = vmatprep.mubr.bf16.mxu0 %v11172
      %11604 = vmatmul.mubr.bf16.gmra.mrb[0].mxu0 %v11171
      %v11605 = vpop.f32.mrb[0].mxu0
      %v11606 = vadd.f32 %v11244, %v11605
      %v11607 = vpop.f32.mrb[0].mxu0
      %v11608 = vadd.f32 %v11248, %v11607
      %v11609 = vpop.f32.mrb[0].mxu0
      %v11610 = vpop.f32.mrb[0].mxu0
      %11611 = vdwg.mxu0
      %11612 = vmatprep.subr.bf16.mxu0 %v11476
      %11613 = vmatpush1.bf16.msra.mxu0 %v11475
      %11614 = vmatprep.subr.bf16.mxu0 %v11478
      %11615 = vmatpush1.bf16.msra.mxu0 %v11477
      %11616 = vmatprep.subr.bf16.mxu0 %v11480
      %11617 = vmatpush1.bf16.msra.mxu0 %v11479
      %11618 = vmatprep.subr.bf16.mxu0 %v11482
      %11619 = vmatpush1.bf16.msra.mxu0 %v11481
      %11620 = vmatprep.subr.bf16.mxu0 %v11484
      %11621 = vmatpush1.bf16.msra.mxu0 %v11483
      %11622 = vmatprep.subr.bf16.mxu0 %v11486
      %11623 = vmatpush1.bf16.msra.mxu0 %v11485
      %11624 = vmatprep.subr.bf16.mxu0 %v11488
      %11625 = vmatpush1.bf16.msra.mxu0 %v11487
      %11626 = vmatprep.subr.bf16.mxu0 %v11490
      %11627 = vmatpush1.bf16.msra.mxu0 %v11489
      %11628 = vmatprep.subr.bf16.mxu0 %v11492
      %11629 = vmatpush1.bf16.msra.mxu0 %v11491
      %11630 = vmatprep.subr.bf16.mxu0 %v11494
      %11631 = vmatpush1.bf16.msra.mxu0 %v11493
      %11632 = vmatprep.subr.bf16.mxu0 %v11496
      %11633 = vmatpush1.bf16.msra.mxu0 %v11495
      %11634 = vmatprep.subr.bf16.mxu0 %v11498
      %11635 = vmatpush1.bf16.msra.mxu0 %v11497
      %11636 = vmatprep.subr.bf16.mxu0 %v11500
      %11637 = vmatpush1.bf16.msra.mxu0 %v11499
      %11638 = vmatprep.subr.bf16.mxu0 %v11502
      %11639 = vmatpush1.bf16.msra.mxu0 %v11501
      %11640 = vmatprep.subr.bf16.mxu0 %v11504
      %11641 = vmatpush1.bf16.msra.mxu0 %v11503
      %11642 = vmatprep.subr.bf16.mxu0 %v11506
      %11643 = vmatpush1.bf16.msra.mxu0 %v11505
      %11644 = vmatprep.mubr.bf16.mxu0 %v11174
      %11645 = vmatmul.mubr.bf16.gmra.mrb[0].mxu0 %v11173
      %v11646 = vpop.f32.mrb[0].mxu0
      %v11647 = vadd.f32 %v11606, %v11646
      %v11648 = vpop.f32.mrb[0].mxu0
      %v11649 = vadd.f32 %v11608, %v11648
      %v11650 = vpop.f32.mrb[0].mxu0
      %v11651 = vpop.f32.mrb[0].mxu0
      %11652 = vdwg.mxu0
      %11653 = vst [vmem:[#allocation7] sm:$0x3] %v11647
      %11654 = vst [vmem:[#allocation9] sm:$0x3] %v11649
      %v11655 = vld [vmem:[%s9] sm:$0x3]
      %v11656 = vmul.f32 %v11649, 0.5
      %v11657 = vmul.f32 %v11656, 1.442695
      %v11658 = vpow.pop %v11657
      %v11659 = vmul.f32 %v11655, %v11658
      %v11660 = vadd.f32 %v11659, %v11647
      %11661 = vst [vmem:[#allocation6] sm:$0x3] %v11660
    $region57: #{encoder_forward.1} parent=1 // pred_fallthru
      _
    // Predicated region
    $region58: #{encoder_forward.1} parent=1 // pred_check
      _
    $region59: #{encoder_forward.1} parent=1 // pred_check_branch
      %11663 = sbr.rel (0) target = $region61
    $region60: #{encoder_forward.1} parent=1 // pred_region
      %s11665 = ssub.s32 32, 32
      %11666 = vsyncadd [#allocation5], %s11665
      %s11668 = sshll.u32 [#allocation6], 4
      %s11669 = int_to_ptr.vmem [resolvable:$true] %s11668
      %11671 = dma.vmem_to_hbm [thread:$0]  %s11669, 32, %s10, [#allocation5]
    $region61: #{encoder_forward.1} parent=1 // pred_fallthru
      _
    // Predicated region
    $region62: #{encoder_forward.1} parent=1 // pred_check
      _
    $region63: #{encoder_forward.1} parent=1 // pred_check_branch
      %11673 = sbr.rel (0) target = $region65
    $region64: #{encoder_forward.1} parent=1 // pred_region
      %s11675 = ssub.s32 32, 32
      %11676 = vsyncadd [#allocation8], %s11675
      %s11678 = sshll.u32 [#allocation7], 4
      %s11679 = int_to_ptr.vmem [resolvable:$true] %s11678
      %11681 = dma.vmem_to_hbm [thread:$0]  %s11679, 32, %s11, [#allocation8]
    $region65: #{encoder_forward.1} parent=1 // pred_fallthru
      _
    // Predicated region
    $region66: #{encoder_forward.1} parent=1 // pred_check
      _
    $region67: #{encoder_forward.1} parent=1 // pred_check_branch
      %11683 = sbr.rel (0) target = $region69
    $region68: #{encoder_forward.1} parent=1 // pred_region
      %s11685 = ssub.s32 32, 32
      %11686 = vsyncadd [#allocation8], %s11685
      %s11688 = sshll.u32 [#allocation9], 4
      %s11689 = int_to_ptr.vmem [resolvable:$true] %s11688
      %11691 = dma.vmem_to_hbm [thread:$0]  %s11689, 32, %s12, [#allocation8]
    $region69: #{encoder_forward.1} parent=1 // pred_fallthru
      _
    // Predicated region
    $region70: #{encoder_forward.1} parent=1 // pred_check
      _
    $region71: #{encoder_forward.1} parent=1 // pred_check_branch
      %11693 = sbr.rel (0) target = $region73
    $region72: #{encoder_forward.1} parent=1 // pred_region
      %11694 = dma.done [#allocation5], 32
    $region73: #{encoder_forward.1} parent=1 // pred_fallthru
      _
    // Predicated region
    $region74: #{encoder_forward.1} parent=1 // pred_check
      _
    $region75: #{encoder_forward.1} parent=1 // pred_check_branch
      %11696 = sbr.rel (0) target = $region77
    $region76: #{encoder_forward.1} parent=1 // pred_region
      %11697 = dma.done [#allocation8], 32
    $region77: #{encoder_forward.1} parent=1 // pred_fallthru
      _
    // Predicated region
    $region78: #{encoder_forward.1} parent=1 // pred_check
      _
    $region79: #{encoder_forward.1} parent=1 // pred_check_branch
      %11699 = sbr.rel (0) target = $region81
    $region80: #{encoder_forward.1} parent=1 // pred_region
      %11700 = dma.done [#allocation8], 32
    $region81: #{encoder_forward.1} parent=1 // pred_fallthru
      _
    %11701 = vsyncpa [#allocation4], 1
    %11702 = vsyncpa [#allocation5], 1
    %11703 = vsyncpa [#allocation8], 1

</llo_original>
